<compile_context>
chip_gen: v7x
topology: tpu7x:2x2x1
jax: 0.10.0
libtpu: 0.0.40
codegen_flags: <defaults>
</compile_context>

<pallas_src>
import functools

import jax
import jax.numpy as jnp
from jax import lax
from jax.experimental import pallas as pl
from jax.experimental.pallas import tpu as pltpu


def _round_up(x, m):
    return ((x + m - 1) // m) * m


def _pick_band_rows(H, cap=32):
    """Largest divisor of H that is <= cap (image rows per grid step)."""
    best = 1
    for d in range(1, min(H, cap) + 1):
        if H % d == 0:
            best = d
    return best


def _pick_chunk_rows(Wp, Cp):
    """Output image rows per accumulation chunk; keeps the (rc*Wp, Cp) f32
    chunk accumulator comfortably inside the 64 x 4 KiB vreg file."""
    target_flat = max(8, (128 * 128) // Cp)          # ~128 flat rows at Cp=128
    return max(1, target_flat // Wp)


def _rcu_kernel(xc_ref, xt1_ref, xt2_ref, xb1_ref, xb2_ref,
                w1_ref, b1_ref, w2_ref, b2_ref,
                o_ref,
                xpad_ref, ypad_ref,
                *, TH, H, W, Wp, Cp, nb, rc, cdt):
    """One (batch, row-band) step of ResidualConvUnit.

    Flat staging layout: xpad super-row s (Wp flat rows each) holds relu(x) of
    image row r0-3+s; ypad super-row s holds relu(conv1) of image row r0-2+s.
    Data lives in cols [0, W), zeros in the pad strip [W, Wp); col -1 of a
    row aliases the previous super-row's last pad column (also zero).
    """
    i = pl.program_id(1)
    r0 = i * TH
    f32 = jnp.float32
    pad_w = Wp - W

    # Hoisted zero constants (reused by every zero store below).
    zstrip = jnp.zeros((pad_w, Cp), cdt)
    zrow_w = jnp.zeros((W, Cp), cdt)
    zrow_full = jnp.zeros((Wp, Cp), cdt)

    # ------------------------------------------------------ minimal zeroing
    # Data columns [0, W) of super-rows 1..TH+4 (xpad) / 1..TH+2 (ypad) are
    # fully rewritten every step, so only the pad-column strips and the dummy
    # boundary super-rows need re-zeroing (vs. memsetting both buffers).
    xpad_ref[pl.ds(0, Wp), :] = zrow_full                     # super-row 0
    xpad_ref[pl.ds((TH + 5) * Wp, Wp), :] = zrow_full         # super-row TH+5
    for s in range(1, TH + 5):
        xpad_ref[pl.ds(s * Wp + W, pad_w), :] = zstrip
    ypad_ref[pl.ds(0, Wp), :] = zrow_full
    ypad_ref[pl.ds((TH + 3) * Wp, Wp), :] = zrow_full
    for s in range(1, TH + 3):
        ypad_ref[pl.ds(s * Wp + W, pad_w), :] = zstrip

    # ------------------------------------------------- stage relu(x) per row
    # ReLU + cast fused into each staging store (no whole-band temporary).
    for j in range(TH):
        xpad_ref[pl.ds((j + 3) * Wp, W), :] = (
            jnp.maximum(xc_ref[0, j], 0).astype(cdt))

    def _halo(h_ref, in_image):
        v = jnp.maximum(h_ref[0, 0], 0)
        return jnp.where(in_image, v, 0).astype(cdt)

    # 2-row halo above / below the band, masked to zero outside the image.
    xpad_ref[pl.ds(1 * Wp, W), :] = _halo(xt1_ref, r0 - 2 >= 0)
    xpad_ref[pl.ds(2 * Wp, W), :] = _halo(xt2_ref, r0 - 1 >= 0)
    xpad_ref[pl.ds((TH + 3) * Wp, W), :] = _halo(xb1_ref, r0 + TH <= H - 1)
    xpad_ref[pl.ds((TH + 4) * Wp, W), :] = _halo(xb2_ref, r0 + TH + 1 <= H - 1)

    b1 = b1_ref[...].astype(f32)                  # (1, Cp)
    b2 = b2_ref[...].astype(f32)

    # --------------------------------------------- conv1 (register-chunked)
    # Chunk accumulator (rc*Wp, Cp) f32 stays in vregs; 9 accumulating tap
    # matmuls; bias + ReLU + cast fused into the per-row epilogue store
    # (data columns only, keeping ypad's zero pad columns intact).
    out_rows1 = TH + 2                            # band + 1-row halo each side
    for c0 in range(0, out_rows1, rc):
        nr = min(rc, out_rows1 - c0)
        m0, cm = c0 * Wp, nr * Wp
        acc = jnp.dot(xpad_ref[pl.ds(Wp - 1 + m0, cm), :], w1_ref[0],
                      preferred_element_type=f32)
        for t in range(1, 9):
            dy, dx = t // 3 - 1, t % 3 - 1
            acc += jnp.dot(xpad_ref[pl.ds((dy + 2) * Wp + dx + m0, cm), :],
                           w1_ref[t], preferred_element_type=f32)
        for lr in range(nr):
            row = jnp.maximum(acc[lr * Wp:lr * Wp + W, :] + b1, 0.0)
            ypad_ref[pl.ds((1 + c0 + lr) * Wp, W), :] = row.astype(cdt)

    # Image-level zero padding of conv1's output along H (rows -1 and H).
    @pl.when(r0 == 0)
    def _():
        ypad_ref[pl.ds(1 * Wp, W), :] = zrow_w

    @pl.when(i == nb - 1)
    def _():
        ypad_ref[pl.ds((TH + 2) * Wp, W), :] = zrow_w

    # --------------------------------------------- conv2 (register-chunked)
    # bias + residual(x, un-ReLU'd) + cast fused into the per-row output store.
    out_rows2 = TH
    for c0 in range(0, out_rows2, rc):
        nr = min(rc, out_rows2 - c0)
        m0, cm = c0 * Wp, nr * Wp
        acc = jnp.dot(ypad_ref[pl.ds(Wp - 1 + m0, cm), :], w2_ref[0],
                      preferred_element_type=f32)
        for t in range(1, 9):
            dy, dx = t // 3 - 1, t % 3 - 1
            acc += jnp.dot(ypad_ref[pl.ds((dy + 2) * Wp + dx + m0, cm), :],
                           w2_ref[t], preferred_element_type=f32)
        for lr in range(nr):
            r = c0 + lr
            row = acc[lr * Wp:lr * Wp + W, :] + b2 + xc_ref[0, r].astype(f32)
            o_ref[0, r] = row.astype(o_ref.dtype)


def residual_conv_unit_nhwc(x_nhwc, w1_hwio, b1, w2_hwio, b2,
                            *, band_rows=None, compute_dtype=jnp.bfloat16):
    """x: (B, H, W, C); weights HWIO (3, 3, C, C); biases (C,).  Returns NHWC."""
    B, H, W, C = x_nhwc.shape
    Cp = _round_up(C, 128)            # lane-dense channels
    Wp = _round_up(W + 1, 8)          # >= W+1 (zero-pad col), 8-aligned flat stride
    TH = band_rows if band_rows is not None else _pick_band_rows(H)
    assert H % TH == 0, "band_rows must divide H"
    nb = H // TH
    rc = _pick_chunk_rows(Wp, Cp)

    x = x_nhwc
    if Cp != C:
        # NOTE: keep activations Cp-padded NHWC end-to-end in a real pipeline;
        # this pad and the final [..., :C] slice are extra HBM passes.
        x = jnp.pad(x, ((0, 0), (0, 0), (0, 0), (0, Cp - C)))

    def prep_w(w):
        if Cp != C:
            w = jnp.pad(w, ((0, 0), (0, 0), (0, Cp - C), (0, Cp - C)))
        return w.reshape(9, Cp, Cp).astype(compute_dtype)

    def prep_b(b):
        b = b.astype(jnp.float32)
        if Cp != C:
            b = jnp.pad(b, (0, Cp - C))
        return b.reshape(1, Cp)

    w1p, w2p = prep_w(w1_hwio), prep_w(w2_hwio)
    b1p, b2p = prep_b(b1), prep_b(b2)

    kern = functools.partial(_rcu_kernel, TH=TH, H=H, W=W, Wp=Wp, Cp=Cp,
                             nb=nb, rc=rc, cdt=compute_dtype)

    # VMEM budget: double-buffered blocks + weights + staging scratch, with
    # 2x headroom, clamped to [24, 64] MiB (fits v7x's 64 MiB/TC; plenty of
    # slack on v5e/v6e's 128 MiB).
    xb = jnp.dtype(x.dtype).itemsize
    cb = jnp.dtype(compute_dtype).itemsize
    est = (2 * TH * W * Cp * xb                      # x band (double-buffered)
           + 2 * 4 * W * Cp * xb                     # 4 halo rows
           + 2 * TH * W * Cp * xb                    # output band
           + 2 * 2 * 9 * Cp * Cp * cb                # conv1/conv2 weights
           + 2 * 2 * Cp * 4                          # biases
           + ((TH + 6) + (TH + 4)) * Wp * Cp * cb)   # staging scratch
    vmem_limit = int(min(max(2 * est, 24 * 1024 * 1024), 64 * 1024 * 1024))

    band_spec = pl.BlockSpec((1, TH, W, Cp), lambda b, i: (b, i, 0, 0))

    def row_spec(rmap):
        return pl.BlockSpec((1, 1, W, Cp), rmap)

    out = pl.pallas_call(
        kern,
        out_shape=jax.ShapeDtypeStruct((B, H, W, Cp), x.dtype),
        grid=(B, nb),
        in_specs=[
            band_spec,                                                           # x band
            row_spec(lambda b, i: (b, jnp.maximum(i * TH - 2, 0), 0, 0)),        # halo r0-2
            row_spec(lambda b, i: (b, jnp.maximum(i * TH - 1, 0), 0, 0)),        # halo r0-1
            row_spec(lambda b, i: (b, jnp.minimum((i + 1) * TH, H - 1), 0, 0)),  # halo r0+TH
            row_spec(lambda b, i: (b, jnp.minimum((i + 1) * TH + 1, H - 1), 0, 0)),
            pl.BlockSpec((9, Cp, Cp), lambda b, i: (0, 0, 0)),                   # w1
            pl.BlockSpec((1, Cp), lambda b, i: (0, 0)),                          # b1
            pl.BlockSpec((9, Cp, Cp), lambda b, i: (0, 0, 0)),                   # w2
            pl.BlockSpec((1, Cp), lambda b, i: (0, 0)),                          # b2
        ],
        out_specs=pl.BlockSpec((1, TH, W, Cp), lambda b, i: (b, i, 0, 0)),
        scratch_shapes=[
            pltpu.VMEM(((TH + 6) * Wp, Cp), compute_dtype),   # padded relu(x) band
            pltpu.VMEM(((TH + 4) * Wp, Cp), compute_dtype),   # padded relu(conv1) band
        ],
        compiler_params=pltpu.CompilerParams(
            dimension_semantics=("parallel", "parallel"),
            vmem_limit_bytes=vmem_limit,
        ),
    )(x, x, x, x, x, w1p, b1p, w2p, b2p)

    if Cp != C:
        out = out[..., :C]
    return out


def residual_conv_unit(x_nchw, w1_oihw, b1, w2_oihw, b2,
                       *, band_rows=None, compute_dtype=jnp.bfloat16):
    """PyTorch-layout entry point: x (B, C, H, W), weights OIHW (C, C, 3, 3)."""
    # NOTE: in a real pipeline keep activations NHWC end-to-end and convert the
    # weights once outside the hot path; these transposes are extra HBM passes.
    x = jnp.transpose(x_nchw, (0, 2, 3, 1))                 # NCHW -> NHWC
    w1 = jnp.transpose(w1_oihw, (2, 3, 1, 0))               # OIHW -> HWIO
    w2 = jnp.transpose(w2_oihw, (2, 3, 1, 0))
    out = residual_conv_unit_nhwc(x, w1, b1, w2, b2,
                                  band_rows=band_rows, compute_dtype=compute_dtype)
    return jnp.transpose(out, (0, 3, 1, 2))                 # back to NCHW


def _reference(x, w1, b1, w2, b2):
    """Pure-JAX NCHW reference mirroring the PyTorch forward (bn=False, ReLU)."""
    def conv(y, w, b):
        out = lax.conv_general_dilated(
            y, w, window_strides=(1, 1), padding=((1, 1), (1, 1)),
            dimension_numbers=("NCHW", "OIHW", "NCHW"))
        return out + b[None, :, None, None]
    out = jax.nn.relu(x)
    out = conv(out, w1, b1)
    out = jax.nn.relu(out)
    out = conv(out, w2, b2)
    return out + x


if __name__ == "__main__":
    B, C, H, W = 2, 4, 16, 16
    key = jax.random.PRNGKey(0)
    kx, k1, k2, k3, k4 = jax.random.split(key, 5)

    x = jax.random.normal(kx, (B, C, H, W), dtype=jnp.float32)
    w1 = jax.random.normal(k1, (C, C, 3, 3), dtype=jnp.float32) * 0.1
    b1 = jax.random.normal(k2, (C,), dtype=jnp.float32) * 0.1
    w2 = jax.random.normal(k3, (C, C, 3, 3), dtype=jnp.float32) * 0.1
    b2 = jax.random.normal(k4, (C,), dtype=jnp.float32) * 0.1

    ref = _reference(x, w1, b1, w2, b2)

    # 1) exact-arithmetic check of band tiling / halo / padding / chunking (f32 MXU path)
    out_f32 = jax.block_until_ready(
        residual_conv_unit(x, w1, b1, w2, b2, band_rows=8, compute_dtype=jnp.float32))
    assert out_f32.shape == (B, C, H, W)
    err = jnp.max(jnp.abs(out_f32 - ref))
    assert jnp.allclose(out_f32, ref, atol=1e-4, rtol=1e-4), f"f32 band=8 max err {err}"

    # 2) single-band (auto band size) f32 path
    out_f32b = jax.block_until_ready(
        residual_conv_unit(x, w1, b1, w2, b2, compute_dtype=jnp.float32))
    err = jnp.max(jnp.abs(out_f32b - ref))
    assert jnp.allclose(out_f32b, ref, atol=1e-4, rtol=1e-4), f"f32 auto max err {err}"

    # 3) production config: bf16 matmul operands, f32 accumulation, banded grid
    out_bf16 = jax.block_until_ready(
        residual_conv_unit(x, w1, b1, w2, b2, band_rows=8, compute_dtype=jnp.bfloat16))
    err = jnp.max(jnp.abs(out_bf16 - ref))
    assert jnp.allclose(out_bf16, ref, atol=1.5e-1, rtol=5e-2), f"bf16 max err {err}"

    print("KERNEL_OK")
</pallas_src>

<mosaic_0001>
module attributes {stable_mosaic.version = 11 : i64} {
  func.func @_rcu_kernel(%arg0: i32, %arg1: i32, %arg2: memref<1x8x16x128xf32, #tpu.memory_space<vmem>>, %arg3: memref<1x1x16x128xf32, #tpu.memory_space<vmem>>, %arg4: memref<1x1x16x128xf32, #tpu.memory_space<vmem>>, %arg5: memref<1x1x16x128xf32, #tpu.memory_space<vmem>>, %arg6: memref<1x1x16x128xf32, #tpu.memory_space<vmem>>, %arg7: memref<9x128x128xf32, #tpu.memory_space<vmem>>, %arg8: memref<1x128xf32, #tpu.memory_space<vmem>>, %arg9: memref<9x128x128xf32, #tpu.memory_space<vmem>>, %arg10: memref<1x128xf32, #tpu.memory_space<vmem>>, %arg11: memref<1x8x16x128xf32, #tpu.memory_space<vmem>>, %arg12: memref<336x128xf32, #tpu.memory_space<vmem>>, %arg13: memref<288x128xf32, #tpu.memory_space<vmem>>) attributes {dimension_semantics = [#tpu.dimension_semantics<parallel>, #tpu.dimension_semantics<parallel>], iteration_bounds = array<i64: 2, 2>, scalar_prefetch = 0 : i64, scratch_operands = 2 : i64, tpu.core_type = #tpu.core_type<tc>, window_params = [{transform_indices = @transform_0, window_bounds = array<i64: 1, 8, 16, 128>}, {transform_indices = @transform_1, window_bounds = array<i64: 1, 1, 16, 128>}, {transform_indices = @transform_2, window_bounds = array<i64: 1, 1, 16, 128>}, {transform_indices = @transform_3, window_bounds = array<i64: 1, 1, 16, 128>}, {transform_indices = @transform_4, window_bounds = array<i64: 1, 1, 16, 128>}, {pipeline_mode = #tpu.pipeline_mode<synchronous>, transform_indices = @transform_5, window_bounds = array<i64: 9, 128, 128>}, {pipeline_mode = #tpu.pipeline_mode<synchronous>, transform_indices = @transform_6, window_bounds = array<i64: 1, 128>}, {pipeline_mode = #tpu.pipeline_mode<synchronous>, transform_indices = @transform_7, window_bounds = array<i64: 9, 128, 128>}, {pipeline_mode = #tpu.pipeline_mode<synchronous>, transform_indices = @transform_8, window_bounds = array<i64: 1, 128>}, {transform_indices = @transform_9, window_bounds = array<i64: 1, 8, 16, 128>}]} {
    %c8_i32 = arith.constant 8 : i32
    %0 = arith.muli %arg1, %c8_i32 : i32
    %cst = arith.constant 0.000000e+00 : f32
    %1 = vector.broadcast %cst : f32 to vector<8x128xf32>
    %cst_0 = arith.constant 0.000000e+00 : f32
    %2 = vector.broadcast %cst_0 : f32 to vector<16x128xf32>
    %cst_1 = arith.constant 0.000000e+00 : f32
    %3 = vector.broadcast %cst_1 : f32 to vector<24x128xf32>
    %c0 = arith.constant 0 : index
    %c0_2 = arith.constant 0 : index
    %4 = vector.load %arg12[%c0, %c0_2] : memref<336x128xf32, #tpu.memory_space<vmem>>, vector<24x128xf32>
    tpu.vector_store %arg12[%c0, %c0_2], %3 {strides = array<i32>} : memref<336x128xf32, #tpu.memory_space<vmem>>, vector<24x128xf32>,
    %c312 = arith.constant 312 : index
    %c0_3 = arith.constant 0 : index
    %5 = vector.load %arg12[%c312, %c0_3] : memref<336x128xf32, #tpu.memory_space<vmem>>, vector<24x128xf32>
    tpu.vector_store %arg12[%c312, %c0_3], %3 {strides = array<i32>} : memref<336x128xf32, #tpu.memory_space<vmem>>, vector<24x128xf32>,
    %c40 = arith.constant 40 : index
    %c0_4 = arith.constant 0 : index
    %6 = vector.load %arg12[%c40, %c0_4] : memref<336x128xf32, #tpu.memory_space<vmem>>, vector<8x128xf32>
    tpu.vector_store %arg12[%c40, %c0_4], %1 {strides = array<i32>} : memref<336x128xf32, #tpu.memory_space<vmem>>, vector<8x128xf32>,
    %c64 = arith.constant 64 : index
    %c0_5 = arith.constant 0 : index
    %7 = vector.load %arg12[%c64, %c0_5] : memref<336x128xf32, #tpu.memory_space<vmem>>, vector<8x128xf32>
    tpu.vector_store %arg12[%c64, %c0_5], %1 {strides = array<i32>} : memref<336x128xf32, #tpu.memory_space<vmem>>, vector<8x128xf32>,
    %c88 = arith.constant 88 : index
    %c0_6 = arith.constant 0 : index
    %8 = vector.load %arg12[%c88, %c0_6] : memref<336x128xf32, #tpu.memory_space<vmem>>, vector<8x128xf32>
    tpu.vector_store %arg12[%c88, %c0_6], %1 {strides = array<i32>} : memref<336x128xf32, #tpu.memory_space<vmem>>, vector<8x128xf32>,
    %c112 = arith.constant 112 : index
    %c0_7 = arith.constant 0 : index
    %9 = vector.load %arg12[%c112, %c0_7] : memref<336x128xf32, #tpu.memory_space<vmem>>, vector<8x128xf32>
    tpu.vector_store %arg12[%c112, %c0_7], %1 {strides = array<i32>} : memref<336x128xf32, #tpu.memory_space<vmem>>, vector<8x128xf32>,
    %c136 = arith.constant 136 : index
    %c0_8 = arith.constant 0 : index
    %10 = vector.load %arg12[%c136, %c0_8] : memref<336x128xf32, #tpu.memory_space<vmem>>, vector<8x128xf32>
    tpu.vector_store %arg12[%c136, %c0_8], %1 {strides = array<i32>} : memref<336x128xf32, #tpu.memory_space<vmem>>, vector<8x128xf32>,
    %c160 = arith.constant 160 : index
    %c0_9 = arith.constant 0 : index
    %11 = vector.load %arg12[%c160, %c0_9] : memref<336x128xf32, #tpu.memory_space<vmem>>, vector<8x128xf32>
    tpu.vector_store %arg12[%c160, %c0_9], %1 {strides = array<i32>} : memref<336x128xf32, #tpu.memory_space<vmem>>, vector<8x128xf32>,
    %c184 = arith.constant 184 : index
    %c0_10 = arith.constant 0 : index
    %12 = vector.load %arg12[%c184, %c0_10] : memref<336x128xf32, #tpu.memory_space<vmem>>, vector<8x128xf32>
    tpu.vector_store %arg12[%c184, %c0_10], %1 {strides = array<i32>} : memref<336x128xf32, #tpu.memory_space<vmem>>, vector<8x128xf32>,
    %c208 = arith.constant 208 : index
    %c0_11 = arith.constant 0 : index
    %13 = vector.load %arg12[%c208, %c0_11] : memref<336x128xf32, #tpu.memory_space<vmem>>, vector<8x128xf32>
    tpu.vector_store %arg12[%c208, %c0_11], %1 {strides = array<i32>} : memref<336x128xf32, #tpu.memory_space<vmem>>, vector<8x128xf32>,
    %c232 = arith.constant 232 : index
    %c0_12 = arith.constant 0 : index
    %14 = vector.load %arg12[%c232, %c0_12] : memref<336x128xf32, #tpu.memory_space<vmem>>, vector<8x128xf32>
    tpu.vector_store %arg12[%c232, %c0_12], %1 {strides = array<i32>} : memref<336x128xf32, #tpu.memory_space<vmem>>, vector<8x128xf32>,
    %c256 = arith.constant 256 : index
    %c0_13 = arith.constant 0 : index
    %15 = vector.load %arg12[%c256, %c0_13] : memref<336x128xf32, #tpu.memory_space<vmem>>, vector<8x128xf32>
    tpu.vector_store %arg12[%c256, %c0_13], %1 {strides = array<i32>} : memref<336x128xf32, #tpu.memory_space<vmem>>, vector<8x128xf32>,
    %c280 = arith.constant 280 : index
    %c0_14 = arith.constant 0 : index
    %16 = vector.load %arg12[%c280, %c0_14] : memref<336x128xf32, #tpu.memory_space<vmem>>, vector<8x128xf32>
    tpu.vector_store %arg12[%c280, %c0_14], %1 {strides = array<i32>} : memref<336x128xf32, #tpu.memory_space<vmem>>, vector<8x128xf32>,
    %c304 = arith.constant 304 : index
    %c0_15 = arith.constant 0 : index
    %17 = vector.load %arg12[%c304, %c0_15] : memref<336x128xf32, #tpu.memory_space<vmem>>, vector<8x128xf32>
    tpu.vector_store %arg12[%c304, %c0_15], %1 {strides = array<i32>} : memref<336x128xf32, #tpu.memory_space<vmem>>, vector<8x128xf32>,
    %c0_16 = arith.constant 0 : index
    %c0_17 = arith.constant 0 : index
    %18 = vector.load %arg13[%c0_16, %c0_17] : memref<288x128xf32, #tpu.memory_space<vmem>>, vector<24x128xf32>
    tpu.vector_store %arg13[%c0_16, %c0_17], %3 {strides = array<i32>} : memref<288x128xf32, #tpu.memory_space<vmem>>, vector<24x128xf32>,
    %c264 = arith.constant 264 : index
    %c0_18 = arith.constant 0 : index
    %19 = vector.load %arg13[%c264, %c0_18] : memref<288x128xf32, #tpu.memory_space<vmem>>, vector<24x128xf32>
    tpu.vector_store %arg13[%c264, %c0_18], %3 {strides = array<i32>} : memref<288x128xf32, #tpu.memory_space<vmem>>, vector<24x128xf32>,
    %c40_19 = arith.constant 40 : index
    %c0_20 = arith.constant 0 : index
    %20 = vector.load %arg13[%c40_19, %c0_20] : memref<288x128xf32, #tpu.memory_space<vmem>>, vector<8x128xf32>
    tpu.vector_store %arg13[%c40_19, %c0_20], %1 {strides = array<i32>} : memref<288x128xf32, #tpu.memory_space<vmem>>, vector<8x128xf32>,
    %c64_21 = arith.constant 64 : index
    %c0_22 = arith.constant 0 : index
    %21 = vector.load %arg13[%c64_21, %c0_22] : memref<288x128xf32, #tpu.memory_space<vmem>>, vector<8x128xf32>
    tpu.vector_store %arg13[%c64_21, %c0_22], %1 {strides = array<i32>} : memref<288x128xf32, #tpu.memory_space<vmem>>, vector<8x128xf32>,
    %c88_23 = arith.constant 88 : index
    %c0_24 = arith.constant 0 : index
    %22 = vector.load %arg13[%c88_23, %c0_24] : memref<288x128xf32, #tpu.memory_space<vmem>>, vector<8x128xf32>
    tpu.vector_store %arg13[%c88_23, %c0_24], %1 {strides = array<i32>} : memref<288x128xf32, #tpu.memory_space<vmem>>, vector<8x128xf32>,
    %c112_25 = arith.constant 112 : index
    %c0_26 = arith.constant 0 : index
    %23 = vector.load %arg13[%c112_25, %c0_26] : memref<288x128xf32, #tpu.memory_space<vmem>>, vector<8x128xf32>
    tpu.vector_store %arg13[%c112_25, %c0_26], %1 {strides = array<i32>} : memref<288x128xf32, #tpu.memory_space<vmem>>, vector<8x128xf32>,
    %c136_27 = arith.constant 136 : index
    %c0_28 = arith.constant 0 : index
    %24 = vector.load %arg13[%c136_27, %c0_28] : memref<288x128xf32, #tpu.memory_space<vmem>>, vector<8x128xf32>
    tpu.vector_store %arg13[%c136_27, %c0_28], %1 {strides = array<i32>} : memref<288x128xf32, #tpu.memory_space<vmem>>, vector<8x128xf32>,
    %c160_29 = arith.constant 160 : index
    %c0_30 = arith.constant 0 : index
    %25 = vector.load %arg13[%c160_29, %c0_30] : memref<288x128xf32, #tpu.memory_space<vmem>>, vector<8x128xf32>
    tpu.vector_store %arg13[%c160_29, %c0_30], %1 {strides = array<i32>} : memref<288x128xf32, #tpu.memory_space<vmem>>, vector<8x128xf32>,
    %c184_31 = arith.constant 184 : index
    %c0_32 = arith.constant 0 : index
    %26 = vector.load %arg13[%c184_31, %c0_32] : memref<288x128xf32, #tpu.memory_space<vmem>>, vector<8x128xf32>
    tpu.vector_store %arg13[%c184_31, %c0_32], %1 {strides = array<i32>} : memref<288x128xf32, #tpu.memory_space<vmem>>, vector<8x128xf32>,
    %c208_33 = arith.constant 208 : index
    %c0_34 = arith.constant 0 : index
    %27 = vector.load %arg13[%c208_33, %c0_34] : memref<288x128xf32, #tpu.memory_space<vmem>>, vector<8x128xf32>
    tpu.vector_store %arg13[%c208_33, %c0_34], %1 {strides = array<i32>} : memref<288x128xf32, #tpu.memory_space<vmem>>, vector<8x128xf32>,
    %c232_35 = arith.constant 232 : index
    %c0_36 = arith.constant 0 : index
    %28 = vector.load %arg13[%c232_35, %c0_36] : memref<288x128xf32, #tpu.memory_space<vmem>>, vector<8x128xf32>
    tpu.vector_store %arg13[%c232_35, %c0_36], %1 {strides = array<i32>} : memref<288x128xf32, #tpu.memory_space<vmem>>, vector<8x128xf32>,
    %c256_37 = arith.constant 256 : index
    %c0_38 = arith.constant 0 : index
    %29 = vector.load %arg13[%c256_37, %c0_38] : memref<288x128xf32, #tpu.memory_space<vmem>>, vector<8x128xf32>
    tpu.vector_store %arg13[%c256_37, %c0_38], %1 {strides = array<i32>} : memref<288x128xf32, #tpu.memory_space<vmem>>, vector<8x128xf32>,
    %c0_39 = arith.constant 0 : index
    %c0_40 = arith.constant 0 : index
    %c0_41 = arith.constant 0 : index
    %c0_42 = arith.constant 0 : index
    %30 = vector.load %arg2[%c0_39, %c0_40, %c0_41, %c0_42] : memref<1x8x16x128xf32, #tpu.memory_space<vmem>>, vector<1x1x16x128xf32>
    %31 = vector.shape_cast %30 : vector<1x1x16x128xf32> to vector<16x128xf32>
    %cst_43 = arith.constant 0.000000e+00 : f32
    %32 = vector.broadcast %cst_43 : f32 to vector<16x128xf32>
    %33 = arith.maximumf %31, %32 : vector<16x128xf32>
    %c72 = arith.constant 72 : index
    %c0_44 = arith.constant 0 : index
    %34 = vector.load %arg12[%c72, %c0_44] : memref<336x128xf32, #tpu.memory_space<vmem>>, vector<16x128xf32>
    tpu.vector_store %arg12[%c72, %c0_44], %33 {strides = array<i32>} : memref<336x128xf32, #tpu.memory_space<vmem>>, vector<16x128xf32>,
    %c0_45 = arith.constant 0 : index
    %c1 = arith.constant 1 : index
    %c0_46 = arith.constant 0 : index
    %c0_47 = arith.constant 0 : index
    %35 = vector.load %arg2[%c0_45, %c1, %c0_46, %c0_47] : memref<1x8x16x128xf32, #tpu.memory_space<vmem>>, vector<1x1x16x128xf32>
    %36 = vector.shape_cast %35 : vector<1x1x16x128xf32> to vector<16x128xf32>
    %cst_48 = arith.constant 0.000000e+00 : f32
    %37 = vector.broadcast %cst_48 : f32 to vector<16x128xf32>
    %38 = arith.maximumf %36, %37 : vector<16x128xf32>
    %c96 = arith.constant 96 : index
    %c0_49 = arith.constant 0 : index
    %39 = vector.load %arg12[%c96, %c0_49] : memref<336x128xf32, #tpu.memory_space<vmem>>, vector<16x128xf32>
    tpu.vector_store %arg12[%c96, %c0_49], %38 {strides = array<i32>} : memref<336x128xf32, #tpu.memory_space<vmem>>, vector<16x128xf32>,
    %c0_50 = arith.constant 0 : index
    %c2 = arith.constant 2 : index
    %c0_51 = arith.constant 0 : index
    %c0_52 = arith.constant 0 : index
    %40 = vector.load %arg2[%c0_50, %c2, %c0_51, %c0_52] : memref<1x8x16x128xf32, #tpu.memory_space<vmem>>, vector<1x1x16x128xf32>
    %41 = vector.shape_cast %40 : vector<1x1x16x128xf32> to vector<16x128xf32>
    %cst_53 = arith.constant 0.000000e+00 : f32
    %42 = vector.broadcast %cst_53 : f32 to vector<16x128xf32>
    %43 = arith.maximumf %41, %42 : vector<16x128xf32>
    %c120 = arith.constant 120 : index
    %c0_54 = arith.constant 0 : index
    %44 = vector.load %arg12[%c120, %c0_54] : memref<336x128xf32, #tpu.memory_space<vmem>>, vector<16x128xf32>
    tpu.vector_store %arg12[%c120, %c0_54], %43 {strides = array<i32>} : memref<336x128xf32, #tpu.memory_space<vmem>>, vector<16x128xf32>,
    %c0_55 = arith.constant 0 : index
    %c3 = arith.constant 3 : index
    %c0_56 = arith.constant 0 : index
    %c0_57 = arith.constant 0 : index
    %45 = vector.load %arg2[%c0_55, %c3, %c0_56, %c0_57] : memref<1x8x16x128xf32, #tpu.memory_space<vmem>>, vector<1x1x16x128xf32>
    %46 = vector.shape_cast %45 : vector<1x1x16x128xf32> to vector<16x128xf32>
    %cst_58 = arith.constant 0.000000e+00 : f32
    %47 = vector.broadcast %cst_58 : f32 to vector<16x128xf32>
    %48 = arith.maximumf %46, %47 : vector<16x128xf32>
    %c144 = arith.constant 144 : index
    %c0_59 = arith.constant 0 : index
    %49 = vector.load %arg12[%c144, %c0_59] : memref<336x128xf32, #tpu.memory_space<vmem>>, vector<16x128xf32>
    tpu.vector_store %arg12[%c144, %c0_59], %48 {strides = array<i32>} : memref<336x128xf32, #tpu.memory_space<vmem>>, vector<16x128xf32>,
    %c0_60 = arith.constant 0 : index
    %c4 = arith.constant 4 : index
    %c0_61 = arith.constant 0 : index
    %c0_62 = arith.constant 0 : index
    %50 = vector.load %arg2[%c0_60, %c4, %c0_61, %c0_62] : memref<1x8x16x128xf32, #tpu.memory_space<vmem>>, vector<1x1x16x128xf32>
    %51 = vector.shape_cast %50 : vector<1x1x16x128xf32> to vector<16x128xf32>
    %cst_63 = arith.constant 0.000000e+00 : f32
    %52 = vector.broadcast %cst_63 : f32 to vector<16x128xf32>
    %53 = arith.maximumf %51, %52 : vector<16x128xf32>
    %c168 = arith.constant 168 : index
    %c0_64 = arith.constant 0 : index
    %54 = vector.load %arg12[%c168, %c0_64] : memref<336x128xf32, #tpu.memory_space<vmem>>, vector<16x128xf32>
    tpu.vector_store %arg12[%c168, %c0_64], %53 {strides = array<i32>} : memref<336x128xf32, #tpu.memory_space<vmem>>, vector<16x128xf32>,
    %c0_65 = arith.constant 0 : index
    %c5 = arith.constant 5 : index
    %c0_66 = arith.constant 0 : index
    %c0_67 = arith.constant 0 : index
    %55 = vector.load %arg2[%c0_65, %c5, %c0_66, %c0_67] : memref<1x8x16x128xf32, #tpu.memory_space<vmem>>, vector<1x1x16x128xf32>
    %56 = vector.shape_cast %55 : vector<1x1x16x128xf32> to vector<16x128xf32>
    %cst_68 = arith.constant 0.000000e+00 : f32
    %57 = vector.broadcast %cst_68 : f32 to vector<16x128xf32>
    %58 = arith.maximumf %56, %57 : vector<16x128xf32>
    %c192 = arith.constant 192 : index
    %c0_69 = arith.constant 0 : index
    %59 = vector.load %arg12[%c192, %c0_69] : memref<336x128xf32, #tpu.memory_space<vmem>>, vector<16x128xf32>
    tpu.vector_store %arg12[%c192, %c0_69], %58 {strides = array<i32>} : memref<336x128xf32, #tpu.memory_space<vmem>>, vector<16x128xf32>,
    %c0_70 = arith.constant 0 : index
    %c6 = arith.constant 6 : index
    %c0_71 = arith.constant 0 : index
    %c0_72 = arith.constant 0 : index
    %60 = vector.load %arg2[%c0_70, %c6, %c0_71, %c0_72] : memref<1x8x16x128xf32, #tpu.memory_space<vmem>>, vector<1x1x16x128xf32>
    %61 = vector.shape_cast %60 : vector<1x1x16x128xf32> to vector<16x128xf32>
    %cst_73 = arith.constant 0.000000e+00 : f32
    %62 = vector.broadcast %cst_73 : f32 to vector<16x128xf32>
    %63 = arith.maximumf %61, %62 : vector<16x128xf32>
    %c216 = arith.constant 216 : index
    %c0_74 = arith.constant 0 : index
    %64 = vector.load %arg12[%c216, %c0_74] : memref<336x128xf32, #tpu.memory_space<vmem>>, vector<16x128xf32>
    tpu.vector_store %arg12[%c216, %c0_74], %63 {strides = array<i32>} : memref<336x128xf32, #tpu.memory_space<vmem>>, vector<16x128xf32>,
    %c0_75 = arith.constant 0 : index
    %c7 = arith.constant 7 : index
    %c0_76 = arith.constant 0 : index
    %c0_77 = arith.constant 0 : index
    %65 = vector.load %arg2[%c0_75, %c7, %c0_76, %c0_77] : memref<1x8x16x128xf32, #tpu.memory_space<vmem>>, vector<1x1x16x128xf32>
    %66 = vector.shape_cast %65 : vector<1x1x16x128xf32> to vector<16x128xf32>
    %cst_78 = arith.constant 0.000000e+00 : f32
    %67 = vector.broadcast %cst_78 : f32 to vector<16x128xf32>
    %68 = arith.maximumf %66, %67 : vector<16x128xf32>
    %c240 = arith.constant 240 : index
    %c0_79 = arith.constant 0 : index
    %69 = vector.load %arg12[%c240, %c0_79] : memref<336x128xf32, #tpu.memory_space<vmem>>, vector<16x128xf32>
    tpu.vector_store %arg12[%c240, %c0_79], %68 {strides = array<i32>} : memref<336x128xf32, #tpu.memory_space<vmem>>, vector<16x128xf32>,
    %c2_i32 = arith.constant 2 : i32
    %70 = arith.subi %0, %c2_i32 : i32
    %c0_i32 = arith.constant 0 : i32
    %71 = arith.cmpi sge, %70, %c0_i32 : i32
    %c0_80 = arith.constant 0 : index
    %c0_81 = arith.constant 0 : index
    %c0_82 = arith.constant 0 : index
    %c0_83 = arith.constant 0 : index
    %72 = vector.load %arg3[%c0_80, %c0_81, %c0_82, %c0_83] : memref<1x1x16x128xf32, #tpu.memory_space<vmem>>, vector<1x1x16x128xf32>
    %73 = vector.shape_cast %72 : vector<1x1x16x128xf32> to vector<16x128xf32>
    %cst_84 = arith.constant 0.000000e+00 : f32
    %74 = vector.broadcast %cst_84 : f32 to vector<16x128xf32>
    %75 = arith.maximumf %73, %74 : vector<16x128xf32>
    %c0_i32_85 = arith.constant 0 : i32
    %76 = arith.sitofp %c0_i32_85 : i32 to f32
    %77 = vector.broadcast %76 : f32 to vector<16x128xf32>
    %78 = arith.select %71, %75, %77 : vector<16x128xf32>
    %c24 = arith.constant 24 : index
    %c0_86 = arith.constant 0 : index
    %79 = vector.load %arg12[%c24, %c0_86] : memref<336x128xf32, #tpu.memory_space<vmem>>, vector<16x128xf32>
    tpu.vector_store %arg12[%c24, %c0_86], %78 {strides = array<i32>} : memref<336x128xf32, #tpu.memory_space<vmem>>, vector<16x128xf32>,
    %c1_i32 = arith.constant 1 : i32
    %80 = arith.subi %0, %c1_i32 : i32
    %c0_i32_87 = arith.constant 0 : i32
    %81 = arith.cmpi sge, %80, %c0_i32_87 : i32
    %c0_88 = arith.constant 0 : index
    %c0_89 = arith.constant 0 : index
    %c0_90 = arith.constant 0 : index
    %c0_91 = arith.constant 0 : index
    %82 = vector.load %arg4[%c0_88, %c0_89, %c0_90, %c0_91] : memref<1x1x16x128xf32, #tpu.memory_space<vmem>>, vector<1x1x16x128xf32>
    %83 = vector.shape_cast %82 : vector<1x1x16x128xf32> to vector<16x128xf32>
    %cst_92 = arith.constant 0.000000e+00 : f32
    %84 = vector.broadcast %cst_92 : f32 to vector<16x128xf32>
    %85 = arith.maximumf %83, %84 : vector<16x128xf32>
    %c0_i32_93 = arith.constant 0 : i32
    %86 = arith.sitofp %c0_i32_93 : i32 to f32
    %87 = vector.broadcast %86 : f32 to vector<16x128xf32>
    %88 = arith.select %81, %85, %87 : vector<16x128xf32>
    %c48 = arith.constant 48 : index
    %c0_94 = arith.constant 0 : index
    %89 = vector.load %arg12[%c48, %c0_94] : memref<336x128xf32, #tpu.memory_space<vmem>>, vector<16x128xf32>
    tpu.vector_store %arg12[%c48, %c0_94], %88 {strides = array<i32>} : memref<336x128xf32, #tpu.memory_space<vmem>>, vector<16x128xf32>,
    %c8_i32_95 = arith.constant 8 : i32
    %90 = arith.addi %0, %c8_i32_95 : i32
    %c15_i32 = arith.constant 15 : i32
    %91 = arith.cmpi sle, %90, %c15_i32 : i32
    %c0_96 = arith.constant 0 : index
    %c0_97 = arith.constant 0 : index
    %c0_98 = arith.constant 0 : index
    %c0_99 = arith.constant 0 : index
    %92 = vector.load %arg5[%c0_96, %c0_97, %c0_98, %c0_99] : memref<1x1x16x128xf32, #tpu.memory_space<vmem>>, vector<1x1x16x128xf32>
    %93 = vector.shape_cast %92 : vector<1x1x16x128xf32> to vector<16x128xf32>
    %cst_100 = arith.constant 0.000000e+00 : f32
    %94 = vector.broadcast %cst_100 : f32 to vector<16x128xf32>
    %95 = arith.maximumf %93, %94 : vector<16x128xf32>
    %c0_i32_101 = arith.constant 0 : i32
    %96 = arith.sitofp %c0_i32_101 : i32 to f32
    %97 = vector.broadcast %96 : f32 to vector<16x128xf32>
    %98 = arith.select %91, %95, %97 : vector<16x128xf32>
    %c264_102 = arith.constant 264 : index
    %c0_103 = arith.constant 0 : index
    %99 = vector.load %arg12[%c264_102, %c0_103] : memref<336x128xf32, #tpu.memory_space<vmem>>, vector<16x128xf32>
    tpu.vector_store %arg12[%c264_102, %c0_103], %98 {strides = array<i32>} : memref<336x128xf32, #tpu.memory_space<vmem>>, vector<16x128xf32>,
    %c8_i32_104 = arith.constant 8 : i32
    %100 = arith.addi %0, %c8_i32_104 : i32
    %c1_i32_105 = arith.constant 1 : i32
    %101 = arith.addi %100, %c1_i32_105 : i32
    %c15_i32_106 = arith.constant 15 : i32
    %102 = arith.cmpi sle, %101, %c15_i32_106 : i32
    %c0_107 = arith.constant 0 : index
    %c0_108 = arith.constant 0 : index
    %c0_109 = arith.constant 0 : index
    %c0_110 = arith.constant 0 : index
    %103 = vector.load %arg6[%c0_107, %c0_108, %c0_109, %c0_110] : memref<1x1x16x128xf32, #tpu.memory_space<vmem>>, vector<1x1x16x128xf32>
    %104 = vector.shape_cast %103 : vector<1x1x16x128xf32> to vector<16x128xf32>
    %cst_111 = arith.constant 0.000000e+00 : f32
    %105 = vector.broadcast %cst_111 : f32 to vector<16x128xf32>
    %106 = arith.maximumf %104, %105 : vector<16x128xf32>
    %c0_i32_112 = arith.constant 0 : i32
    %107 = arith.sitofp %c0_i32_112 : i32 to f32
    %108 = vector.broadcast %107 : f32 to vector<16x128xf32>
    %109 = arith.select %102, %106, %108 : vector<16x128xf32>
    %c288 = arith.constant 288 : index
    %c0_113 = arith.constant 0 : index
    %110 = vector.load %arg12[%c288, %c0_113] : memref<336x128xf32, #tpu.memory_space<vmem>>, vector<16x128xf32>
    tpu.vector_store %arg12[%c288, %c0_113], %109 {strides = array<i32>} : memref<336x128xf32, #tpu.memory_space<vmem>>, vector<16x128xf32>,
    %c0_114 = arith.constant 0 : index
    %c0_115 = arith.constant 0 : index
    %111 = vector.load %arg8[%c0_114, %c0_115] : memref<1x128xf32, #tpu.memory_space<vmem>>, vector<1x128xf32>
    %c0_116 = arith.constant 0 : index
    %c0_117 = arith.constant 0 : index
    %112 = vector.load %arg10[%c0_116, %c0_117] : memref<1x128xf32, #tpu.memory_space<vmem>>, vector<1x128xf32>
    %c23 = arith.constant 23 : index
    %c0_118 = arith.constant 0 : index
    %113 = vector.load %arg12[%c23, %c0_118] : memref<336x128xf32, #tpu.memory_space<vmem>>, vector<120x128xf32>
    %c0_119 = arith.constant 0 : index
    %c0_120 = arith.constant 0 : index
    %c0_121 = arith.constant 0 : index
    %114 = vector.load %arg7[%c0_119, %c0_120, %c0_121] : memref<9x128x128xf32, #tpu.memory_space<vmem>>, vector<1x128x128xf32>
    %115 = vector.shape_cast %114 : vector<1x128x128xf32> to vector<128x128xf32>
    %cst_122 = arith.constant dense<0.000000e+00> : vector<120x128xf32>
    %116 = tpu.matmul %113, %115, %cst_122 {dimension_numbers = #tpu.dot_dimension_numbers<[1], [0], [0], [1], [0, 0, 1, 1], [], []>} : vector<120x128xf32>, vector<128x128xf32>, vector<120x128xf32> -> vector<120x128xf32>
    %c24_123 = arith.constant 24 : index
    %c0_124 = arith.constant 0 : index
    %117 = vector.load %arg12[%c24_123, %c0_124] : memref<336x128xf32, #tpu.memory_space<vmem>>, vector<120x128xf32>
    %c1_125 = arith.constant 1 : index
    %c0_126 = arith.constant 0 : index
    %c0_127 = arith.constant 0 : index
    %118 = vector.load %arg7[%c1_125, %c0_126, %c0_127] : memref<9x128x128xf32, #tpu.memory_space<vmem>>, vector<1x128x128xf32>
    %119 = vector.shape_cast %118 : vector<1x128x128xf32> to vector<128x128xf32>
    %cst_128 = arith.constant dense<0.000000e+00> : vector<120x128xf32>
    %120 = tpu.matmul %117, %119, %cst_128 {dimension_numbers = #tpu.dot_dimension_numbers<[1], [0], [0], [1], [0, 0, 1, 1], [], []>} : vector<120x128xf32>, vector<128x128xf32>, vector<120x128xf32> -> vector<120x128xf32>
    %121 = arith.addf %116, %120 : vector<120x128xf32>
    %c25 = arith.constant 25 : index
    %c0_129 = arith.constant 0 : index
    %122 = vector.load %arg12[%c25, %c0_129] : memref<336x128xf32, #tpu.memory_space<vmem>>, vector<120x128xf32>
    %c2_130 = arith.constant 2 : index
    %c0_131 = arith.constant 0 : index
    %c0_132 = arith.constant 0 : index
    %123 = vector.load %arg7[%c2_130, %c0_131, %c0_132] : memref<9x128x128xf32, #tpu.memory_space<vmem>>, vector<1x128x128xf32>
    %124 = vector.shape_cast %123 : vector<1x128x128xf32> to vector<128x128xf32>
    %cst_133 = arith.constant dense<0.000000e+00> : vector<120x128xf32>
    %125 = tpu.matmul %122, %124, %cst_133 {dimension_numbers = #tpu.dot_dimension_numbers<[1], [0], [0], [1], [0, 0, 1, 1], [], []>} : vector<120x128xf32>, vector<128x128xf32>, vector<120x128xf32> -> vector<120x128xf32>
    %126 = arith.addf %121, %125 : vector<120x128xf32>
    %c47 = arith.constant 47 : index
    %c0_134 = arith.constant 0 : index
    %127 = vector.load %arg12[%c47, %c0_134] : memref<336x128xf32, #tpu.memory_space<vmem>>, vector<120x128xf32>
    %c3_135 = arith.constant 3 : index
    %c0_136 = arith.constant 0 : index
    %c0_137 = arith.constant 0 : index
    %128 = vector.load %arg7[%c3_135, %c0_136, %c0_137] : memref<9x128x128xf32, #tpu.memory_space<vmem>>, vector<1x128x128xf32>
    %129 = vector.shape_cast %128 : vector<1x128x128xf32> to vector<128x128xf32>
    %cst_138 = arith.constant dense<0.000000e+00> : vector<120x128xf32>
    %130 = tpu.matmul %127, %129, %cst_138 {dimension_numbers = #tpu.dot_dimension_numbers<[1], [0], [0], [1], [0, 0, 1, 1], [], []>} : vector<120x128xf32>, vector<128x128xf32>, vector<120x128xf32> -> vector<120x128xf32>
    %131 = arith.addf %126, %130 : vector<120x128xf32>
    %c48_139 = arith.constant 48 : index
    %c0_140 = arith.constant 0 : index
    %132 = vector.load %arg12[%c48_139, %c0_140] : memref<336x128xf32, #tpu.memory_space<vmem>>, vector<120x128xf32>
    %c4_141 = arith.constant 4 : index
    %c0_142 = arith.constant 0 : index
    %c0_143 = arith.constant 0 : index
    %133 = vector.load %arg7[%c4_141, %c0_142, %c0_143] : memref<9x128x128xf32, #tpu.memory_space<vmem>>, vector<1x128x128xf32>
    %134 = vector.shape_cast %133 : vector<1x128x128xf32> to vector<128x128xf32>
    %cst_144 = arith.constant dense<0.000000e+00> : vector<120x128xf32>
    %135 = tpu.matmul %132, %134, %cst_144 {dimension_numbers = #tpu.dot_dimension_numbers<[1], [0], [0], [1], [0, 0, 1, 1], [], []>} : vector<120x128xf32>, vector<128x128xf32>, vector<120x128xf32> -> vector<120x128xf32>
    %136 = arith.addf %131, %135 : vector<120x128xf32>
    %c49 = arith.constant 49 : index
    %c0_145 = arith.constant 0 : index
    %137 = vector.load %arg12[%c49, %c0_145] : memref<336x128xf32, #tpu.memory_space<vmem>>, vector<120x128xf32>
    %c5_146 = arith.constant 5 : index
    %c0_147 = arith.constant 0 : index
    %c0_148 = arith.constant 0 : index
    %138 = vector.load %arg7[%c5_146, %c0_147, %c0_148] : memref<9x128x128xf32, #tpu.memory_space<vmem>>, vector<1x128x128xf32>
    %139 = vector.shape_cast %138 : vector<1x128x128xf32> to vector<128x128xf32>
    %cst_149 = arith.constant dense<0.000000e+00> : vector<120x128xf32>
    %140 = tpu.matmul %137, %139, %cst_149 {dimension_numbers = #tpu.dot_dimension_numbers<[1], [0], [0], [1], [0, 0, 1, 1], [], []>} : vector<120x128xf32>, vector<128x128xf32>, vector<120x128xf32> -> vector<120x128xf32>
    %141 = arith.addf %136, %140 : vector<120x128xf32>
    %c71 = arith.constant 71 : index
    %c0_150 = arith.constant 0 : index
    %142 = vector.load %arg12[%c71, %c0_150] : memref<336x128xf32, #tpu.memory_space<vmem>>, vector<120x128xf32>
    %c6_151 = arith.constant 6 : index
    %c0_152 = arith.constant 0 : index
    %c0_153 = arith.constant 0 : index
    %143 = vector.load %arg7[%c6_151, %c0_152, %c0_153] : memref<9x128x128xf32, #tpu.memory_space<vmem>>, vector<1x128x128xf32>
    %144 = vector.shape_cast %143 : vector<1x128x128xf32> to vector<128x128xf32>
    %cst_154 = arith.constant dense<0.000000e+00> : vector<120x128xf32>
    %145 = tpu.matmul %142, %144, %cst_154 {dimension_numbers = #tpu.dot_dimension_numbers<[1], [0], [0], [1], [0, 0, 1, 1], [], []>} : vector<120x128xf32>, vector<128x128xf32>, vector<120x128xf32> -> vector<120x128xf32>
    %146 = arith.addf %141, %145 : vector<120x128xf32>
    %c72_155 = arith.constant 72 : index
    %c0_156 = arith.constant 0 : index
    %147 = vector.load %arg12[%c72_155, %c0_156] : memref<336x128xf32, #tpu.memory_space<vmem>>, vector<120x128xf32>
    %c7_157 = arith.constant 7 : index
    %c0_158 = arith.constant 0 : index
    %c0_159 = arith.constant 0 : index
    %148 = vector.load %arg7[%c7_157, %c0_158, %c0_159] : memref<9x128x128xf32, #tpu.memory_space<vmem>>, vector<1x128x128xf32>
    %149 = vector.shape_cast %148 : vector<1x128x128xf32> to vector<128x128xf32>
    %cst_160 = arith.constant dense<0.000000e+00> : vector<120x128xf32>
    %150 = tpu.matmul %147, %149, %cst_160 {dimension_numbers = #tpu.dot_dimension_numbers<[1], [0], [0], [1], [0, 0, 1, 1], [], []>} : vector<120x128xf32>, vector<128x128xf32>, vector<120x128xf32> -> vector<120x128xf32>
    %151 = arith.addf %146, %150 : vector<120x128xf32>
    %c73 = arith.constant 73 : index
    %c0_161 = arith.constant 0 : index
    %152 = vector.load %arg12[%c73, %c0_161] : memref<336x128xf32, #tpu.memory_space<vmem>>, vector<120x128xf32>
    %c8 = arith.constant 8 : index
    %c0_162 = arith.constant 0 : index
    %c0_163 = arith.constant 0 : index
    %153 = vector.load %arg7[%c8, %c0_162, %c0_163] : memref<9x128x128xf32, #tpu.memory_space<vmem>>, vector<1x128x128xf32>
    %154 = vector.shape_cast %153 : vector<1x128x128xf32> to vector<128x128xf32>
    %cst_164 = arith.constant dense<0.000000e+00> : vector<120x128xf32>
    %155 = tpu.matmul %152, %154, %cst_164 {dimension_numbers = #tpu.dot_dimension_numbers<[1], [0], [0], [1], [0, 0, 1, 1], [], []>} : vector<120x128xf32>, vector<128x128xf32>, vector<120x128xf32> -> vector<120x128xf32>
    %156 = arith.addf %151, %155 : vector<120x128xf32>
    %157 = vector.extract_strided_slice %156 {offsets = [0, 0], sizes = [16, 128], strides = [1, 1]} : vector<120x128xf32> to vector<16x128xf32>
    %158 = vector.broadcast %111 : vector<1x128xf32> to vector<16x128xf32>
    %159 = arith.addf %157, %158 : vector<16x128xf32>
    %cst_165 = arith.constant 0.000000e+00 : f32
    %160 = vector.broadcast %cst_165 : f32 to vector<16x128xf32>
    %161 = arith.maximumf %159, %160 : vector<16x128xf32>
    %c24_166 = arith.constant 24 : index
    %c0_167 = arith.constant 0 : index
    %162 = vector.load %arg13[%c24_166, %c0_167] : memref<288x128xf32, #tpu.memory_space<vmem>>, vector<16x128xf32>
    tpu.vector_store %arg13[%c24_166, %c0_167], %161 {strides = array<i32>} : memref<288x128xf32, #tpu.memory_space<vmem>>, vector<16x128xf32>,
    %163 = vector.extract_strided_slice %156 {offsets = [24, 0], sizes = [16, 128], strides = [1, 1]} : vector<120x128xf32> to vector<16x128xf32>
    %164 = vector.broadcast %111 : vector<1x128xf32> to vector<16x128xf32>
    %165 = arith.addf %163, %164 : vector<16x128xf32>
    %cst_168 = arith.constant 0.000000e+00 : f32
    %166 = vector.broadcast %cst_168 : f32 to vector<16x128xf32>
    %167 = arith.maximumf %165, %166 : vector<16x128xf32>
    %c48_169 = arith.constant 48 : index
    %c0_170 = arith.constant 0 : index
    %168 = vector.load %arg13[%c48_169, %c0_170] : memref<288x128xf32, #tpu.memory_space<vmem>>, vector<16x128xf32>
    tpu.vector_store %arg13[%c48_169, %c0_170], %167 {strides = array<i32>} : memref<288x128xf32, #tpu.memory_space<vmem>>, vector<16x128xf32>,
    %169 = vector.extract_strided_slice %156 {offsets = [48, 0], sizes = [16, 128], strides = [1, 1]} : vector<120x128xf32> to vector<16x128xf32>
    %170 = vector.broadcast %111 : vector<1x128xf32> to vector<16x128xf32>
    %171 = arith.addf %169, %170 : vector<16x128xf32>
    %cst_171 = arith.constant 0.000000e+00 : f32
    %172 = vector.broadcast %cst_171 : f32 to vector<16x128xf32>
    %173 = arith.maximumf %171, %172 : vector<16x128xf32>
    %c72_172 = arith.constant 72 : index
    %c0_173 = arith.constant 0 : index
    %174 = vector.load %arg13[%c72_172, %c0_173] : memref<288x128xf32, #tpu.memory_space<vmem>>, vector<16x128xf32>
    tpu.vector_store %arg13[%c72_172, %c0_173], %173 {strides = array<i32>} : memref<288x128xf32, #tpu.memory_space<vmem>>, vector<16x128xf32>,
    %175 = vector.extract_strided_slice %156 {offsets = [72, 0], sizes = [16, 128], strides = [1, 1]} : vector<120x128xf32> to vector<16x128xf32>
    %176 = vector.broadcast %111 : vector<1x128xf32> to vector<16x128xf32>
    %177 = arith.addf %175, %176 : vector<16x128xf32>
    %cst_174 = arith.constant 0.000000e+00 : f32
    %178 = vector.broadcast %cst_174 : f32 to vector<16x128xf32>
    %179 = arith.maximumf %177, %178 : vector<16x128xf32>
    %c96_175 = arith.constant 96 : index
    %c0_176 = arith.constant 0 : index
    %180 = vector.load %arg13[%c96_175, %c0_176] : memref<288x128xf32, #tpu.memory_space<vmem>>, vector<16x128xf32>
    tpu.vector_store %arg13[%c96_175, %c0_176], %179 {strides = array<i32>} : memref<288x128xf32, #tpu.memory_space<vmem>>, vector<16x128xf32>,
    %181 = vector.extract_strided_slice %156 {offsets = [96, 0], sizes = [16, 128], strides = [1, 1]} : vector<120x128xf32> to vector<16x128xf32>
    %182 = vector.broadcast %111 : vector<1x128xf32> to vector<16x128xf32>
    %183 = arith.addf %181, %182 : vector<16x128xf32>
    %cst_177 = arith.constant 0.000000e+00 : f32
    %184 = vector.broadcast %cst_177 : f32 to vector<16x128xf32>
    %185 = arith.maximumf %183, %184 : vector<16x128xf32>
    %c120_178 = arith.constant 120 : index
    %c0_179 = arith.constant 0 : index
    %186 = vector.load %arg13[%c120_178, %c0_179] : memref<288x128xf32, #tpu.memory_space<vmem>>, vector<16x128xf32>
    tpu.vector_store %arg13[%c120_178, %c0_179], %185 {strides = array<i32>} : memref<288x128xf32, #tpu.memory_space<vmem>>, vector<16x128xf32>,
    %c143 = arith.constant 143 : index
    %c0_180 = arith.constant 0 : index
    %187 = vector.load %arg12[%c143, %c0_180] : memref<336x128xf32, #tpu.memory_space<vmem>>, vector<120x128xf32>
    %c0_181 = arith.constant 0 : index
    %c0_182 = arith.constant 0 : index
    %c0_183 = arith.constant 0 : index
    %188 = vector.load %arg7[%c0_181, %c0_182, %c0_183] : memref<9x128x128xf32, #tpu.memory_space<vmem>>, vector<1x128x128xf32>
    %189 = vector.shape_cast %188 : vector<1x128x128xf32> to vector<128x128xf32>
    %cst_184 = arith.constant dense<0.000000e+00> : vector<120x128xf32>
    %190 = tpu.matmul %187, %189, %cst_184 {dimension_numbers = #tpu.dot_dimension_numbers<[1], [0], [0], [1], [0, 0, 1, 1], [], []>} : vector<120x128xf32>, vector<128x128xf32>, vector<120x128xf32> -> vector<120x128xf32>
    %c144_185 = arith.constant 144 : index
    %c0_186 = arith.constant 0 : index
    %191 = vector.load %arg12[%c144_185, %c0_186] : memref<336x128xf32, #tpu.memory_space<vmem>>, vector<120x128xf32>
    %c1_187 = arith.constant 1 : index
    %c0_188 = arith.constant 0 : index
    %c0_189 = arith.constant 0 : index
    %192 = vector.load %arg7[%c1_187, %c0_188, %c0_189] : memref<9x128x128xf32, #tpu.memory_space<vmem>>, vector<1x128x128xf32>
    %193 = vector.shape_cast %192 : vector<1x128x128xf32> to vector<128x128xf32>
    %cst_190 = arith.constant dense<0.000000e+00> : vector<120x128xf32>
    %194 = tpu.matmul %191, %193, %cst_190 {dimension_numbers = #tpu.dot_dimension_numbers<[1], [0], [0], [1], [0, 0, 1, 1], [], []>} : vector<120x128xf32>, vector<128x128xf32>, vector<120x128xf32> -> vector<120x128xf32>
    %195 = arith.addf %190, %194 : vector<120x128xf32>
    %c145 = arith.constant 145 : index
    %c0_191 = arith.constant 0 : index
    %196 = vector.load %arg12[%c145, %c0_191] : memref<336x128xf32, #tpu.memory_space<vmem>>, vector<120x128xf32>
    %c2_192 = arith.constant 2 : index
    %c0_193 = arith.constant 0 : index
    %c0_194 = arith.constant 0 : index
    %197 = vector.load %arg7[%c2_192, %c0_193, %c0_194] : memref<9x128x128xf32, #tpu.memory_space<vmem>>, vector<1x128x128xf32>
    %198 = vector.shape_cast %197 : vector<1x128x128xf32> to vector<128x128xf32>
    %cst_195 = arith.constant dense<0.000000e+00> : vector<120x128xf32>
    %199 = tpu.matmul %196, %198, %cst_195 {dimension_numbers = #tpu.dot_dimension_numbers<[1], [0], [0], [1], [0, 0, 1, 1], [], []>} : vector<120x128xf32>, vector<128x128xf32>, vector<120x128xf32> -> vector<120x128xf32>
    %200 = arith.addf %195, %199 : vector<120x128xf32>
    %c167 = arith.constant 167 : index
    %c0_196 = arith.constant 0 : index
    %201 = vector.load %arg12[%c167, %c0_196] : memref<336x128xf32, #tpu.memory_space<vmem>>, vector<120x128xf32>
    %c3_197 = arith.constant 3 : index
    %c0_198 = arith.constant 0 : index
    %c0_199 = arith.constant 0 : index
    %202 = vector.load %arg7[%c3_197, %c0_198, %c0_199] : memref<9x128x128xf32, #tpu.memory_space<vmem>>, vector<1x128x128xf32>
    %203 = vector.shape_cast %202 : vector<1x128x128xf32> to vector<128x128xf32>
    %cst_200 = arith.constant dense<0.000000e+00> : vector<120x128xf32>
    %204 = tpu.matmul %201, %203, %cst_200 {dimension_numbers = #tpu.dot_dimension_numbers<[1], [0], [0], [1], [0, 0, 1, 1], [], []>} : vector<120x128xf32>, vector<128x128xf32>, vector<120x128xf32> -> vector<120x128xf32>
    %205 = arith.addf %200, %204 : vector<120x128xf32>
    %c168_201 = arith.constant 168 : index
    %c0_202 = arith.constant 0 : index
    %206 = vector.load %arg12[%c168_201, %c0_202] : memref<336x128xf32, #tpu.memory_space<vmem>>, vector<120x128xf32>
    %c4_203 = arith.constant 4 : index
    %c0_204 = arith.constant 0 : index
    %c0_205 = arith.constant 0 : index
    %207 = vector.load %arg7[%c4_203, %c0_204, %c0_205] : memref<9x128x128xf32, #tpu.memory_space<vmem>>, vector<1x128x128xf32>
    %208 = vector.shape_cast %207 : vector<1x128x128xf32> to vector<128x128xf32>
    %cst_206 = arith.constant dense<0.000000e+00> : vector<120x128xf32>
    %209 = tpu.matmul %206, %208, %cst_206 {dimension_numbers = #tpu.dot_dimension_numbers<[1], [0], [0], [1], [0, 0, 1, 1], [], []>} : vector<120x128xf32>, vector<128x128xf32>, vector<120x128xf32> -> vector<120x128xf32>
    %210 = arith.addf %205, %209 : vector<120x128xf32>
    %c169 = arith.constant 169 : index
    %c0_207 = arith.constant 0 : index
    %211 = vector.load %arg12[%c169, %c0_207] : memref<336x128xf32, #tpu.memory_space<vmem>>, vector<120x128xf32>
    %c5_208 = arith.constant 5 : index
    %c0_209 = arith.constant 0 : index
    %c0_210 = arith.constant 0 : index
    %212 = vector.load %arg7[%c5_208, %c0_209, %c0_210] : memref<9x128x128xf32, #tpu.memory_space<vmem>>, vector<1x128x128xf32>
    %213 = vector.shape_cast %212 : vector<1x128x128xf32> to vector<128x128xf32>
    %cst_211 = arith.constant dense<0.000000e+00> : vector<120x128xf32>
    %214 = tpu.matmul %211, %213, %cst_211 {dimension_numbers = #tpu.dot_dimension_numbers<[1], [0], [0], [1], [0, 0, 1, 1], [], []>} : vector<120x128xf32>, vector<128x128xf32>, vector<120x128xf32> -> vector<120x128xf32>
    %215 = arith.addf %210, %214 : vector<120x128xf32>
    %c191 = arith.constant 191 : index
    %c0_212 = arith.constant 0 : index
    %216 = vector.load %arg12[%c191, %c0_212] : memref<336x128xf32, #tpu.memory_space<vmem>>, vector<120x128xf32>
    %c6_213 = arith.constant 6 : index
    %c0_214 = arith.constant 0 : index
    %c0_215 = arith.constant 0 : index
    %217 = vector.load %arg7[%c6_213, %c0_214, %c0_215] : memref<9x128x128xf32, #tpu.memory_space<vmem>>, vector<1x128x128xf32>
    %218 = vector.shape_cast %217 : vector<1x128x128xf32> to vector<128x128xf32>
    %cst_216 = arith.constant dense<0.000000e+00> : vector<120x128xf32>
    %219 = tpu.matmul %216, %218, %cst_216 {dimension_numbers = #tpu.dot_dimension_numbers<[1], [0], [0], [1], [0, 0, 1, 1], [], []>} : vector<120x128xf32>, vector<128x128xf32>, vector<120x128xf32> -> vector<120x128xf32>
    %220 = arith.addf %215, %219 : vector<120x128xf32>
    %c192_217 = arith.constant 192 : index
    %c0_218 = arith.constant 0 : index
    %221 = vector.load %arg12[%c192_217, %c0_218] : memref<336x128xf32, #tpu.memory_space<vmem>>, vector<120x128xf32>
    %c7_219 = arith.constant 7 : index
    %c0_220 = arith.constant 0 : index
    %c0_221 = arith.constant 0 : index
    %222 = vector.load %arg7[%c7_219, %c0_220, %c0_221] : memref<9x128x128xf32, #tpu.memory_space<vmem>>, vector<1x128x128xf32>
    %223 = vector.shape_cast %222 : vector<1x128x128xf32> to vector<128x128xf32>
    %cst_222 = arith.constant dense<0.000000e+00> : vector<120x128xf32>
    %224 = tpu.matmul %221, %223, %cst_222 {dimension_numbers = #tpu.dot_dimension_numbers<[1], [0], [0], [1], [0, 0, 1, 1], [], []>} : vector<120x128xf32>, vector<128x128xf32>, vector<120x128xf32> -> vector<120x128xf32>
    %225 = arith.addf %220, %224 : vector<120x128xf32>
    %c193 = arith.constant 193 : index
    %c0_223 = arith.constant 0 : index
    %226 = vector.load %arg12[%c193, %c0_223] : memref<336x128xf32, #tpu.memory_space<vmem>>, vector<120x128xf32>
    %c8_224 = arith.constant 8 : index
    %c0_225 = arith.constant 0 : index
    %c0_226 = arith.constant 0 : index
    %227 = vector.load %arg7[%c8_224, %c0_225, %c0_226] : memref<9x128x128xf32, #tpu.memory_space<vmem>>, vector<1x128x128xf32>
    %228 = vector.shape_cast %227 : vector<1x128x128xf32> to vector<128x128xf32>
    %cst_227 = arith.constant dense<0.000000e+00> : vector<120x128xf32>
    %229 = tpu.matmul %226, %228, %cst_227 {dimension_numbers = #tpu.dot_dimension_numbers<[1], [0], [0], [1], [0, 0, 1, 1], [], []>} : vector<120x128xf32>, vector<128x128xf32>, vector<120x128xf32> -> vector<120x128xf32>
    %230 = arith.addf %225, %229 : vector<120x128xf32>
    %231 = vector.extract_strided_slice %230 {offsets = [0, 0], sizes = [16, 128], strides = [1, 1]} : vector<120x128xf32> to vector<16x128xf32>
    %232 = vector.broadcast %111 : vector<1x128xf32> to vector<16x128xf32>
    %233 = arith.addf %231, %232 : vector<16x128xf32>
    %cst_228 = arith.constant 0.000000e+00 : f32
    %234 = vector.broadcast %cst_228 : f32 to vector<16x128xf32>
    %235 = arith.maximumf %233, %234 : vector<16x128xf32>
    %c144_229 = arith.constant 144 : index
    %c0_230 = arith.constant 0 : index
    %236 = vector.load %arg13[%c144_229, %c0_230] : memref<288x128xf32, #tpu.memory_space<vmem>>, vector<16x128xf32>
    tpu.vector_store %arg13[%c144_229, %c0_230], %235 {strides = array<i32>} : memref<288x128xf32, #tpu.memory_space<vmem>>, vector<16x128xf32>,
    %237 = vector.extract_strided_slice %230 {offsets = [24, 0], sizes = [16, 128], strides = [1, 1]} : vector<120x128xf32> to vector<16x128xf32>
    %238 = vector.broadcast %111 : vector<1x128xf32> to vector<16x128xf32>
    %239 = arith.addf %237, %238 : vector<16x128xf32>
    %cst_231 = arith.constant 0.000000e+00 : f32
    %240 = vector.broadcast %cst_231 : f32 to vector<16x128xf32>
    %241 = arith.maximumf %239, %240 : vector<16x128xf32>
    %c168_232 = arith.constant 168 : index
    %c0_233 = arith.constant 0 : index
    %242 = vector.load %arg13[%c168_232, %c0_233] : memref<288x128xf32, #tpu.memory_space<vmem>>, vector<16x128xf32>
    tpu.vector_store %arg13[%c168_232, %c0_233], %241 {strides = array<i32>} : memref<288x128xf32, #tpu.memory_space<vmem>>, vector<16x128xf32>,
    %243 = vector.extract_strided_slice %230 {offsets = [48, 0], sizes = [16, 128], strides = [1, 1]} : vector<120x128xf32> to vector<16x128xf32>
    %244 = vector.broadcast %111 : vector<1x128xf32> to vector<16x128xf32>
    %245 = arith.addf %243, %244 : vector<16x128xf32>
    %cst_234 = arith.constant 0.000000e+00 : f32
    %246 = vector.broadcast %cst_234 : f32 to vector<16x128xf32>
    %247 = arith.maximumf %245, %246 : vector<16x128xf32>
    %c192_235 = arith.constant 192 : index
    %c0_236 = arith.constant 0 : index
    %248 = vector.load %arg13[%c192_235, %c0_236] : memref<288x128xf32, #tpu.memory_space<vmem>>, vector<16x128xf32>
    tpu.vector_store %arg13[%c192_235, %c0_236], %247 {strides = array<i32>} : memref<288x128xf32, #tpu.memory_space<vmem>>, vector<16x128xf32>,
    %249 = vector.extract_strided_slice %230 {offsets = [72, 0], sizes = [16, 128], strides = [1, 1]} : vector<120x128xf32> to vector<16x128xf32>
    %250 = vector.broadcast %111 : vector<1x128xf32> to vector<16x128xf32>
    %251 = arith.addf %249, %250 : vector<16x128xf32>
    %cst_237 = arith.constant 0.000000e+00 : f32
    %252 = vector.broadcast %cst_237 : f32 to vector<16x128xf32>
    %253 = arith.maximumf %251, %252 : vector<16x128xf32>
    %c216_238 = arith.constant 216 : index
    %c0_239 = arith.constant 0 : index
    %254 = vector.load %arg13[%c216_238, %c0_239] : memref<288x128xf32, #tpu.memory_space<vmem>>, vector<16x128xf32>
    tpu.vector_store %arg13[%c216_238, %c0_239], %253 {strides = array<i32>} : memref<288x128xf32, #tpu.memory_space<vmem>>, vector<16x128xf32>,
    %255 = vector.extract_strided_slice %230 {offsets = [96, 0], sizes = [16, 128], strides = [1, 1]} : vector<120x128xf32> to vector<16x128xf32>
    %256 = vector.broadcast %111 : vector<1x128xf32> to vector<16x128xf32>
    %257 = arith.addf %255, %256 : vector<16x128xf32>
    %cst_240 = arith.constant 0.000000e+00 : f32
    %258 = vector.broadcast %cst_240 : f32 to vector<16x128xf32>
    %259 = arith.maximumf %257, %258 : vector<16x128xf32>
    %c240_241 = arith.constant 240 : index
    %c0_242 = arith.constant 0 : index
    %260 = vector.load %arg13[%c240_241, %c0_242] : memref<288x128xf32, #tpu.memory_space<vmem>>, vector<16x128xf32>
    tpu.vector_store %arg13[%c240_241, %c0_242], %259 {strides = array<i32>} : memref<288x128xf32, #tpu.memory_space<vmem>>, vector<16x128xf32>,
    %c0_i32_243 = arith.constant 0 : i32
    %261 = arith.cmpi eq, %0, %c0_i32_243 : i32
    %262 = arith.extui %261 : i1 to i32
    %c0_i32_244 = arith.constant 0 : i32
    %263 = arith.cmpi ne, %262, %c0_i32_244 : i32
    scf.if %263 {
      %c24_419 = arith.constant 24 : index
      %c0_420 = arith.constant 0 : index
      %427 = vector.load %arg13[%c24_419, %c0_420] : memref<288x128xf32, #tpu.memory_space<vmem>>, vector<16x128xf32>
      tpu.vector_store %arg13[%c24_419, %c0_420], %2 {strides = array<i32>} : memref<288x128xf32, #tpu.memory_space<vmem>>, vector<16x128xf32>,
    } else {
    }
    %c1_i32_245 = arith.constant 1 : i32
    %264 = arith.cmpi eq, %arg1, %c1_i32_245 : i32
    %265 = arith.extui %264 : i1 to i32
    %c0_i32_246 = arith.constant 0 : i32
    %266 = arith.cmpi ne, %265, %c0_i32_246 : i32
    scf.if %266 {
      %c240_419 = arith.constant 240 : index
      %c0_420 = arith.constant 0 : index
      %427 = vector.load %arg13[%c240_419, %c0_420] : memref<288x128xf32, #tpu.memory_space<vmem>>, vector<16x128xf32>
      tpu.vector_store %arg13[%c240_419, %c0_420], %2 {strides = array<i32>} : memref<288x128xf32, #tpu.memory_space<vmem>>, vector<16x128xf32>,
    } else {
    }
    %c23_247 = arith.constant 23 : index
    %c0_248 = arith.constant 0 : index
    %267 = vector.load %arg13[%c23_247, %c0_248] : memref<288x128xf32, #tpu.memory_space<vmem>>, vector<120x128xf32>
    %c0_249 = arith.constant 0 : index
    %c0_250 = arith.constant 0 : index
    %c0_251 = arith.constant 0 : index
    %268 = vector.load %arg9[%c0_249, %c0_250, %c0_251] : memref<9x128x128xf32, #tpu.memory_space<vmem>>, vector<1x128x128xf32>
    %269 = vector.shape_cast %268 : vector<1x128x128xf32> to vector<128x128xf32>
    %cst_252 = arith.constant dense<0.000000e+00> : vector<120x128xf32>
    %270 = tpu.matmul %267, %269, %cst_252 {dimension_numbers = #tpu.dot_dimension_numbers<[1], [0], [0], [1], [0, 0, 1, 1], [], []>} : vector<120x128xf32>, vector<128x128xf32>, vector<120x128xf32> -> vector<120x128xf32>
    %c24_253 = arith.constant 24 : index
    %c0_254 = arith.constant 0 : index
    %271 = vector.load %arg13[%c24_253, %c0_254] : memref<288x128xf32, #tpu.memory_space<vmem>>, vector<120x128xf32>
    %c1_255 = arith.constant 1 : index
    %c0_256 = arith.constant 0 : index
    %c0_257 = arith.constant 0 : index
    %272 = vector.load %arg9[%c1_255, %c0_256, %c0_257] : memref<9x128x128xf32, #tpu.memory_space<vmem>>, vector<1x128x128xf32>
    %273 = vector.shape_cast %272 : vector<1x128x128xf32> to vector<128x128xf32>
    %cst_258 = arith.constant dense<0.000000e+00> : vector<120x128xf32>
    %274 = tpu.matmul %271, %273, %cst_258 {dimension_numbers = #tpu.dot_dimension_numbers<[1], [0], [0], [1], [0, 0, 1, 1], [], []>} : vector<120x128xf32>, vector<128x128xf32>, vector<120x128xf32> -> vector<120x128xf32>
    %275 = arith.addf %270, %274 : vector<120x128xf32>
    %c25_259 = arith.constant 25 : index
    %c0_260 = arith.constant 0 : index
    %276 = vector.load %arg13[%c25_259, %c0_260] : memref<288x128xf32, #tpu.memory_space<vmem>>, vector<120x128xf32>
    %c2_261 = arith.constant 2 : index
    %c0_262 = arith.constant 0 : index
    %c0_263 = arith.constant 0 : index
    %277 = vector.load %arg9[%c2_261, %c0_262, %c0_263] : memref<9x128x128xf32, #tpu.memory_space<vmem>>, vector<1x128x128xf32>
    %278 = vector.shape_cast %277 : vector<1x128x128xf32> to vector<128x128xf32>
    %cst_264 = arith.constant dense<0.000000e+00> : vector<120x128xf32>
    %279 = tpu.matmul %276, %278, %cst_264 {dimension_numbers = #tpu.dot_dimension_numbers<[1], [0], [0], [1], [0, 0, 1, 1], [], []>} : vector<120x128xf32>, vector<128x128xf32>, vector<120x128xf32> -> vector<120x128xf32>
    %280 = arith.addf %275, %279 : vector<120x128xf32>
    %c47_265 = arith.constant 47 : index
    %c0_266 = arith.constant 0 : index
    %281 = vector.load %arg13[%c47_265, %c0_266] : memref<288x128xf32, #tpu.memory_space<vmem>>, vector<120x128xf32>
    %c3_267 = arith.constant 3 : index
    %c0_268 = arith.constant 0 : index
    %c0_269 = arith.constant 0 : index
    %282 = vector.load %arg9[%c3_267, %c0_268, %c0_269] : memref<9x128x128xf32, #tpu.memory_space<vmem>>, vector<1x128x128xf32>
    %283 = vector.shape_cast %282 : vector<1x128x128xf32> to vector<128x128xf32>
    %cst_270 = arith.constant dense<0.000000e+00> : vector<120x128xf32>
    %284 = tpu.matmul %281, %283, %cst_270 {dimension_numbers = #tpu.dot_dimension_numbers<[1], [0], [0], [1], [0, 0, 1, 1], [], []>} : vector<120x128xf32>, vector<128x128xf32>, vector<120x128xf32> -> vector<120x128xf32>
    %285 = arith.addf %280, %284 : vector<120x128xf32>
    %c48_271 = arith.constant 48 : index
    %c0_272 = arith.constant 0 : index
    %286 = vector.load %arg13[%c48_271, %c0_272] : memref<288x128xf32, #tpu.memory_space<vmem>>, vector<120x128xf32>
    %c4_273 = arith.constant 4 : index
    %c0_274 = arith.constant 0 : index
    %c0_275 = arith.constant 0 : index
    %287 = vector.load %arg9[%c4_273, %c0_274, %c0_275] : memref<9x128x128xf32, #tpu.memory_space<vmem>>, vector<1x128x128xf32>
    %288 = vector.shape_cast %287 : vector<1x128x128xf32> to vector<128x128xf32>
    %cst_276 = arith.constant dense<0.000000e+00> : vector<120x128xf32>
    %289 = tpu.matmul %286, %288, %cst_276 {dimension_numbers = #tpu.dot_dimension_numbers<[1], [0], [0], [1], [0, 0, 1, 1], [], []>} : vector<120x128xf32>, vector<128x128xf32>, vector<120x128xf32> -> vector<120x128xf32>
    %290 = arith.addf %285, %289 : vector<120x128xf32>
    %c49_277 = arith.constant 49 : index
    %c0_278 = arith.constant 0 : index
    %291 = vector.load %arg13[%c49_277, %c0_278] : memref<288x128xf32, #tpu.memory_space<vmem>>, vector<120x128xf32>
    %c5_279 = arith.constant 5 : index
    %c0_280 = arith.constant 0 : index
    %c0_281 = arith.constant 0 : index
    %292 = vector.load %arg9[%c5_279, %c0_280, %c0_281] : memref<9x128x128xf32, #tpu.memory_space<vmem>>, vector<1x128x128xf32>
    %293 = vector.shape_cast %292 : vector<1x128x128xf32> to vector<128x128xf32>
    %cst_282 = arith.constant dense<0.000000e+00> : vector<120x128xf32>
    %294 = tpu.matmul %291, %293, %cst_282 {dimension_numbers = #tpu.dot_dimension_numbers<[1], [0], [0], [1], [0, 0, 1, 1], [], []>} : vector<120x128xf32>, vector<128x128xf32>, vector<120x128xf32> -> vector<120x128xf32>
    %295 = arith.addf %290, %294 : vector<120x128xf32>
    %c71_283 = arith.constant 71 : index
    %c0_284 = arith.constant 0 : index
    %296 = vector.load %arg13[%c71_283, %c0_284] : memref<288x128xf32, #tpu.memory_space<vmem>>, vector<120x128xf32>
    %c6_285 = arith.constant 6 : index
    %c0_286 = arith.constant 0 : index
    %c0_287 = arith.constant 0 : index
    %297 = vector.load %arg9[%c6_285, %c0_286, %c0_287] : memref<9x128x128xf32, #tpu.memory_space<vmem>>, vector<1x128x128xf32>
    %298 = vector.shape_cast %297 : vector<1x128x128xf32> to vector<128x128xf32>
    %cst_288 = arith.constant dense<0.000000e+00> : vector<120x128xf32>
    %299 = tpu.matmul %296, %298, %cst_288 {dimension_numbers = #tpu.dot_dimension_numbers<[1], [0], [0], [1], [0, 0, 1, 1], [], []>} : vector<120x128xf32>, vector<128x128xf32>, vector<120x128xf32> -> vector<120x128xf32>
    %300 = arith.addf %295, %299 : vector<120x128xf32>
    %c72_289 = arith.constant 72 : index
    %c0_290 = arith.constant 0 : index
    %301 = vector.load %arg13[%c72_289, %c0_290] : memref<288x128xf32, #tpu.memory_space<vmem>>, vector<120x128xf32>
    %c7_291 = arith.constant 7 : index
    %c0_292 = arith.constant 0 : index
    %c0_293 = arith.constant 0 : index
    %302 = vector.load %arg9[%c7_291, %c0_292, %c0_293] : memref<9x128x128xf32, #tpu.memory_space<vmem>>, vector<1x128x128xf32>
    %303 = vector.shape_cast %302 : vector<1x128x128xf32> to vector<128x128xf32>
    %cst_294 = arith.constant dense<0.000000e+00> : vector<120x128xf32>
    %304 = tpu.matmul %301, %303, %cst_294 {dimension_numbers = #tpu.dot_dimension_numbers<[1], [0], [0], [1], [0, 0, 1, 1], [], []>} : vector<120x128xf32>, vector<128x128xf32>, vector<120x128xf32> -> vector<120x128xf32>
    %305 = arith.addf %300, %304 : vector<120x128xf32>
    %c73_295 = arith.constant 73 : index
    %c0_296 = arith.constant 0 : index
    %306 = vector.load %arg13[%c73_295, %c0_296] : memref<288x128xf32, #tpu.memory_space<vmem>>, vector<120x128xf32>
    %c8_297 = arith.constant 8 : index
    %c0_298 = arith.constant 0 : index
    %c0_299 = arith.constant 0 : index
    %307 = vector.load %arg9[%c8_297, %c0_298, %c0_299] : memref<9x128x128xf32, #tpu.memory_space<vmem>>, vector<1x128x128xf32>
    %308 = vector.shape_cast %307 : vector<1x128x128xf32> to vector<128x128xf32>
    %cst_300 = arith.constant dense<0.000000e+00> : vector<120x128xf32>
    %309 = tpu.matmul %306, %308, %cst_300 {dimension_numbers = #tpu.dot_dimension_numbers<[1], [0], [0], [1], [0, 0, 1, 1], [], []>} : vector<120x128xf32>, vector<128x128xf32>, vector<120x128xf32> -> vector<120x128xf32>
    %310 = arith.addf %305, %309 : vector<120x128xf32>
    %311 = vector.extract_strided_slice %310 {offsets = [0, 0], sizes = [16, 128], strides = [1, 1]} : vector<120x128xf32> to vector<16x128xf32>
    %312 = vector.broadcast %112 : vector<1x128xf32> to vector<16x128xf32>
    %313 = arith.addf %311, %312 : vector<16x128xf32>
    %c0_301 = arith.constant 0 : index
    %c0_302 = arith.constant 0 : index
    %c0_303 = arith.constant 0 : index
    %c0_304 = arith.constant 0 : index
    %314 = vector.load %arg2[%c0_301, %c0_302, %c0_303, %c0_304] : memref<1x8x16x128xf32, #tpu.memory_space<vmem>>, vector<1x1x16x128xf32>
    %315 = vector.shape_cast %314 : vector<1x1x16x128xf32> to vector<16x128xf32>
    %316 = arith.addf %313, %315 : vector<16x128xf32>
    %c0_305 = arith.constant 0 : index
    %c0_306 = arith.constant 0 : index
    %c0_307 = arith.constant 0 : index
    %c0_308 = arith.constant 0 : index
    %317 = vector.load %arg11[%c0_305, %c0_306, %c0_307, %c0_308] : memref<1x8x16x128xf32, #tpu.memory_space<vmem>>, vector<1x1x16x128xf32>
    %318 = vector.shape_cast %317 : vector<1x1x16x128xf32> to vector<16x128xf32>
    %319 = vector.shape_cast %316 : vector<16x128xf32> to vector<1x1x16x128xf32>
    tpu.vector_store %arg11[%c0_305, %c0_306, %c0_307, %c0_308], %319 {strides = array<i32>} : memref<1x8x16x128xf32, #tpu.memory_space<vmem>>, vector<1x1x16x128xf32>,
    %320 = vector.extract_strided_slice %310 {offsets = [24, 0], sizes = [16, 128], strides = [1, 1]} : vector<120x128xf32> to vector<16x128xf32>
    %321 = vector.broadcast %112 : vector<1x128xf32> to vector<16x128xf32>
    %322 = arith.addf %320, %321 : vector<16x128xf32>
    %c0_309 = arith.constant 0 : index
    %c1_310 = arith.constant 1 : index
    %c0_311 = arith.constant 0 : index
    %c0_312 = arith.constant 0 : index
    %323 = vector.load %arg2[%c0_309, %c1_310, %c0_311, %c0_312] : memref<1x8x16x128xf32, #tpu.memory_space<vmem>>, vector<1x1x16x128xf32>
    %324 = vector.shape_cast %323 : vector<1x1x16x128xf32> to vector<16x128xf32>
    %325 = arith.addf %322, %324 : vector<16x128xf32>
    %c0_313 = arith.constant 0 : index
    %c1_314 = arith.constant 1 : index
    %c0_315 = arith.constant 0 : index
    %c0_316 = arith.constant 0 : index
    %326 = vector.load %arg11[%c0_313, %c1_314, %c0_315, %c0_316] : memref<1x8x16x128xf32, #tpu.memory_space<vmem>>, vector<1x1x16x128xf32>
    %327 = vector.shape_cast %326 : vector<1x1x16x128xf32> to vector<16x128xf32>
    %328 = vector.shape_cast %325 : vector<16x128xf32> to vector<1x1x16x128xf32>
    tpu.vector_store %arg11[%c0_313, %c1_314, %c0_315, %c0_316], %328 {strides = array<i32>} : memref<1x8x16x128xf32, #tpu.memory_space<vmem>>, vector<1x1x16x128xf32>,
    %329 = vector.extract_strided_slice %310 {offsets = [48, 0], sizes = [16, 128], strides = [1, 1]} : vector<120x128xf32> to vector<16x128xf32>
    %330 = vector.broadcast %112 : vector<1x128xf32> to vector<16x128xf32>
    %331 = arith.addf %329, %330 : vector<16x128xf32>
    %c0_317 = arith.constant 0 : index
    %c2_318 = arith.constant 2 : index
    %c0_319 = arith.constant 0 : index
    %c0_320 = arith.constant 0 : index
    %332 = vector.load %arg2[%c0_317, %c2_318, %c0_319, %c0_320] : memref<1x8x16x128xf32, #tpu.memory_space<vmem>>, vector<1x1x16x128xf32>
    %333 = vector.shape_cast %332 : vector<1x1x16x128xf32> to vector<16x128xf32>
    %334 = arith.addf %331, %333 : vector<16x128xf32>
    %c0_321 = arith.constant 0 : index
    %c2_322 = arith.constant 2 : index
    %c0_323 = arith.constant 0 : index
    %c0_324 = arith.constant 0 : index
    %335 = vector.load %arg11[%c0_321, %c2_322, %c0_323, %c0_324] : memref<1x8x16x128xf32, #tpu.memory_space<vmem>>, vector<1x1x16x128xf32>
    %336 = vector.shape_cast %335 : vector<1x1x16x128xf32> to vector<16x128xf32>
    %337 = vector.shape_cast %334 : vector<16x128xf32> to vector<1x1x16x128xf32>
    tpu.vector_store %arg11[%c0_321, %c2_322, %c0_323, %c0_324], %337 {strides = array<i32>} : memref<1x8x16x128xf32, #tpu.memory_space<vmem>>, vector<1x1x16x128xf32>,
    %338 = vector.extract_strided_slice %310 {offsets = [72, 0], sizes = [16, 128], strides = [1, 1]} : vector<120x128xf32> to vector<16x128xf32>
    %339 = vector.broadcast %112 : vector<1x128xf32> to vector<16x128xf32>
    %340 = arith.addf %338, %339 : vector<16x128xf32>
    %c0_325 = arith.constant 0 : index
    %c3_326 = arith.constant 3 : index
    %c0_327 = arith.constant 0 : index
    %c0_328 = arith.constant 0 : index
    %341 = vector.load %arg2[%c0_325, %c3_326, %c0_327, %c0_328] : memref<1x8x16x128xf32, #tpu.memory_space<vmem>>, vector<1x1x16x128xf32>
    %342 = vector.shape_cast %341 : vector<1x1x16x128xf32> to vector<16x128xf32>
    %343 = arith.addf %340, %342 : vector<16x128xf32>
    %c0_329 = arith.constant 0 : index
    %c3_330 = arith.constant 3 : index
    %c0_331 = arith.constant 0 : index
    %c0_332 = arith.constant 0 : index
    %344 = vector.load %arg11[%c0_329, %c3_330, %c0_331, %c0_332] : memref<1x8x16x128xf32, #tpu.memory_space<vmem>>, vector<1x1x16x128xf32>
    %345 = vector.shape_cast %344 : vector<1x1x16x128xf32> to vector<16x128xf32>
    %346 = vector.shape_cast %343 : vector<16x128xf32> to vector<1x1x16x128xf32>
    tpu.vector_store %arg11[%c0_329, %c3_330, %c0_331, %c0_332], %346 {strides = array<i32>} : memref<1x8x16x128xf32, #tpu.memory_space<vmem>>, vector<1x1x16x128xf32>,
    %347 = vector.extract_strided_slice %310 {offsets = [96, 0], sizes = [16, 128], strides = [1, 1]} : vector<120x128xf32> to vector<16x128xf32>
    %348 = vector.broadcast %112 : vector<1x128xf32> to vector<16x128xf32>
    %349 = arith.addf %347, %348 : vector<16x128xf32>
    %c0_333 = arith.constant 0 : index
    %c4_334 = arith.constant 4 : index
    %c0_335 = arith.constant 0 : index
    %c0_336 = arith.constant 0 : index
    %350 = vector.load %arg2[%c0_333, %c4_334, %c0_335, %c0_336] : memref<1x8x16x128xf32, #tpu.memory_space<vmem>>, vector<1x1x16x128xf32>
    %351 = vector.shape_cast %350 : vector<1x1x16x128xf32> to vector<16x128xf32>
    %352 = arith.addf %349, %351 : vector<16x128xf32>
    %c0_337 = arith.constant 0 : index
    %c4_338 = arith.constant 4 : index
    %c0_339 = arith.constant 0 : index
    %c0_340 = arith.constant 0 : index
    %353 = vector.load %arg11[%c0_337, %c4_338, %c0_339, %c0_340] : memref<1x8x16x128xf32, #tpu.memory_space<vmem>>, vector<1x1x16x128xf32>
    %354 = vector.shape_cast %353 : vector<1x1x16x128xf32> to vector<16x128xf32>
    %355 = vector.shape_cast %352 : vector<16x128xf32> to vector<1x1x16x128xf32>
    tpu.vector_store %arg11[%c0_337, %c4_338, %c0_339, %c0_340], %355 {strides = array<i32>} : memref<1x8x16x128xf32, #tpu.memory_space<vmem>>, vector<1x1x16x128xf32>,
    %c143_341 = arith.constant 143 : index
    %c0_342 = arith.constant 0 : index
    %356 = vector.load %arg13[%c143_341, %c0_342] : memref<288x128xf32, #tpu.memory_space<vmem>>, vector<72x128xf32>
    %c0_343 = arith.constant 0 : index
    %c0_344 = arith.constant 0 : index
    %c0_345 = arith.constant 0 : index
    %357 = vector.load %arg9[%c0_343, %c0_344, %c0_345] : memref<9x128x128xf32, #tpu.memory_space<vmem>>, vector<1x128x128xf32>
    %358 = vector.shape_cast %357 : vector<1x128x128xf32> to vector<128x128xf32>
    %cst_346 = arith.constant dense<0.000000e+00> : vector<72x128xf32>
    %359 = tpu.matmul %356, %358, %cst_346 {dimension_numbers = #tpu.dot_dimension_numbers<[1], [0], [0], [1], [0, 0, 1, 1], [], []>} : vector<72x128xf32>, vector<128x128xf32>, vector<72x128xf32> -> vector<72x128xf32>
    %c144_347 = arith.constant 144 : index
    %c0_348 = arith.constant 0 : index
    %360 = vector.load %arg13[%c144_347, %c0_348] : memref<288x128xf32, #tpu.memory_space<vmem>>, vector<72x128xf32>
    %c1_349 = arith.constant 1 : index
    %c0_350 = arith.constant 0 : index
    %c0_351 = arith.constant 0 : index
    %361 = vector.load %arg9[%c1_349, %c0_350, %c0_351] : memref<9x128x128xf32, #tpu.memory_space<vmem>>, vector<1x128x128xf32>
    %362 = vector.shape_cast %361 : vector<1x128x128xf32> to vector<128x128xf32>
    %cst_352 = arith.constant dense<0.000000e+00> : vector<72x128xf32>
    %363 = tpu.matmul %360, %362, %cst_352 {dimension_numbers = #tpu.dot_dimension_numbers<[1], [0], [0], [1], [0, 0, 1, 1], [], []>} : vector<72x128xf32>, vector<128x128xf32>, vector<72x128xf32> -> vector<72x128xf32>
    %364 = arith.addf %359, %363 : vector<72x128xf32>
    %c145_353 = arith.constant 145 : index
    %c0_354 = arith.constant 0 : index
    %365 = vector.load %arg13[%c145_353, %c0_354] : memref<288x128xf32, #tpu.memory_space<vmem>>, vector<72x128xf32>
    %c2_355 = arith.constant 2 : index
    %c0_356 = arith.constant 0 : index
    %c0_357 = arith.constant 0 : index
    %366 = vector.load %arg9[%c2_355, %c0_356, %c0_357] : memref<9x128x128xf32, #tpu.memory_space<vmem>>, vector<1x128x128xf32>
    %367 = vector.shape_cast %366 : vector<1x128x128xf32> to vector<128x128xf32>
    %cst_358 = arith.constant dense<0.000000e+00> : vector<72x128xf32>
    %368 = tpu.matmul %365, %367, %cst_358 {dimension_numbers = #tpu.dot_dimension_numbers<[1], [0], [0], [1], [0, 0, 1, 1], [], []>} : vector<72x128xf32>, vector<128x128xf32>, vector<72x128xf32> -> vector<72x128xf32>
    %369 = arith.addf %364, %368 : vector<72x128xf32>
    %c167_359 = arith.constant 167 : index
    %c0_360 = arith.constant 0 : index
    %370 = vector.load %arg13[%c167_359, %c0_360] : memref<288x128xf32, #tpu.memory_space<vmem>>, vector<72x128xf32>
    %c3_361 = arith.constant 3 : index
    %c0_362 = arith.constant 0 : index
    %c0_363 = arith.constant 0 : index
    %371 = vector.load %arg9[%c3_361, %c0_362, %c0_363] : memref<9x128x128xf32, #tpu.memory_space<vmem>>, vector<1x128x128xf32>
    %372 = vector.shape_cast %371 : vector<1x128x128xf32> to vector<128x128xf32>
    %cst_364 = arith.constant dense<0.000000e+00> : vector<72x128xf32>
    %373 = tpu.matmul %370, %372, %cst_364 {dimension_numbers = #tpu.dot_dimension_numbers<[1], [0], [0], [1], [0, 0, 1, 1], [], []>} : vector<72x128xf32>, vector<128x128xf32>, vector<72x128xf32> -> vector<72x128xf32>
    %374 = arith.addf %369, %373 : vector<72x128xf32>
    %c168_365 = arith.constant 168 : index
    %c0_366 = arith.constant 0 : index
    %375 = vector.load %arg13[%c168_365, %c0_366] : memref<288x128xf32, #tpu.memory_space<vmem>>, vector<72x128xf32>
    %c4_367 = arith.constant 4 : index
    %c0_368 = arith.constant 0 : index
    %c0_369 = arith.constant 0 : index
    %376 = vector.load %arg9[%c4_367, %c0_368, %c0_369] : memref<9x128x128xf32, #tpu.memory_space<vmem>>, vector<1x128x128xf32>
    %377 = vector.shape_cast %376 : vector<1x128x128xf32> to vector<128x128xf32>
    %cst_370 = arith.constant dense<0.000000e+00> : vector<72x128xf32>
    %378 = tpu.matmul %375, %377, %cst_370 {dimension_numbers = #tpu.dot_dimension_numbers<[1], [0], [0], [1], [0, 0, 1, 1], [], []>} : vector<72x128xf32>, vector<128x128xf32>, vector<72x128xf32> -> vector<72x128xf32>
    %379 = arith.addf %374, %378 : vector<72x128xf32>
    %c169_371 = arith.constant 169 : index
    %c0_372 = arith.constant 0 : index
    %380 = vector.load %arg13[%c169_371, %c0_372] : memref<288x128xf32, #tpu.memory_space<vmem>>, vector<72x128xf32>
    %c5_373 = arith.constant 5 : index
    %c0_374 = arith.constant 0 : index
    %c0_375 = arith.constant 0 : index
    %381 = vector.load %arg9[%c5_373, %c0_374, %c0_375] : memref<9x128x128xf32, #tpu.memory_space<vmem>>, vector<1x128x128xf32>
    %382 = vector.shape_cast %381 : vector<1x128x128xf32> to vector<128x128xf32>
    %cst_376 = arith.constant dense<0.000000e+00> : vector<72x128xf32>
    %383 = tpu.matmul %380, %382, %cst_376 {dimension_numbers = #tpu.dot_dimension_numbers<[1], [0], [0], [1], [0, 0, 1, 1], [], []>} : vector<72x128xf32>, vector<128x128xf32>, vector<72x128xf32> -> vector<72x128xf32>
    %384 = arith.addf %379, %383 : vector<72x128xf32>
    %c191_377 = arith.constant 191 : index
    %c0_378 = arith.constant 0 : index
    %385 = vector.load %arg13[%c191_377, %c0_378] : memref<288x128xf32, #tpu.memory_space<vmem>>, vector<72x128xf32>
    %c6_379 = arith.constant 6 : index
    %c0_380 = arith.constant 0 : index
    %c0_381 = arith.constant 0 : index
    %386 = vector.load %arg9[%c6_379, %c0_380, %c0_381] : memref<9x128x128xf32, #tpu.memory_space<vmem>>, vector<1x128x128xf32>
    %387 = vector.shape_cast %386 : vector<1x128x128xf32> to vector<128x128xf32>
    %cst_382 = arith.constant dense<0.000000e+00> : vector<72x128xf32>
    %388 = tpu.matmul %385, %387, %cst_382 {dimension_numbers = #tpu.dot_dimension_numbers<[1], [0], [0], [1], [0, 0, 1, 1], [], []>} : vector<72x128xf32>, vector<128x128xf32>, vector<72x128xf32> -> vector<72x128xf32>
    %389 = arith.addf %384, %388 : vector<72x128xf32>
    %c192_383 = arith.constant 192 : index
    %c0_384 = arith.constant 0 : index
    %390 = vector.load %arg13[%c192_383, %c0_384] : memref<288x128xf32, #tpu.memory_space<vmem>>, vector<72x128xf32>
    %c7_385 = arith.constant 7 : index
    %c0_386 = arith.constant 0 : index
    %c0_387 = arith.constant 0 : index
    %391 = vector.load %arg9[%c7_385, %c0_386, %c0_387] : memref<9x128x128xf32, #tpu.memory_space<vmem>>, vector<1x128x128xf32>
    %392 = vector.shape_cast %391 : vector<1x128x128xf32> to vector<128x128xf32>
    %cst_388 = arith.constant dense<0.000000e+00> : vector<72x128xf32>
    %393 = tpu.matmul %390, %392, %cst_388 {dimension_numbers = #tpu.dot_dimension_numbers<[1], [0], [0], [1], [0, 0, 1, 1], [], []>} : vector<72x128xf32>, vector<128x128xf32>, vector<72x128xf32> -> vector<72x128xf32>
    %394 = arith.addf %389, %393 : vector<72x128xf32>
    %c193_389 = arith.constant 193 : index
    %c0_390 = arith.constant 0 : index
    %395 = vector.load %arg13[%c193_389, %c0_390] : memref<288x128xf32, #tpu.memory_space<vmem>>, vector<72x128xf32>
    %c8_391 = arith.constant 8 : index
    %c0_392 = arith.constant 0 : index
    %c0_393 = arith.constant 0 : index
    %396 = vector.load %arg9[%c8_391, %c0_392, %c0_393] : memref<9x128x128xf32, #tpu.memory_space<vmem>>, vector<1x128x128xf32>
    %397 = vector.shape_cast %396 : vector<1x128x128xf32> to vector<128x128xf32>
    %cst_394 = arith.constant dense<0.000000e+00> : vector<72x128xf32>
    %398 = tpu.matmul %395, %397, %cst_394 {dimension_numbers = #tpu.dot_dimension_numbers<[1], [0], [0], [1], [0, 0, 1, 1], [], []>} : vector<72x128xf32>, vector<128x128xf32>, vector<72x128xf32> -> vector<72x128xf32>
    %399 = arith.addf %394, %398 : vector<72x128xf32>
    %400 = vector.extract_strided_slice %399 {offsets = [0, 0], sizes = [16, 128], strides = [1, 1]} : vector<72x128xf32> to vector<16x128xf32>
    %401 = vector.broadcast %112 : vector<1x128xf32> to vector<16x128xf32>
    %402 = arith.addf %400, %401 : vector<16x128xf32>
    %c0_395 = arith.constant 0 : index
    %c5_396 = arith.constant 5 : index
    %c0_397 = arith.constant 0 : index
    %c0_398 = arith.constant 0 : index
    %403 = vector.load %arg2[%c0_395, %c5_396, %c0_397, %c0_398] : memref<1x8x16x128xf32, #tpu.memory_space<vmem>>, vector<1x1x16x128xf32>
    %404 = vector.shape_cast %403 : vector<1x1x16x128xf32> to vector<16x128xf32>
    %405 = arith.addf %402, %404 : vector<16x128xf32>
    %c0_399 = arith.constant 0 : index
    %c5_400 = arith.constant 5 : index
    %c0_401 = arith.constant 0 : index
    %c0_402 = arith.constant 0 : index
    %406 = vector.load %arg11[%c0_399, %c5_400, %c0_401, %c0_402] : memref<1x8x16x128xf32, #tpu.memory_space<vmem>>, vector<1x1x16x128xf32>
    %407 = vector.shape_cast %406 : vector<1x1x16x128xf32> to vector<16x128xf32>
    %408 = vector.shape_cast %405 : vector<16x128xf32> to vector<1x1x16x128xf32>
    tpu.vector_store %arg11[%c0_399, %c5_400, %c0_401, %c0_402], %408 {strides = array<i32>} : memref<1x8x16x128xf32, #tpu.memory_space<vmem>>, vector<1x1x16x128xf32>,
    %409 = vector.extract_strided_slice %399 {offsets = [24, 0], sizes = [16, 128], strides = [1, 1]} : vector<72x128xf32> to vector<16x128xf32>
    %410 = vector.broadcast %112 : vector<1x128xf32> to vector<16x128xf32>
    %411 = arith.addf %409, %410 : vector<16x128xf32>
    %c0_403 = arith.constant 0 : index
    %c6_404 = arith.constant 6 : index
    %c0_405 = arith.constant 0 : index
    %c0_406 = arith.constant 0 : index
    %412 = vector.load %arg2[%c0_403, %c6_404, %c0_405, %c0_406] : memref<1x8x16x128xf32, #tpu.memory_space<vmem>>, vector<1x1x16x128xf32>
    %413 = vector.shape_cast %412 : vector<1x1x16x128xf32> to vector<16x128xf32>
    %414 = arith.addf %411, %413 : vector<16x128xf32>
    %c0_407 = arith.constant 0 : index
    %c6_408 = arith.constant 6 : index
    %c0_409 = arith.constant 0 : index
    %c0_410 = arith.constant 0 : index
    %415 = vector.load %arg11[%c0_407, %c6_408, %c0_409, %c0_410] : memref<1x8x16x128xf32, #tpu.memory_space<vmem>>, vector<1x1x16x128xf32>
    %416 = vector.shape_cast %415 : vector<1x1x16x128xf32> to vector<16x128xf32>
    %417 = vector.shape_cast %414 : vector<16x128xf32> to vector<1x1x16x128xf32>
    tpu.vector_store %arg11[%c0_407, %c6_408, %c0_409, %c0_410], %417 {strides = array<i32>} : memref<1x8x16x128xf32, #tpu.memory_space<vmem>>, vector<1x1x16x128xf32>,
    %418 = vector.extract_strided_slice %399 {offsets = [48, 0], sizes = [16, 128], strides = [1, 1]} : vector<72x128xf32> to vector<16x128xf32>
    %419 = vector.broadcast %112 : vector<1x128xf32> to vector<16x128xf32>
    %420 = arith.addf %418, %419 : vector<16x128xf32>
    %c0_411 = arith.constant 0 : index
    %c7_412 = arith.constant 7 : index
    %c0_413 = arith.constant 0 : index
    %c0_414 = arith.constant 0 : index
    %421 = vector.load %arg2[%c0_411, %c7_412, %c0_413, %c0_414] : memref<1x8x16x128xf32, #tpu.memory_space<vmem>>, vector<1x1x16x128xf32>
    %422 = vector.shape_cast %421 : vector<1x1x16x128xf32> to vector<16x128xf32>
    %423 = arith.addf %420, %422 : vector<16x128xf32>
    %c0_415 = arith.constant 0 : index
    %c7_416 = arith.constant 7 : index
    %c0_417 = arith.constant 0 : index
    %c0_418 = arith.constant 0 : index
    %424 = vector.load %arg11[%c0_415, %c7_416, %c0_417, %c0_418] : memref<1x8x16x128xf32, #tpu.memory_space<vmem>>, vector<1x1x16x128xf32>
    %425 = vector.shape_cast %424 : vector<1x1x16x128xf32> to vector<16x128xf32>
    %426 = vector.shape_cast %423 : vector<16x128xf32> to vector<1x1x16x128xf32>
    tpu.vector_store %arg11[%c0_415, %c7_416, %c0_417, %c0_418], %426 {strides = array<i32>} : memref<1x8x16x128xf32, #tpu.memory_space<vmem>>, vector<1x1x16x128xf32>,
    return
  }
  func.func @transform_0(%arg0: i32, %arg1: i32) -> (i32, i32, i32, i32) {
    %c0_i32 = arith.constant 0 : i32
    %c0_i32_0 = arith.constant 0 : i32
    %c0_i32_1 = arith.constant 0 : i32
    return %arg0, %arg1, %c0_i32, %c0_i32_0 : i32, i32, i32, i32
  }
  func.func @transform_1(%arg0: i32, %arg1: i32) -> (i32, i32, i32, i32) {
    %c8_i32 = arith.constant 8 : i32
    %0 = arith.muli %arg1, %c8_i32 : i32
    %c2_i32 = arith.constant 2 : i32
    %1 = arith.subi %0, %c2_i32 : i32
    %c0_i32 = arith.constant 0 : i32
    %2 = arith.maxsi %1, %c0_i32 : i32
    %c0_i32_0 = arith.constant 0 : i32
    %c0_i32_1 = arith.constant 0 : i32
    %c0_i32_2 = arith.constant 0 : i32
    return %arg0, %2, %c0_i32_0, %c0_i32_1 : i32, i32, i32, i32
  }
  func.func @transform_2(%arg0: i32, %arg1: i32) -> (i32, i32, i32, i32) {
    %c8_i32 = arith.constant 8 : i32
    %0 = arith.muli %arg1, %c8_i32 : i32
    %c1_i32 = arith.constant 1 : i32
    %1 = arith.subi %0, %c1_i32 : i32
    %c0_i32 = arith.constant 0 : i32
    %2 = arith.maxsi %1, %c0_i32 : i32
    %c0_i32_0 = arith.constant 0 : i32
    %c0_i32_1 = arith.constant 0 : i32
    %c0_i32_2 = arith.constant 0 : i32
    return %arg0, %2, %c0_i32_0, %c0_i32_1 : i32, i32, i32, i32
  }
  func.func @transform_3(%arg0: i32, %arg1: i32) -> (i32, i32, i32, i32) {
    %c1_i32 = arith.constant 1 : i32
    %0 = arith.addi %arg1, %c1_i32 : i32
    %c8_i32 = arith.constant 8 : i32
    %1 = arith.muli %0, %c8_i32 : i32
    %c15_i32 = arith.constant 15 : i32
    %2 = arith.minsi %1, %c15_i32 : i32
    %c0_i32 = arith.constant 0 : i32
    %c0_i32_0 = arith.constant 0 : i32
    %c0_i32_1 = arith.constant 0 : i32
    return %arg0, %2, %c0_i32, %c0_i32_0 : i32, i32, i32, i32
  }
  func.func @transform_4(%arg0: i32, %arg1: i32) -> (i32, i32, i32, i32) {
    %c1_i32 = arith.constant 1 : i32
    %0 = arith.addi %arg1, %c1_i32 : i32
    %c8_i32 = arith.constant 8 : i32
    %1 = arith.muli %0, %c8_i32 : i32
    %c1_i32_0 = arith.constant 1 : i32
    %2 = arith.addi %1, %c1_i32_0 : i32
    %c15_i32 = arith.constant 15 : i32
    %3 = arith.minsi %2, %c15_i32 : i32
    %c0_i32 = arith.constant 0 : i32
    %c0_i32_1 = arith.constant 0 : i32
    %c0_i32_2 = arith.constant 0 : i32
    return %arg0, %3, %c0_i32, %c0_i32_1 : i32, i32, i32, i32
  }
  func.func @transform_5(%arg0: i32, %arg1: i32) -> (i32, i32, i32) {
    %c0_i32 = arith.constant 0 : i32
    %c0_i32_0 = arith.constant 0 : i32
    %c0_i32_1 = arith.constant 0 : i32
    %c0_i32_2 = arith.constant 0 : i32
    return %c0_i32, %c0_i32_0, %c0_i32_1 : i32, i32, i32
  }
  func.func @transform_6(%arg0: i32, %arg1: i32) -> (i32, i32) {
    %c0_i32 = arith.constant 0 : i32
    %c0_i32_0 = arith.constant 0 : i32
    %c0_i32_1 = arith.constant 0 : i32
    return %c0_i32, %c0_i32_0 : i32, i32
  }
  func.func @transform_7(%arg0: i32, %arg1: i32) -> (i32, i32, i32) {
    %c0_i32 = arith.constant 0 : i32
    %c0_i32_0 = arith.constant 0 : i32
    %c0_i32_1 = arith.constant 0 : i32
    %c0_i32_2 = arith.constant 0 : i32
    return %c0_i32, %c0_i32_0, %c0_i32_1 : i32, i32, i32
  }
  func.func @transform_8(%arg0: i32, %arg1: i32) -> (i32, i32) {
    %c0_i32 = arith.constant 0 : i32
    %c0_i32_0 = arith.constant 0 : i32
    %c0_i32_1 = arith.constant 0 : i32
    return %c0_i32, %c0_i32_0 : i32, i32
  }
  func.func @transform_9(%arg0: i32, %arg1: i32) -> (i32, i32, i32, i32) {
    %c0_i32 = arith.constant 0 : i32
    %c0_i32_0 = arith.constant 0 : i32
    %c0_i32_1 = arith.constant 0 : i32
    return %arg0, %arg1, %c0_i32, %c0_i32_0 : i32, i32, i32, i32
  }
}

</mosaic_0001>

<llo_original>
// kernel: tpu_custom_call.1
$region0: #{tpu_custom_call.1}
  #allocation0 [shape = 'u32[]', space=smem, size = 0x4, offset = 0x4, fixed_abs, tag = 'smem constant byte address 0x4 - core index']
  #allocation1 [shape = 'u32[144,128]{1,0:T(1,128)}', space=vmem, size = 0x12000, scoped, tag = 'internal scratch']
  #allocation2 [shape = 'f32[336,128]{1,0:T(8,128)}', space=vmem, size = 0x2a000, scoped, tag = 'scratch operand']
  #allocation3 [shape = 'f32[288,128]{1,0:T(8,128)}', space=vmem, size = 0x24000, scoped, tag = 'scratch operand']
  %s0 = inlined_call_operand.hbm [shape: f32[2,16,16,128], index: 0, kind: input, shape index: {}]
  %s1 = inlined_call_operand.hbm [shape: f32[2,16,16,128], index: 1, kind: input, shape index: {}]
  %s2 = inlined_call_operand.hbm [shape: f32[2,16,16,128], index: 2, kind: input, shape index: {}]
  %s3 = inlined_call_operand.hbm [shape: f32[2,16,16,128], index: 3, kind: input, shape index: {}]
  %s4 = inlined_call_operand.hbm [shape: f32[2,16,16,128], index: 4, kind: input, shape index: {}]
  %s5 = inlined_call_operand.hbm [shape: f32[9,128,128], index: 5, kind: input, shape index: {}]
  %s6 = inlined_call_operand.vmem [shape: f32[1,128], index: 6, kind: input, shape index: {}]
  %s7 = inlined_call_operand.hbm [shape: f32[9,128,128], index: 7, kind: input, shape index: {}]
  %s8 = inlined_call_operand.vmem [shape: f32[1,128], index: 8, kind: input, shape index: {}]
  %s9 = inlined_call_operand.hbm [shape: f32[2,16,16,128], index: 9, kind: output, shape index: {}]
  %s10 = sld [smem:[#allocation0]]
  $region105: #{tpu_custom_call.1} parent=0
    _
  %s12 = ssub.s32 1, %s10
  %s13 = scalar_select 0, %s12, %s10
  $region1: #{tpu_custom_call.1} parent=0
    #allocation4 [shape = 'u8[131072]{0}', space=vmem, size = 0x20000, scoped, tag = 'input window, operand 0']
    #allocation5 [shape = 's32[2]{0}', space=sflag, size = 0x8, scoped, tag = 'scoped memory for tpu_custom_call.1']
    #allocation6 [shape = 's32[2]{0}', space=sflag, size = 0x8, scoped, tag = 'scoped memory for tpu_custom_call.1']
    #allocation7 [shape = 'u8[16384]{0}', space=vmem, size = 0x4000, scoped, tag = 'input window, operand 1']
    #allocation8 [shape = 's32[2]{0}', space=sflag, size = 0x8, scoped, tag = 'scoped memory for tpu_custom_call.1']
    #allocation9 [shape = 'u8[16384]{0}', space=vmem, size = 0x4000, scoped, tag = 'input window, operand 2']
    #allocation10 [shape = 'u8[16384]{0}', space=vmem, size = 0x4000, scoped, tag = 'input window, operand 3']
    #allocation11 [shape = 's32[2]{0}', space=sflag, size = 0x8, scoped, tag = 'scoped memory for tpu_custom_call.1']
    #allocation12 [shape = 'u8[16384]{0}', space=vmem, size = 0x4000, scoped, tag = 'input window, operand 4']
    #allocation13 [shape = 'u8[589824]{0}', space=vmem, size = 0x90000, scoped, tag = 'input window, operand 5, single buffered']
    #allocation14 [shape = 's32[1]{0}', space=sflag, size = 0x4, scoped, tag = 'scoped memory for tpu_custom_call.1']
    #allocation15 [shape = 'u8[589824]{0}', space=vmem, size = 0x90000, scoped, tag = 'input window, operand 7, single buffered']
    #allocation16 [shape = 'u8[131072]{0}', space=vmem, size = 0x20000, scoped, tag = 'output window, operand 0']
    %14 = vsyncpa [#allocation5], 0
    %s15 = scalar_lea.sflag [#allocation5], 1
    %16 = vsyncpa %s15, 0
    %17 = vsyncpa [#allocation8], 0
    %s18 = scalar_lea.sflag [#allocation8], 1
    %19 = vsyncpa %s18, 0
    %20 = vsyncpa [#allocation11], 0
    %s21 = scalar_lea.sflag [#allocation11], 1
    %22 = vsyncpa %s21, 0
    %23 = vsyncpa [#allocation14], 0
    %24 = vsyncpa [#allocation6], 0
    %s25 = scalar_lea.sflag [#allocation6], 1
    %26 = vsyncpa %s25, 0
    loop: start=0, step=1, limit=6
    $region2: #{tpu_custom_call.1} parent=1 // loop_pre_header
      _
    $region3: #{tpu_custom_call.1} parent=1 // loop_header
      %s28 = sphi 0, %s32
      %p29 = scmp.ge.s32.totalorder %s28, 6
      %s35 = sphi 0, %s47
      %s36 = sphi 0, %s43
      %s37 = sphi 0, %s35
      %s38 = sphi 0, %s36
      %s39 = sphi 0, %s37
      %s40 = sphi 0, %s38
      %s52 = sphi 0, %s54
      %s55 = sphi 0, %s52
      %s56 = sphi 0, %s55
      %s72 = sphi 0, %s56
      %s88 = sphi 0, %s90
      %s91 = sphi 0, %s88
      %s92 = sphi 0, %s91
      %s108 = sphi 0, %s92
      %s124 = sphi 0, %s126
      %s127 = sphi 0, %s124
      %s128 = sphi 0, %s127
      %s144 = sphi 0, %s128
      %s160 = sphi 0, %s162
      %s163 = sphi 0, %s160
      %s164 = sphi 0, %s163
      %s180 = sphi 0, %s164
      %s198 = sphi 0, %s200
      %s201 = sphi 0, %s198
      %s202 = sphi 0, %s201
      %s218 = sphi 0, %s202
      %s222 = sphi 0, %s222
      %s224 = sphi 0, %s222
      %s225 = sphi 0, %s224
      %s239 = sphi 0, %s225
      %s243 = sphi 0, %s243
      %s245 = sphi 0, %s243
      %s246 = sphi 0, %s245
      %s260 = sphi 0, %s246
      %s264 = sphi 0, %s264
      %s266 = sphi 0, %s264
      %s267 = sphi 0, %s266
      %s281 = sphi 0, %s267
      %s285 = sphi 0, %s285
      %s287 = sphi 0, %s285
      %s288 = sphi 0, %s287
      %s302 = sphi 0, %s288
      %s310 = sphi 0, %s312
      %s313 = sphi 0, %s310
      %s314 = sphi 0, %s313
      %s330 = sphi 0, %s314
    $region4: #{tpu_custom_call.1} parent=1 // loop_header_branch
      %31 = sbr.rel (%p29) target = $region8
    $region5: #{tpu_custom_call.1} parent=1 // loop_body
      %s33 = ssub.s32 %s28, 1
      %s34 = ssub.s32 %s28, 2
      %s41 = sadd.s32 1, %s36
      %p42 = scmp.ge.s32.totalorder %s41, 2
      %s43 = scalar_select %p42, 0, %s41
      %s44 = sadd.s32 1, %s35
      %s45 = scalar_select %p42, %s44, %s35
      %p46 = scmp.ge.s32.totalorder %s45, 2
      %s47 = scalar_select %p46, 0, %s45
      %s48 = ssub.s32 %s35, %s47
      %s49 = ssub.s32 %s36, %s43
      %s50 = sor.u32 %s48, %s49
      %p51 = scmp.eq.s32.totalorder %s50, 0
      %s53 = sadd.s32 %s52, 1
      %s54 = scalar_select %p51, %s52, %s53
      %p57 = pneg %p51
      %p58 = scmp.eq.s32.totalorder %s28, 3
      %p59 = por %p57, %p58
      %p60 = scmp.ne.s32.totalorder %s52, %s55
      %p61 = scmp.eq.s32.totalorder %s28, 0
      %p62 = por %p60, %p61
      %p63 = scmp.ne.s32.totalorder %s52, %s55
      %p64 = scmp.eq.s32.totalorder %s33, 3
      %p65 = por %p63, %p64
      %p66 = scmp.ne.s32.totalorder %s55, %s56
      %p67 = scmp.eq.s32.totalorder %s33, 0
      %p68 = por %p66, %p67
      %p69 = scmp.ne.s32.totalorder %s55, %s56
      %p70 = scmp.eq.s32.totalorder %s34, 3
      %p71 = por %p69, %p70
      %p73 = scmp.ne.s32.totalorder %s56, %s72
      %p74 = scmp.eq.s32.totalorder %s34, 0
      %p75 = por %p73, %p74
      %s76 = smul.u32 %s36, 8
      %s77 = ssub.s32 %s76, 2
      %p78 = scmp.gt.s32.totalorder %s77, 0
      %s79 = scalar_select %p78, %s77, 0
      %s80 = smul.u32 %s43, 8
      %s81 = ssub.s32 %s80, 2
      %p82 = scmp.gt.s32.totalorder %s81, 0
      %s83 = scalar_select %p82, %s81, 0
      %s84 = ssub.s32 %s35, %s47
      %s85 = ssub.s32 %s79, %s83
      %s86 = sor.u32 %s84, %s85
      %p87 = scmp.eq.s32.totalorder %s86, 0
      %s89 = sadd.s32 %s88, 1
      %s90 = scalar_select %p87, %s88, %s89
      %p93 = pneg %p87
      %p94 = scmp.eq.s32.totalorder %s28, 3
      %p95 = por %p93, %p94
      %p96 = scmp.ne.s32.totalorder %s88, %s91
      %p97 = scmp.eq.s32.totalorder %s28, 0
      %p98 = por %p96, %p97
      %p99 = scmp.ne.s32.totalorder %s88, %s91
      %p100 = scmp.eq.s32.totalorder %s33, 3
      %p101 = por %p99, %p100
      %p102 = scmp.ne.s32.totalorder %s91, %s92
      %p103 = scmp.eq.s32.totalorder %s33, 0
      %p104 = por %p102, %p103
      %p105 = scmp.ne.s32.totalorder %s91, %s92
      %p106 = scmp.eq.s32.totalorder %s34, 3
      %p107 = por %p105, %p106
      %p109 = scmp.ne.s32.totalorder %s92, %s108
      %p110 = scmp.eq.s32.totalorder %s34, 0
      %p111 = por %p109, %p110
      %s112 = smul.u32 %s36, 8
      %s113 = ssub.s32 %s112, 1
      %p114 = scmp.gt.s32.totalorder %s113, 0
      %s115 = scalar_select %p114, %s113, 0
      %s116 = smul.u32 %s43, 8
      %s117 = ssub.s32 %s116, 1
      %p118 = scmp.gt.s32.totalorder %s117, 0
      %s119 = scalar_select %p118, %s117, 0
      %s120 = ssub.s32 %s35, %s47
      %s121 = ssub.s32 %s115, %s119
      %s122 = sor.u32 %s120, %s121
      %p123 = scmp.eq.s32.totalorder %s122, 0
      %s125 = sadd.s32 %s124, 1
      %s126 = scalar_select %p123, %s124, %s125
      %p129 = pneg %p123
      %p130 = scmp.eq.s32.totalorder %s28, 3
      %p131 = por %p129, %p130
      %p132 = scmp.ne.s32.totalorder %s124, %s127
      %p133 = scmp.eq.s32.totalorder %s28, 0
      %p134 = por %p132, %p133
      %p135 = scmp.ne.s32.totalorder %s124, %s127
      %p136 = scmp.eq.s32.totalorder %s33, 3
      %p137 = por %p135, %p136
      %p138 = scmp.ne.s32.totalorder %s127, %s128
      %p139 = scmp.eq.s32.totalorder %s33, 0
      %p140 = por %p138, %p139
      %p141 = scmp.ne.s32.totalorder %s127, %s128
      %p142 = scmp.eq.s32.totalorder %s34, 3
      %p143 = por %p141, %p142
      %p145 = scmp.ne.s32.totalorder %s128, %s144
      %p146 = scmp.eq.s32.totalorder %s34, 0
      %p147 = por %p145, %p146
      %s148 = sadd.s32 %s36, 1
      %s149 = smul.u32 %s148, 8
      %p150 = scmp.lt.s32.totalorder %s149, 15
      %s151 = scalar_select %p150, %s149, 15
      %s152 = sadd.s32 %s43, 1
      %s153 = smul.u32 %s152, 8
      %p154 = scmp.lt.s32.totalorder %s153, 15
      %s155 = scalar_select %p154, %s153, 15
      %s156 = ssub.s32 %s35, %s47
      %s157 = ssub.s32 %s151, %s155
      %s158 = sor.u32 %s156, %s157
      %p159 = scmp.eq.s32.totalorder %s158, 0
      %s161 = sadd.s32 %s160, 1
      %s162 = scalar_select %p159, %s160, %s161
      %p165 = pneg %p159
      %p166 = scmp.eq.s32.totalorder %s28, 3
      %p167 = por %p165, %p166
      %p168 = scmp.ne.s32.totalorder %s160, %s163
      %p169 = scmp.eq.s32.totalorder %s28, 0
      %p170 = por %p168, %p169
      %p171 = scmp.ne.s32.totalorder %s160, %s163
      %p172 = scmp.eq.s32.totalorder %s33, 3
      %p173 = por %p171, %p172
      %p174 = scmp.ne.s32.totalorder %s163, %s164
      %p175 = scmp.eq.s32.totalorder %s33, 0
      %p176 = por %p174, %p175
      %p177 = scmp.ne.s32.totalorder %s163, %s164
      %p178 = scmp.eq.s32.totalorder %s34, 3
      %p179 = por %p177, %p178
      %p181 = scmp.ne.s32.totalorder %s164, %s180
      %p182 = scmp.eq.s32.totalorder %s34, 0
      %p183 = por %p181, %p182
      %s184 = sadd.s32 %s36, 1
      %s185 = smul.u32 %s184, 8
      %s186 = sadd.s32 %s185, 1
      %p187 = scmp.lt.s32.totalorder %s186, 15
      %s188 = scalar_select %p187, %s186, 15
      %s189 = sadd.s32 %s43, 1
      %s190 = smul.u32 %s189, 8
      %s191 = sadd.s32 %s190, 1
      %p192 = scmp.lt.s32.totalorder %s191, 15
      %s193 = scalar_select %p192, %s191, 15
      %s194 = ssub.s32 %s35, %s47
      %s195 = ssub.s32 %s188, %s193
      %s196 = sor.u32 %s194, %s195
      %p197 = scmp.eq.s32.totalorder %s196, 0
      %s199 = sadd.s32 %s198, 1
      %s200 = scalar_select %p197, %s198, %s199
      %p203 = pneg %p197
      %p204 = scmp.eq.s32.totalorder %s28, 3
      %p205 = por %p203, %p204
      %p206 = scmp.ne.s32.totalorder %s198, %s201
      %p207 = scmp.eq.s32.totalorder %s28, 0
      %p208 = por %p206, %p207
      %p209 = scmp.ne.s32.totalorder %s198, %s201
      %p210 = scmp.eq.s32.totalorder %s33, 3
      %p211 = por %p209, %p210
      %p212 = scmp.ne.s32.totalorder %s201, %s202
      %p213 = scmp.eq.s32.totalorder %s33, 0
      %p214 = por %p212, %p213
      %p215 = scmp.ne.s32.totalorder %s201, %s202
      %p216 = scmp.eq.s32.totalorder %s34, 3
      %p217 = por %p215, %p216
      %p219 = scmp.ne.s32.totalorder %s202, %s218
      %p220 = scmp.eq.s32.totalorder %s34, 0
      %p221 = por %p219, %p220
      %s223 = sadd.s32 %s222, 1
      %p226 = scmp.eq.s32.totalorder %s28, 3
      %p227 = scmp.ne.s32.totalorder %s222, %s224
      %p228 = scmp.eq.s32.totalorder %s28, 0
      %p229 = por %p227, %p228
      %p230 = scmp.ne.s32.totalorder %s222, %s224
      %p231 = scmp.eq.s32.totalorder %s33, 3
      %p232 = por %p230, %p231
      %p233 = scmp.ne.s32.totalorder %s224, %s225
      %p234 = scmp.eq.s32.totalorder %s33, 0
      %p235 = por %p233, %p234
      %p236 = scmp.ne.s32.totalorder %s224, %s225
      %p237 = scmp.eq.s32.totalorder %s34, 3
      %p238 = por %p236, %p237
      %p240 = scmp.ne.s32.totalorder %s225, %s239
      %p241 = scmp.eq.s32.totalorder %s34, 0
      %p242 = por %p240, %p241
      %s244 = sadd.s32 %s243, 1
      %p247 = scmp.eq.s32.totalorder %s28, 3
      %p248 = scmp.ne.s32.totalorder %s243, %s245
      %p249 = scmp.eq.s32.totalorder %s28, 0
      %p250 = por %p248, %p249
      %p251 = scmp.ne.s32.totalorder %s243, %s245
      %p252 = scmp.eq.s32.totalorder %s33, 3
      %p253 = por %p251, %p252
      %p254 = scmp.ne.s32.totalorder %s245, %s246
      %p255 = scmp.eq.s32.totalorder %s33, 0
      %p256 = por %p254, %p255
      %p257 = scmp.ne.s32.totalorder %s245, %s246
      %p258 = scmp.eq.s32.totalorder %s34, 3
      %p259 = por %p257, %p258
      %p261 = scmp.ne.s32.totalorder %s246, %s260
      %p262 = scmp.eq.s32.totalorder %s34, 0
      %p263 = por %p261, %p262
      %s265 = sadd.s32 %s264, 1
      %p268 = scmp.eq.s32.totalorder %s28, 3
      %p269 = scmp.ne.s32.totalorder %s264, %s266
      %p270 = scmp.eq.s32.totalorder %s28, 0
      %p271 = por %p269, %p270
      %p272 = scmp.ne.s32.totalorder %s264, %s266
      %p273 = scmp.eq.s32.totalorder %s33, 3
      %p274 = por %p272, %p273
      %p275 = scmp.ne.s32.totalorder %s266, %s267
      %p276 = scmp.eq.s32.totalorder %s33, 0
      %p277 = por %p275, %p276
      %p278 = scmp.ne.s32.totalorder %s266, %s267
      %p279 = scmp.eq.s32.totalorder %s34, 3
      %p280 = por %p278, %p279
      %p282 = scmp.ne.s32.totalorder %s267, %s281
      %p283 = scmp.eq.s32.totalorder %s34, 0
      %p284 = por %p282, %p283
      %s286 = sadd.s32 %s285, 1
      %p289 = scmp.eq.s32.totalorder %s28, 3
      %p290 = scmp.ne.s32.totalorder %s285, %s287
      %p291 = scmp.eq.s32.totalorder %s28, 0
      %p292 = por %p290, %p291
      %p293 = scmp.ne.s32.totalorder %s285, %s287
      %p294 = scmp.eq.s32.totalorder %s33, 3
      %p295 = por %p293, %p294
      %p296 = scmp.ne.s32.totalorder %s287, %s288
      %p297 = scmp.eq.s32.totalorder %s33, 0
      %p298 = por %p296, %p297
      %p299 = scmp.ne.s32.totalorder %s287, %s288
      %p300 = scmp.eq.s32.totalorder %s34, 3
      %p301 = por %p299, %p300
      %p303 = scmp.ne.s32.totalorder %s288, %s302
      %p304 = scmp.eq.s32.totalorder %s34, 0
      %p305 = por %p303, %p304
      %s306 = ssub.s32 %s35, %s47
      %s307 = ssub.s32 %s36, %s43
      %s308 = sor.u32 %s306, %s307
      %p309 = scmp.eq.s32.totalorder %s308, 0
      %s311 = sadd.s32 %s310, 1
      %s312 = scalar_select %p309, %s310, %s311
      %p315 = pneg %p309
      %p316 = scmp.eq.s32.totalorder %s28, 3
      %p317 = por %p315, %p316
      %p318 = scmp.ne.s32.totalorder %s310, %s313
      %p319 = scmp.eq.s32.totalorder %s28, 0
      %p320 = por %p318, %p319
      %p321 = scmp.ne.s32.totalorder %s310, %s313
      %p322 = scmp.eq.s32.totalorder %s33, 3
      %p323 = por %p321, %p322
      %p324 = scmp.ne.s32.totalorder %s313, %s314
      %p325 = scmp.eq.s32.totalorder %s33, 0
      %p326 = por %p324, %p325
      %p327 = scmp.ne.s32.totalorder %s313, %s314
      %p328 = scmp.eq.s32.totalorder %s34, 3
      %p329 = por %p327, %p328
      %p331 = scmp.ne.s32.totalorder %s314, %s330
      %p332 = scmp.eq.s32.totalorder %s34, 0
      %p333 = por %p331, %p332
      %p334 = scmp.le.s32.totalorder 1, %s28
      %p335 = scmp.lt.s32.totalorder %s28, 5
      %p336 = pnand %p334, %p335
      %p337 = pneg %p336
      // Predicated region
      $region9: #{tpu_custom_call.1} parent=5 // pred_check
        _
      $region10: #{tpu_custom_call.1} parent=5 // pred_check_branch
        %339 = sbr.rel (%p336) target = $region12
      $region11: #{tpu_custom_call.1} parent=5 // pred_region
        %s340 = ssub.s32 %s28, 1
        // Predicated region
        $region13: #{tpu_custom_call.1} parent=11 // pred_check
          %p341 = pneg %p235
        $region14: #{tpu_custom_call.1} parent=11 // pred_check_branch
          %343 = sbr.rel (%p341) target = $region16
        $region15: #{tpu_custom_call.1} parent=11 // pred_region
          %s345 = ssub.s32 18432, 18432
          %346 = vsyncadd [#allocation14], %s345
          %s347 = sshll.u32 [#allocation13], 4
          %s348 = int_to_ptr.vmem [resolvable:$true] %s347
          %353 = dma.hbm_to_vmem [thread:$0]  %s5, 18432, %s348, [#allocation14], 128, 128, 8
        $region16: #{tpu_custom_call.1} parent=11 // pred_fallthru
          _
        // Predicated region
        $region17: #{tpu_custom_call.1} parent=11 // pred_check
          %p354 = pneg %p256
        $region18: #{tpu_custom_call.1} parent=11 // pred_check_branch
          %356 = sbr.rel (%p354) target = $region20
        $region19: #{tpu_custom_call.1} parent=11 // pred_region
          _
        $region20: #{tpu_custom_call.1} parent=11 // pred_fallthru
          _
        // Predicated region
        $region21: #{tpu_custom_call.1} parent=11 // pred_check
          %p357 = pneg %p277
        $region22: #{tpu_custom_call.1} parent=11 // pred_check_branch
          %359 = sbr.rel (%p357) target = $region24
        $region23: #{tpu_custom_call.1} parent=11 // pred_region
          %s361 = ssub.s32 18432, 18432
          %362 = vsyncadd [#allocation14], %s361
          %s363 = sshll.u32 [#allocation15], 4
          %s364 = int_to_ptr.vmem [resolvable:$true] %s363
          %369 = dma.hbm_to_vmem [thread:$0]  %s7, 18432, %s364, [#allocation14], 128, 128, 8
        $region24: #{tpu_custom_call.1} parent=11 // pred_fallthru
          _
        // Predicated region
        $region25: #{tpu_custom_call.1} parent=11 // pred_check
          %p370 = pneg %p298
        $region26: #{tpu_custom_call.1} parent=11 // pred_check_branch
          %372 = sbr.rel (%p370) target = $region28
        $region27: #{tpu_custom_call.1} parent=11 // pred_region
          _
        $region28: #{tpu_custom_call.1} parent=11 // pred_fallthru
          _
      $region12: #{tpu_custom_call.1} parent=5 // pred_fallthru
        _
      %p373 = scmp.lt.s32.totalorder %s28, 4
      // Predicated region
      $region29: #{tpu_custom_call.1} parent=5 // pred_check
        %p374 = pneg %p373
      $region30: #{tpu_custom_call.1} parent=5 // pred_check_branch
        %376 = sbr.rel (%p374) target = $region32
      $region31: #{tpu_custom_call.1} parent=5 // pred_region
        // Predicated region
        $region33: #{tpu_custom_call.1} parent=31 // pred_check
          %p377 = pneg %p62
        $region34: #{tpu_custom_call.1} parent=31 // pred_check_branch
          %379 = sbr.rel (%p377) target = $region36
        $region35: #{tpu_custom_call.1} parent=31 // pred_region
          %s380 = sand.u32 %s52, 1
          %s381 = scalar_lea.sflag [#allocation5], %s380
          %s382 = sand.u32 %s52, 1
          %s383 = smul.addr %s382, 128
          %s384 = scalar_lea.vmem [#allocation4], %s383
          %s385 = smul.u32 8, %s36
          %s387 = ssub.s32 2048, 2048
          %388 = vsyncadd %s381, %s387
          %s389 = smul.addr %s385, 2
          %s390 = smul.addr %s35, 32
          %s391 = sadd.s32 %s389, %s390
          %s392 = smul.addr %s391, 128
          %s393 = scalar_lea.hbm %s0, %s392
          %s394 = sshll.u32 %s384, 4
          %s395 = int_to_ptr.vmem [resolvable:$true] %s394
          %400 = dma.hbm_to_vmem [thread:$0]  %s393, 2048, %s395, %s381, 128, 128, 8
        $region36: #{tpu_custom_call.1} parent=31 // pred_fallthru
          _
        // Predicated region
        $region37: #{tpu_custom_call.1} parent=31 // pred_check
          %p401 = pneg %p98
        $region38: #{tpu_custom_call.1} parent=31 // pred_check_branch
          %403 = sbr.rel (%p401) target = $region40
        $region39: #{tpu_custom_call.1} parent=31 // pred_region
          %s404 = sand.u32 %s28, 1
          %s405 = scalar_lea.sflag [#allocation8], %s404
          %s406 = sand.u32 %s88, 1
          %s407 = smul.addr %s406, 16
          %s408 = scalar_lea.vmem [#allocation7], %s407
          %s409 = smul.u32 %s36, 8
          %s410 = ssub.s32 %s409, 2
          %p411 = scmp.gt.s32.totalorder %s410, 0
          %s412 = scalar_select %p411, %s410, 0
          %s414 = ssub.s32 256, 256
          %415 = vsyncadd %s405, %s414
          %s416 = smul.addr %s412, 2
          %s417 = smul.addr %s35, 32
          %s418 = sadd.s32 %s416, %s417
          %s419 = smul.addr %s418, 128
          %s420 = scalar_lea.hbm %s1, %s419
          %s421 = sshll.u32 %s408, 4
          %s422 = int_to_ptr.vmem [resolvable:$true] %s421
          %427 = dma.hbm_to_vmem [thread:$0]  %s420, 256, %s422, %s405, 128, 128, 8
        $region40: #{tpu_custom_call.1} parent=31 // pred_fallthru
          _
        // Predicated region
        $region41: #{tpu_custom_call.1} parent=31 // pred_check
          %p428 = pneg %p134
        $region42: #{tpu_custom_call.1} parent=31 // pred_check_branch
          %430 = sbr.rel (%p428) target = $region44
        $region43: #{tpu_custom_call.1} parent=31 // pred_region
          %s431 = sand.u32 %s28, 1
          %s432 = scalar_lea.sflag [#allocation8], %s431
          %s433 = sand.u32 %s124, 1
          %s434 = smul.addr %s433, 16
          %s435 = scalar_lea.vmem [#allocation9], %s434
          %s436 = smul.u32 %s36, 8
          %s437 = ssub.s32 %s436, 1
          %p438 = scmp.gt.s32.totalorder %s437, 0
          %s439 = scalar_select %p438, %s437, 0
          %s441 = ssub.s32 256, 256
          %442 = vsyncadd %s432, %s441
          %s443 = smul.addr %s439, 2
          %s444 = smul.addr %s35, 32
          %s445 = sadd.s32 %s443, %s444
          %s446 = smul.addr %s445, 128
          %s447 = scalar_lea.hbm %s2, %s446
          %s448 = sshll.u32 %s435, 4
          %s449 = int_to_ptr.vmem [resolvable:$true] %s448
          %454 = dma.hbm_to_vmem [thread:$0]  %s447, 256, %s449, %s432, 128, 128, 8
        $region44: #{tpu_custom_call.1} parent=31 // pred_fallthru
          _
        // Predicated region
        $region45: #{tpu_custom_call.1} parent=31 // pred_check
          %p455 = pneg %p170
        $region46: #{tpu_custom_call.1} parent=31 // pred_check_branch
          %457 = sbr.rel (%p455) target = $region48
        $region47: #{tpu_custom_call.1} parent=31 // pred_region
          %s458 = sand.u32 %s28, 1
          %s459 = scalar_lea.sflag [#allocation11], %s458
          %s460 = sand.u32 %s160, 1
          %s461 = smul.addr %s460, 16
          %s462 = scalar_lea.vmem [#allocation10], %s461
          %s463 = sadd.s32 %s36, 1
          %s464 = smul.u32 %s463, 8
          %p465 = scmp.lt.s32.totalorder %s464, 15
          %s466 = scalar_select %p465, %s464, 15
          %s468 = ssub.s32 256, 256
          %469 = vsyncadd %s459, %s468
          %s470 = smul.addr %s466, 2
          %s471 = smul.addr %s35, 32
          %s472 = sadd.s32 %s470, %s471
          %s473 = smul.addr %s472, 128
          %s474 = scalar_lea.hbm %s3, %s473
          %s475 = sshll.u32 %s462, 4
          %s476 = int_to_ptr.vmem [resolvable:$true] %s475
          %481 = dma.hbm_to_vmem [thread:$0]  %s474, 256, %s476, %s459, 128, 128, 8
        $region48: #{tpu_custom_call.1} parent=31 // pred_fallthru
          _
        // Predicated region
        $region49: #{tpu_custom_call.1} parent=31 // pred_check
          %p482 = pneg %p208
        $region50: #{tpu_custom_call.1} parent=31 // pred_check_branch
          %484 = sbr.rel (%p482) target = $region52
        $region51: #{tpu_custom_call.1} parent=31 // pred_region
          %s485 = sand.u32 %s28, 1
          %s486 = scalar_lea.sflag [#allocation11], %s485
          %s487 = sand.u32 %s198, 1
          %s488 = smul.addr %s487, 16
          %s489 = scalar_lea.vmem [#allocation12], %s488
          %s490 = sadd.s32 %s36, 1
          %s491 = smul.u32 %s490, 8
          %s492 = sadd.s32 %s491, 1
          %p493 = scmp.lt.s32.totalorder %s492, 15
          %s494 = scalar_select %p493, %s492, 15
          %s496 = ssub.s32 256, 256
          %497 = vsyncadd %s486, %s496
          %s498 = smul.addr %s494, 2
          %s499 = smul.addr %s35, 32
          %s500 = sadd.s32 %s498, %s499
          %s501 = smul.addr %s500, 128
          %s502 = scalar_lea.hbm %s4, %s501
          %s503 = sshll.u32 %s489, 4
          %s504 = int_to_ptr.vmem [resolvable:$true] %s503
          %509 = dma.hbm_to_vmem [thread:$0]  %s502, 256, %s504, %s486, 128, 128, 8
        $region52: #{tpu_custom_call.1} parent=31 // pred_fallthru
          _
      $region32: #{tpu_custom_call.1} parent=5 // pred_fallthru
        _
      %p510 = scmp.le.s32.totalorder 1, %s28
      %p511 = scmp.lt.s32.totalorder %s28, 5
      %p512 = pnand %p510, %p511
      %p513 = pneg %p512
      // Predicated region
      $region53: #{tpu_custom_call.1} parent=5 // pred_check
        _
      $region54: #{tpu_custom_call.1} parent=5 // pred_check_branch
        %515 = sbr.rel (%p512) target = $region56
      $region55: #{tpu_custom_call.1} parent=5 // pred_region
        %s516 = ssub.s32 %s28, 1
        %s517 = sand.u32 %s55, 1
        %s518 = scalar_lea.sflag [#allocation5], %s517
        %s519 = sand.u32 %s55, 1
        %s520 = smul.addr %s519, 128
        %s521 = scalar_lea.vmem [#allocation4], %s520
        // Predicated region
        $region57: #{tpu_custom_call.1} parent=55 // pred_check
          %p522 = pneg %p68
        $region58: #{tpu_custom_call.1} parent=55 // pred_check_branch
          %524 = sbr.rel (%p522) target = $region60
        $region59: #{tpu_custom_call.1} parent=55 // pred_region
          %525 = dma.done %s518, 2048
        $region60: #{tpu_custom_call.1} parent=55 // pred_fallthru
          _
        %s526 = sand.u32 %s33, 1
        %s527 = scalar_lea.sflag [#allocation8], %s526
        %s528 = sand.u32 %s91, 1
        %s529 = smul.addr %s528, 16
        %s530 = scalar_lea.vmem [#allocation7], %s529
        // Predicated region
        $region61: #{tpu_custom_call.1} parent=55 // pred_check
          %p531 = pneg %p104
        $region62: #{tpu_custom_call.1} parent=55 // pred_check_branch
          %533 = sbr.rel (%p531) target = $region64
        $region63: #{tpu_custom_call.1} parent=55 // pred_region
          %534 = dma.done %s527, 256
        $region64: #{tpu_custom_call.1} parent=55 // pred_fallthru
          _
        %s535 = sand.u32 %s33, 1
        %s536 = scalar_lea.sflag [#allocation8], %s535
        %s537 = sand.u32 %s127, 1
        %s538 = smul.addr %s537, 16
        %s539 = scalar_lea.vmem [#allocation9], %s538
        // Predicated region
        $region65: #{tpu_custom_call.1} parent=55 // pred_check
          %p540 = pneg %p140
        $region66: #{tpu_custom_call.1} parent=55 // pred_check_branch
          %542 = sbr.rel (%p540) target = $region68
        $region67: #{tpu_custom_call.1} parent=55 // pred_region
          %543 = dma.done %s536, 256
        $region68: #{tpu_custom_call.1} parent=55 // pred_fallthru
          _
        %s544 = sand.u32 %s33, 1
        %s545 = scalar_lea.sflag [#allocation11], %s544
        %s546 = sand.u32 %s163, 1
        %s547 = smul.addr %s546, 16
        %s548 = scalar_lea.vmem [#allocation10], %s547
        // Predicated region
        $region69: #{tpu_custom_call.1} parent=55 // pred_check
          %p549 = pneg %p176
        $region70: #{tpu_custom_call.1} parent=55 // pred_check_branch
          %551 = sbr.rel (%p549) target = $region72
        $region71: #{tpu_custom_call.1} parent=55 // pred_region
          %552 = dma.done %s545, 256
        $region72: #{tpu_custom_call.1} parent=55 // pred_fallthru
          _
        %s553 = sand.u32 %s33, 1
        %s554 = scalar_lea.sflag [#allocation11], %s553
        %s555 = sand.u32 %s201, 1
        %s556 = smul.addr %s555, 16
        %s557 = scalar_lea.vmem [#allocation12], %s556
        // Predicated region
        $region73: #{tpu_custom_call.1} parent=55 // pred_check
          %p558 = pneg %p214
        $region74: #{tpu_custom_call.1} parent=55 // pred_check_branch
          %560 = sbr.rel (%p558) target = $region76
        $region75: #{tpu_custom_call.1} parent=55 // pred_region
          %561 = dma.done %s554, 256
        $region76: #{tpu_custom_call.1} parent=55 // pred_fallthru
          _
        // Predicated region
        $region77: #{tpu_custom_call.1} parent=55 // pred_check
          %p562 = pneg %p235
        $region78: #{tpu_custom_call.1} parent=55 // pred_check_branch
          %564 = sbr.rel (%p562) target = $region80
        $region79: #{tpu_custom_call.1} parent=55 // pred_region
          %565 = dma.done [#allocation14], 18432
        $region80: #{tpu_custom_call.1} parent=55 // pred_fallthru
          _
        // Predicated region
        $region81: #{tpu_custom_call.1} parent=55 // pred_check
          %p566 = pneg %p277
        $region82: #{tpu_custom_call.1} parent=55 // pred_check_branch
          %568 = sbr.rel (%p566) target = $region84
        $region83: #{tpu_custom_call.1} parent=55 // pred_region
          %569 = dma.done [#allocation14], 18432
        $region84: #{tpu_custom_call.1} parent=55 // pred_fallthru
          _
        %s570 = sand.u32 %s55, 1
        %s571 = scalar_lea.sflag [#allocation5], %s570
        %s572 = sand.u32 %s55, 1
        %s573 = smul.addr %s572, 128
        %s574 = scalar_lea.vmem [#allocation4], %s573
        %p575 = pneg %p68
        %p576 = pneg %p65
        %s577 = sand.u32 %s33, 1
        %s578 = scalar_lea.sflag [#allocation8], %s577
        %s579 = sand.u32 %s91, 1
        %s580 = smul.addr %s579, 16
        %s581 = scalar_lea.vmem [#allocation7], %s580
        %p582 = pneg %p104
        %p583 = pneg %p101
        %s584 = sand.u32 %s33, 1
        %s585 = scalar_lea.sflag [#allocation8], %s584
        %s586 = sand.u32 %s127, 1
        %s587 = smul.addr %s586, 16
        %s588 = scalar_lea.vmem [#allocation9], %s587
        %p589 = pneg %p140
        %p590 = pneg %p137
        %s591 = sand.u32 %s33, 1
        %s592 = scalar_lea.sflag [#allocation11], %s591
        %s593 = sand.u32 %s163, 1
        %s594 = smul.addr %s593, 16
        %s595 = scalar_lea.vmem [#allocation10], %s594
        %p596 = pneg %p176
        %p597 = pneg %p173
        %s598 = sand.u32 %s33, 1
        %s599 = scalar_lea.sflag [#allocation11], %s598
        %s600 = sand.u32 %s201, 1
        %s601 = smul.addr %s600, 16
        %s602 = scalar_lea.vmem [#allocation12], %s601
        %p603 = pneg %p214
        %p604 = pneg %p211
        %p605 = pneg %p235
        %p606 = pneg %p232
        %p607 = pneg %p256
        %p608 = pneg %p253
        %p609 = pneg %p277
        %p610 = pneg %p274
        %p611 = pneg %p298
        %p612 = pneg %p295
        %p613 = pneg %p326
        %p614 = pneg %p323
        %s615 = sand.u32 %s313, 1
        %s616 = scalar_lea.sflag [#allocation6], %s615
        %s617 = sand.u32 %s313, 1
        %s618 = smul.addr %s617, 128
        %s619 = scalar_lea.vmem [#allocation16], %s618
        %s620 = smul.u32 8, %s38
        %s621 = smul.u32 %s38, 8
        %s622 = ssub.s32 %s621, 2
        %p623 = scmp.gt.s32.totalorder %s622, 0
        %s624 = scalar_select %p623, %s622, 0
        %s625 = smul.u32 %s38, 8
        %s626 = ssub.s32 %s625, 1
        %p627 = scmp.gt.s32.totalorder %s626, 0
        %s628 = scalar_select %p627, %s626, 0
        %s629 = sadd.s32 %s38, 1
        %s630 = smul.u32 %s629, 8
        %p631 = scmp.lt.s32.totalorder %s630, 15
        %s632 = scalar_select %p631, %s630, 15
        %s633 = sadd.s32 %s38, 1
        %s634 = smul.u32 %s633, 8
        %s635 = sadd.s32 %s634, 1
        %p636 = scmp.lt.s32.totalorder %s635, 15
        %s637 = scalar_select %p636, %s635, 15
        %s638 = smul.u32 8, %s38
        %s639 = smul.u32 %s38, 8
        %640 = vst [vmem:[#allocation2] sm:$0xff] 0.0
        %641 = vst [vmem:[#allocation2 + $0x8] sm:$0xff] 0.0
        %642 = vst [vmem:[#allocation2 + $0x10] sm:$0xff] 0.0
        %643 = vst [vmem:[#allocation2 + $0x138] sm:$0xff] 0.0
        %644 = vst [vmem:[#allocation2 + $0x140] sm:$0xff] 0.0
        %645 = vst [vmem:[#allocation2 + $0x148] sm:$0xff] 0.0
        %646 = vst [vmem:[#allocation2 + $0x28] sm:$0xff] 0.0
        %647 = vst [vmem:[#allocation2 + $0x40] sm:$0xff] 0.0
        %648 = vst [vmem:[#allocation2 + $0x58] sm:$0xff] 0.0
        %649 = vst [vmem:[#allocation2 + $0x70] sm:$0xff] 0.0
        %650 = vst [vmem:[#allocation2 + $0x88] sm:$0xff] 0.0
        %651 = vst [vmem:[#allocation2 + $0xa0] sm:$0xff] 0.0
        %652 = vst [vmem:[#allocation2 + $0xb8] sm:$0xff] 0.0
        %653 = vst [vmem:[#allocation2 + $0xd0] sm:$0xff] 0.0
        %654 = vst [vmem:[#allocation2 + $0xe8] sm:$0xff] 0.0
        %655 = vst [vmem:[#allocation2 + $0x100] sm:$0xff] 0.0
        %656 = vst [vmem:[#allocation2 + $0x118] sm:$0xff] 0.0
        %657 = vst [vmem:[#allocation2 + $0x130] sm:$0xff] 0.0
        %658 = vst [vmem:[#allocation3] sm:$0xff] 0.0
        %659 = vst [vmem:[#allocation3 + $0x8] sm:$0xff] 0.0
        %660 = vst [vmem:[#allocation3 + $0x10] sm:$0xff] 0.0
        %661 = vst [vmem:[#allocation3 + $0x108] sm:$0xff] 0.0
        %662 = vst [vmem:[#allocation3 + $0x110] sm:$0xff] 0.0
        %663 = vst [vmem:[#allocation3 + $0x118] sm:$0xff] 0.0
        %664 = vst [vmem:[#allocation3 + $0x28] sm:$0xff] 0.0
        %665 = vst [vmem:[#allocation3 + $0x40] sm:$0xff] 0.0
        %666 = vst [vmem:[#allocation3 + $0x58] sm:$0xff] 0.0
        %667 = vst [vmem:[#allocation3 + $0x70] sm:$0xff] 0.0
        %668 = vst [vmem:[#allocation3 + $0x88] sm:$0xff] 0.0
        %669 = vst [vmem:[#allocation3 + $0xa0] sm:$0xff] 0.0
        %670 = vst [vmem:[#allocation3 + $0xb8] sm:$0xff] 0.0
        %671 = vst [vmem:[#allocation3 + $0xd0] sm:$0xff] 0.0
        %672 = vst [vmem:[#allocation3 + $0xe8] sm:$0xff] 0.0
        %673 = vst [vmem:[#allocation3 + $0x100] sm:$0xff] 0.0
        %v674 = vld [vmem:[%s521] sm:$0xff]
        %v675 = vld [vmem:[%s521 + $0x8] sm:$0xff]
        %v676 = vmax.f32 %v674, 0.0
        %v677 = vmax.f32 %v675, 0.0
        %678 = vst [vmem:[#allocation2 + $0x48] sm:$0xff] %v676
        %679 = vst [vmem:[#allocation2 + $0x50] sm:$0xff] %v677
        %s680 = scalar_lea.vmem %s521, 16 [#allocation4]
        %v681 = vld [vmem:[%s680] sm:$0xff]
        %v682 = vld [vmem:[%s680 + $0x8] sm:$0xff]
        %v683 = vmax.f32 %v681, 0.0
        %v684 = vmax.f32 %v682, 0.0
        %685 = vst [vmem:[#allocation2 + $0x60] sm:$0xff] %v683
        %686 = vst [vmem:[#allocation2 + $0x68] sm:$0xff] %v684
        %s687 = scalar_lea.vmem %s521, 32 [#allocation4]
        %v688 = vld [vmem:[%s687] sm:$0xff]
        %v689 = vld [vmem:[%s687 + $0x8] sm:$0xff]
        %v690 = vmax.f32 %v688, 0.0
        %v691 = vmax.f32 %v689, 0.0
        %692 = vst [vmem:[#allocation2 + $0x78] sm:$0xff] %v690
        %693 = vst [vmem:[#allocation2 + $0x80] sm:$0xff] %v691
        %s694 = scalar_lea.vmem %s521, 48 [#allocation4]
        %v695 = vld [vmem:[%s694] sm:$0xff]
        %v696 = vld [vmem:[%s694 + $0x8] sm:$0xff]
        %v697 = vmax.f32 %v695, 0.0
        %v698 = vmax.f32 %v696, 0.0
        %699 = vst [vmem:[#allocation2 + $0x90] sm:$0xff] %v697
        %700 = vst [vmem:[#allocation2 + $0x98] sm:$0xff] %v698
        %s701 = scalar_lea.vmem %s521, 64 [#allocation4]
        %v702 = vld [vmem:[%s701] sm:$0xff]
        %v703 = vld [vmem:[%s701 + $0x8] sm:$0xff]
        %v704 = vmax.f32 %v702, 0.0
        %v705 = vmax.f32 %v703, 0.0
        %706 = vst [vmem:[#allocation2 + $0xa8] sm:$0xff] %v704
        %707 = vst [vmem:[#allocation2 + $0xb0] sm:$0xff] %v705
        %s708 = scalar_lea.vmem %s521, 80 [#allocation4]
        %v709 = vld [vmem:[%s708] sm:$0xff]
        %v710 = vld [vmem:[%s708 + $0x8] sm:$0xff]
        %v711 = vmax.f32 %v709, 0.0
        %v712 = vmax.f32 %v710, 0.0
        %713 = vst [vmem:[#allocation2 + $0xc0] sm:$0xff] %v711
        %714 = vst [vmem:[#allocation2 + $0xc8] sm:$0xff] %v712
        %s715 = scalar_lea.vmem %s521, 96 [#allocation4]
        %v716 = vld [vmem:[%s715] sm:$0xff]
        %v717 = vld [vmem:[%s715 + $0x8] sm:$0xff]
        %v718 = vmax.f32 %v716, 0.0
        %v719 = vmax.f32 %v717, 0.0
        %720 = vst [vmem:[#allocation2 + $0xd8] sm:$0xff] %v718
        %721 = vst [vmem:[#allocation2 + $0xe0] sm:$0xff] %v719
        %s722 = scalar_lea.vmem %s521, 112 [#allocation4]
        %v723 = vld [vmem:[%s722] sm:$0xff]
        %v724 = vld [vmem:[%s722 + $0x8] sm:$0xff]
        %v725 = vmax.f32 %v723, 0.0
        %v726 = vmax.f32 %v724, 0.0
        %727 = vst [vmem:[#allocation2 + $0xf0] sm:$0xff] %v725
        %728 = vst [vmem:[#allocation2 + $0xf8] sm:$0xff] %v726
        %s729 = ssub.s32 %s639, 2
        %p730 = scmp.ge.s32.totalorder %s729, 0
        %v731 = vld [vmem:[%s530] sm:$0xff]
        %v732 = vld [vmem:[%s530 + $0x8] sm:$0xff]
        %v733 = vmax.f32 %v731, 0.0
        %v734 = vmax.f32 %v732, 0.0
        %s735 = scalar_select %p730, 1, 0
        %v736 = vstv %s735
        %vm737 = vcmp.eq.s32.totalorder %v736, 1
        %v738 = vsel %vm737, %v733, 0.0
        %v739 = vsel %vm737, %v734, 0.0
        %740 = vst [vmem:[#allocation2 + $0x18] sm:$0xff] %v738
        %741 = vst [vmem:[#allocation2 + $0x20] sm:$0xff] %v739
        %s742 = ssub.s32 %s639, 1
        %p743 = scmp.ge.s32.totalorder %s742, 0
        %v744 = vld [vmem:[%s539] sm:$0xff]
        %v745 = vld [vmem:[%s539 + $0x8] sm:$0xff]
        %v746 = vmax.f32 %v744, 0.0
        %v747 = vmax.f32 %v745, 0.0
        %s748 = scalar_select %p743, 1, 0
        %v749 = vstv %s748
        %vm750 = vcmp.eq.s32.totalorder %v749, 1
        %v751 = vsel %vm750, %v746, 0.0
        %v752 = vsel %vm750, %v747, 0.0
        %753 = vst [vmem:[#allocation2 + $0x30] sm:$0xff] %v751
        %754 = vst [vmem:[#allocation2 + $0x38] sm:$0xff] %v752
        %s755 = sadd.s32 %s639, 8
        %p756 = scmp.le.s32.totalorder %s755, 15
        %v757 = vld [vmem:[%s548] sm:$0xff]
        %v758 = vld [vmem:[%s548 + $0x8] sm:$0xff]
        %v759 = vmax.f32 %v757, 0.0
        %v760 = vmax.f32 %v758, 0.0
        %s761 = scalar_select %p756, 1, 0
        %v762 = vstv %s761
        %vm763 = vcmp.eq.s32.totalorder %v762, 1
        %v764 = vsel %vm763, %v759, 0.0
        %v765 = vsel %vm763, %v760, 0.0
        %766 = vst [vmem:[#allocation2 + $0x108] sm:$0xff] %v764
        %767 = vst [vmem:[#allocation2 + $0x110] sm:$0xff] %v765
        %s768 = sadd.s32 %s639, 9
        %p769 = scmp.le.s32.totalorder %s768, 15
        %v770 = vld [vmem:[%s557] sm:$0xff]
        %v771 = vld [vmem:[%s557 + $0x8] sm:$0xff]
        %v772 = vmax.f32 %v770, 0.0
        %v773 = vmax.f32 %v771, 0.0
        %s774 = scalar_select %p769, 1, 0
        %v775 = vstv %s774
        %vm776 = vcmp.eq.s32.totalorder %v775, 1
        %v777 = vsel %vm776, %v772, 0.0
        %v778 = vsel %vm776, %v773, 0.0
        %779 = vst [vmem:[#allocation2 + $0x120] sm:$0xff] %v777
        %780 = vst [vmem:[#allocation2 + $0x128] sm:$0xff] %v778
        %v781 = vld [vmem:[%s6] sm:$0x1]
        %v782 = vld [vmem:[%s8] sm:$0x1]
        %v783 = vld [vmem:[#allocation2 + $0x17] sm:$0xff]
        %v784 = vld [vmem:[#allocation2 + $0x1f] sm:$0xff]
        %v785 = vld [vmem:[#allocation2 + $0x27] sm:$0xff]
        %v786 = vld [vmem:[#allocation2 + $0x2f] sm:$0xff]
        %v787 = vld [vmem:[#allocation2 + $0x37] sm:$0xff]
        %v788 = vld [vmem:[#allocation2 + $0x3f] sm:$0xff]
        %v789 = vld [vmem:[#allocation2 + $0x47] sm:$0xff]
        %v790 = vld [vmem:[#allocation2 + $0x4f] sm:$0xff]
        %v791 = vld [vmem:[#allocation2 + $0x57] sm:$0xff]
        %v792 = vld [vmem:[#allocation2 + $0x5f] sm:$0xff]
        %v793 = vld [vmem:[#allocation2 + $0x67] sm:$0xff]
        %v794 = vld [vmem:[#allocation2 + $0x6f] sm:$0xff]
        %v795 = vld [vmem:[#allocation2 + $0x77] sm:$0xff]
        %v796 = vld [vmem:[#allocation2 + $0x7f] sm:$0xff]
        %v797 = vld [vmem:[#allocation2 + $0x87] sm:$0xff]
        %v798 = vld [vmem:[#allocation13] sm:$0xff]
        %v799 = vld [vmem:[#allocation13 + $0x8] sm:$0xff]
        %v800 = vld [vmem:[#allocation13 + $0x10] sm:$0xff]
        %v801 = vld [vmem:[#allocation13 + $0x18] sm:$0xff]
        %v802 = vld [vmem:[#allocation13 + $0x20] sm:$0xff]
        %v803 = vld [vmem:[#allocation13 + $0x28] sm:$0xff]
        %v804 = vld [vmem:[#allocation13 + $0x30] sm:$0xff]
        %v805 = vld [vmem:[#allocation13 + $0x38] sm:$0xff]
        %v806 = vld [vmem:[#allocation13 + $0x40] sm:$0xff]
        %v807 = vld [vmem:[#allocation13 + $0x48] sm:$0xff]
        %v808 = vld [vmem:[#allocation13 + $0x50] sm:$0xff]
        %v809 = vld [vmem:[#allocation13 + $0x58] sm:$0xff]
        %v810 = vld [vmem:[#allocation13 + $0x60] sm:$0xff]
        %v811 = vld [vmem:[#allocation13 + $0x68] sm:$0xff]
        %v812 = vld [vmem:[#allocation13 + $0x70] sm:$0xff]
        %v813 = vld [vmem:[#allocation13 + $0x78] sm:$0xff]
        %v814 = vld [vmem:[#allocation2 + $0x18] sm:$0xff]
        %v815 = vld [vmem:[#allocation2 + $0x20] sm:$0xff]
        %v816 = vld [vmem:[#allocation2 + $0x28] sm:$0xff]
        %v817 = vld [vmem:[#allocation2 + $0x30] sm:$0xff]
        %v818 = vld [vmem:[#allocation2 + $0x38] sm:$0xff]
        %v819 = vld [vmem:[#allocation2 + $0x40] sm:$0xff]
        %v820 = vld [vmem:[#allocation2 + $0x48] sm:$0xff]
        %v821 = vld [vmem:[#allocation2 + $0x50] sm:$0xff]
        %v822 = vld [vmem:[#allocation2 + $0x58] sm:$0xff]
        %v823 = vld [vmem:[#allocation2 + $0x60] sm:$0xff]
        %v824 = vld [vmem:[#allocation2 + $0x68] sm:$0xff]
        %v825 = vld [vmem:[#allocation2 + $0x70] sm:$0xff]
        %v826 = vld [vmem:[#allocation2 + $0x78] sm:$0xff]
        %v827 = vld [vmem:[#allocation2 + $0x80] sm:$0xff]
        %v828 = vld [vmem:[#allocation2 + $0x88] sm:$0xff]
        %s829 = scalar_lea.vmem [#allocation13], 128
        %v830 = vld [vmem:[%s829] sm:$0xff]
        %v831 = vld [vmem:[%s829 + $0x8] sm:$0xff]
        %v832 = vld [vmem:[%s829 + $0x10] sm:$0xff]
        %v833 = vld [vmem:[%s829 + $0x18] sm:$0xff]
        %v834 = vld [vmem:[%s829 + $0x20] sm:$0xff]
        %v835 = vld [vmem:[%s829 + $0x28] sm:$0xff]
        %v836 = vld [vmem:[%s829 + $0x30] sm:$0xff]
        %v837 = vld [vmem:[%s829 + $0x38] sm:$0xff]
        %v838 = vld [vmem:[%s829 + $0x40] sm:$0xff]
        %v839 = vld [vmem:[%s829 + $0x48] sm:$0xff]
        %v840 = vld [vmem:[%s829 + $0x50] sm:$0xff]
        %v841 = vld [vmem:[%s829 + $0x58] sm:$0xff]
        %v842 = vld [vmem:[%s829 + $0x60] sm:$0xff]
        %v843 = vld [vmem:[%s829 + $0x68] sm:$0xff]
        %v844 = vld [vmem:[%s829 + $0x70] sm:$0xff]
        %v845 = vld [vmem:[%s829 + $0x78] sm:$0xff]
        %846 = vmatprep.subr.mxu0 0.0
        %847 = vmatpush1.msra.mxu0 %v830
        %848 = vmatprep.subr.mxu0 0.0
        %849 = vmatpush1.msra.mxu0 %v831
        %850 = vmatprep.subr.mxu0 0.0
        %851 = vmatpush1.msra.mxu0 %v832
        %852 = vmatprep.subr.mxu0 0.0
        %853 = vmatpush1.msra.mxu0 %v833
        %854 = vmatprep.subr.mxu0 0.0
        %855 = vmatpush1.msra.mxu0 %v834
        %856 = vmatprep.subr.mxu0 0.0
        %857 = vmatpush1.msra.mxu0 %v835
        %858 = vmatprep.subr.mxu0 0.0
        %859 = vmatpush1.msra.mxu0 %v836
        %860 = vmatprep.subr.mxu0 0.0
        %861 = vmatpush1.msra.mxu0 %v837
        %862 = vmatprep.subr.mxu0 0.0
        %863 = vmatpush1.msra.mxu0 %v838
        %864 = vmatprep.subr.mxu0 0.0
        %865 = vmatpush1.msra.mxu0 %v839
        %866 = vmatprep.subr.mxu0 0.0
        %867 = vmatpush1.msra.mxu0 %v840
        %868 = vmatprep.subr.mxu0 0.0
        %869 = vmatpush1.msra.mxu0 %v841
        %870 = vmatprep.subr.mxu0 0.0
        %871 = vmatpush1.msra.mxu0 %v842
        %872 = vmatprep.subr.mxu0 0.0
        %873 = vmatpush1.msra.mxu0 %v843
        %874 = vmatprep.subr.mxu0 0.0
        %875 = vmatpush1.msra.mxu0 %v844
        %876 = vmatprep.subr.mxu0 0.0
        %877 = vmatpush1.msra.mxu0 %v845
        %878 = vmatprep.subr.mxu0 0.0
        %879 = vmatpush1.msra.mxu0 0.0
        %880 = vmatprep.subr.mxu0 0.0
        %881 = vmatpush1.msra.mxu0 0.0
        %882 = vmatprep.subr.mxu0 0.0
        %883 = vmatpush1.msra.mxu0 0.0
        %884 = vmatprep.subr.mxu0 0.0
        %885 = vmatpush1.msra.mxu0 0.0
        %886 = vmatprep.subr.mxu0 0.0
        %887 = vmatpush1.msra.mxu0 0.0
        %888 = vmatprep.subr.mxu0 0.0
        %889 = vmatpush1.msra.mxu0 0.0
        %890 = vmatprep.subr.mxu0 0.0
        %891 = vmatpush1.msra.mxu0 0.0
        %892 = vmatprep.subr.mxu0 0.0
        %893 = vmatpush1.msra.mxu0 0.0
        %894 = vmatprep.subr.mxu0 0.0
        %895 = vmatpush1.msra.mxu0 0.0
        %896 = vmatprep.subr.mxu0 0.0
        %897 = vmatpush1.msra.mxu0 0.0
        %898 = vmatprep.subr.mxu0 0.0
        %899 = vmatpush1.msra.mxu0 0.0
        %900 = vmatprep.subr.mxu0 0.0
        %901 = vmatpush1.msra.mxu0 0.0
        %902 = vmatprep.subr.mxu0 0.0
        %903 = vmatpush1.msra.mxu0 0.0
        %904 = vmatprep.subr.mxu0 0.0
        %905 = vmatpush1.msra.mxu0 0.0
        %906 = vmatprep.subr.mxu0 0.0
        %907 = vmatpush1.msra.mxu0 0.0
        %908 = vmatprep.subr.mxu0 0.0
        %909 = vmatpush1.msra.mxu0 0.0
        %910 = vmatprep.mubr.f32.mxu0 0.0
        %911 = vmatmul.mubr.f32.gmra.mrb[0].mxu0 %v814
        %v912 = vpop.f32.mrb[0].mxu0
        %v913 = vadd.f32 0.0, %v912
        %v914 = vpop.f32.mrb[0].mxu0
        %915 = vmatprep.mubr.f32.mxu0 0.0
        %916 = vmatmul.mubr.f32.gmra.mrb[0].mxu0 %v815
        %v917 = vpop.f32.mrb[0].mxu0
        %v918 = vadd.f32 0.0, %v917
        %v919 = vpop.f32.mrb[0].mxu0
        %920 = vmatprep.mubr.f32.mxu0 0.0
        %921 = vmatmul.mubr.f32.gmra.mrb[0].mxu0 %v816
        %v922 = vpop.f32.mrb[0].mxu0
        %v923 = vpop.f32.mrb[0].mxu0
        %924 = vmatprep.mubr.f32.mxu0 0.0
        %925 = vmatmul.mubr.f32.gmra.mrb[0].mxu0 %v817
        %v926 = vpop.f32.mrb[0].mxu0
        %v927 = vadd.f32 0.0, %v926
        %v928 = vpop.f32.mrb[0].mxu0
        %929 = vmatprep.mubr.f32.mxu0 0.0
        %930 = vmatmul.mubr.f32.gmra.mrb[0].mxu0 %v818
        %v931 = vpop.f32.mrb[0].mxu0
        %v932 = vadd.f32 0.0, %v931
        %v933 = vpop.f32.mrb[0].mxu0
        %934 = vmatprep.mubr.f32.mxu0 0.0
        %935 = vmatmul.mubr.f32.gmra.mrb[0].mxu0 %v819
        %v936 = vpop.f32.mrb[0].mxu0
        %v937 = vpop.f32.mrb[0].mxu0
        %938 = vmatprep.mubr.f32.mxu0 0.0
        %939 = vmatmul.mubr.f32.gmra.mrb[0].mxu0 %v820
        %v940 = vpop.f32.mrb[0].mxu0
        %v941 = vadd.f32 0.0, %v940
        %v942 = vpop.f32.mrb[0].mxu0
        %943 = vmatprep.mubr.f32.mxu0 0.0
        %944 = vmatmul.mubr.f32.gmra.mrb[0].mxu0 %v821
        %v945 = vpop.f32.mrb[0].mxu0
        %v946 = vadd.f32 0.0, %v945
        %v947 = vpop.f32.mrb[0].mxu0
        %948 = vmatprep.mubr.f32.mxu0 0.0
        %949 = vmatmul.mubr.f32.gmra.mrb[0].mxu0 %v822
        %v950 = vpop.f32.mrb[0].mxu0
        %v951 = vpop.f32.mrb[0].mxu0
        %952 = vmatprep.mubr.f32.mxu0 0.0
        %953 = vmatmul.mubr.f32.gmra.mrb[0].mxu0 %v823
        %v954 = vpop.f32.mrb[0].mxu0
        %v955 = vadd.f32 0.0, %v954
        %v956 = vpop.f32.mrb[0].mxu0
        %957 = vmatprep.mubr.f32.mxu0 0.0
        %958 = vmatmul.mubr.f32.gmra.mrb[0].mxu0 %v824
        %v959 = vpop.f32.mrb[0].mxu0
        %v960 = vadd.f32 0.0, %v959
        %v961 = vpop.f32.mrb[0].mxu0
        %962 = vmatprep.mubr.f32.mxu0 0.0
        %963 = vmatmul.mubr.f32.gmra.mrb[0].mxu0 %v825
        %v964 = vpop.f32.mrb[0].mxu0
        %v965 = vpop.f32.mrb[0].mxu0
        %966 = vmatprep.mubr.f32.mxu0 0.0
        %967 = vmatmul.mubr.f32.gmra.mrb[0].mxu0 %v826
        %v968 = vpop.f32.mrb[0].mxu0
        %v969 = vadd.f32 0.0, %v968
        %v970 = vpop.f32.mrb[0].mxu0
        %971 = vmatprep.mubr.f32.mxu0 0.0
        %972 = vmatmul.mubr.f32.gmra.mrb[0].mxu0 %v827
        %v973 = vpop.f32.mrb[0].mxu0
        %v974 = vadd.f32 0.0, %v973
        %v975 = vpop.f32.mrb[0].mxu0
        %976 = vmatprep.mubr.f32.mxu0 0.0
        %977 = vmatmul.mubr.f32.gmra.mrb[0].mxu0 %v828
        %v978 = vpop.f32.mrb[0].mxu0
        %v979 = vpop.f32.mrb[0].mxu0
        %980 = vdwg.mxu0
        %981 = vmatprep.subr.mxu0 0.0
        %982 = vmatpush1.msra.mxu0 %v798
        %983 = vmatprep.subr.mxu0 0.0
        %984 = vmatpush1.msra.mxu0 %v799
        %985 = vmatprep.subr.mxu0 0.0
        %986 = vmatpush1.msra.mxu0 %v800
        %987 = vmatprep.subr.mxu0 0.0
        %988 = vmatpush1.msra.mxu0 %v801
        %989 = vmatprep.subr.mxu0 0.0
        %990 = vmatpush1.msra.mxu0 %v802
        %991 = vmatprep.subr.mxu0 0.0
        %992 = vmatpush1.msra.mxu0 %v803
        %993 = vmatprep.subr.mxu0 0.0
        %994 = vmatpush1.msra.mxu0 %v804
        %995 = vmatprep.subr.mxu0 0.0
        %996 = vmatpush1.msra.mxu0 %v805
        %997 = vmatprep.subr.mxu0 0.0
        %998 = vmatpush1.msra.mxu0 %v806
        %999 = vmatprep.subr.mxu0 0.0
        %1000 = vmatpush1.msra.mxu0 %v807
        %1001 = vmatprep.subr.mxu0 0.0
        %1002 = vmatpush1.msra.mxu0 %v808
        %1003 = vmatprep.subr.mxu0 0.0
        %1004 = vmatpush1.msra.mxu0 %v809
        %1005 = vmatprep.subr.mxu0 0.0
        %1006 = vmatpush1.msra.mxu0 %v810
        %1007 = vmatprep.subr.mxu0 0.0
        %1008 = vmatpush1.msra.mxu0 %v811
        %1009 = vmatprep.subr.mxu0 0.0
        %1010 = vmatpush1.msra.mxu0 %v812
        %1011 = vmatprep.subr.mxu0 0.0
        %1012 = vmatpush1.msra.mxu0 %v813
        %1013 = vmatprep.subr.mxu0 0.0
        %1014 = vmatpush1.msra.mxu0 0.0
        %1015 = vmatprep.subr.mxu0 0.0
        %1016 = vmatpush1.msra.mxu0 0.0
        %1017 = vmatprep.subr.mxu0 0.0
        %1018 = vmatpush1.msra.mxu0 0.0
        %1019 = vmatprep.subr.mxu0 0.0
        %1020 = vmatpush1.msra.mxu0 0.0
        %1021 = vmatprep.subr.mxu0 0.0
        %1022 = vmatpush1.msra.mxu0 0.0
        %1023 = vmatprep.subr.mxu0 0.0
        %1024 = vmatpush1.msra.mxu0 0.0
        %1025 = vmatprep.subr.mxu0 0.0
        %1026 = vmatpush1.msra.mxu0 0.0
        %1027 = vmatprep.subr.mxu0 0.0
        %1028 = vmatpush1.msra.mxu0 0.0
        %1029 = vmatprep.subr.mxu0 0.0
        %1030 = vmatpush1.msra.mxu0 0.0
        %1031 = vmatprep.subr.mxu0 0.0
        %1032 = vmatpush1.msra.mxu0 0.0
        %1033 = vmatprep.subr.mxu0 0.0
        %1034 = vmatpush1.msra.mxu0 0.0
        %1035 = vmatprep.subr.mxu0 0.0
        %1036 = vmatpush1.msra.mxu0 0.0
        %1037 = vmatprep.subr.mxu0 0.0
        %1038 = vmatpush1.msra.mxu0 0.0
        %1039 = vmatprep.subr.mxu0 0.0
        %1040 = vmatpush1.msra.mxu0 0.0
        %1041 = vmatprep.subr.mxu0 0.0
        %1042 = vmatpush1.msra.mxu0 0.0
        %1043 = vmatprep.subr.mxu0 0.0
        %1044 = vmatpush1.msra.mxu0 0.0
        %1045 = vmatprep.mubr.f32.mxu0 0.0
        %1046 = vmatmul.mubr.f32.gmra.mrb[0].mxu0 %v783
        %v1047 = vpop.f32.mrb[0].mxu0
        %v1048 = vadd.f32 %v913, %v1047
        %v1049 = vpop.f32.mrb[0].mxu0
        %1050 = vmatprep.mubr.f32.mxu0 0.0
        %1051 = vmatmul.mubr.f32.gmra.mrb[0].mxu0 %v784
        %v1052 = vpop.f32.mrb[0].mxu0
        %v1053 = vadd.f32 %v918, %v1052
        %v1054 = vpop.f32.mrb[0].mxu0
        %1055 = vmatprep.mubr.f32.mxu0 0.0
        %1056 = vmatmul.mubr.f32.gmra.mrb[0].mxu0 %v785
        %v1057 = vpop.f32.mrb[0].mxu0
        %v1058 = vpop.f32.mrb[0].mxu0
        %1059 = vmatprep.mubr.f32.mxu0 0.0
        %1060 = vmatmul.mubr.f32.gmra.mrb[0].mxu0 %v786
        %v1061 = vpop.f32.mrb[0].mxu0
        %v1062 = vadd.f32 %v927, %v1061
        %v1063 = vpop.f32.mrb[0].mxu0
        %1064 = vmatprep.mubr.f32.mxu0 0.0
        %1065 = vmatmul.mubr.f32.gmra.mrb[0].mxu0 %v787
        %v1066 = vpop.f32.mrb[0].mxu0
        %v1067 = vadd.f32 %v932, %v1066
        %v1068 = vpop.f32.mrb[0].mxu0
        %1069 = vmatprep.mubr.f32.mxu0 0.0
        %1070 = vmatmul.mubr.f32.gmra.mrb[0].mxu0 %v788
        %v1071 = vpop.f32.mrb[0].mxu0
        %v1072 = vpop.f32.mrb[0].mxu0
        %1073 = vmatprep.mubr.f32.mxu0 0.0
        %1074 = vmatmul.mubr.f32.gmra.mrb[0].mxu0 %v789
        %v1075 = vpop.f32.mrb[0].mxu0
        %v1076 = vadd.f32 %v941, %v1075
        %v1077 = vpop.f32.mrb[0].mxu0
        %1078 = vmatprep.mubr.f32.mxu0 0.0
        %1079 = vmatmul.mubr.f32.gmra.mrb[0].mxu0 %v790
        %v1080 = vpop.f32.mrb[0].mxu0
        %v1081 = vadd.f32 %v946, %v1080
        %v1082 = vpop.f32.mrb[0].mxu0
        %1083 = vmatprep.mubr.f32.mxu0 0.0
        %1084 = vmatmul.mubr.f32.gmra.mrb[0].mxu0 %v791
        %v1085 = vpop.f32.mrb[0].mxu0
        %v1086 = vpop.f32.mrb[0].mxu0
        %1087 = vmatprep.mubr.f32.mxu0 0.0
        %1088 = vmatmul.mubr.f32.gmra.mrb[0].mxu0 %v792
        %v1089 = vpop.f32.mrb[0].mxu0
        %v1090 = vadd.f32 %v955, %v1089
        %v1091 = vpop.f32.mrb[0].mxu0
        %1092 = vmatprep.mubr.f32.mxu0 0.0
        %1093 = vmatmul.mubr.f32.gmra.mrb[0].mxu0 %v793
        %v1094 = vpop.f32.mrb[0].mxu0
        %v1095 = vadd.f32 %v960, %v1094
        %v1096 = vpop.f32.mrb[0].mxu0
        %1097 = vmatprep.mubr.f32.mxu0 0.0
        %1098 = vmatmul.mubr.f32.gmra.mrb[0].mxu0 %v794
        %v1099 = vpop.f32.mrb[0].mxu0
        %v1100 = vpop.f32.mrb[0].mxu0
        %1101 = vmatprep.mubr.f32.mxu0 0.0
        %1102 = vmatmul.mubr.f32.gmra.mrb[0].mxu0 %v795
        %v1103 = vpop.f32.mrb[0].mxu0
        %v1104 = vadd.f32 %v969, %v1103
        %v1105 = vpop.f32.mrb[0].mxu0
        %1106 = vmatprep.mubr.f32.mxu0 0.0
        %1107 = vmatmul.mubr.f32.gmra.mrb[0].mxu0 %v796
        %v1108 = vpop.f32.mrb[0].mxu0
        %v1109 = vadd.f32 %v974, %v1108
        %v1110 = vpop.f32.mrb[0].mxu0
        %1111 = vmatprep.mubr.f32.mxu0 0.0
        %1112 = vmatmul.mubr.f32.gmra.mrb[0].mxu0 %v797
        %v1113 = vpop.f32.mrb[0].mxu0
        %v1114 = vpop.f32.mrb[0].mxu0
        %1115 = vdwg.mxu0
        %v1116 = vld [vmem:[#allocation2 + $0x19] sm:$0xff]
        %v1117 = vld [vmem:[#allocation2 + $0x21] sm:$0xff]
        %v1118 = vld [vmem:[#allocation2 + $0x29] sm:$0xff]
        %v1119 = vld [vmem:[#allocation2 + $0x31] sm:$0xff]
        %v1120 = vld [vmem:[#allocation2 + $0x39] sm:$0xff]
        %v1121 = vld [vmem:[#allocation2 + $0x41] sm:$0xff]
        %v1122 = vld [vmem:[#allocation2 + $0x49] sm:$0xff]
        %v1123 = vld [vmem:[#allocation2 + $0x51] sm:$0xff]
        %v1124 = vld [vmem:[#allocation2 + $0x59] sm:$0xff]
        %v1125 = vld [vmem:[#allocation2 + $0x61] sm:$0xff]
        %v1126 = vld [vmem:[#allocation2 + $0x69] sm:$0xff]
        %v1127 = vld [vmem:[#allocation2 + $0x71] sm:$0xff]
        %v1128 = vld [vmem:[#allocation2 + $0x79] sm:$0xff]
        %v1129 = vld [vmem:[#allocation2 + $0x81] sm:$0xff]
        %v1130 = vld [vmem:[#allocation2 + $0x89] sm:$0xff]
        %s1131 = scalar_lea.vmem [#allocation13], 256
        %v1132 = vld [vmem:[%s1131] sm:$0xff]
        %v1133 = vld [vmem:[%s1131 + $0x8] sm:$0xff]
        %v1134 = vld [vmem:[%s1131 + $0x10] sm:$0xff]
        %v1135 = vld [vmem:[%s1131 + $0x18] sm:$0xff]
        %v1136 = vld [vmem:[%s1131 + $0x20] sm:$0xff]
        %v1137 = vld [vmem:[%s1131 + $0x28] sm:$0xff]
        %v1138 = vld [vmem:[%s1131 + $0x30] sm:$0xff]
        %v1139 = vld [vmem:[%s1131 + $0x38] sm:$0xff]
        %v1140 = vld [vmem:[%s1131 + $0x40] sm:$0xff]
        %v1141 = vld [vmem:[%s1131 + $0x48] sm:$0xff]
        %v1142 = vld [vmem:[%s1131 + $0x50] sm:$0xff]
        %v1143 = vld [vmem:[%s1131 + $0x58] sm:$0xff]
        %v1144 = vld [vmem:[%s1131 + $0x60] sm:$0xff]
        %v1145 = vld [vmem:[%s1131 + $0x68] sm:$0xff]
        %v1146 = vld [vmem:[%s1131 + $0x70] sm:$0xff]
        %v1147 = vld [vmem:[%s1131 + $0x78] sm:$0xff]
        %1148 = vmatprep.subr.mxu0 0.0
        %1149 = vmatpush1.msra.mxu0 %v1132
        %1150 = vmatprep.subr.mxu0 0.0
        %1151 = vmatpush1.msra.mxu0 %v1133
        %1152 = vmatprep.subr.mxu0 0.0
        %1153 = vmatpush1.msra.mxu0 %v1134
        %1154 = vmatprep.subr.mxu0 0.0
        %1155 = vmatpush1.msra.mxu0 %v1135
        %1156 = vmatprep.subr.mxu0 0.0
        %1157 = vmatpush1.msra.mxu0 %v1136
        %1158 = vmatprep.subr.mxu0 0.0
        %1159 = vmatpush1.msra.mxu0 %v1137
        %1160 = vmatprep.subr.mxu0 0.0
        %1161 = vmatpush1.msra.mxu0 %v1138
        %1162 = vmatprep.subr.mxu0 0.0
        %1163 = vmatpush1.msra.mxu0 %v1139
        %1164 = vmatprep.subr.mxu0 0.0
        %1165 = vmatpush1.msra.mxu0 %v1140
        %1166 = vmatprep.subr.mxu0 0.0
        %1167 = vmatpush1.msra.mxu0 %v1141
        %1168 = vmatprep.subr.mxu0 0.0
        %1169 = vmatpush1.msra.mxu0 %v1142
        %1170 = vmatprep.subr.mxu0 0.0
        %1171 = vmatpush1.msra.mxu0 %v1143
        %1172 = vmatprep.subr.mxu0 0.0
        %1173 = vmatpush1.msra.mxu0 %v1144
        %1174 = vmatprep.subr.mxu0 0.0
        %1175 = vmatpush1.msra.mxu0 %v1145
        %1176 = vmatprep.subr.mxu0 0.0
        %1177 = vmatpush1.msra.mxu0 %v1146
        %1178 = vmatprep.subr.mxu0 0.0
        %1179 = vmatpush1.msra.mxu0 %v1147
        %1180 = vmatprep.subr.mxu0 0.0
        %1181 = vmatpush1.msra.mxu0 0.0
        %1182 = vmatprep.subr.mxu0 0.0
        %1183 = vmatpush1.msra.mxu0 0.0
        %1184 = vmatprep.subr.mxu0 0.0
        %1185 = vmatpush1.msra.mxu0 0.0
        %1186 = vmatprep.subr.mxu0 0.0
        %1187 = vmatpush1.msra.mxu0 0.0
        %1188 = vmatprep.subr.mxu0 0.0
        %1189 = vmatpush1.msra.mxu0 0.0
        %1190 = vmatprep.subr.mxu0 0.0
        %1191 = vmatpush1.msra.mxu0 0.0
        %1192 = vmatprep.subr.mxu0 0.0
        %1193 = vmatpush1.msra.mxu0 0.0
        %1194 = vmatprep.subr.mxu0 0.0
        %1195 = vmatpush1.msra.mxu0 0.0
        %1196 = vmatprep.subr.mxu0 0.0
        %1197 = vmatpush1.msra.mxu0 0.0
        %1198 = vmatprep.subr.mxu0 0.0
        %1199 = vmatpush1.msra.mxu0 0.0
        %1200 = vmatprep.subr.mxu0 0.0
        %1201 = vmatpush1.msra.mxu0 0.0
        %1202 = vmatprep.subr.mxu0 0.0
        %1203 = vmatpush1.msra.mxu0 0.0
        %1204 = vmatprep.subr.mxu0 0.0
        %1205 = vmatpush1.msra.mxu0 0.0
        %1206 = vmatprep.subr.mxu0 0.0
        %1207 = vmatpush1.msra.mxu0 0.0
        %1208 = vmatprep.subr.mxu0 0.0
        %1209 = vmatpush1.msra.mxu0 0.0
        %1210 = vmatprep.subr.mxu0 0.0
        %1211 = vmatpush1.msra.mxu0 0.0
        %1212 = vmatprep.mubr.f32.mxu0 0.0
        %1213 = vmatmul.mubr.f32.gmra.mrb[0].mxu0 %v1116
        %v1214 = vpop.f32.mrb[0].mxu0
        %v1215 = vadd.f32 0.0, %v1214
        %v1216 = vpop.f32.mrb[0].mxu0
        %1217 = vmatprep.mubr.f32.mxu0 0.0
        %1218 = vmatmul.mubr.f32.gmra.mrb[0].mxu0 %v1117
        %v1219 = vpop.f32.mrb[0].mxu0
        %v1220 = vadd.f32 0.0, %v1219
        %v1221 = vpop.f32.mrb[0].mxu0
        %1222 = vmatprep.mubr.f32.mxu0 0.0
        %1223 = vmatmul.mubr.f32.gmra.mrb[0].mxu0 %v1118
        %v1224 = vpop.f32.mrb[0].mxu0
        %v1225 = vpop.f32.mrb[0].mxu0
        %1226 = vmatprep.mubr.f32.mxu0 0.0
        %1227 = vmatmul.mubr.f32.gmra.mrb[0].mxu0 %v1119
        %v1228 = vpop.f32.mrb[0].mxu0
        %v1229 = vadd.f32 0.0, %v1228
        %v1230 = vpop.f32.mrb[0].mxu0
        %1231 = vmatprep.mubr.f32.mxu0 0.0
        %1232 = vmatmul.mubr.f32.gmra.mrb[0].mxu0 %v1120
        %v1233 = vpop.f32.mrb[0].mxu0
        %v1234 = vadd.f32 0.0, %v1233
        %v1235 = vpop.f32.mrb[0].mxu0
        %1236 = vmatprep.mubr.f32.mxu0 0.0
        %1237 = vmatmul.mubr.f32.gmra.mrb[0].mxu0 %v1121
        %v1238 = vpop.f32.mrb[0].mxu0
        %v1239 = vpop.f32.mrb[0].mxu0
        %1240 = vmatprep.mubr.f32.mxu0 0.0
        %1241 = vmatmul.mubr.f32.gmra.mrb[0].mxu0 %v1122
        %v1242 = vpop.f32.mrb[0].mxu0
        %v1243 = vadd.f32 0.0, %v1242
        %v1244 = vpop.f32.mrb[0].mxu0
        %1245 = vmatprep.mubr.f32.mxu0 0.0
        %1246 = vmatmul.mubr.f32.gmra.mrb[0].mxu0 %v1123
        %v1247 = vpop.f32.mrb[0].mxu0
        %v1248 = vadd.f32 0.0, %v1247
        %v1249 = vpop.f32.mrb[0].mxu0
        %1250 = vmatprep.mubr.f32.mxu0 0.0
        %1251 = vmatmul.mubr.f32.gmra.mrb[0].mxu0 %v1124
        %v1252 = vpop.f32.mrb[0].mxu0
        %v1253 = vpop.f32.mrb[0].mxu0
        %1254 = vmatprep.mubr.f32.mxu0 0.0
        %1255 = vmatmul.mubr.f32.gmra.mrb[0].mxu0 %v1125
        %v1256 = vpop.f32.mrb[0].mxu0
        %v1257 = vadd.f32 0.0, %v1256
        %v1258 = vpop.f32.mrb[0].mxu0
        %1259 = vmatprep.mubr.f32.mxu0 0.0
        %1260 = vmatmul.mubr.f32.gmra.mrb[0].mxu0 %v1126
        %v1261 = vpop.f32.mrb[0].mxu0
        %v1262 = vadd.f32 0.0, %v1261
        %v1263 = vpop.f32.mrb[0].mxu0
        %1264 = vmatprep.mubr.f32.mxu0 0.0
        %1265 = vmatmul.mubr.f32.gmra.mrb[0].mxu0 %v1127
        %v1266 = vpop.f32.mrb[0].mxu0
        %v1267 = vpop.f32.mrb[0].mxu0
        %1268 = vmatprep.mubr.f32.mxu0 0.0
        %1269 = vmatmul.mubr.f32.gmra.mrb[0].mxu0 %v1128
        %v1270 = vpop.f32.mrb[0].mxu0
        %v1271 = vadd.f32 0.0, %v1270
        %v1272 = vpop.f32.mrb[0].mxu0
        %1273 = vmatprep.mubr.f32.mxu0 0.0
        %1274 = vmatmul.mubr.f32.gmra.mrb[0].mxu0 %v1129
        %v1275 = vpop.f32.mrb[0].mxu0
        %v1276 = vadd.f32 0.0, %v1275
        %v1277 = vpop.f32.mrb[0].mxu0
        %1278 = vmatprep.mubr.f32.mxu0 0.0
        %1279 = vmatmul.mubr.f32.gmra.mrb[0].mxu0 %v1130
        %v1280 = vpop.f32.mrb[0].mxu0
        %v1281 = vpop.f32.mrb[0].mxu0
        %1282 = vdwg.mxu0
        %v1283 = vadd.f32 %v1048, %v1215
        %v1284 = vadd.f32 %v1053, %v1220
        %v1285 = vadd.f32 %v1062, %v1229
        %v1286 = vadd.f32 %v1067, %v1234
        %v1287 = vadd.f32 %v1076, %v1243
        %v1288 = vadd.f32 %v1081, %v1248
        %v1289 = vadd.f32 %v1090, %v1257
        %v1290 = vadd.f32 %v1095, %v1262
        %v1291 = vadd.f32 %v1104, %v1271
        %v1292 = vadd.f32 %v1109, %v1276
        %v1293 = vld [vmem:[#allocation2 + $0x2f] sm:$0xff]
        %v1294 = vld [vmem:[#allocation2 + $0x37] sm:$0xff]
        %v1295 = vld [vmem:[#allocation2 + $0x3f] sm:$0xff]
        %v1296 = vld [vmem:[#allocation2 + $0x47] sm:$0xff]
        %v1297 = vld [vmem:[#allocation2 + $0x4f] sm:$0xff]
        %v1298 = vld [vmem:[#allocation2 + $0x57] sm:$0xff]
        %v1299 = vld [vmem:[#allocation2 + $0x5f] sm:$0xff]
        %v1300 = vld [vmem:[#allocation2 + $0x67] sm:$0xff]
        %v1301 = vld [vmem:[#allocation2 + $0x6f] sm:$0xff]
        %v1302 = vld [vmem:[#allocation2 + $0x77] sm:$0xff]
        %v1303 = vld [vmem:[#allocation2 + $0x7f] sm:$0xff]
        %v1304 = vld [vmem:[#allocation2 + $0x87] sm:$0xff]
        %v1305 = vld [vmem:[#allocation2 + $0x8f] sm:$0xff]
        %v1306 = vld [vmem:[#allocation2 + $0x97] sm:$0xff]
        %v1307 = vld [vmem:[#allocation2 + $0x9f] sm:$0xff]
        %s1308 = scalar_lea.vmem [#allocation13], 384
        %v1309 = vld [vmem:[%s1308] sm:$0xff]
        %v1310 = vld [vmem:[%s1308 + $0x8] sm:$0xff]
        %v1311 = vld [vmem:[%s1308 + $0x10] sm:$0xff]
        %v1312 = vld [vmem:[%s1308 + $0x18] sm:$0xff]
        %v1313 = vld [vmem:[%s1308 + $0x20] sm:$0xff]
        %v1314 = vld [vmem:[%s1308 + $0x28] sm:$0xff]
        %v1315 = vld [vmem:[%s1308 + $0x30] sm:$0xff]
        %v1316 = vld [vmem:[%s1308 + $0x38] sm:$0xff]
        %v1317 = vld [vmem:[%s1308 + $0x40] sm:$0xff]
        %v1318 = vld [vmem:[%s1308 + $0x48] sm:$0xff]
        %v1319 = vld [vmem:[%s1308 + $0x50] sm:$0xff]
        %v1320 = vld [vmem:[%s1308 + $0x58] sm:$0xff]
        %v1321 = vld [vmem:[%s1308 + $0x60] sm:$0xff]
        %v1322 = vld [vmem:[%s1308 + $0x68] sm:$0xff]
        %v1323 = vld [vmem:[%s1308 + $0x70] sm:$0xff]
        %v1324 = vld [vmem:[%s1308 + $0x78] sm:$0xff]
        %1325 = vmatprep.subr.mxu0 0.0
        %1326 = vmatpush1.msra.mxu0 %v1309
        %1327 = vmatprep.subr.mxu0 0.0
        %1328 = vmatpush1.msra.mxu0 %v1310
        %1329 = vmatprep.subr.mxu0 0.0
        %1330 = vmatpush1.msra.mxu0 %v1311
        %1331 = vmatprep.subr.mxu0 0.0
        %1332 = vmatpush1.msra.mxu0 %v1312
        %1333 = vmatprep.subr.mxu0 0.0
        %1334 = vmatpush1.msra.mxu0 %v1313
        %1335 = vmatprep.subr.mxu0 0.0
        %1336 = vmatpush1.msra.mxu0 %v1314
        %1337 = vmatprep.subr.mxu0 0.0
        %1338 = vmatpush1.msra.mxu0 %v1315
        %1339 = vmatprep.subr.mxu0 0.0
        %1340 = vmatpush1.msra.mxu0 %v1316
        %1341 = vmatprep.subr.mxu0 0.0
        %1342 = vmatpush1.msra.mxu0 %v1317
        %1343 = vmatprep.subr.mxu0 0.0
        %1344 = vmatpush1.msra.mxu0 %v1318
        %1345 = vmatprep.subr.mxu0 0.0
        %1346 = vmatpush1.msra.mxu0 %v1319
        %1347 = vmatprep.subr.mxu0 0.0
        %1348 = vmatpush1.msra.mxu0 %v1320
        %1349 = vmatprep.subr.mxu0 0.0
        %1350 = vmatpush1.msra.mxu0 %v1321
        %1351 = vmatprep.subr.mxu0 0.0
        %1352 = vmatpush1.msra.mxu0 %v1322
        %1353 = vmatprep.subr.mxu0 0.0
        %1354 = vmatpush1.msra.mxu0 %v1323
        %1355 = vmatprep.subr.mxu0 0.0
        %1356 = vmatpush1.msra.mxu0 %v1324
        %1357 = vmatprep.subr.mxu0 0.0
        %1358 = vmatpush1.msra.mxu0 0.0
        %1359 = vmatprep.subr.mxu0 0.0
        %1360 = vmatpush1.msra.mxu0 0.0
        %1361 = vmatprep.subr.mxu0 0.0
        %1362 = vmatpush1.msra.mxu0 0.0
        %1363 = vmatprep.subr.mxu0 0.0
        %1364 = vmatpush1.msra.mxu0 0.0
        %1365 = vmatprep.subr.mxu0 0.0
        %1366 = vmatpush1.msra.mxu0 0.0
        %1367 = vmatprep.subr.mxu0 0.0
        %1368 = vmatpush1.msra.mxu0 0.0
        %1369 = vmatprep.subr.mxu0 0.0
        %1370 = vmatpush1.msra.mxu0 0.0
        %1371 = vmatprep.subr.mxu0 0.0
        %1372 = vmatpush1.msra.mxu0 0.0
        %1373 = vmatprep.subr.mxu0 0.0
        %1374 = vmatpush1.msra.mxu0 0.0
        %1375 = vmatprep.subr.mxu0 0.0
        %1376 = vmatpush1.msra.mxu0 0.0
        %1377 = vmatprep.subr.mxu0 0.0
        %1378 = vmatpush1.msra.mxu0 0.0
        %1379 = vmatprep.subr.mxu0 0.0
        %1380 = vmatpush1.msra.mxu0 0.0
        %1381 = vmatprep.subr.mxu0 0.0
        %1382 = vmatpush1.msra.mxu0 0.0
        %1383 = vmatprep.subr.mxu0 0.0
        %1384 = vmatpush1.msra.mxu0 0.0
        %1385 = vmatprep.subr.mxu0 0.0
        %1386 = vmatpush1.msra.mxu0 0.0
        %1387 = vmatprep.subr.mxu0 0.0
        %1388 = vmatpush1.msra.mxu0 0.0
        %1389 = vmatprep.mubr.f32.mxu0 0.0
        %1390 = vmatmul.mubr.f32.gmra.mrb[0].mxu0 %v1293
        %v1391 = vpop.f32.mrb[0].mxu0
        %v1392 = vadd.f32 0.0, %v1391
        %v1393 = vpop.f32.mrb[0].mxu0
        %1394 = vmatprep.mubr.f32.mxu0 0.0
        %1395 = vmatmul.mubr.f32.gmra.mrb[0].mxu0 %v1294
        %v1396 = vpop.f32.mrb[0].mxu0
        %v1397 = vadd.f32 0.0, %v1396
        %v1398 = vpop.f32.mrb[0].mxu0
        %1399 = vmatprep.mubr.f32.mxu0 0.0
        %1400 = vmatmul.mubr.f32.gmra.mrb[0].mxu0 %v1295
        %v1401 = vpop.f32.mrb[0].mxu0
        %v1402 = vpop.f32.mrb[0].mxu0
        %1403 = vmatprep.mubr.f32.mxu0 0.0
        %1404 = vmatmul.mubr.f32.gmra.mrb[0].mxu0 %v1296
        %v1405 = vpop.f32.mrb[0].mxu0
        %v1406 = vadd.f32 0.0, %v1405
        %v1407 = vpop.f32.mrb[0].mxu0
        %1408 = vmatprep.mubr.f32.mxu0 0.0
        %1409 = vmatmul.mubr.f32.gmra.mrb[0].mxu0 %v1297
        %v1410 = vpop.f32.mrb[0].mxu0
        %v1411 = vadd.f32 0.0, %v1410
        %v1412 = vpop.f32.mrb[0].mxu0
        %1413 = vmatprep.mubr.f32.mxu0 0.0
        %1414 = vmatmul.mubr.f32.gmra.mrb[0].mxu0 %v1298
        %v1415 = vpop.f32.mrb[0].mxu0
        %v1416 = vpop.f32.mrb[0].mxu0
        %1417 = vmatprep.mubr.f32.mxu0 0.0
        %1418 = vmatmul.mubr.f32.gmra.mrb[0].mxu0 %v1299
        %v1419 = vpop.f32.mrb[0].mxu0
        %v1420 = vadd.f32 0.0, %v1419
        %v1421 = vpop.f32.mrb[0].mxu0
        %1422 = vmatprep.mubr.f32.mxu0 0.0
        %1423 = vmatmul.mubr.f32.gmra.mrb[0].mxu0 %v1300
        %v1424 = vpop.f32.mrb[0].mxu0
        %v1425 = vadd.f32 0.0, %v1424
        %v1426 = vpop.f32.mrb[0].mxu0
        %1427 = vmatprep.mubr.f32.mxu0 0.0
        %1428 = vmatmul.mubr.f32.gmra.mrb[0].mxu0 %v1301
        %v1429 = vpop.f32.mrb[0].mxu0
        %v1430 = vpop.f32.mrb[0].mxu0
        %1431 = vmatprep.mubr.f32.mxu0 0.0
        %1432 = vmatmul.mubr.f32.gmra.mrb[0].mxu0 %v1302
        %v1433 = vpop.f32.mrb[0].mxu0
        %v1434 = vadd.f32 0.0, %v1433
        %v1435 = vpop.f32.mrb[0].mxu0
        %1436 = vmatprep.mubr.f32.mxu0 0.0
        %1437 = vmatmul.mubr.f32.gmra.mrb[0].mxu0 %v1303
        %v1438 = vpop.f32.mrb[0].mxu0
        %v1439 = vadd.f32 0.0, %v1438
        %v1440 = vpop.f32.mrb[0].mxu0
        %1441 = vmatprep.mubr.f32.mxu0 0.0
        %1442 = vmatmul.mubr.f32.gmra.mrb[0].mxu0 %v1304
        %v1443 = vpop.f32.mrb[0].mxu0
        %v1444 = vpop.f32.mrb[0].mxu0
        %1445 = vmatprep.mubr.f32.mxu0 0.0
        %1446 = vmatmul.mubr.f32.gmra.mrb[0].mxu0 %v1305
        %v1447 = vpop.f32.mrb[0].mxu0
        %v1448 = vadd.f32 0.0, %v1447
        %v1449 = vpop.f32.mrb[0].mxu0
        %1450 = vmatprep.mubr.f32.mxu0 0.0
        %1451 = vmatmul.mubr.f32.gmra.mrb[0].mxu0 %v1306
        %v1452 = vpop.f32.mrb[0].mxu0
        %v1453 = vadd.f32 0.0, %v1452
        %v1454 = vpop.f32.mrb[0].mxu0
        %1455 = vmatprep.mubr.f32.mxu0 0.0
        %1456 = vmatmul.mubr.f32.gmra.mrb[0].mxu0 %v1307
        %v1457 = vpop.f32.mrb[0].mxu0
        %v1458 = vpop.f32.mrb[0].mxu0
        %1459 = vdwg.mxu0
        %v1460 = vadd.f32 %v1283, %v1392
        %v1461 = vadd.f32 %v1284, %v1397
        %v1462 = vadd.f32 %v1285, %v1406
        %v1463 = vadd.f32 %v1286, %v1411
        %v1464 = vadd.f32 %v1287, %v1420
        %v1465 = vadd.f32 %v1288, %v1425
        %v1466 = vadd.f32 %v1289, %v1434
        %v1467 = vadd.f32 %v1290, %v1439
        %v1468 = vadd.f32 %v1291, %v1448
        %v1469 = vadd.f32 %v1292, %v1453
        %v1470 = vld [vmem:[#allocation2 + $0x30] sm:$0xff]
        %v1471 = vld [vmem:[#allocation2 + $0x38] sm:$0xff]
        %v1472 = vld [vmem:[#allocation2 + $0x40] sm:$0xff]
        %v1473 = vld [vmem:[#allocation2 + $0x48] sm:$0xff]
        %v1474 = vld [vmem:[#allocation2 + $0x50] sm:$0xff]
        %v1475 = vld [vmem:[#allocation2 + $0x58] sm:$0xff]
        %v1476 = vld [vmem:[#allocation2 + $0x60] sm:$0xff]
        %v1477 = vld [vmem:[#allocation2 + $0x68] sm:$0xff]
        %v1478 = vld [vmem:[#allocation2 + $0x70] sm:$0xff]
        %v1479 = vld [vmem:[#allocation2 + $0x78] sm:$0xff]
        %v1480 = vld [vmem:[#allocation2 + $0x80] sm:$0xff]
        %v1481 = vld [vmem:[#allocation2 + $0x88] sm:$0xff]
        %v1482 = vld [vmem:[#allocation2 + $0x90] sm:$0xff]
        %v1483 = vld [vmem:[#allocation2 + $0x98] sm:$0xff]
        %v1484 = vld [vmem:[#allocation2 + $0xa0] sm:$0xff]
        %s1485 = scalar_lea.vmem [#allocation13], 512
        %v1486 = vld [vmem:[%s1485] sm:$0xff]
        %v1487 = vld [vmem:[%s1485 + $0x8] sm:$0xff]
        %v1488 = vld [vmem:[%s1485 + $0x10] sm:$0xff]
        %v1489 = vld [vmem:[%s1485 + $0x18] sm:$0xff]
        %v1490 = vld [vmem:[%s1485 + $0x20] sm:$0xff]
        %v1491 = vld [vmem:[%s1485 + $0x28] sm:$0xff]
        %v1492 = vld [vmem:[%s1485 + $0x30] sm:$0xff]
        %v1493 = vld [vmem:[%s1485 + $0x38] sm:$0xff]
        %v1494 = vld [vmem:[%s1485 + $0x40] sm:$0xff]
        %v1495 = vld [vmem:[%s1485 + $0x48] sm:$0xff]
        %v1496 = vld [vmem:[%s1485 + $0x50] sm:$0xff]
        %v1497 = vld [vmem:[%s1485 + $0x58] sm:$0xff]
        %v1498 = vld [vmem:[%s1485 + $0x60] sm:$0xff]
        %v1499 = vld [vmem:[%s1485 + $0x68] sm:$0xff]
        %v1500 = vld [vmem:[%s1485 + $0x70] sm:$0xff]
        %v1501 = vld [vmem:[%s1485 + $0x78] sm:$0xff]
        %1502 = vmatprep.subr.mxu0 0.0
        %1503 = vmatpush1.msra.mxu0 %v1486
        %1504 = vmatprep.subr.mxu0 0.0
        %1505 = vmatpush1.msra.mxu0 %v1487
        %1506 = vmatprep.subr.mxu0 0.0
        %1507 = vmatpush1.msra.mxu0 %v1488
        %1508 = vmatprep.subr.mxu0 0.0
        %1509 = vmatpush1.msra.mxu0 %v1489
        %1510 = vmatprep.subr.mxu0 0.0
        %1511 = vmatpush1.msra.mxu0 %v1490
        %1512 = vmatprep.subr.mxu0 0.0
        %1513 = vmatpush1.msra.mxu0 %v1491
        %1514 = vmatprep.subr.mxu0 0.0
        %1515 = vmatpush1.msra.mxu0 %v1492
        %1516 = vmatprep.subr.mxu0 0.0
        %1517 = vmatpush1.msra.mxu0 %v1493
        %1518 = vmatprep.subr.mxu0 0.0
        %1519 = vmatpush1.msra.mxu0 %v1494
        %1520 = vmatprep.subr.mxu0 0.0
        %1521 = vmatpush1.msra.mxu0 %v1495
        %1522 = vmatprep.subr.mxu0 0.0
        %1523 = vmatpush1.msra.mxu0 %v1496
        %1524 = vmatprep.subr.mxu0 0.0
        %1525 = vmatpush1.msra.mxu0 %v1497
        %1526 = vmatprep.subr.mxu0 0.0
        %1527 = vmatpush1.msra.mxu0 %v1498
        %1528 = vmatprep.subr.mxu0 0.0
        %1529 = vmatpush1.msra.mxu0 %v1499
        %1530 = vmatprep.subr.mxu0 0.0
        %1531 = vmatpush1.msra.mxu0 %v1500
        %1532 = vmatprep.subr.mxu0 0.0
        %1533 = vmatpush1.msra.mxu0 %v1501
        %1534 = vmatprep.subr.mxu0 0.0
        %1535 = vmatpush1.msra.mxu0 0.0
        %1536 = vmatprep.subr.mxu0 0.0
        %1537 = vmatpush1.msra.mxu0 0.0
        %1538 = vmatprep.subr.mxu0 0.0
        %1539 = vmatpush1.msra.mxu0 0.0
        %1540 = vmatprep.subr.mxu0 0.0
        %1541 = vmatpush1.msra.mxu0 0.0
        %1542 = vmatprep.subr.mxu0 0.0
        %1543 = vmatpush1.msra.mxu0 0.0
        %1544 = vmatprep.subr.mxu0 0.0
        %1545 = vmatpush1.msra.mxu0 0.0
        %1546 = vmatprep.subr.mxu0 0.0
        %1547 = vmatpush1.msra.mxu0 0.0
        %1548 = vmatprep.subr.mxu0 0.0
        %1549 = vmatpush1.msra.mxu0 0.0
        %1550 = vmatprep.subr.mxu0 0.0
        %1551 = vmatpush1.msra.mxu0 0.0
        %1552 = vmatprep.subr.mxu0 0.0
        %1553 = vmatpush1.msra.mxu0 0.0
        %1554 = vmatprep.subr.mxu0 0.0
        %1555 = vmatpush1.msra.mxu0 0.0
        %1556 = vmatprep.subr.mxu0 0.0
        %1557 = vmatpush1.msra.mxu0 0.0
        %1558 = vmatprep.subr.mxu0 0.0
        %1559 = vmatpush1.msra.mxu0 0.0
        %1560 = vmatprep.subr.mxu0 0.0
        %1561 = vmatpush1.msra.mxu0 0.0
        %1562 = vmatprep.subr.mxu0 0.0
        %1563 = vmatpush1.msra.mxu0 0.0
        %1564 = vmatprep.subr.mxu0 0.0
        %1565 = vmatpush1.msra.mxu0 0.0
        %1566 = vmatprep.mubr.f32.mxu0 0.0
        %1567 = vmatmul.mubr.f32.gmra.mrb[0].mxu0 %v1470
        %v1568 = vpop.f32.mrb[0].mxu0
        %v1569 = vadd.f32 0.0, %v1568
        %v1570 = vpop.f32.mrb[0].mxu0
        %1571 = vmatprep.mubr.f32.mxu0 0.0
        %1572 = vmatmul.mubr.f32.gmra.mrb[0].mxu0 %v1471
        %v1573 = vpop.f32.mrb[0].mxu0
        %v1574 = vadd.f32 0.0, %v1573
        %v1575 = vpop.f32.mrb[0].mxu0
        %1576 = vmatprep.mubr.f32.mxu0 0.0
        %1577 = vmatmul.mubr.f32.gmra.mrb[0].mxu0 %v1472
        %v1578 = vpop.f32.mrb[0].mxu0
        %v1579 = vpop.f32.mrb[0].mxu0
        %1580 = vmatprep.mubr.f32.mxu0 0.0
        %1581 = vmatmul.mubr.f32.gmra.mrb[0].mxu0 %v1473
        %v1582 = vpop.f32.mrb[0].mxu0
        %v1583 = vadd.f32 0.0, %v1582
        %v1584 = vpop.f32.mrb[0].mxu0
        %1585 = vmatprep.mubr.f32.mxu0 0.0
        %1586 = vmatmul.mubr.f32.gmra.mrb[0].mxu0 %v1474
        %v1587 = vpop.f32.mrb[0].mxu0
        %v1588 = vadd.f32 0.0, %v1587
        %v1589 = vpop.f32.mrb[0].mxu0
        %1590 = vmatprep.mubr.f32.mxu0 0.0
        %1591 = vmatmul.mubr.f32.gmra.mrb[0].mxu0 %v1475
        %v1592 = vpop.f32.mrb[0].mxu0
        %v1593 = vpop.f32.mrb[0].mxu0
        %1594 = vmatprep.mubr.f32.mxu0 0.0
        %1595 = vmatmul.mubr.f32.gmra.mrb[0].mxu0 %v1476
        %v1596 = vpop.f32.mrb[0].mxu0
        %v1597 = vadd.f32 0.0, %v1596
        %v1598 = vpop.f32.mrb[0].mxu0
        %1599 = vmatprep.mubr.f32.mxu0 0.0
        %1600 = vmatmul.mubr.f32.gmra.mrb[0].mxu0 %v1477
        %v1601 = vpop.f32.mrb[0].mxu0
        %v1602 = vadd.f32 0.0, %v1601
        %v1603 = vpop.f32.mrb[0].mxu0
        %1604 = vmatprep.mubr.f32.mxu0 0.0
        %1605 = vmatmul.mubr.f32.gmra.mrb[0].mxu0 %v1478
        %v1606 = vpop.f32.mrb[0].mxu0
        %v1607 = vpop.f32.mrb[0].mxu0
        %1608 = vmatprep.mubr.f32.mxu0 0.0
        %1609 = vmatmul.mubr.f32.gmra.mrb[0].mxu0 %v1479
        %v1610 = vpop.f32.mrb[0].mxu0
        %v1611 = vadd.f32 0.0, %v1610
        %v1612 = vpop.f32.mrb[0].mxu0
        %1613 = vmatprep.mubr.f32.mxu0 0.0
        %1614 = vmatmul.mubr.f32.gmra.mrb[0].mxu0 %v1480
        %v1615 = vpop.f32.mrb[0].mxu0
        %v1616 = vadd.f32 0.0, %v1615
        %v1617 = vpop.f32.mrb[0].mxu0
        %1618 = vmatprep.mubr.f32.mxu0 0.0
        %1619 = vmatmul.mubr.f32.gmra.mrb[0].mxu0 %v1481
        %v1620 = vpop.f32.mrb[0].mxu0
        %v1621 = vpop.f32.mrb[0].mxu0
        %1622 = vmatprep.mubr.f32.mxu0 0.0
        %1623 = vmatmul.mubr.f32.gmra.mrb[0].mxu0 %v1482
        %v1624 = vpop.f32.mrb[0].mxu0
        %v1625 = vadd.f32 0.0, %v1624
        %v1626 = vpop.f32.mrb[0].mxu0
        %1627 = vmatprep.mubr.f32.mxu0 0.0
        %1628 = vmatmul.mubr.f32.gmra.mrb[0].mxu0 %v1483
        %v1629 = vpop.f32.mrb[0].mxu0
        %v1630 = vadd.f32 0.0, %v1629
        %v1631 = vpop.f32.mrb[0].mxu0
        %1632 = vmatprep.mubr.f32.mxu0 0.0
        %1633 = vmatmul.mubr.f32.gmra.mrb[0].mxu0 %v1484
        %v1634 = vpop.f32.mrb[0].mxu0
        %v1635 = vpop.f32.mrb[0].mxu0
        %1636 = vdwg.mxu0
        %v1637 = vadd.f32 %v1460, %v1569
        %v1638 = vadd.f32 %v1461, %v1574
        %v1639 = vadd.f32 %v1462, %v1583
        %v1640 = vadd.f32 %v1463, %v1588
        %v1641 = vadd.f32 %v1464, %v1597
        %v1642 = vadd.f32 %v1465, %v1602
        %v1643 = vadd.f32 %v1466, %v1611
        %v1644 = vadd.f32 %v1467, %v1616
        %v1645 = vadd.f32 %v1468, %v1625
        %v1646 = vadd.f32 %v1469, %v1630
        %v1647 = vld [vmem:[#allocation2 + $0x31] sm:$0xff]
        %v1648 = vld [vmem:[#allocation2 + $0x39] sm:$0xff]
        %v1649 = vld [vmem:[#allocation2 + $0x41] sm:$0xff]
        %v1650 = vld [vmem:[#allocation2 + $0x49] sm:$0xff]
        %v1651 = vld [vmem:[#allocation2 + $0x51] sm:$0xff]
        %v1652 = vld [vmem:[#allocation2 + $0x59] sm:$0xff]
        %v1653 = vld [vmem:[#allocation2 + $0x61] sm:$0xff]
        %v1654 = vld [vmem:[#allocation2 + $0x69] sm:$0xff]
        %v1655 = vld [vmem:[#allocation2 + $0x71] sm:$0xff]
        %v1656 = vld [vmem:[#allocation2 + $0x79] sm:$0xff]
        %v1657 = vld [vmem:[#allocation2 + $0x81] sm:$0xff]
        %v1658 = vld [vmem:[#allocation2 + $0x89] sm:$0xff]
        %v1659 = vld [vmem:[#allocation2 + $0x91] sm:$0xff]
        %v1660 = vld [vmem:[#allocation2 + $0x99] sm:$0xff]
        %v1661 = vld [vmem:[#allocation2 + $0xa1] sm:$0xff]
        %s1662 = scalar_lea.vmem [#allocation13], 640
        %v1663 = vld [vmem:[%s1662] sm:$0xff]
        %v1664 = vld [vmem:[%s1662 + $0x8] sm:$0xff]
        %v1665 = vld [vmem:[%s1662 + $0x10] sm:$0xff]
        %v1666 = vld [vmem:[%s1662 + $0x18] sm:$0xff]
        %v1667 = vld [vmem:[%s1662 + $0x20] sm:$0xff]
        %v1668 = vld [vmem:[%s1662 + $0x28] sm:$0xff]
        %v1669 = vld [vmem:[%s1662 + $0x30] sm:$0xff]
        %v1670 = vld [vmem:[%s1662 + $0x38] sm:$0xff]
        %v1671 = vld [vmem:[%s1662 + $0x40] sm:$0xff]
        %v1672 = vld [vmem:[%s1662 + $0x48] sm:$0xff]
        %v1673 = vld [vmem:[%s1662 + $0x50] sm:$0xff]
        %v1674 = vld [vmem:[%s1662 + $0x58] sm:$0xff]
        %v1675 = vld [vmem:[%s1662 + $0x60] sm:$0xff]
        %v1676 = vld [vmem:[%s1662 + $0x68] sm:$0xff]
        %v1677 = vld [vmem:[%s1662 + $0x70] sm:$0xff]
        %v1678 = vld [vmem:[%s1662 + $0x78] sm:$0xff]
        %1679 = vmatprep.subr.mxu0 0.0
        %1680 = vmatpush1.msra.mxu0 %v1663
        %1681 = vmatprep.subr.mxu0 0.0
        %1682 = vmatpush1.msra.mxu0 %v1664
        %1683 = vmatprep.subr.mxu0 0.0
        %1684 = vmatpush1.msra.mxu0 %v1665
        %1685 = vmatprep.subr.mxu0 0.0
        %1686 = vmatpush1.msra.mxu0 %v1666
        %1687 = vmatprep.subr.mxu0 0.0
        %1688 = vmatpush1.msra.mxu0 %v1667
        %1689 = vmatprep.subr.mxu0 0.0
        %1690 = vmatpush1.msra.mxu0 %v1668
        %1691 = vmatprep.subr.mxu0 0.0
        %1692 = vmatpush1.msra.mxu0 %v1669
        %1693 = vmatprep.subr.mxu0 0.0
        %1694 = vmatpush1.msra.mxu0 %v1670
        %1695 = vmatprep.subr.mxu0 0.0
        %1696 = vmatpush1.msra.mxu0 %v1671
        %1697 = vmatprep.subr.mxu0 0.0
        %1698 = vmatpush1.msra.mxu0 %v1672
        %1699 = vmatprep.subr.mxu0 0.0
        %1700 = vmatpush1.msra.mxu0 %v1673
        %1701 = vmatprep.subr.mxu0 0.0
        %1702 = vmatpush1.msra.mxu0 %v1674
        %1703 = vmatprep.subr.mxu0 0.0
        %1704 = vmatpush1.msra.mxu0 %v1675
        %1705 = vmatprep.subr.mxu0 0.0
        %1706 = vmatpush1.msra.mxu0 %v1676
        %1707 = vmatprep.subr.mxu0 0.0
        %1708 = vmatpush1.msra.mxu0 %v1677
        %1709 = vmatprep.subr.mxu0 0.0
        %1710 = vmatpush1.msra.mxu0 %v1678
        %1711 = vmatprep.subr.mxu0 0.0
        %1712 = vmatpush1.msra.mxu0 0.0
        %1713 = vmatprep.subr.mxu0 0.0
        %1714 = vmatpush1.msra.mxu0 0.0
        %1715 = vmatprep.subr.mxu0 0.0
        %1716 = vmatpush1.msra.mxu0 0.0
        %1717 = vmatprep.subr.mxu0 0.0
        %1718 = vmatpush1.msra.mxu0 0.0
        %1719 = vmatprep.subr.mxu0 0.0
        %1720 = vmatpush1.msra.mxu0 0.0
        %1721 = vmatprep.subr.mxu0 0.0
        %1722 = vmatpush1.msra.mxu0 0.0
        %1723 = vmatprep.subr.mxu0 0.0
        %1724 = vmatpush1.msra.mxu0 0.0
        %1725 = vmatprep.subr.mxu0 0.0
        %1726 = vmatpush1.msra.mxu0 0.0
        %1727 = vmatprep.subr.mxu0 0.0
        %1728 = vmatpush1.msra.mxu0 0.0
        %1729 = vmatprep.subr.mxu0 0.0
        %1730 = vmatpush1.msra.mxu0 0.0
        %1731 = vmatprep.subr.mxu0 0.0
        %1732 = vmatpush1.msra.mxu0 0.0
        %1733 = vmatprep.subr.mxu0 0.0
        %1734 = vmatpush1.msra.mxu0 0.0
        %1735 = vmatprep.subr.mxu0 0.0
        %1736 = vmatpush1.msra.mxu0 0.0
        %1737 = vmatprep.subr.mxu0 0.0
        %1738 = vmatpush1.msra.mxu0 0.0
        %1739 = vmatprep.subr.mxu0 0.0
        %1740 = vmatpush1.msra.mxu0 0.0
        %1741 = vmatprep.subr.mxu0 0.0
        %1742 = vmatpush1.msra.mxu0 0.0
        %1743 = vmatprep.mubr.f32.mxu0 0.0
        %1744 = vmatmul.mubr.f32.gmra.mrb[0].mxu0 %v1647
        %v1745 = vpop.f32.mrb[0].mxu0
        %v1746 = vadd.f32 0.0, %v1745
        %v1747 = vpop.f32.mrb[0].mxu0
        %1748 = vmatprep.mubr.f32.mxu0 0.0
        %1749 = vmatmul.mubr.f32.gmra.mrb[0].mxu0 %v1648
        %v1750 = vpop.f32.mrb[0].mxu0
        %v1751 = vadd.f32 0.0, %v1750
        %v1752 = vpop.f32.mrb[0].mxu0
        %1753 = vmatprep.mubr.f32.mxu0 0.0
        %1754 = vmatmul.mubr.f32.gmra.mrb[0].mxu0 %v1649
        %v1755 = vpop.f32.mrb[0].mxu0
        %v1756 = vpop.f32.mrb[0].mxu0
        %1757 = vmatprep.mubr.f32.mxu0 0.0
        %1758 = vmatmul.mubr.f32.gmra.mrb[0].mxu0 %v1650
        %v1759 = vpop.f32.mrb[0].mxu0
        %v1760 = vadd.f32 0.0, %v1759
        %v1761 = vpop.f32.mrb[0].mxu0
        %1762 = vmatprep.mubr.f32.mxu0 0.0
        %1763 = vmatmul.mubr.f32.gmra.mrb[0].mxu0 %v1651
        %v1764 = vpop.f32.mrb[0].mxu0
        %v1765 = vadd.f32 0.0, %v1764
        %v1766 = vpop.f32.mrb[0].mxu0
        %1767 = vmatprep.mubr.f32.mxu0 0.0
        %1768 = vmatmul.mubr.f32.gmra.mrb[0].mxu0 %v1652
        %v1769 = vpop.f32.mrb[0].mxu0
        %v1770 = vpop.f32.mrb[0].mxu0
        %1771 = vmatprep.mubr.f32.mxu0 0.0
        %1772 = vmatmul.mubr.f32.gmra.mrb[0].mxu0 %v1653
        %v1773 = vpop.f32.mrb[0].mxu0
        %v1774 = vadd.f32 0.0, %v1773
        %v1775 = vpop.f32.mrb[0].mxu0
        %1776 = vmatprep.mubr.f32.mxu0 0.0
        %1777 = vmatmul.mubr.f32.gmra.mrb[0].mxu0 %v1654
        %v1778 = vpop.f32.mrb[0].mxu0
        %v1779 = vadd.f32 0.0, %v1778
        %v1780 = vpop.f32.mrb[0].mxu0
        %1781 = vmatprep.mubr.f32.mxu0 0.0
        %1782 = vmatmul.mubr.f32.gmra.mrb[0].mxu0 %v1655
        %v1783 = vpop.f32.mrb[0].mxu0
        %v1784 = vpop.f32.mrb[0].mxu0
        %1785 = vmatprep.mubr.f32.mxu0 0.0
        %1786 = vmatmul.mubr.f32.gmra.mrb[0].mxu0 %v1656
        %v1787 = vpop.f32.mrb[0].mxu0
        %v1788 = vadd.f32 0.0, %v1787
        %v1789 = vpop.f32.mrb[0].mxu0
        %1790 = vmatprep.mubr.f32.mxu0 0.0
        %1791 = vmatmul.mubr.f32.gmra.mrb[0].mxu0 %v1657
        %v1792 = vpop.f32.mrb[0].mxu0
        %v1793 = vadd.f32 0.0, %v1792
        %v1794 = vpop.f32.mrb[0].mxu0
        %1795 = vmatprep.mubr.f32.mxu0 0.0
        %1796 = vmatmul.mubr.f32.gmra.mrb[0].mxu0 %v1658
        %v1797 = vpop.f32.mrb[0].mxu0
        %v1798 = vpop.f32.mrb[0].mxu0
        %1799 = vmatprep.mubr.f32.mxu0 0.0
        %1800 = vmatmul.mubr.f32.gmra.mrb[0].mxu0 %v1659
        %v1801 = vpop.f32.mrb[0].mxu0
        %v1802 = vadd.f32 0.0, %v1801
        %v1803 = vpop.f32.mrb[0].mxu0
        %1804 = vmatprep.mubr.f32.mxu0 0.0
        %1805 = vmatmul.mubr.f32.gmra.mrb[0].mxu0 %v1660
        %v1806 = vpop.f32.mrb[0].mxu0
        %v1807 = vadd.f32 0.0, %v1806
        %v1808 = vpop.f32.mrb[0].mxu0
        %1809 = vmatprep.mubr.f32.mxu0 0.0
        %1810 = vmatmul.mubr.f32.gmra.mrb[0].mxu0 %v1661
        %v1811 = vpop.f32.mrb[0].mxu0
        %v1812 = vpop.f32.mrb[0].mxu0
        %1813 = vdwg.mxu0
        %v1814 = vadd.f32 %v1637, %v1746
        %v1815 = vadd.f32 %v1638, %v1751
        %v1816 = vadd.f32 %v1639, %v1760
        %v1817 = vadd.f32 %v1640, %v1765
        %v1818 = vadd.f32 %v1641, %v1774
        %v1819 = vadd.f32 %v1642, %v1779
        %v1820 = vadd.f32 %v1643, %v1788
        %v1821 = vadd.f32 %v1644, %v1793
        %v1822 = vadd.f32 %v1645, %v1802
        %v1823 = vadd.f32 %v1646, %v1807
        %v1824 = vld [vmem:[#allocation2 + $0x47] sm:$0xff]
        %v1825 = vld [vmem:[#allocation2 + $0x4f] sm:$0xff]
        %v1826 = vld [vmem:[#allocation2 + $0x57] sm:$0xff]
        %v1827 = vld [vmem:[#allocation2 + $0x5f] sm:$0xff]
        %v1828 = vld [vmem:[#allocation2 + $0x67] sm:$0xff]
        %v1829 = vld [vmem:[#allocation2 + $0x6f] sm:$0xff]
        %v1830 = vld [vmem:[#allocation2 + $0x77] sm:$0xff]
        %v1831 = vld [vmem:[#allocation2 + $0x7f] sm:$0xff]
        %v1832 = vld [vmem:[#allocation2 + $0x87] sm:$0xff]
        %v1833 = vld [vmem:[#allocation2 + $0x8f] sm:$0xff]
        %v1834 = vld [vmem:[#allocation2 + $0x97] sm:$0xff]
        %v1835 = vld [vmem:[#allocation2 + $0x9f] sm:$0xff]
        %v1836 = vld [vmem:[#allocation2 + $0xa7] sm:$0xff]
        %v1837 = vld [vmem:[#allocation2 + $0xaf] sm:$0xff]
        %v1838 = vld [vmem:[#allocation2 + $0xb7] sm:$0xff]
        %s1839 = scalar_lea.vmem [#allocation13], 768
        %v1840 = vld [vmem:[%s1839] sm:$0xff]
        %v1841 = vld [vmem:[%s1839 + $0x8] sm:$0xff]
        %v1842 = vld [vmem:[%s1839 + $0x10] sm:$0xff]
        %v1843 = vld [vmem:[%s1839 + $0x18] sm:$0xff]
        %v1844 = vld [vmem:[%s1839 + $0x20] sm:$0xff]
        %v1845 = vld [vmem:[%s1839 + $0x28] sm:$0xff]
        %v1846 = vld [vmem:[%s1839 + $0x30] sm:$0xff]
        %v1847 = vld [vmem:[%s1839 + $0x38] sm:$0xff]
        %v1848 = vld [vmem:[%s1839 + $0x40] sm:$0xff]
        %v1849 = vld [vmem:[%s1839 + $0x48] sm:$0xff]
        %v1850 = vld [vmem:[%s1839 + $0x50] sm:$0xff]
        %v1851 = vld [vmem:[%s1839 + $0x58] sm:$0xff]
        %v1852 = vld [vmem:[%s1839 + $0x60] sm:$0xff]
        %v1853 = vld [vmem:[%s1839 + $0x68] sm:$0xff]
        %v1854 = vld [vmem:[%s1839 + $0x70] sm:$0xff]
        %v1855 = vld [vmem:[%s1839 + $0x78] sm:$0xff]
        %1856 = vmatprep.subr.mxu0 0.0
        %1857 = vmatpush1.msra.mxu0 %v1840
        %1858 = vmatprep.subr.mxu0 0.0
        %1859 = vmatpush1.msra.mxu0 %v1841
        %1860 = vmatprep.subr.mxu0 0.0
        %1861 = vmatpush1.msra.mxu0 %v1842
        %1862 = vmatprep.subr.mxu0 0.0
        %1863 = vmatpush1.msra.mxu0 %v1843
        %1864 = vmatprep.subr.mxu0 0.0
        %1865 = vmatpush1.msra.mxu0 %v1844
        %1866 = vmatprep.subr.mxu0 0.0
        %1867 = vmatpush1.msra.mxu0 %v1845
        %1868 = vmatprep.subr.mxu0 0.0
        %1869 = vmatpush1.msra.mxu0 %v1846
        %1870 = vmatprep.subr.mxu0 0.0
        %1871 = vmatpush1.msra.mxu0 %v1847
        %1872 = vmatprep.subr.mxu0 0.0
        %1873 = vmatpush1.msra.mxu0 %v1848
        %1874 = vmatprep.subr.mxu0 0.0
        %1875 = vmatpush1.msra.mxu0 %v1849
        %1876 = vmatprep.subr.mxu0 0.0
        %1877 = vmatpush1.msra.mxu0 %v1850
        %1878 = vmatprep.subr.mxu0 0.0
        %1879 = vmatpush1.msra.mxu0 %v1851
        %1880 = vmatprep.subr.mxu0 0.0
        %1881 = vmatpush1.msra.mxu0 %v1852
        %1882 = vmatprep.subr.mxu0 0.0
        %1883 = vmatpush1.msra.mxu0 %v1853
        %1884 = vmatprep.subr.mxu0 0.0
        %1885 = vmatpush1.msra.mxu0 %v1854
        %1886 = vmatprep.subr.mxu0 0.0
        %1887 = vmatpush1.msra.mxu0 %v1855
        %1888 = vmatprep.subr.mxu0 0.0
        %1889 = vmatpush1.msra.mxu0 0.0
        %1890 = vmatprep.subr.mxu0 0.0
        %1891 = vmatpush1.msra.mxu0 0.0
        %1892 = vmatprep.subr.mxu0 0.0
        %1893 = vmatpush1.msra.mxu0 0.0
        %1894 = vmatprep.subr.mxu0 0.0
        %1895 = vmatpush1.msra.mxu0 0.0
        %1896 = vmatprep.subr.mxu0 0.0
        %1897 = vmatpush1.msra.mxu0 0.0
        %1898 = vmatprep.subr.mxu0 0.0
        %1899 = vmatpush1.msra.mxu0 0.0
        %1900 = vmatprep.subr.mxu0 0.0
        %1901 = vmatpush1.msra.mxu0 0.0
        %1902 = vmatprep.subr.mxu0 0.0
        %1903 = vmatpush1.msra.mxu0 0.0
        %1904 = vmatprep.subr.mxu0 0.0
        %1905 = vmatpush1.msra.mxu0 0.0
        %1906 = vmatprep.subr.mxu0 0.0
        %1907 = vmatpush1.msra.mxu0 0.0
        %1908 = vmatprep.subr.mxu0 0.0
        %1909 = vmatpush1.msra.mxu0 0.0
        %1910 = vmatprep.subr.mxu0 0.0
        %1911 = vmatpush1.msra.mxu0 0.0
        %1912 = vmatprep.subr.mxu0 0.0
        %1913 = vmatpush1.msra.mxu0 0.0
        %1914 = vmatprep.subr.mxu0 0.0
        %1915 = vmatpush1.msra.mxu0 0.0
        %1916 = vmatprep.subr.mxu0 0.0
        %1917 = vmatpush1.msra.mxu0 0.0
        %1918 = vmatprep.subr.mxu0 0.0
        %1919 = vmatpush1.msra.mxu0 0.0
        %1920 = vmatprep.mubr.f32.mxu0 0.0
        %1921 = vmatmul.mubr.f32.gmra.mrb[0].mxu0 %v1824
        %v1922 = vpop.f32.mrb[0].mxu0
        %v1923 = vadd.f32 0.0, %v1922
        %v1924 = vpop.f32.mrb[0].mxu0
        %1925 = vmatprep.mubr.f32.mxu0 0.0
        %1926 = vmatmul.mubr.f32.gmra.mrb[0].mxu0 %v1825
        %v1927 = vpop.f32.mrb[0].mxu0
        %v1928 = vadd.f32 0.0, %v1927
        %v1929 = vpop.f32.mrb[0].mxu0
        %1930 = vmatprep.mubr.f32.mxu0 0.0
        %1931 = vmatmul.mubr.f32.gmra.mrb[0].mxu0 %v1826
        %v1932 = vpop.f32.mrb[0].mxu0
        %v1933 = vpop.f32.mrb[0].mxu0
        %1934 = vmatprep.mubr.f32.mxu0 0.0
        %1935 = vmatmul.mubr.f32.gmra.mrb[0].mxu0 %v1827
        %v1936 = vpop.f32.mrb[0].mxu0
        %v1937 = vadd.f32 0.0, %v1936
        %v1938 = vpop.f32.mrb[0].mxu0
        %1939 = vmatprep.mubr.f32.mxu0 0.0
        %1940 = vmatmul.mubr.f32.gmra.mrb[0].mxu0 %v1828
        %v1941 = vpop.f32.mrb[0].mxu0
        %v1942 = vadd.f32 0.0, %v1941
        %v1943 = vpop.f32.mrb[0].mxu0
        %1944 = vmatprep.mubr.f32.mxu0 0.0
        %1945 = vmatmul.mubr.f32.gmra.mrb[0].mxu0 %v1829
        %v1946 = vpop.f32.mrb[0].mxu0
        %v1947 = vpop.f32.mrb[0].mxu0
        %1948 = vmatprep.mubr.f32.mxu0 0.0
        %1949 = vmatmul.mubr.f32.gmra.mrb[0].mxu0 %v1830
        %v1950 = vpop.f32.mrb[0].mxu0
        %v1951 = vadd.f32 0.0, %v1950
        %v1952 = vpop.f32.mrb[0].mxu0
        %1953 = vmatprep.mubr.f32.mxu0 0.0
        %1954 = vmatmul.mubr.f32.gmra.mrb[0].mxu0 %v1831
        %v1955 = vpop.f32.mrb[0].mxu0
        %v1956 = vadd.f32 0.0, %v1955
        %v1957 = vpop.f32.mrb[0].mxu0
        %1958 = vmatprep.mubr.f32.mxu0 0.0
        %1959 = vmatmul.mubr.f32.gmra.mrb[0].mxu0 %v1832
        %v1960 = vpop.f32.mrb[0].mxu0
        %v1961 = vpop.f32.mrb[0].mxu0
        %1962 = vmatprep.mubr.f32.mxu0 0.0
        %1963 = vmatmul.mubr.f32.gmra.mrb[0].mxu0 %v1833
        %v1964 = vpop.f32.mrb[0].mxu0
        %v1965 = vadd.f32 0.0, %v1964
        %v1966 = vpop.f32.mrb[0].mxu0
        %1967 = vmatprep.mubr.f32.mxu0 0.0
        %1968 = vmatmul.mubr.f32.gmra.mrb[0].mxu0 %v1834
        %v1969 = vpop.f32.mrb[0].mxu0
        %v1970 = vadd.f32 0.0, %v1969
        %v1971 = vpop.f32.mrb[0].mxu0
        %1972 = vmatprep.mubr.f32.mxu0 0.0
        %1973 = vmatmul.mubr.f32.gmra.mrb[0].mxu0 %v1835
        %v1974 = vpop.f32.mrb[0].mxu0
        %v1975 = vpop.f32.mrb[0].mxu0
        %1976 = vmatprep.mubr.f32.mxu0 0.0
        %1977 = vmatmul.mubr.f32.gmra.mrb[0].mxu0 %v1836
        %v1978 = vpop.f32.mrb[0].mxu0
        %v1979 = vadd.f32 0.0, %v1978
        %v1980 = vpop.f32.mrb[0].mxu0
        %1981 = vmatprep.mubr.f32.mxu0 0.0
        %1982 = vmatmul.mubr.f32.gmra.mrb[0].mxu0 %v1837
        %v1983 = vpop.f32.mrb[0].mxu0
        %v1984 = vadd.f32 0.0, %v1983
        %v1985 = vpop.f32.mrb[0].mxu0
        %1986 = vmatprep.mubr.f32.mxu0 0.0
        %1987 = vmatmul.mubr.f32.gmra.mrb[0].mxu0 %v1838
        %v1988 = vpop.f32.mrb[0].mxu0
        %v1989 = vpop.f32.mrb[0].mxu0
        %1990 = vdwg.mxu0
        %v1991 = vadd.f32 %v1814, %v1923
        %v1992 = vadd.f32 %v1815, %v1928
        %v1993 = vadd.f32 %v1816, %v1937
        %v1994 = vadd.f32 %v1817, %v1942
        %v1995 = vadd.f32 %v1818, %v1951
        %v1996 = vadd.f32 %v1819, %v1956
        %v1997 = vadd.f32 %v1820, %v1965
        %v1998 = vadd.f32 %v1821, %v1970
        %v1999 = vadd.f32 %v1822, %v1979
        %v2000 = vadd.f32 %v1823, %v1984
        %v2001 = vld [vmem:[#allocation2 + $0x48] sm:$0xff]
        %v2002 = vld [vmem:[#allocation2 + $0x50] sm:$0xff]
        %v2003 = vld [vmem:[#allocation2 + $0x58] sm:$0xff]
        %v2004 = vld [vmem:[#allocation2 + $0x60] sm:$0xff]
        %v2005 = vld [vmem:[#allocation2 + $0x68] sm:$0xff]
        %v2006 = vld [vmem:[#allocation2 + $0x70] sm:$0xff]
        %v2007 = vld [vmem:[#allocation2 + $0x78] sm:$0xff]
        %v2008 = vld [vmem:[#allocation2 + $0x80] sm:$0xff]
        %v2009 = vld [vmem:[#allocation2 + $0x88] sm:$0xff]
        %v2010 = vld [vmem:[#allocation2 + $0x90] sm:$0xff]
        %v2011 = vld [vmem:[#allocation2 + $0x98] sm:$0xff]
        %v2012 = vld [vmem:[#allocation2 + $0xa0] sm:$0xff]
        %v2013 = vld [vmem:[#allocation2 + $0xa8] sm:$0xff]
        %v2014 = vld [vmem:[#allocation2 + $0xb0] sm:$0xff]
        %v2015 = vld [vmem:[#allocation2 + $0xb8] sm:$0xff]
        %s2016 = scalar_lea.vmem [#allocation13], 896
        %v2017 = vld [vmem:[%s2016] sm:$0xff]
        %v2018 = vld [vmem:[%s2016 + $0x8] sm:$0xff]
        %v2019 = vld [vmem:[%s2016 + $0x10] sm:$0xff]
        %v2020 = vld [vmem:[%s2016 + $0x18] sm:$0xff]
        %v2021 = vld [vmem:[%s2016 + $0x20] sm:$0xff]
        %v2022 = vld [vmem:[%s2016 + $0x28] sm:$0xff]
        %v2023 = vld [vmem:[%s2016 + $0x30] sm:$0xff]
        %v2024 = vld [vmem:[%s2016 + $0x38] sm:$0xff]
        %v2025 = vld [vmem:[%s2016 + $0x40] sm:$0xff]
        %v2026 = vld [vmem:[%s2016 + $0x48] sm:$0xff]
        %v2027 = vld [vmem:[%s2016 + $0x50] sm:$0xff]
        %v2028 = vld [vmem:[%s2016 + $0x58] sm:$0xff]
        %v2029 = vld [vmem:[%s2016 + $0x60] sm:$0xff]
        %v2030 = vld [vmem:[%s2016 + $0x68] sm:$0xff]
        %v2031 = vld [vmem:[%s2016 + $0x70] sm:$0xff]
        %v2032 = vld [vmem:[%s2016 + $0x78] sm:$0xff]
        %2033 = vmatprep.subr.mxu0 0.0
        %2034 = vmatpush1.msra.mxu0 %v2017
        %2035 = vmatprep.subr.mxu0 0.0
        %2036 = vmatpush1.msra.mxu0 %v2018
        %2037 = vmatprep.subr.mxu0 0.0
        %2038 = vmatpush1.msra.mxu0 %v2019
        %2039 = vmatprep.subr.mxu0 0.0
        %2040 = vmatpush1.msra.mxu0 %v2020
        %2041 = vmatprep.subr.mxu0 0.0
        %2042 = vmatpush1.msra.mxu0 %v2021
        %2043 = vmatprep.subr.mxu0 0.0
        %2044 = vmatpush1.msra.mxu0 %v2022
        %2045 = vmatprep.subr.mxu0 0.0
        %2046 = vmatpush1.msra.mxu0 %v2023
        %2047 = vmatprep.subr.mxu0 0.0
        %2048 = vmatpush1.msra.mxu0 %v2024
        %2049 = vmatprep.subr.mxu0 0.0
        %2050 = vmatpush1.msra.mxu0 %v2025
        %2051 = vmatprep.subr.mxu0 0.0
        %2052 = vmatpush1.msra.mxu0 %v2026
        %2053 = vmatprep.subr.mxu0 0.0
        %2054 = vmatpush1.msra.mxu0 %v2027
        %2055 = vmatprep.subr.mxu0 0.0
        %2056 = vmatpush1.msra.mxu0 %v2028
        %2057 = vmatprep.subr.mxu0 0.0
        %2058 = vmatpush1.msra.mxu0 %v2029
        %2059 = vmatprep.subr.mxu0 0.0
        %2060 = vmatpush1.msra.mxu0 %v2030
        %2061 = vmatprep.subr.mxu0 0.0
        %2062 = vmatpush1.msra.mxu0 %v2031
        %2063 = vmatprep.subr.mxu0 0.0
        %2064 = vmatpush1.msra.mxu0 %v2032
        %2065 = vmatprep.subr.mxu0 0.0
        %2066 = vmatpush1.msra.mxu0 0.0
        %2067 = vmatprep.subr.mxu0 0.0
        %2068 = vmatpush1.msra.mxu0 0.0
        %2069 = vmatprep.subr.mxu0 0.0
        %2070 = vmatpush1.msra.mxu0 0.0
        %2071 = vmatprep.subr.mxu0 0.0
        %2072 = vmatpush1.msra.mxu0 0.0
        %2073 = vmatprep.subr.mxu0 0.0
        %2074 = vmatpush1.msra.mxu0 0.0
        %2075 = vmatprep.subr.mxu0 0.0
        %2076 = vmatpush1.msra.mxu0 0.0
        %2077 = vmatprep.subr.mxu0 0.0
        %2078 = vmatpush1.msra.mxu0 0.0
        %2079 = vmatprep.subr.mxu0 0.0
        %2080 = vmatpush1.msra.mxu0 0.0
        %2081 = vmatprep.subr.mxu0 0.0
        %2082 = vmatpush1.msra.mxu0 0.0
        %2083 = vmatprep.subr.mxu0 0.0
        %2084 = vmatpush1.msra.mxu0 0.0
        %2085 = vmatprep.subr.mxu0 0.0
        %2086 = vmatpush1.msra.mxu0 0.0
        %2087 = vmatprep.subr.mxu0 0.0
        %2088 = vmatpush1.msra.mxu0 0.0
        %2089 = vmatprep.subr.mxu0 0.0
        %2090 = vmatpush1.msra.mxu0 0.0
        %2091 = vmatprep.subr.mxu0 0.0
        %2092 = vmatpush1.msra.mxu0 0.0
        %2093 = vmatprep.subr.mxu0 0.0
        %2094 = vmatpush1.msra.mxu0 0.0
        %2095 = vmatprep.subr.mxu0 0.0
        %2096 = vmatpush1.msra.mxu0 0.0
        %2097 = vmatprep.mubr.f32.mxu0 0.0
        %2098 = vmatmul.mubr.f32.gmra.mrb[0].mxu0 %v2001
        %v2099 = vpop.f32.mrb[0].mxu0
        %v2100 = vadd.f32 0.0, %v2099
        %v2101 = vpop.f32.mrb[0].mxu0
        %2102 = vmatprep.mubr.f32.mxu0 0.0
        %2103 = vmatmul.mubr.f32.gmra.mrb[0].mxu0 %v2002
        %v2104 = vpop.f32.mrb[0].mxu0
        %v2105 = vadd.f32 0.0, %v2104
        %v2106 = vpop.f32.mrb[0].mxu0
        %2107 = vmatprep.mubr.f32.mxu0 0.0
        %2108 = vmatmul.mubr.f32.gmra.mrb[0].mxu0 %v2003
        %v2109 = vpop.f32.mrb[0].mxu0
        %v2110 = vpop.f32.mrb[0].mxu0
        %2111 = vmatprep.mubr.f32.mxu0 0.0
        %2112 = vmatmul.mubr.f32.gmra.mrb[0].mxu0 %v2004
        %v2113 = vpop.f32.mrb[0].mxu0
        %v2114 = vadd.f32 0.0, %v2113
        %v2115 = vpop.f32.mrb[0].mxu0
        %2116 = vmatprep.mubr.f32.mxu0 0.0
        %2117 = vmatmul.mubr.f32.gmra.mrb[0].mxu0 %v2005
        %v2118 = vpop.f32.mrb[0].mxu0
        %v2119 = vadd.f32 0.0, %v2118
        %v2120 = vpop.f32.mrb[0].mxu0
        %2121 = vmatprep.mubr.f32.mxu0 0.0
        %2122 = vmatmul.mubr.f32.gmra.mrb[0].mxu0 %v2006
        %v2123 = vpop.f32.mrb[0].mxu0
        %v2124 = vpop.f32.mrb[0].mxu0
        %2125 = vmatprep.mubr.f32.mxu0 0.0
        %2126 = vmatmul.mubr.f32.gmra.mrb[0].mxu0 %v2007
        %v2127 = vpop.f32.mrb[0].mxu0
        %v2128 = vadd.f32 0.0, %v2127
        %v2129 = vpop.f32.mrb[0].mxu0
        %2130 = vmatprep.mubr.f32.mxu0 0.0
        %2131 = vmatmul.mubr.f32.gmra.mrb[0].mxu0 %v2008
        %v2132 = vpop.f32.mrb[0].mxu0
        %v2133 = vadd.f32 0.0, %v2132
        %v2134 = vpop.f32.mrb[0].mxu0
        %2135 = vmatprep.mubr.f32.mxu0 0.0
        %2136 = vmatmul.mubr.f32.gmra.mrb[0].mxu0 %v2009
        %v2137 = vpop.f32.mrb[0].mxu0
        %v2138 = vpop.f32.mrb[0].mxu0
        %2139 = vmatprep.mubr.f32.mxu0 0.0
        %2140 = vmatmul.mubr.f32.gmra.mrb[0].mxu0 %v2010
        %v2141 = vpop.f32.mrb[0].mxu0
        %v2142 = vadd.f32 0.0, %v2141
        %v2143 = vpop.f32.mrb[0].mxu0
        %2144 = vmatprep.mubr.f32.mxu0 0.0
        %2145 = vmatmul.mubr.f32.gmra.mrb[0].mxu0 %v2011
        %v2146 = vpop.f32.mrb[0].mxu0
        %v2147 = vadd.f32 0.0, %v2146
        %v2148 = vpop.f32.mrb[0].mxu0
        %2149 = vmatprep.mubr.f32.mxu0 0.0
        %2150 = vmatmul.mubr.f32.gmra.mrb[0].mxu0 %v2012
        %v2151 = vpop.f32.mrb[0].mxu0
        %v2152 = vpop.f32.mrb[0].mxu0
        %2153 = vmatprep.mubr.f32.mxu0 0.0
        %2154 = vmatmul.mubr.f32.gmra.mrb[0].mxu0 %v2013
        %v2155 = vpop.f32.mrb[0].mxu0
        %v2156 = vadd.f32 0.0, %v2155
        %v2157 = vpop.f32.mrb[0].mxu0
        %2158 = vmatprep.mubr.f32.mxu0 0.0
        %2159 = vmatmul.mubr.f32.gmra.mrb[0].mxu0 %v2014
        %v2160 = vpop.f32.mrb[0].mxu0
        %v2161 = vadd.f32 0.0, %v2160
        %v2162 = vpop.f32.mrb[0].mxu0
        %2163 = vmatprep.mubr.f32.mxu0 0.0
        %2164 = vmatmul.mubr.f32.gmra.mrb[0].mxu0 %v2015
        %v2165 = vpop.f32.mrb[0].mxu0
        %v2166 = vpop.f32.mrb[0].mxu0
        %2167 = vdwg.mxu0
        %v2168 = vadd.f32 %v1991, %v2100
        %v2169 = vadd.f32 %v1992, %v2105
        %v2170 = vadd.f32 %v1993, %v2114
        %v2171 = vadd.f32 %v1994, %v2119
        %v2172 = vadd.f32 %v1995, %v2128
        %v2173 = vadd.f32 %v1996, %v2133
        %v2174 = vadd.f32 %v1997, %v2142
        %v2175 = vadd.f32 %v1998, %v2147
        %v2176 = vadd.f32 %v1999, %v2156
        %v2177 = vadd.f32 %v2000, %v2161
        %v2178 = vld [vmem:[#allocation2 + $0x49] sm:$0xff]
        %v2179 = vld [vmem:[#allocation2 + $0x51] sm:$0xff]
        %v2180 = vld [vmem:[#allocation2 + $0x59] sm:$0xff]
        %v2181 = vld [vmem:[#allocation2 + $0x61] sm:$0xff]
        %v2182 = vld [vmem:[#allocation2 + $0x69] sm:$0xff]
        %v2183 = vld [vmem:[#allocation2 + $0x71] sm:$0xff]
        %v2184 = vld [vmem:[#allocation2 + $0x79] sm:$0xff]
        %v2185 = vld [vmem:[#allocation2 + $0x81] sm:$0xff]
        %v2186 = vld [vmem:[#allocation2 + $0x89] sm:$0xff]
        %v2187 = vld [vmem:[#allocation2 + $0x91] sm:$0xff]
        %v2188 = vld [vmem:[#allocation2 + $0x99] sm:$0xff]
        %v2189 = vld [vmem:[#allocation2 + $0xa1] sm:$0xff]
        %v2190 = vld [vmem:[#allocation2 + $0xa9] sm:$0xff]
        %v2191 = vld [vmem:[#allocation2 + $0xb1] sm:$0xff]
        %v2192 = vld [vmem:[#allocation2 + $0xb9] sm:$0xff]
        %s2193 = scalar_lea.vmem [#allocation13], 1024
        %v2194 = vld [vmem:[%s2193] sm:$0xff]
        %v2195 = vld [vmem:[%s2193 + $0x8] sm:$0xff]
        %v2196 = vld [vmem:[%s2193 + $0x10] sm:$0xff]
        %v2197 = vld [vmem:[%s2193 + $0x18] sm:$0xff]
        %v2198 = vld [vmem:[%s2193 + $0x20] sm:$0xff]
        %v2199 = vld [vmem:[%s2193 + $0x28] sm:$0xff]
        %v2200 = vld [vmem:[%s2193 + $0x30] sm:$0xff]
        %v2201 = vld [vmem:[%s2193 + $0x38] sm:$0xff]
        %v2202 = vld [vmem:[%s2193 + $0x40] sm:$0xff]
        %v2203 = vld [vmem:[%s2193 + $0x48] sm:$0xff]
        %v2204 = vld [vmem:[%s2193 + $0x50] sm:$0xff]
        %v2205 = vld [vmem:[%s2193 + $0x58] sm:$0xff]
        %v2206 = vld [vmem:[%s2193 + $0x60] sm:$0xff]
        %v2207 = vld [vmem:[%s2193 + $0x68] sm:$0xff]
        %v2208 = vld [vmem:[%s2193 + $0x70] sm:$0xff]
        %v2209 = vld [vmem:[%s2193 + $0x78] sm:$0xff]
        %2210 = vmatprep.subr.mxu0 0.0
        %2211 = vmatpush1.msra.mxu0 %v2194
        %2212 = vmatprep.subr.mxu0 0.0
        %2213 = vmatpush1.msra.mxu0 %v2195
        %2214 = vmatprep.subr.mxu0 0.0
        %2215 = vmatpush1.msra.mxu0 %v2196
        %2216 = vmatprep.subr.mxu0 0.0
        %2217 = vmatpush1.msra.mxu0 %v2197
        %2218 = vmatprep.subr.mxu0 0.0
        %2219 = vmatpush1.msra.mxu0 %v2198
        %2220 = vmatprep.subr.mxu0 0.0
        %2221 = vmatpush1.msra.mxu0 %v2199
        %2222 = vmatprep.subr.mxu0 0.0
        %2223 = vmatpush1.msra.mxu0 %v2200
        %2224 = vmatprep.subr.mxu0 0.0
        %2225 = vmatpush1.msra.mxu0 %v2201
        %2226 = vmatprep.subr.mxu0 0.0
        %2227 = vmatpush1.msra.mxu0 %v2202
        %2228 = vmatprep.subr.mxu0 0.0
        %2229 = vmatpush1.msra.mxu0 %v2203
        %2230 = vmatprep.subr.mxu0 0.0
        %2231 = vmatpush1.msra.mxu0 %v2204
        %2232 = vmatprep.subr.mxu0 0.0
        %2233 = vmatpush1.msra.mxu0 %v2205
        %2234 = vmatprep.subr.mxu0 0.0
        %2235 = vmatpush1.msra.mxu0 %v2206
        %2236 = vmatprep.subr.mxu0 0.0
        %2237 = vmatpush1.msra.mxu0 %v2207
        %2238 = vmatprep.subr.mxu0 0.0
        %2239 = vmatpush1.msra.mxu0 %v2208
        %2240 = vmatprep.subr.mxu0 0.0
        %2241 = vmatpush1.msra.mxu0 %v2209
        %2242 = vmatprep.subr.mxu0 0.0
        %2243 = vmatpush1.msra.mxu0 0.0
        %2244 = vmatprep.subr.mxu0 0.0
        %2245 = vmatpush1.msra.mxu0 0.0
        %2246 = vmatprep.subr.mxu0 0.0
        %2247 = vmatpush1.msra.mxu0 0.0
        %2248 = vmatprep.subr.mxu0 0.0
        %2249 = vmatpush1.msra.mxu0 0.0
        %2250 = vmatprep.subr.mxu0 0.0
        %2251 = vmatpush1.msra.mxu0 0.0
        %2252 = vmatprep.subr.mxu0 0.0
        %2253 = vmatpush1.msra.mxu0 0.0
        %2254 = vmatprep.subr.mxu0 0.0
        %2255 = vmatpush1.msra.mxu0 0.0
        %2256 = vmatprep.subr.mxu0 0.0
        %2257 = vmatpush1.msra.mxu0 0.0
        %2258 = vmatprep.subr.mxu0 0.0
        %2259 = vmatpush1.msra.mxu0 0.0
        %2260 = vmatprep.subr.mxu0 0.0
        %2261 = vmatpush1.msra.mxu0 0.0
        %2262 = vmatprep.subr.mxu0 0.0
        %2263 = vmatpush1.msra.mxu0 0.0
        %2264 = vmatprep.subr.mxu0 0.0
        %2265 = vmatpush1.msra.mxu0 0.0
        %2266 = vmatprep.subr.mxu0 0.0
        %2267 = vmatpush1.msra.mxu0 0.0
        %2268 = vmatprep.subr.mxu0 0.0
        %2269 = vmatpush1.msra.mxu0 0.0
        %2270 = vmatprep.subr.mxu0 0.0
        %2271 = vmatpush1.msra.mxu0 0.0
        %2272 = vmatprep.subr.mxu0 0.0
        %2273 = vmatpush1.msra.mxu0 0.0
        %2274 = vmatprep.mubr.f32.mxu0 0.0
        %2275 = vmatmul.mubr.f32.gmra.mrb[0].mxu0 %v2178
        %v2276 = vpop.f32.mrb[0].mxu0
        %v2277 = vadd.f32 0.0, %v2276
        %v2278 = vpop.f32.mrb[0].mxu0
        %2279 = vmatprep.mubr.f32.mxu0 0.0
        %2280 = vmatmul.mubr.f32.gmra.mrb[0].mxu0 %v2179
        %v2281 = vpop.f32.mrb[0].mxu0
        %v2282 = vadd.f32 0.0, %v2281
        %v2283 = vpop.f32.mrb[0].mxu0
        %2284 = vmatprep.mubr.f32.mxu0 0.0
        %2285 = vmatmul.mubr.f32.gmra.mrb[0].mxu0 %v2180
        %v2286 = vpop.f32.mrb[0].mxu0
        %v2287 = vpop.f32.mrb[0].mxu0
        %2288 = vmatprep.mubr.f32.mxu0 0.0
        %2289 = vmatmul.mubr.f32.gmra.mrb[0].mxu0 %v2181
        %v2290 = vpop.f32.mrb[0].mxu0
        %v2291 = vadd.f32 0.0, %v2290
        %v2292 = vpop.f32.mrb[0].mxu0
        %2293 = vmatprep.mubr.f32.mxu0 0.0
        %2294 = vmatmul.mubr.f32.gmra.mrb[0].mxu0 %v2182
        %v2295 = vpop.f32.mrb[0].mxu0
        %v2296 = vadd.f32 0.0, %v2295
        %v2297 = vpop.f32.mrb[0].mxu0
        %2298 = vmatprep.mubr.f32.mxu0 0.0
        %2299 = vmatmul.mubr.f32.gmra.mrb[0].mxu0 %v2183
        %v2300 = vpop.f32.mrb[0].mxu0
        %v2301 = vpop.f32.mrb[0].mxu0
        %2302 = vmatprep.mubr.f32.mxu0 0.0
        %2303 = vmatmul.mubr.f32.gmra.mrb[0].mxu0 %v2184
        %v2304 = vpop.f32.mrb[0].mxu0
        %v2305 = vadd.f32 0.0, %v2304
        %v2306 = vpop.f32.mrb[0].mxu0
        %2307 = vmatprep.mubr.f32.mxu0 0.0
        %2308 = vmatmul.mubr.f32.gmra.mrb[0].mxu0 %v2185
        %v2309 = vpop.f32.mrb[0].mxu0
        %v2310 = vadd.f32 0.0, %v2309
        %v2311 = vpop.f32.mrb[0].mxu0
        %2312 = vmatprep.mubr.f32.mxu0 0.0
        %2313 = vmatmul.mubr.f32.gmra.mrb[0].mxu0 %v2186
        %v2314 = vpop.f32.mrb[0].mxu0
        %v2315 = vpop.f32.mrb[0].mxu0
        %2316 = vmatprep.mubr.f32.mxu0 0.0
        %2317 = vmatmul.mubr.f32.gmra.mrb[0].mxu0 %v2187
        %v2318 = vpop.f32.mrb[0].mxu0
        %v2319 = vadd.f32 0.0, %v2318
        %v2320 = vpop.f32.mrb[0].mxu0
        %2321 = vmatprep.mubr.f32.mxu0 0.0
        %2322 = vmatmul.mubr.f32.gmra.mrb[0].mxu0 %v2188
        %v2323 = vpop.f32.mrb[0].mxu0
        %v2324 = vadd.f32 0.0, %v2323
        %v2325 = vpop.f32.mrb[0].mxu0
        %2326 = vmatprep.mubr.f32.mxu0 0.0
        %2327 = vmatmul.mubr.f32.gmra.mrb[0].mxu0 %v2189
        %v2328 = vpop.f32.mrb[0].mxu0
        %v2329 = vpop.f32.mrb[0].mxu0
        %2330 = vmatprep.mubr.f32.mxu0 0.0
        %2331 = vmatmul.mubr.f32.gmra.mrb[0].mxu0 %v2190
        %v2332 = vpop.f32.mrb[0].mxu0
        %v2333 = vadd.f32 0.0, %v2332
        %v2334 = vpop.f32.mrb[0].mxu0
        %2335 = vmatprep.mubr.f32.mxu0 0.0
        %2336 = vmatmul.mubr.f32.gmra.mrb[0].mxu0 %v2191
        %v2337 = vpop.f32.mrb[0].mxu0
        %v2338 = vadd.f32 0.0, %v2337
        %v2339 = vpop.f32.mrb[0].mxu0
        %2340 = vmatprep.mubr.f32.mxu0 0.0
        %2341 = vmatmul.mubr.f32.gmra.mrb[0].mxu0 %v2192
        %v2342 = vpop.f32.mrb[0].mxu0
        %v2343 = vpop.f32.mrb[0].mxu0
        %2344 = vdwg.mxu0
        %v2345 = vadd.f32 %v2168, %v2277
        %v2346 = vadd.f32 %v2169, %v2282
        %v2347 = vadd.f32 %v2170, %v2291
        %v2348 = vadd.f32 %v2171, %v2296
        %v2349 = vadd.f32 %v2172, %v2305
        %v2350 = vadd.f32 %v2173, %v2310
        %v2351 = vadd.f32 %v2174, %v2319
        %v2352 = vadd.f32 %v2175, %v2324
        %v2353 = vadd.f32 %v2176, %v2333
        %v2354 = vadd.f32 %v2177, %v2338
        %v2356 = vlaneseq
        %v2357 = vshrl.u32 %v2356, 7
        %v2358 = vsub.s32 0, %v2357
        %v2359 = vrot.slane %v781, %v2358
        %v2361 = vadd.f32 %v2345, %v2359
        %v2362 = vadd.f32 %v2346, %v2359
        %v2363 = vmax.f32 %v2361, 0.0
        %v2364 = vmax.f32 %v2362, 0.0
        %2365 = vst [vmem:[#allocation3 + $0x18] sm:$0xff] %v2363
        %2366 = vst [vmem:[#allocation3 + $0x20] sm:$0xff] %v2364
        %v2367 = vadd.f32 %v2347, %v2359
        %v2368 = vadd.f32 %v2348, %v2359
        %v2369 = vmax.f32 %v2367, 0.0
        %v2370 = vmax.f32 %v2368, 0.0
        %2371 = vst [vmem:[#allocation3 + $0x30] sm:$0xff] %v2369
        %2372 = vst [vmem:[#allocation3 + $0x38] sm:$0xff] %v2370
        %v2373 = vadd.f32 %v2349, %v2359
        %v2374 = vadd.f32 %v2350, %v2359
        %v2375 = vmax.f32 %v2373, 0.0
        %v2376 = vmax.f32 %v2374, 0.0
        %2377 = vst [vmem:[#allocation3 + $0x48] sm:$0xff] %v2375
        %2378 = vst [vmem:[#allocation3 + $0x50] sm:$0xff] %v2376
        %v2379 = vadd.f32 %v2351, %v2359
        %v2380 = vadd.f32 %v2352, %v2359
        %v2381 = vmax.f32 %v2379, 0.0
        %v2382 = vmax.f32 %v2380, 0.0
        %2383 = vst [vmem:[#allocation3 + $0x60] sm:$0xff] %v2381
        %2384 = vst [vmem:[#allocation3 + $0x68] sm:$0xff] %v2382
        %v2385 = vadd.f32 %v2353, %v2359
        %v2386 = vadd.f32 %v2354, %v2359
        %v2387 = vmax.f32 %v2385, 0.0
        %v2388 = vmax.f32 %v2386, 0.0
        %2389 = vst [vmem:[#allocation3 + $0x78] sm:$0xff] %v2387
        %2390 = vst [vmem:[#allocation3 + $0x80] sm:$0xff] %v2388
        %v2391 = vld [vmem:[#allocation2 + $0x8f] sm:$0xff]
        %v2392 = vld [vmem:[#allocation2 + $0x97] sm:$0xff]
        %v2393 = vld [vmem:[#allocation2 + $0x9f] sm:$0xff]
        %v2394 = vld [vmem:[#allocation2 + $0xa7] sm:$0xff]
        %v2395 = vld [vmem:[#allocation2 + $0xaf] sm:$0xff]
        %v2396 = vld [vmem:[#allocation2 + $0xb7] sm:$0xff]
        %v2397 = vld [vmem:[#allocation2 + $0xbf] sm:$0xff]
        %v2398 = vld [vmem:[#allocation2 + $0xc7] sm:$0xff]
        %v2399 = vld [vmem:[#allocation2 + $0xcf] sm:$0xff]
        %v2400 = vld [vmem:[#allocation2 + $0xd7] sm:$0xff]
        %v2401 = vld [vmem:[#allocation2 + $0xdf] sm:$0xff]
        %v2402 = vld [vmem:[#allocation2 + $0xe7] sm:$0xff]
        %v2403 = vld [vmem:[#allocation2 + $0xef] sm:$0xff]
        %v2404 = vld [vmem:[#allocation2 + $0xf7] sm:$0xff]
        %v2405 = vld [vmem:[#allocation2 + $0xff] sm:$0xff]
        %v2406 = vld [vmem:[#allocation13] sm:$0xff]
        %v2407 = vld [vmem:[#allocation13 + $0x8] sm:$0xff]
        %v2408 = vld [vmem:[#allocation13 + $0x10] sm:$0xff]
        %v2409 = vld [vmem:[#allocation13 + $0x18] sm:$0xff]
        %v2410 = vld [vmem:[#allocation13 + $0x20] sm:$0xff]
        %v2411 = vld [vmem:[#allocation13 + $0x28] sm:$0xff]
        %v2412 = vld [vmem:[#allocation13 + $0x30] sm:$0xff]
        %v2413 = vld [vmem:[#allocation13 + $0x38] sm:$0xff]
        %v2414 = vld [vmem:[#allocation13 + $0x40] sm:$0xff]
        %v2415 = vld [vmem:[#allocation13 + $0x48] sm:$0xff]
        %v2416 = vld [vmem:[#allocation13 + $0x50] sm:$0xff]
        %v2417 = vld [vmem:[#allocation13 + $0x58] sm:$0xff]
        %v2418 = vld [vmem:[#allocation13 + $0x60] sm:$0xff]
        %v2419 = vld [vmem:[#allocation13 + $0x68] sm:$0xff]
        %v2420 = vld [vmem:[#allocation13 + $0x70] sm:$0xff]
        %v2421 = vld [vmem:[#allocation13 + $0x78] sm:$0xff]
        %v2422 = vld [vmem:[#allocation2 + $0x90] sm:$0xff]
        %v2423 = vld [vmem:[#allocation2 + $0x98] sm:$0xff]
        %v2424 = vld [vmem:[#allocation2 + $0xa0] sm:$0xff]
        %v2425 = vld [vmem:[#allocation2 + $0xa8] sm:$0xff]
        %v2426 = vld [vmem:[#allocation2 + $0xb0] sm:$0xff]
        %v2427 = vld [vmem:[#allocation2 + $0xb8] sm:$0xff]
        %v2428 = vld [vmem:[#allocation2 + $0xc0] sm:$0xff]
        %v2429 = vld [vmem:[#allocation2 + $0xc8] sm:$0xff]
        %v2430 = vld [vmem:[#allocation2 + $0xd0] sm:$0xff]
        %v2431 = vld [vmem:[#allocation2 + $0xd8] sm:$0xff]
        %v2432 = vld [vmem:[#allocation2 + $0xe0] sm:$0xff]
        %v2433 = vld [vmem:[#allocation2 + $0xe8] sm:$0xff]
        %v2434 = vld [vmem:[#allocation2 + $0xf0] sm:$0xff]
        %v2435 = vld [vmem:[#allocation2 + $0xf8] sm:$0xff]
        %v2436 = vld [vmem:[#allocation2 + $0x100] sm:$0xff]
        %v2437 = vld [vmem:[%s829] sm:$0xff]
        %v2438 = vld [vmem:[%s829 + $0x8] sm:$0xff]
        %v2439 = vld [vmem:[%s829 + $0x10] sm:$0xff]
        %v2440 = vld [vmem:[%s829 + $0x18] sm:$0xff]
        %v2441 = vld [vmem:[%s829 + $0x20] sm:$0xff]
        %v2442 = vld [vmem:[%s829 + $0x28] sm:$0xff]
        %v2443 = vld [vmem:[%s829 + $0x30] sm:$0xff]
        %v2444 = vld [vmem:[%s829 + $0x38] sm:$0xff]
        %v2445 = vld [vmem:[%s829 + $0x40] sm:$0xff]
        %v2446 = vld [vmem:[%s829 + $0x48] sm:$0xff]
        %v2447 = vld [vmem:[%s829 + $0x50] sm:$0xff]
        %v2448 = vld [vmem:[%s829 + $0x58] sm:$0xff]
        %v2449 = vld [vmem:[%s829 + $0x60] sm:$0xff]
        %v2450 = vld [vmem:[%s829 + $0x68] sm:$0xff]
        %v2451 = vld [vmem:[%s829 + $0x70] sm:$0xff]
        %v2452 = vld [vmem:[%s829 + $0x78] sm:$0xff]
        %2453 = vmatprep.subr.mxu0 0.0
        %2454 = vmatpush1.msra.mxu0 %v2437
        %2455 = vmatprep.subr.mxu0 0.0
        %2456 = vmatpush1.msra.mxu0 %v2438
        %2457 = vmatprep.subr.mxu0 0.0
        %2458 = vmatpush1.msra.mxu0 %v2439
        %2459 = vmatprep.subr.mxu0 0.0
        %2460 = vmatpush1.msra.mxu0 %v2440
        %2461 = vmatprep.subr.mxu0 0.0
        %2462 = vmatpush1.msra.mxu0 %v2441
        %2463 = vmatprep.subr.mxu0 0.0
        %2464 = vmatpush1.msra.mxu0 %v2442
        %2465 = vmatprep.subr.mxu0 0.0
        %2466 = vmatpush1.msra.mxu0 %v2443
        %2467 = vmatprep.subr.mxu0 0.0
        %2468 = vmatpush1.msra.mxu0 %v2444
        %2469 = vmatprep.subr.mxu0 0.0
        %2470 = vmatpush1.msra.mxu0 %v2445
        %2471 = vmatprep.subr.mxu0 0.0
        %2472 = vmatpush1.msra.mxu0 %v2446
        %2473 = vmatprep.subr.mxu0 0.0
        %2474 = vmatpush1.msra.mxu0 %v2447
        %2475 = vmatprep.subr.mxu0 0.0
        %2476 = vmatpush1.msra.mxu0 %v2448
        %2477 = vmatprep.subr.mxu0 0.0
        %2478 = vmatpush1.msra.mxu0 %v2449
        %2479 = vmatprep.subr.mxu0 0.0
        %2480 = vmatpush1.msra.mxu0 %v2450
        %2481 = vmatprep.subr.mxu0 0.0
        %2482 = vmatpush1.msra.mxu0 %v2451
        %2483 = vmatprep.subr.mxu0 0.0
        %2484 = vmatpush1.msra.mxu0 %v2452
        %2485 = vmatprep.subr.mxu0 0.0
        %2486 = vmatpush1.msra.mxu0 0.0
        %2487 = vmatprep.subr.mxu0 0.0
        %2488 = vmatpush1.msra.mxu0 0.0
        %2489 = vmatprep.subr.mxu0 0.0
        %2490 = vmatpush1.msra.mxu0 0.0
        %2491 = vmatprep.subr.mxu0 0.0
        %2492 = vmatpush1.msra.mxu0 0.0
        %2493 = vmatprep.subr.mxu0 0.0
        %2494 = vmatpush1.msra.mxu0 0.0
        %2495 = vmatprep.subr.mxu0 0.0
        %2496 = vmatpush1.msra.mxu0 0.0
        %2497 = vmatprep.subr.mxu0 0.0
        %2498 = vmatpush1.msra.mxu0 0.0
        %2499 = vmatprep.subr.mxu0 0.0
        %2500 = vmatpush1.msra.mxu0 0.0
        %2501 = vmatprep.subr.mxu0 0.0
        %2502 = vmatpush1.msra.mxu0 0.0
        %2503 = vmatprep.subr.mxu0 0.0
        %2504 = vmatpush1.msra.mxu0 0.0
        %2505 = vmatprep.subr.mxu0 0.0
        %2506 = vmatpush1.msra.mxu0 0.0
        %2507 = vmatprep.subr.mxu0 0.0
        %2508 = vmatpush1.msra.mxu0 0.0
        %2509 = vmatprep.subr.mxu0 0.0
        %2510 = vmatpush1.msra.mxu0 0.0
        %2511 = vmatprep.subr.mxu0 0.0
        %2512 = vmatpush1.msra.mxu0 0.0
        %2513 = vmatprep.subr.mxu0 0.0
        %2514 = vmatpush1.msra.mxu0 0.0
        %2515 = vmatprep.subr.mxu0 0.0
        %2516 = vmatpush1.msra.mxu0 0.0
        %2517 = vmatprep.mubr.f32.mxu0 0.0
        %2518 = vmatmul.mubr.f32.gmra.mrb[0].mxu0 %v2422
        %v2519 = vpop.f32.mrb[0].mxu0
        %v2520 = vadd.f32 0.0, %v2519
        %v2521 = vpop.f32.mrb[0].mxu0
        %2522 = vmatprep.mubr.f32.mxu0 0.0
        %2523 = vmatmul.mubr.f32.gmra.mrb[0].mxu0 %v2423
        %v2524 = vpop.f32.mrb[0].mxu0
        %v2525 = vadd.f32 0.0, %v2524
        %v2526 = vpop.f32.mrb[0].mxu0
        %2527 = vmatprep.mubr.f32.mxu0 0.0
        %2528 = vmatmul.mubr.f32.gmra.mrb[0].mxu0 %v2424
        %v2529 = vpop.f32.mrb[0].mxu0
        %v2530 = vpop.f32.mrb[0].mxu0
        %2531 = vmatprep.mubr.f32.mxu0 0.0
        %2532 = vmatmul.mubr.f32.gmra.mrb[0].mxu0 %v2425
        %v2533 = vpop.f32.mrb[0].mxu0
        %v2534 = vadd.f32 0.0, %v2533
        %v2535 = vpop.f32.mrb[0].mxu0
        %2536 = vmatprep.mubr.f32.mxu0 0.0
        %2537 = vmatmul.mubr.f32.gmra.mrb[0].mxu0 %v2426
        %v2538 = vpop.f32.mrb[0].mxu0
        %v2539 = vadd.f32 0.0, %v2538
        %v2540 = vpop.f32.mrb[0].mxu0
        %2541 = vmatprep.mubr.f32.mxu0 0.0
        %2542 = vmatmul.mubr.f32.gmra.mrb[0].mxu0 %v2427
        %v2543 = vpop.f32.mrb[0].mxu0
        %v2544 = vpop.f32.mrb[0].mxu0
        %2545 = vmatprep.mubr.f32.mxu0 0.0
        %2546 = vmatmul.mubr.f32.gmra.mrb[0].mxu0 %v2428
        %v2547 = vpop.f32.mrb[0].mxu0
        %v2548 = vadd.f32 0.0, %v2547
        %v2549 = vpop.f32.mrb[0].mxu0
        %2550 = vmatprep.mubr.f32.mxu0 0.0
        %2551 = vmatmul.mubr.f32.gmra.mrb[0].mxu0 %v2429
        %v2552 = vpop.f32.mrb[0].mxu0
        %v2553 = vadd.f32 0.0, %v2552
        %v2554 = vpop.f32.mrb[0].mxu0
        %2555 = vmatprep.mubr.f32.mxu0 0.0
        %2556 = vmatmul.mubr.f32.gmra.mrb[0].mxu0 %v2430
        %v2557 = vpop.f32.mrb[0].mxu0
        %v2558 = vpop.f32.mrb[0].mxu0
        %2559 = vmatprep.mubr.f32.mxu0 0.0
        %2560 = vmatmul.mubr.f32.gmra.mrb[0].mxu0 %v2431
        %v2561 = vpop.f32.mrb[0].mxu0
        %v2562 = vadd.f32 0.0, %v2561
        %v2563 = vpop.f32.mrb[0].mxu0
        %2564 = vmatprep.mubr.f32.mxu0 0.0
        %2565 = vmatmul.mubr.f32.gmra.mrb[0].mxu0 %v2432
        %v2566 = vpop.f32.mrb[0].mxu0
        %v2567 = vadd.f32 0.0, %v2566
        %v2568 = vpop.f32.mrb[0].mxu0
        %2569 = vmatprep.mubr.f32.mxu0 0.0
        %2570 = vmatmul.mubr.f32.gmra.mrb[0].mxu0 %v2433
        %v2571 = vpop.f32.mrb[0].mxu0
        %v2572 = vpop.f32.mrb[0].mxu0
        %2573 = vmatprep.mubr.f32.mxu0 0.0
        %2574 = vmatmul.mubr.f32.gmra.mrb[0].mxu0 %v2434
        %v2575 = vpop.f32.mrb[0].mxu0
        %v2576 = vadd.f32 0.0, %v2575
        %v2577 = vpop.f32.mrb[0].mxu0
        %2578 = vmatprep.mubr.f32.mxu0 0.0
        %2579 = vmatmul.mubr.f32.gmra.mrb[0].mxu0 %v2435
        %v2580 = vpop.f32.mrb[0].mxu0
        %v2581 = vadd.f32 0.0, %v2580
        %v2582 = vpop.f32.mrb[0].mxu0
        %2583 = vmatprep.mubr.f32.mxu0 0.0
        %2584 = vmatmul.mubr.f32.gmra.mrb[0].mxu0 %v2436
        %v2585 = vpop.f32.mrb[0].mxu0
        %v2586 = vpop.f32.mrb[0].mxu0
        %2587 = vdwg.mxu0
        %2588 = vmatprep.subr.mxu0 0.0
        %2589 = vmatpush1.msra.mxu0 %v2406
        %2590 = vmatprep.subr.mxu0 0.0
        %2591 = vmatpush1.msra.mxu0 %v2407
        %2592 = vmatprep.subr.mxu0 0.0
        %2593 = vmatpush1.msra.mxu0 %v2408
        %2594 = vmatprep.subr.mxu0 0.0
        %2595 = vmatpush1.msra.mxu0 %v2409
        %2596 = vmatprep.subr.mxu0 0.0
        %2597 = vmatpush1.msra.mxu0 %v2410
        %2598 = vmatprep.subr.mxu0 0.0
        %2599 = vmatpush1.msra.mxu0 %v2411
        %2600 = vmatprep.subr.mxu0 0.0
        %2601 = vmatpush1.msra.mxu0 %v2412
        %2602 = vmatprep.subr.mxu0 0.0
        %2603 = vmatpush1.msra.mxu0 %v2413
        %2604 = vmatprep.subr.mxu0 0.0
        %2605 = vmatpush1.msra.mxu0 %v2414
        %2606 = vmatprep.subr.mxu0 0.0
        %2607 = vmatpush1.msra.mxu0 %v2415
        %2608 = vmatprep.subr.mxu0 0.0
        %2609 = vmatpush1.msra.mxu0 %v2416
        %2610 = vmatprep.subr.mxu0 0.0
        %2611 = vmatpush1.msra.mxu0 %v2417
        %2612 = vmatprep.subr.mxu0 0.0
        %2613 = vmatpush1.msra.mxu0 %v2418
        %2614 = vmatprep.subr.mxu0 0.0
        %2615 = vmatpush1.msra.mxu0 %v2419
        %2616 = vmatprep.subr.mxu0 0.0
        %2617 = vmatpush1.msra.mxu0 %v2420
        %2618 = vmatprep.subr.mxu0 0.0
        %2619 = vmatpush1.msra.mxu0 %v2421
        %2620 = vmatprep.subr.mxu0 0.0
        %2621 = vmatpush1.msra.mxu0 0.0
        %2622 = vmatprep.subr.mxu0 0.0
        %2623 = vmatpush1.msra.mxu0 0.0
        %2624 = vmatprep.subr.mxu0 0.0
        %2625 = vmatpush1.msra.mxu0 0.0
        %2626 = vmatprep.subr.mxu0 0.0
        %2627 = vmatpush1.msra.mxu0 0.0
        %2628 = vmatprep.subr.mxu0 0.0
        %2629 = vmatpush1.msra.mxu0 0.0
        %2630 = vmatprep.subr.mxu0 0.0
        %2631 = vmatpush1.msra.mxu0 0.0
        %2632 = vmatprep.subr.mxu0 0.0
        %2633 = vmatpush1.msra.mxu0 0.0
        %2634 = vmatprep.subr.mxu0 0.0
        %2635 = vmatpush1.msra.mxu0 0.0
        %2636 = vmatprep.subr.mxu0 0.0
        %2637 = vmatpush1.msra.mxu0 0.0
        %2638 = vmatprep.subr.mxu0 0.0
        %2639 = vmatpush1.msra.mxu0 0.0
        %2640 = vmatprep.subr.mxu0 0.0
        %2641 = vmatpush1.msra.mxu0 0.0
        %2642 = vmatprep.subr.mxu0 0.0
        %2643 = vmatpush1.msra.mxu0 0.0
        %2644 = vmatprep.subr.mxu0 0.0
        %2645 = vmatpush1.msra.mxu0 0.0
        %2646 = vmatprep.subr.mxu0 0.0
        %2647 = vmatpush1.msra.mxu0 0.0
        %2648 = vmatprep.subr.mxu0 0.0
        %2649 = vmatpush1.msra.mxu0 0.0
        %2650 = vmatprep.subr.mxu0 0.0
        %2651 = vmatpush1.msra.mxu0 0.0
        %2652 = vmatprep.mubr.f32.mxu0 0.0
        %2653 = vmatmul.mubr.f32.gmra.mrb[0].mxu0 %v2391
        %v2654 = vpop.f32.mrb[0].mxu0
        %v2655 = vadd.f32 %v2520, %v2654
        %v2656 = vpop.f32.mrb[0].mxu0
        %2657 = vmatprep.mubr.f32.mxu0 0.0
        %2658 = vmatmul.mubr.f32.gmra.mrb[0].mxu0 %v2392
        %v2659 = vpop.f32.mrb[0].mxu0
        %v2660 = vadd.f32 %v2525, %v2659
        %v2661 = vpop.f32.mrb[0].mxu0
        %2662 = vmatprep.mubr.f32.mxu0 0.0
        %2663 = vmatmul.mubr.f32.gmra.mrb[0].mxu0 %v2393
        %v2664 = vpop.f32.mrb[0].mxu0
        %v2665 = vpop.f32.mrb[0].mxu0
        %2666 = vmatprep.mubr.f32.mxu0 0.0
        %2667 = vmatmul.mubr.f32.gmra.mrb[0].mxu0 %v2394
        %v2668 = vpop.f32.mrb[0].mxu0
        %v2669 = vadd.f32 %v2534, %v2668
        %v2670 = vpop.f32.mrb[0].mxu0
        %2671 = vmatprep.mubr.f32.mxu0 0.0
        %2672 = vmatmul.mubr.f32.gmra.mrb[0].mxu0 %v2395
        %v2673 = vpop.f32.mrb[0].mxu0
        %v2674 = vadd.f32 %v2539, %v2673
        %v2675 = vpop.f32.mrb[0].mxu0
        %2676 = vmatprep.mubr.f32.mxu0 0.0
        %2677 = vmatmul.mubr.f32.gmra.mrb[0].mxu0 %v2396
        %v2678 = vpop.f32.mrb[0].mxu0
        %v2679 = vpop.f32.mrb[0].mxu0
        %2680 = vmatprep.mubr.f32.mxu0 0.0
        %2681 = vmatmul.mubr.f32.gmra.mrb[0].mxu0 %v2397
        %v2682 = vpop.f32.mrb[0].mxu0
        %v2683 = vadd.f32 %v2548, %v2682
        %v2684 = vpop.f32.mrb[0].mxu0
        %2685 = vmatprep.mubr.f32.mxu0 0.0
        %2686 = vmatmul.mubr.f32.gmra.mrb[0].mxu0 %v2398
        %v2687 = vpop.f32.mrb[0].mxu0
        %v2688 = vadd.f32 %v2553, %v2687
        %v2689 = vpop.f32.mrb[0].mxu0
        %2690 = vmatprep.mubr.f32.mxu0 0.0
        %2691 = vmatmul.mubr.f32.gmra.mrb[0].mxu0 %v2399
        %v2692 = vpop.f32.mrb[0].mxu0
        %v2693 = vpop.f32.mrb[0].mxu0
        %2694 = vmatprep.mubr.f32.mxu0 0.0
        %2695 = vmatmul.mubr.f32.gmra.mrb[0].mxu0 %v2400
        %v2696 = vpop.f32.mrb[0].mxu0
        %v2697 = vadd.f32 %v2562, %v2696
        %v2698 = vpop.f32.mrb[0].mxu0
        %2699 = vmatprep.mubr.f32.mxu0 0.0
        %2700 = vmatmul.mubr.f32.gmra.mrb[0].mxu0 %v2401
        %v2701 = vpop.f32.mrb[0].mxu0
        %v2702 = vadd.f32 %v2567, %v2701
        %v2703 = vpop.f32.mrb[0].mxu0
        %2704 = vmatprep.mubr.f32.mxu0 0.0
        %2705 = vmatmul.mubr.f32.gmra.mrb[0].mxu0 %v2402
        %v2706 = vpop.f32.mrb[0].mxu0
        %v2707 = vpop.f32.mrb[0].mxu0
        %2708 = vmatprep.mubr.f32.mxu0 0.0
        %2709 = vmatmul.mubr.f32.gmra.mrb[0].mxu0 %v2403
        %v2710 = vpop.f32.mrb[0].mxu0
        %v2711 = vadd.f32 %v2576, %v2710
        %v2712 = vpop.f32.mrb[0].mxu0
        %2713 = vmatprep.mubr.f32.mxu0 0.0
        %2714 = vmatmul.mubr.f32.gmra.mrb[0].mxu0 %v2404
        %v2715 = vpop.f32.mrb[0].mxu0
        %v2716 = vadd.f32 %v2581, %v2715
        %v2717 = vpop.f32.mrb[0].mxu0
        %2718 = vmatprep.mubr.f32.mxu0 0.0
        %2719 = vmatmul.mubr.f32.gmra.mrb[0].mxu0 %v2405
        %v2720 = vpop.f32.mrb[0].mxu0
        %v2721 = vpop.f32.mrb[0].mxu0
        %2722 = vdwg.mxu0
        %v2723 = vld [vmem:[#allocation2 + $0x91] sm:$0xff]
        %v2724 = vld [vmem:[#allocation2 + $0x99] sm:$0xff]
        %v2725 = vld [vmem:[#allocation2 + $0xa1] sm:$0xff]
        %v2726 = vld [vmem:[#allocation2 + $0xa9] sm:$0xff]
        %v2727 = vld [vmem:[#allocation2 + $0xb1] sm:$0xff]
        %v2728 = vld [vmem:[#allocation2 + $0xb9] sm:$0xff]
        %v2729 = vld [vmem:[#allocation2 + $0xc1] sm:$0xff]
        %v2730 = vld [vmem:[#allocation2 + $0xc9] sm:$0xff]
        %v2731 = vld [vmem:[#allocation2 + $0xd1] sm:$0xff]
        %v2732 = vld [vmem:[#allocation2 + $0xd9] sm:$0xff]
        %v2733 = vld [vmem:[#allocation2 + $0xe1] sm:$0xff]
        %v2734 = vld [vmem:[#allocation2 + $0xe9] sm:$0xff]
        %v2735 = vld [vmem:[#allocation2 + $0xf1] sm:$0xff]
        %v2736 = vld [vmem:[#allocation2 + $0xf9] sm:$0xff]
        %v2737 = vld [vmem:[#allocation2 + $0x101] sm:$0xff]
        %v2738 = vld [vmem:[%s1131] sm:$0xff]
        %v2739 = vld [vmem:[%s1131 + $0x8] sm:$0xff]
        %v2740 = vld [vmem:[%s1131 + $0x10] sm:$0xff]
        %v2741 = vld [vmem:[%s1131 + $0x18] sm:$0xff]
        %v2742 = vld [vmem:[%s1131 + $0x20] sm:$0xff]
        %v2743 = vld [vmem:[%s1131 + $0x28] sm:$0xff]
        %v2744 = vld [vmem:[%s1131 + $0x30] sm:$0xff]
        %v2745 = vld [vmem:[%s1131 + $0x38] sm:$0xff]
        %v2746 = vld [vmem:[%s1131 + $0x40] sm:$0xff]
        %v2747 = vld [vmem:[%s1131 + $0x48] sm:$0xff]
        %v2748 = vld [vmem:[%s1131 + $0x50] sm:$0xff]
        %v2749 = vld [vmem:[%s1131 + $0x58] sm:$0xff]
        %v2750 = vld [vmem:[%s1131 + $0x60] sm:$0xff]
        %v2751 = vld [vmem:[%s1131 + $0x68] sm:$0xff]
        %v2752 = vld [vmem:[%s1131 + $0x70] sm:$0xff]
        %v2753 = vld [vmem:[%s1131 + $0x78] sm:$0xff]
        %2754 = vmatprep.subr.mxu0 0.0
        %2755 = vmatpush1.msra.mxu0 %v2738
        %2756 = vmatprep.subr.mxu0 0.0
        %2757 = vmatpush1.msra.mxu0 %v2739
        %2758 = vmatprep.subr.mxu0 0.0
        %2759 = vmatpush1.msra.mxu0 %v2740
        %2760 = vmatprep.subr.mxu0 0.0
        %2761 = vmatpush1.msra.mxu0 %v2741
        %2762 = vmatprep.subr.mxu0 0.0
        %2763 = vmatpush1.msra.mxu0 %v2742
        %2764 = vmatprep.subr.mxu0 0.0
        %2765 = vmatpush1.msra.mxu0 %v2743
        %2766 = vmatprep.subr.mxu0 0.0
        %2767 = vmatpush1.msra.mxu0 %v2744
        %2768 = vmatprep.subr.mxu0 0.0
        %2769 = vmatpush1.msra.mxu0 %v2745
        %2770 = vmatprep.subr.mxu0 0.0
        %2771 = vmatpush1.msra.mxu0 %v2746
        %2772 = vmatprep.subr.mxu0 0.0
        %2773 = vmatpush1.msra.mxu0 %v2747
        %2774 = vmatprep.subr.mxu0 0.0
        %2775 = vmatpush1.msra.mxu0 %v2748
        %2776 = vmatprep.subr.mxu0 0.0
        %2777 = vmatpush1.msra.mxu0 %v2749
        %2778 = vmatprep.subr.mxu0 0.0
        %2779 = vmatpush1.msra.mxu0 %v2750
        %2780 = vmatprep.subr.mxu0 0.0
        %2781 = vmatpush1.msra.mxu0 %v2751
        %2782 = vmatprep.subr.mxu0 0.0
        %2783 = vmatpush1.msra.mxu0 %v2752
        %2784 = vmatprep.subr.mxu0 0.0
        %2785 = vmatpush1.msra.mxu0 %v2753
        %2786 = vmatprep.subr.mxu0 0.0
        %2787 = vmatpush1.msra.mxu0 0.0
        %2788 = vmatprep.subr.mxu0 0.0
        %2789 = vmatpush1.msra.mxu0 0.0
        %2790 = vmatprep.subr.mxu0 0.0
        %2791 = vmatpush1.msra.mxu0 0.0
        %2792 = vmatprep.subr.mxu0 0.0
        %2793 = vmatpush1.msra.mxu0 0.0
        %2794 = vmatprep.subr.mxu0 0.0
        %2795 = vmatpush1.msra.mxu0 0.0
        %2796 = vmatprep.subr.mxu0 0.0
        %2797 = vmatpush1.msra.mxu0 0.0
        %2798 = vmatprep.subr.mxu0 0.0
        %2799 = vmatpush1.msra.mxu0 0.0
        %2800 = vmatprep.subr.mxu0 0.0
        %2801 = vmatpush1.msra.mxu0 0.0
        %2802 = vmatprep.subr.mxu0 0.0
        %2803 = vmatpush1.msra.mxu0 0.0
        %2804 = vmatprep.subr.mxu0 0.0
        %2805 = vmatpush1.msra.mxu0 0.0
        %2806 = vmatprep.subr.mxu0 0.0
        %2807 = vmatpush1.msra.mxu0 0.0
        %2808 = vmatprep.subr.mxu0 0.0
        %2809 = vmatpush1.msra.mxu0 0.0
        %2810 = vmatprep.subr.mxu0 0.0
        %2811 = vmatpush1.msra.mxu0 0.0
        %2812 = vmatprep.subr.mxu0 0.0
        %2813 = vmatpush1.msra.mxu0 0.0
        %2814 = vmatprep.subr.mxu0 0.0
        %2815 = vmatpush1.msra.mxu0 0.0
        %2816 = vmatprep.subr.mxu0 0.0
        %2817 = vmatpush1.msra.mxu0 0.0
        %2818 = vmatprep.mubr.f32.mxu0 0.0
        %2819 = vmatmul.mubr.f32.gmra.mrb[0].mxu0 %v2723
        %v2820 = vpop.f32.mrb[0].mxu0
        %v2821 = vadd.f32 0.0, %v2820
        %v2822 = vpop.f32.mrb[0].mxu0
        %2823 = vmatprep.mubr.f32.mxu0 0.0
        %2824 = vmatmul.mubr.f32.gmra.mrb[0].mxu0 %v2724
        %v2825 = vpop.f32.mrb[0].mxu0
        %v2826 = vadd.f32 0.0, %v2825
        %v2827 = vpop.f32.mrb[0].mxu0
        %2828 = vmatprep.mubr.f32.mxu0 0.0
        %2829 = vmatmul.mubr.f32.gmra.mrb[0].mxu0 %v2725
        %v2830 = vpop.f32.mrb[0].mxu0
        %v2831 = vpop.f32.mrb[0].mxu0
        %2832 = vmatprep.mubr.f32.mxu0 0.0
        %2833 = vmatmul.mubr.f32.gmra.mrb[0].mxu0 %v2726
        %v2834 = vpop.f32.mrb[0].mxu0
        %v2835 = vadd.f32 0.0, %v2834
        %v2836 = vpop.f32.mrb[0].mxu0
        %2837 = vmatprep.mubr.f32.mxu0 0.0
        %2838 = vmatmul.mubr.f32.gmra.mrb[0].mxu0 %v2727
        %v2839 = vpop.f32.mrb[0].mxu0
        %v2840 = vadd.f32 0.0, %v2839
        %v2841 = vpop.f32.mrb[0].mxu0
        %2842 = vmatprep.mubr.f32.mxu0 0.0
        %2843 = vmatmul.mubr.f32.gmra.mrb[0].mxu0 %v2728
        %v2844 = vpop.f32.mrb[0].mxu0
        %v2845 = vpop.f32.mrb[0].mxu0
        %2846 = vmatprep.mubr.f32.mxu0 0.0
        %2847 = vmatmul.mubr.f32.gmra.mrb[0].mxu0 %v2729
        %v2848 = vpop.f32.mrb[0].mxu0
        %v2849 = vadd.f32 0.0, %v2848
        %v2850 = vpop.f32.mrb[0].mxu0
        %2851 = vmatprep.mubr.f32.mxu0 0.0
        %2852 = vmatmul.mubr.f32.gmra.mrb[0].mxu0 %v2730
        %v2853 = vpop.f32.mrb[0].mxu0
        %v2854 = vadd.f32 0.0, %v2853
        %v2855 = vpop.f32.mrb[0].mxu0
        %2856 = vmatprep.mubr.f32.mxu0 0.0
        %2857 = vmatmul.mubr.f32.gmra.mrb[0].mxu0 %v2731
        %v2858 = vpop.f32.mrb[0].mxu0
        %v2859 = vpop.f32.mrb[0].mxu0
        %2860 = vmatprep.mubr.f32.mxu0 0.0
        %2861 = vmatmul.mubr.f32.gmra.mrb[0].mxu0 %v2732
        %v2862 = vpop.f32.mrb[0].mxu0
        %v2863 = vadd.f32 0.0, %v2862
        %v2864 = vpop.f32.mrb[0].mxu0
        %2865 = vmatprep.mubr.f32.mxu0 0.0
        %2866 = vmatmul.mubr.f32.gmra.mrb[0].mxu0 %v2733
        %v2867 = vpop.f32.mrb[0].mxu0
        %v2868 = vadd.f32 0.0, %v2867
        %v2869 = vpop.f32.mrb[0].mxu0
        %2870 = vmatprep.mubr.f32.mxu0 0.0
        %2871 = vmatmul.mubr.f32.gmra.mrb[0].mxu0 %v2734
        %v2872 = vpop.f32.mrb[0].mxu0
        %v2873 = vpop.f32.mrb[0].mxu0
        %2874 = vmatprep.mubr.f32.mxu0 0.0
        %2875 = vmatmul.mubr.f32.gmra.mrb[0].mxu0 %v2735
        %v2876 = vpop.f32.mrb[0].mxu0
        %v2877 = vadd.f32 0.0, %v2876
        %v2878 = vpop.f32.mrb[0].mxu0
        %2879 = vmatprep.mubr.f32.mxu0 0.0
        %2880 = vmatmul.mubr.f32.gmra.mrb[0].mxu0 %v2736
        %v2881 = vpop.f32.mrb[0].mxu0
        %v2882 = vadd.f32 0.0, %v2881
        %v2883 = vpop.f32.mrb[0].mxu0
        %2884 = vmatprep.mubr.f32.mxu0 0.0
        %2885 = vmatmul.mubr.f32.gmra.mrb[0].mxu0 %v2737
        %v2886 = vpop.f32.mrb[0].mxu0
        %v2887 = vpop.f32.mrb[0].mxu0
        %2888 = vdwg.mxu0
        %v2889 = vadd.f32 %v2655, %v2821
        %v2890 = vadd.f32 %v2660, %v2826
        %v2891 = vadd.f32 %v2669, %v2835
        %v2892 = vadd.f32 %v2674, %v2840
        %v2893 = vadd.f32 %v2683, %v2849
        %v2894 = vadd.f32 %v2688, %v2854
        %v2895 = vadd.f32 %v2697, %v2863
        %v2896 = vadd.f32 %v2702, %v2868
        %v2897 = vadd.f32 %v2711, %v2877
        %v2898 = vadd.f32 %v2716, %v2882
        %v2899 = vld [vmem:[#allocation2 + $0xa7] sm:$0xff]
        %v2900 = vld [vmem:[#allocation2 + $0xaf] sm:$0xff]
        %v2901 = vld [vmem:[#allocation2 + $0xb7] sm:$0xff]
        %v2902 = vld [vmem:[#allocation2 + $0xbf] sm:$0xff]
        %v2903 = vld [vmem:[#allocation2 + $0xc7] sm:$0xff]
        %v2904 = vld [vmem:[#allocation2 + $0xcf] sm:$0xff]
        %v2905 = vld [vmem:[#allocation2 + $0xd7] sm:$0xff]
        %v2906 = vld [vmem:[#allocation2 + $0xdf] sm:$0xff]
        %v2907 = vld [vmem:[#allocation2 + $0xe7] sm:$0xff]
        %v2908 = vld [vmem:[#allocation2 + $0xef] sm:$0xff]
        %v2909 = vld [vmem:[#allocation2 + $0xf7] sm:$0xff]
        %v2910 = vld [vmem:[#allocation2 + $0xff] sm:$0xff]
        %v2911 = vld [vmem:[#allocation2 + $0x107] sm:$0xff]
        %v2912 = vld [vmem:[#allocation2 + $0x10f] sm:$0xff]
        %v2913 = vld [vmem:[#allocation2 + $0x117] sm:$0xff]
        %v2914 = vld [vmem:[%s1308] sm:$0xff]
        %v2915 = vld [vmem:[%s1308 + $0x8] sm:$0xff]
        %v2916 = vld [vmem:[%s1308 + $0x10] sm:$0xff]
        %v2917 = vld [vmem:[%s1308 + $0x18] sm:$0xff]
        %v2918 = vld [vmem:[%s1308 + $0x20] sm:$0xff]
        %v2919 = vld [vmem:[%s1308 + $0x28] sm:$0xff]
        %v2920 = vld [vmem:[%s1308 + $0x30] sm:$0xff]
        %v2921 = vld [vmem:[%s1308 + $0x38] sm:$0xff]
        %v2922 = vld [vmem:[%s1308 + $0x40] sm:$0xff]
        %v2923 = vld [vmem:[%s1308 + $0x48] sm:$0xff]
        %v2924 = vld [vmem:[%s1308 + $0x50] sm:$0xff]
        %v2925 = vld [vmem:[%s1308 + $0x58] sm:$0xff]
        %v2926 = vld [vmem:[%s1308 + $0x60] sm:$0xff]
        %v2927 = vld [vmem:[%s1308 + $0x68] sm:$0xff]
        %v2928 = vld [vmem:[%s1308 + $0x70] sm:$0xff]
        %v2929 = vld [vmem:[%s1308 + $0x78] sm:$0xff]
        %2930 = vmatprep.subr.mxu0 0.0
        %2931 = vmatpush1.msra.mxu0 %v2914
        %2932 = vmatprep.subr.mxu0 0.0
        %2933 = vmatpush1.msra.mxu0 %v2915
        %2934 = vmatprep.subr.mxu0 0.0
        %2935 = vmatpush1.msra.mxu0 %v2916
        %2936 = vmatprep.subr.mxu0 0.0
        %2937 = vmatpush1.msra.mxu0 %v2917
        %2938 = vmatprep.subr.mxu0 0.0
        %2939 = vmatpush1.msra.mxu0 %v2918
        %2940 = vmatprep.subr.mxu0 0.0
        %2941 = vmatpush1.msra.mxu0 %v2919
        %2942 = vmatprep.subr.mxu0 0.0
        %2943 = vmatpush1.msra.mxu0 %v2920
        %2944 = vmatprep.subr.mxu0 0.0
        %2945 = vmatpush1.msra.mxu0 %v2921
        %2946 = vmatprep.subr.mxu0 0.0
        %2947 = vmatpush1.msra.mxu0 %v2922
        %2948 = vmatprep.subr.mxu0 0.0
        %2949 = vmatpush1.msra.mxu0 %v2923
        %2950 = vmatprep.subr.mxu0 0.0
        %2951 = vmatpush1.msra.mxu0 %v2924
        %2952 = vmatprep.subr.mxu0 0.0
        %2953 = vmatpush1.msra.mxu0 %v2925
        %2954 = vmatprep.subr.mxu0 0.0
        %2955 = vmatpush1.msra.mxu0 %v2926
        %2956 = vmatprep.subr.mxu0 0.0
        %2957 = vmatpush1.msra.mxu0 %v2927
        %2958 = vmatprep.subr.mxu0 0.0
        %2959 = vmatpush1.msra.mxu0 %v2928
        %2960 = vmatprep.subr.mxu0 0.0
        %2961 = vmatpush1.msra.mxu0 %v2929
        %2962 = vmatprep.subr.mxu0 0.0
        %2963 = vmatpush1.msra.mxu0 0.0
        %2964 = vmatprep.subr.mxu0 0.0
        %2965 = vmatpush1.msra.mxu0 0.0
        %2966 = vmatprep.subr.mxu0 0.0
        %2967 = vmatpush1.msra.mxu0 0.0
        %2968 = vmatprep.subr.mxu0 0.0
        %2969 = vmatpush1.msra.mxu0 0.0
        %2970 = vmatprep.subr.mxu0 0.0
        %2971 = vmatpush1.msra.mxu0 0.0
        %2972 = vmatprep.subr.mxu0 0.0
        %2973 = vmatpush1.msra.mxu0 0.0
        %2974 = vmatprep.subr.mxu0 0.0
        %2975 = vmatpush1.msra.mxu0 0.0
        %2976 = vmatprep.subr.mxu0 0.0
        %2977 = vmatpush1.msra.mxu0 0.0
        %2978 = vmatprep.subr.mxu0 0.0
        %2979 = vmatpush1.msra.mxu0 0.0
        %2980 = vmatprep.subr.mxu0 0.0
        %2981 = vmatpush1.msra.mxu0 0.0
        %2982 = vmatprep.subr.mxu0 0.0
        %2983 = vmatpush1.msra.mxu0 0.0
        %2984 = vmatprep.subr.mxu0 0.0
        %2985 = vmatpush1.msra.mxu0 0.0
        %2986 = vmatprep.subr.mxu0 0.0
        %2987 = vmatpush1.msra.mxu0 0.0
        %2988 = vmatprep.subr.mxu0 0.0
        %2989 = vmatpush1.msra.mxu0 0.0
        %2990 = vmatprep.subr.mxu0 0.0
        %2991 = vmatpush1.msra.mxu0 0.0
        %2992 = vmatprep.subr.mxu0 0.0
        %2993 = vmatpush1.msra.mxu0 0.0
        %2994 = vmatprep.mubr.f32.mxu0 0.0
        %2995 = vmatmul.mubr.f32.gmra.mrb[0].mxu0 %v2899
        %v2996 = vpop.f32.mrb[0].mxu0
        %v2997 = vadd.f32 0.0, %v2996
        %v2998 = vpop.f32.mrb[0].mxu0
        %2999 = vmatprep.mubr.f32.mxu0 0.0
        %3000 = vmatmul.mubr.f32.gmra.mrb[0].mxu0 %v2900
        %v3001 = vpop.f32.mrb[0].mxu0
        %v3002 = vadd.f32 0.0, %v3001
        %v3003 = vpop.f32.mrb[0].mxu0
        %3004 = vmatprep.mubr.f32.mxu0 0.0
        %3005 = vmatmul.mubr.f32.gmra.mrb[0].mxu0 %v2901
        %v3006 = vpop.f32.mrb[0].mxu0
        %v3007 = vpop.f32.mrb[0].mxu0
        %3008 = vmatprep.mubr.f32.mxu0 0.0
        %3009 = vmatmul.mubr.f32.gmra.mrb[0].mxu0 %v2902
        %v3010 = vpop.f32.mrb[0].mxu0
        %v3011 = vadd.f32 0.0, %v3010
        %v3012 = vpop.f32.mrb[0].mxu0
        %3013 = vmatprep.mubr.f32.mxu0 0.0
        %3014 = vmatmul.mubr.f32.gmra.mrb[0].mxu0 %v2903
        %v3015 = vpop.f32.mrb[0].mxu0
        %v3016 = vadd.f32 0.0, %v3015
        %v3017 = vpop.f32.mrb[0].mxu0
        %3018 = vmatprep.mubr.f32.mxu0 0.0
        %3019 = vmatmul.mubr.f32.gmra.mrb[0].mxu0 %v2904
        %v3020 = vpop.f32.mrb[0].mxu0
        %v3021 = vpop.f32.mrb[0].mxu0
        %3022 = vmatprep.mubr.f32.mxu0 0.0
        %3023 = vmatmul.mubr.f32.gmra.mrb[0].mxu0 %v2905
        %v3024 = vpop.f32.mrb[0].mxu0
        %v3025 = vadd.f32 0.0, %v3024
        %v3026 = vpop.f32.mrb[0].mxu0
        %3027 = vmatprep.mubr.f32.mxu0 0.0
        %3028 = vmatmul.mubr.f32.gmra.mrb[0].mxu0 %v2906
        %v3029 = vpop.f32.mrb[0].mxu0
        %v3030 = vadd.f32 0.0, %v3029
        %v3031 = vpop.f32.mrb[0].mxu0
        %3032 = vmatprep.mubr.f32.mxu0 0.0
        %3033 = vmatmul.mubr.f32.gmra.mrb[0].mxu0 %v2907
        %v3034 = vpop.f32.mrb[0].mxu0
        %v3035 = vpop.f32.mrb[0].mxu0
        %3036 = vmatprep.mubr.f32.mxu0 0.0
        %3037 = vmatmul.mubr.f32.gmra.mrb[0].mxu0 %v2908
        %v3038 = vpop.f32.mrb[0].mxu0
        %v3039 = vadd.f32 0.0, %v3038
        %v3040 = vpop.f32.mrb[0].mxu0
        %3041 = vmatprep.mubr.f32.mxu0 0.0
        %3042 = vmatmul.mubr.f32.gmra.mrb[0].mxu0 %v2909
        %v3043 = vpop.f32.mrb[0].mxu0
        %v3044 = vadd.f32 0.0, %v3043
        %v3045 = vpop.f32.mrb[0].mxu0
        %3046 = vmatprep.mubr.f32.mxu0 0.0
        %3047 = vmatmul.mubr.f32.gmra.mrb[0].mxu0 %v2910
        %v3048 = vpop.f32.mrb[0].mxu0
        %v3049 = vpop.f32.mrb[0].mxu0
        %3050 = vmatprep.mubr.f32.mxu0 0.0
        %3051 = vmatmul.mubr.f32.gmra.mrb[0].mxu0 %v2911
        %v3052 = vpop.f32.mrb[0].mxu0
        %v3053 = vadd.f32 0.0, %v3052
        %v3054 = vpop.f32.mrb[0].mxu0
        %3055 = vmatprep.mubr.f32.mxu0 0.0
        %3056 = vmatmul.mubr.f32.gmra.mrb[0].mxu0 %v2912
        %v3057 = vpop.f32.mrb[0].mxu0
        %v3058 = vadd.f32 0.0, %v3057
        %v3059 = vpop.f32.mrb[0].mxu0
        %3060 = vmatprep.mubr.f32.mxu0 0.0
        %3061 = vmatmul.mubr.f32.gmra.mrb[0].mxu0 %v2913
        %v3062 = vpop.f32.mrb[0].mxu0
        %v3063 = vpop.f32.mrb[0].mxu0
        %3064 = vdwg.mxu0
        %v3065 = vadd.f32 %v2889, %v2997
        %v3066 = vadd.f32 %v2890, %v3002
        %v3067 = vadd.f32 %v2891, %v3011
        %v3068 = vadd.f32 %v2892, %v3016
        %v3069 = vadd.f32 %v2893, %v3025
        %v3070 = vadd.f32 %v2894, %v3030
        %v3071 = vadd.f32 %v2895, %v3039
        %v3072 = vadd.f32 %v2896, %v3044
        %v3073 = vadd.f32 %v2897, %v3053
        %v3074 = vadd.f32 %v2898, %v3058
        %v3075 = vld [vmem:[#allocation2 + $0xa8] sm:$0xff]
        %v3076 = vld [vmem:[#allocation2 + $0xb0] sm:$0xff]
        %v3077 = vld [vmem:[#allocation2 + $0xb8] sm:$0xff]
        %v3078 = vld [vmem:[#allocation2 + $0xc0] sm:$0xff]
        %v3079 = vld [vmem:[#allocation2 + $0xc8] sm:$0xff]
        %v3080 = vld [vmem:[#allocation2 + $0xd0] sm:$0xff]
        %v3081 = vld [vmem:[#allocation2 + $0xd8] sm:$0xff]
        %v3082 = vld [vmem:[#allocation2 + $0xe0] sm:$0xff]
        %v3083 = vld [vmem:[#allocation2 + $0xe8] sm:$0xff]
        %v3084 = vld [vmem:[#allocation2 + $0xf0] sm:$0xff]
        %v3085 = vld [vmem:[#allocation2 + $0xf8] sm:$0xff]
        %v3086 = vld [vmem:[#allocation2 + $0x100] sm:$0xff]
        %v3087 = vld [vmem:[#allocation2 + $0x108] sm:$0xff]
        %v3088 = vld [vmem:[#allocation2 + $0x110] sm:$0xff]
        %v3089 = vld [vmem:[#allocation2 + $0x118] sm:$0xff]
        %v3090 = vld [vmem:[%s1485] sm:$0xff]
        %v3091 = vld [vmem:[%s1485 + $0x8] sm:$0xff]
        %v3092 = vld [vmem:[%s1485 + $0x10] sm:$0xff]
        %v3093 = vld [vmem:[%s1485 + $0x18] sm:$0xff]
        %v3094 = vld [vmem:[%s1485 + $0x20] sm:$0xff]
        %v3095 = vld [vmem:[%s1485 + $0x28] sm:$0xff]
        %v3096 = vld [vmem:[%s1485 + $0x30] sm:$0xff]
        %v3097 = vld [vmem:[%s1485 + $0x38] sm:$0xff]
        %v3098 = vld [vmem:[%s1485 + $0x40] sm:$0xff]
        %v3099 = vld [vmem:[%s1485 + $0x48] sm:$0xff]
        %v3100 = vld [vmem:[%s1485 + $0x50] sm:$0xff]
        %v3101 = vld [vmem:[%s1485 + $0x58] sm:$0xff]
        %v3102 = vld [vmem:[%s1485 + $0x60] sm:$0xff]
        %v3103 = vld [vmem:[%s1485 + $0x68] sm:$0xff]
        %v3104 = vld [vmem:[%s1485 + $0x70] sm:$0xff]
        %v3105 = vld [vmem:[%s1485 + $0x78] sm:$0xff]
        %3106 = vmatprep.subr.mxu0 0.0
        %3107 = vmatpush1.msra.mxu0 %v3090
        %3108 = vmatprep.subr.mxu0 0.0
        %3109 = vmatpush1.msra.mxu0 %v3091
        %3110 = vmatprep.subr.mxu0 0.0
        %3111 = vmatpush1.msra.mxu0 %v3092
        %3112 = vmatprep.subr.mxu0 0.0
        %3113 = vmatpush1.msra.mxu0 %v3093
        %3114 = vmatprep.subr.mxu0 0.0
        %3115 = vmatpush1.msra.mxu0 %v3094
        %3116 = vmatprep.subr.mxu0 0.0
        %3117 = vmatpush1.msra.mxu0 %v3095
        %3118 = vmatprep.subr.mxu0 0.0
        %3119 = vmatpush1.msra.mxu0 %v3096
        %3120 = vmatprep.subr.mxu0 0.0
        %3121 = vmatpush1.msra.mxu0 %v3097
        %3122 = vmatprep.subr.mxu0 0.0
        %3123 = vmatpush1.msra.mxu0 %v3098
        %3124 = vmatprep.subr.mxu0 0.0
        %3125 = vmatpush1.msra.mxu0 %v3099
        %3126 = vmatprep.subr.mxu0 0.0
        %3127 = vmatpush1.msra.mxu0 %v3100
        %3128 = vmatprep.subr.mxu0 0.0
        %3129 = vmatpush1.msra.mxu0 %v3101
        %3130 = vmatprep.subr.mxu0 0.0
        %3131 = vmatpush1.msra.mxu0 %v3102
        %3132 = vmatprep.subr.mxu0 0.0
        %3133 = vmatpush1.msra.mxu0 %v3103
        %3134 = vmatprep.subr.mxu0 0.0
        %3135 = vmatpush1.msra.mxu0 %v3104
        %3136 = vmatprep.subr.mxu0 0.0
        %3137 = vmatpush1.msra.mxu0 %v3105
        %3138 = vmatprep.subr.mxu0 0.0
        %3139 = vmatpush1.msra.mxu0 0.0
        %3140 = vmatprep.subr.mxu0 0.0
        %3141 = vmatpush1.msra.mxu0 0.0
        %3142 = vmatprep.subr.mxu0 0.0
        %3143 = vmatpush1.msra.mxu0 0.0
        %3144 = vmatprep.subr.mxu0 0.0
        %3145 = vmatpush1.msra.mxu0 0.0
        %3146 = vmatprep.subr.mxu0 0.0
        %3147 = vmatpush1.msra.mxu0 0.0
        %3148 = vmatprep.subr.mxu0 0.0
        %3149 = vmatpush1.msra.mxu0 0.0
        %3150 = vmatprep.subr.mxu0 0.0
        %3151 = vmatpush1.msra.mxu0 0.0
        %3152 = vmatprep.subr.mxu0 0.0
        %3153 = vmatpush1.msra.mxu0 0.0
        %3154 = vmatprep.subr.mxu0 0.0
        %3155 = vmatpush1.msra.mxu0 0.0
        %3156 = vmatprep.subr.mxu0 0.0
        %3157 = vmatpush1.msra.mxu0 0.0
        %3158 = vmatprep.subr.mxu0 0.0
        %3159 = vmatpush1.msra.mxu0 0.0
        %3160 = vmatprep.subr.mxu0 0.0
        %3161 = vmatpush1.msra.mxu0 0.0
        %3162 = vmatprep.subr.mxu0 0.0
        %3163 = vmatpush1.msra.mxu0 0.0
        %3164 = vmatprep.subr.mxu0 0.0
        %3165 = vmatpush1.msra.mxu0 0.0
        %3166 = vmatprep.subr.mxu0 0.0
        %3167 = vmatpush1.msra.mxu0 0.0
        %3168 = vmatprep.subr.mxu0 0.0
        %3169 = vmatpush1.msra.mxu0 0.0
        %3170 = vmatprep.mubr.f32.mxu0 0.0
        %3171 = vmatmul.mubr.f32.gmra.mrb[0].mxu0 %v3075
        %v3172 = vpop.f32.mrb[0].mxu0
        %v3173 = vadd.f32 0.0, %v3172
        %v3174 = vpop.f32.mrb[0].mxu0
        %3175 = vmatprep.mubr.f32.mxu0 0.0
        %3176 = vmatmul.mubr.f32.gmra.mrb[0].mxu0 %v3076
        %v3177 = vpop.f32.mrb[0].mxu0
        %v3178 = vadd.f32 0.0, %v3177
        %v3179 = vpop.f32.mrb[0].mxu0
        %3180 = vmatprep.mubr.f32.mxu0 0.0
        %3181 = vmatmul.mubr.f32.gmra.mrb[0].mxu0 %v3077
        %v3182 = vpop.f32.mrb[0].mxu0
        %v3183 = vpop.f32.mrb[0].mxu0
        %3184 = vmatprep.mubr.f32.mxu0 0.0
        %3185 = vmatmul.mubr.f32.gmra.mrb[0].mxu0 %v3078
        %v3186 = vpop.f32.mrb[0].mxu0
        %v3187 = vadd.f32 0.0, %v3186
        %v3188 = vpop.f32.mrb[0].mxu0
        %3189 = vmatprep.mubr.f32.mxu0 0.0
        %3190 = vmatmul.mubr.f32.gmra.mrb[0].mxu0 %v3079
        %v3191 = vpop.f32.mrb[0].mxu0
        %v3192 = vadd.f32 0.0, %v3191
        %v3193 = vpop.f32.mrb[0].mxu0
        %3194 = vmatprep.mubr.f32.mxu0 0.0
        %3195 = vmatmul.mubr.f32.gmra.mrb[0].mxu0 %v3080
        %v3196 = vpop.f32.mrb[0].mxu0
        %v3197 = vpop.f32.mrb[0].mxu0
        %3198 = vmatprep.mubr.f32.mxu0 0.0
        %3199 = vmatmul.mubr.f32.gmra.mrb[0].mxu0 %v3081
        %v3200 = vpop.f32.mrb[0].mxu0
        %v3201 = vadd.f32 0.0, %v3200
        %v3202 = vpop.f32.mrb[0].mxu0
        %3203 = vmatprep.mubr.f32.mxu0 0.0
        %3204 = vmatmul.mubr.f32.gmra.mrb[0].mxu0 %v3082
        %v3205 = vpop.f32.mrb[0].mxu0
        %v3206 = vadd.f32 0.0, %v3205
        %v3207 = vpop.f32.mrb[0].mxu0
        %3208 = vmatprep.mubr.f32.mxu0 0.0
        %3209 = vmatmul.mubr.f32.gmra.mrb[0].mxu0 %v3083
        %v3210 = vpop.f32.mrb[0].mxu0
        %v3211 = vpop.f32.mrb[0].mxu0
        %3212 = vmatprep.mubr.f32.mxu0 0.0
        %3213 = vmatmul.mubr.f32.gmra.mrb[0].mxu0 %v3084
        %v3214 = vpop.f32.mrb[0].mxu0
        %v3215 = vadd.f32 0.0, %v3214
        %v3216 = vpop.f32.mrb[0].mxu0
        %3217 = vmatprep.mubr.f32.mxu0 0.0
        %3218 = vmatmul.mubr.f32.gmra.mrb[0].mxu0 %v3085
        %v3219 = vpop.f32.mrb[0].mxu0
        %v3220 = vadd.f32 0.0, %v3219
        %v3221 = vpop.f32.mrb[0].mxu0
        %3222 = vmatprep.mubr.f32.mxu0 0.0
        %3223 = vmatmul.mubr.f32.gmra.mrb[0].mxu0 %v3086
        %v3224 = vpop.f32.mrb[0].mxu0
        %v3225 = vpop.f32.mrb[0].mxu0
        %3226 = vmatprep.mubr.f32.mxu0 0.0
        %3227 = vmatmul.mubr.f32.gmra.mrb[0].mxu0 %v3087
        %v3228 = vpop.f32.mrb[0].mxu0
        %v3229 = vadd.f32 0.0, %v3228
        %v3230 = vpop.f32.mrb[0].mxu0
        %3231 = vmatprep.mubr.f32.mxu0 0.0
        %3232 = vmatmul.mubr.f32.gmra.mrb[0].mxu0 %v3088
        %v3233 = vpop.f32.mrb[0].mxu0
        %v3234 = vadd.f32 0.0, %v3233
        %v3235 = vpop.f32.mrb[0].mxu0
        %3236 = vmatprep.mubr.f32.mxu0 0.0
        %3237 = vmatmul.mubr.f32.gmra.mrb[0].mxu0 %v3089
        %v3238 = vpop.f32.mrb[0].mxu0
        %v3239 = vpop.f32.mrb[0].mxu0
        %3240 = vdwg.mxu0
        %v3241 = vadd.f32 %v3065, %v3173
        %v3242 = vadd.f32 %v3066, %v3178
        %v3243 = vadd.f32 %v3067, %v3187
        %v3244 = vadd.f32 %v3068, %v3192
        %v3245 = vadd.f32 %v3069, %v3201
        %v3246 = vadd.f32 %v3070, %v3206
        %v3247 = vadd.f32 %v3071, %v3215
        %v3248 = vadd.f32 %v3072, %v3220
        %v3249 = vadd.f32 %v3073, %v3229
        %v3250 = vadd.f32 %v3074, %v3234
        %v3251 = vld [vmem:[#allocation2 + $0xa9] sm:$0xff]
        %v3252 = vld [vmem:[#allocation2 + $0xb1] sm:$0xff]
        %v3253 = vld [vmem:[#allocation2 + $0xb9] sm:$0xff]
        %v3254 = vld [vmem:[#allocation2 + $0xc1] sm:$0xff]
        %v3255 = vld [vmem:[#allocation2 + $0xc9] sm:$0xff]
        %v3256 = vld [vmem:[#allocation2 + $0xd1] sm:$0xff]
        %v3257 = vld [vmem:[#allocation2 + $0xd9] sm:$0xff]
        %v3258 = vld [vmem:[#allocation2 + $0xe1] sm:$0xff]
        %v3259 = vld [vmem:[#allocation2 + $0xe9] sm:$0xff]
        %v3260 = vld [vmem:[#allocation2 + $0xf1] sm:$0xff]
        %v3261 = vld [vmem:[#allocation2 + $0xf9] sm:$0xff]
        %v3262 = vld [vmem:[#allocation2 + $0x101] sm:$0xff]
        %v3263 = vld [vmem:[#allocation2 + $0x109] sm:$0xff]
        %v3264 = vld [vmem:[#allocation2 + $0x111] sm:$0xff]
        %v3265 = vld [vmem:[#allocation2 + $0x119] sm:$0xff]
        %v3266 = vld [vmem:[%s1662] sm:$0xff]
        %v3267 = vld [vmem:[%s1662 + $0x8] sm:$0xff]
        %v3268 = vld [vmem:[%s1662 + $0x10] sm:$0xff]
        %v3269 = vld [vmem:[%s1662 + $0x18] sm:$0xff]
        %v3270 = vld [vmem:[%s1662 + $0x20] sm:$0xff]
        %v3271 = vld [vmem:[%s1662 + $0x28] sm:$0xff]
        %v3272 = vld [vmem:[%s1662 + $0x30] sm:$0xff]
        %v3273 = vld [vmem:[%s1662 + $0x38] sm:$0xff]
        %v3274 = vld [vmem:[%s1662 + $0x40] sm:$0xff]
        %v3275 = vld [vmem:[%s1662 + $0x48] sm:$0xff]
        %v3276 = vld [vmem:[%s1662 + $0x50] sm:$0xff]
        %v3277 = vld [vmem:[%s1662 + $0x58] sm:$0xff]
        %v3278 = vld [vmem:[%s1662 + $0x60] sm:$0xff]
        %v3279 = vld [vmem:[%s1662 + $0x68] sm:$0xff]
        %v3280 = vld [vmem:[%s1662 + $0x70] sm:$0xff]
        %v3281 = vld [vmem:[%s1662 + $0x78] sm:$0xff]
        %3282 = vmatprep.subr.mxu0 0.0
        %3283 = vmatpush1.msra.mxu0 %v3266
        %3284 = vmatprep.subr.mxu0 0.0
        %3285 = vmatpush1.msra.mxu0 %v3267
        %3286 = vmatprep.subr.mxu0 0.0
        %3287 = vmatpush1.msra.mxu0 %v3268
        %3288 = vmatprep.subr.mxu0 0.0
        %3289 = vmatpush1.msra.mxu0 %v3269
        %3290 = vmatprep.subr.mxu0 0.0
        %3291 = vmatpush1.msra.mxu0 %v3270
        %3292 = vmatprep.subr.mxu0 0.0
        %3293 = vmatpush1.msra.mxu0 %v3271
        %3294 = vmatprep.subr.mxu0 0.0
        %3295 = vmatpush1.msra.mxu0 %v3272
        %3296 = vmatprep.subr.mxu0 0.0
        %3297 = vmatpush1.msra.mxu0 %v3273
        %3298 = vmatprep.subr.mxu0 0.0
        %3299 = vmatpush1.msra.mxu0 %v3274
        %3300 = vmatprep.subr.mxu0 0.0
        %3301 = vmatpush1.msra.mxu0 %v3275
        %3302 = vmatprep.subr.mxu0 0.0
        %3303 = vmatpush1.msra.mxu0 %v3276
        %3304 = vmatprep.subr.mxu0 0.0
        %3305 = vmatpush1.msra.mxu0 %v3277
        %3306 = vmatprep.subr.mxu0 0.0
        %3307 = vmatpush1.msra.mxu0 %v3278
        %3308 = vmatprep.subr.mxu0 0.0
        %3309 = vmatpush1.msra.mxu0 %v3279
        %3310 = vmatprep.subr.mxu0 0.0
        %3311 = vmatpush1.msra.mxu0 %v3280
        %3312 = vmatprep.subr.mxu0 0.0
        %3313 = vmatpush1.msra.mxu0 %v3281
        %3314 = vmatprep.subr.mxu0 0.0
        %3315 = vmatpush1.msra.mxu0 0.0
        %3316 = vmatprep.subr.mxu0 0.0
        %3317 = vmatpush1.msra.mxu0 0.0
        %3318 = vmatprep.subr.mxu0 0.0
        %3319 = vmatpush1.msra.mxu0 0.0
        %3320 = vmatprep.subr.mxu0 0.0
        %3321 = vmatpush1.msra.mxu0 0.0
        %3322 = vmatprep.subr.mxu0 0.0
        %3323 = vmatpush1.msra.mxu0 0.0
        %3324 = vmatprep.subr.mxu0 0.0
        %3325 = vmatpush1.msra.mxu0 0.0
        %3326 = vmatprep.subr.mxu0 0.0
        %3327 = vmatpush1.msra.mxu0 0.0
        %3328 = vmatprep.subr.mxu0 0.0
        %3329 = vmatpush1.msra.mxu0 0.0
        %3330 = vmatprep.subr.mxu0 0.0
        %3331 = vmatpush1.msra.mxu0 0.0
        %3332 = vmatprep.subr.mxu0 0.0
        %3333 = vmatpush1.msra.mxu0 0.0
        %3334 = vmatprep.subr.mxu0 0.0
        %3335 = vmatpush1.msra.mxu0 0.0
        %3336 = vmatprep.subr.mxu0 0.0
        %3337 = vmatpush1.msra.mxu0 0.0
        %3338 = vmatprep.subr.mxu0 0.0
        %3339 = vmatpush1.msra.mxu0 0.0
        %3340 = vmatprep.subr.mxu0 0.0
        %3341 = vmatpush1.msra.mxu0 0.0
        %3342 = vmatprep.subr.mxu0 0.0
        %3343 = vmatpush1.msra.mxu0 0.0
        %3344 = vmatprep.subr.mxu0 0.0
        %3345 = vmatpush1.msra.mxu0 0.0
        %3346 = vmatprep.mubr.f32.mxu0 0.0
        %3347 = vmatmul.mubr.f32.gmra.mrb[0].mxu0 %v3251
        %v3348 = vpop.f32.mrb[0].mxu0
        %v3349 = vadd.f32 0.0, %v3348
        %v3350 = vpop.f32.mrb[0].mxu0
        %3351 = vmatprep.mubr.f32.mxu0 0.0
        %3352 = vmatmul.mubr.f32.gmra.mrb[0].mxu0 %v3252
        %v3353 = vpop.f32.mrb[0].mxu0
        %v3354 = vadd.f32 0.0, %v3353
        %v3355 = vpop.f32.mrb[0].mxu0
        %3356 = vmatprep.mubr.f32.mxu0 0.0
        %3357 = vmatmul.mubr.f32.gmra.mrb[0].mxu0 %v3253
        %v3358 = vpop.f32.mrb[0].mxu0
        %v3359 = vpop.f32.mrb[0].mxu0
        %3360 = vmatprep.mubr.f32.mxu0 0.0
        %3361 = vmatmul.mubr.f32.gmra.mrb[0].mxu0 %v3254
        %v3362 = vpop.f32.mrb[0].mxu0
        %v3363 = vadd.f32 0.0, %v3362
        %v3364 = vpop.f32.mrb[0].mxu0
        %3365 = vmatprep.mubr.f32.mxu0 0.0
        %3366 = vmatmul.mubr.f32.gmra.mrb[0].mxu0 %v3255
        %v3367 = vpop.f32.mrb[0].mxu0
        %v3368 = vadd.f32 0.0, %v3367
        %v3369 = vpop.f32.mrb[0].mxu0
        %3370 = vmatprep.mubr.f32.mxu0 0.0
        %3371 = vmatmul.mubr.f32.gmra.mrb[0].mxu0 %v3256
        %v3372 = vpop.f32.mrb[0].mxu0
        %v3373 = vpop.f32.mrb[0].mxu0
        %3374 = vmatprep.mubr.f32.mxu0 0.0
        %3375 = vmatmul.mubr.f32.gmra.mrb[0].mxu0 %v3257
        %v3376 = vpop.f32.mrb[0].mxu0
        %v3377 = vadd.f32 0.0, %v3376
        %v3378 = vpop.f32.mrb[0].mxu0
        %3379 = vmatprep.mubr.f32.mxu0 0.0
        %3380 = vmatmul.mubr.f32.gmra.mrb[0].mxu0 %v3258
        %v3381 = vpop.f32.mrb[0].mxu0
        %v3382 = vadd.f32 0.0, %v3381
        %v3383 = vpop.f32.mrb[0].mxu0
        %3384 = vmatprep.mubr.f32.mxu0 0.0
        %3385 = vmatmul.mubr.f32.gmra.mrb[0].mxu0 %v3259
        %v3386 = vpop.f32.mrb[0].mxu0
        %v3387 = vpop.f32.mrb[0].mxu0
        %3388 = vmatprep.mubr.f32.mxu0 0.0
        %3389 = vmatmul.mubr.f32.gmra.mrb[0].mxu0 %v3260
        %v3390 = vpop.f32.mrb[0].mxu0
        %v3391 = vadd.f32 0.0, %v3390
        %v3392 = vpop.f32.mrb[0].mxu0
        %3393 = vmatprep.mubr.f32.mxu0 0.0
        %3394 = vmatmul.mubr.f32.gmra.mrb[0].mxu0 %v3261
        %v3395 = vpop.f32.mrb[0].mxu0
        %v3396 = vadd.f32 0.0, %v3395
        %v3397 = vpop.f32.mrb[0].mxu0
        %3398 = vmatprep.mubr.f32.mxu0 0.0
        %3399 = vmatmul.mubr.f32.gmra.mrb[0].mxu0 %v3262
        %v3400 = vpop.f32.mrb[0].mxu0
        %v3401 = vpop.f32.mrb[0].mxu0
        %3402 = vmatprep.mubr.f32.mxu0 0.0
        %3403 = vmatmul.mubr.f32.gmra.mrb[0].mxu0 %v3263
        %v3404 = vpop.f32.mrb[0].mxu0
        %v3405 = vadd.f32 0.0, %v3404
        %v3406 = vpop.f32.mrb[0].mxu0
        %3407 = vmatprep.mubr.f32.mxu0 0.0
        %3408 = vmatmul.mubr.f32.gmra.mrb[0].mxu0 %v3264
        %v3409 = vpop.f32.mrb[0].mxu0
        %v3410 = vadd.f32 0.0, %v3409
        %v3411 = vpop.f32.mrb[0].mxu0
        %3412 = vmatprep.mubr.f32.mxu0 0.0
        %3413 = vmatmul.mubr.f32.gmra.mrb[0].mxu0 %v3265
        %v3414 = vpop.f32.mrb[0].mxu0
        %v3415 = vpop.f32.mrb[0].mxu0
        %3416 = vdwg.mxu0
        %v3417 = vadd.f32 %v3241, %v3349
        %v3418 = vadd.f32 %v3242, %v3354
        %v3419 = vadd.f32 %v3243, %v3363
        %v3420 = vadd.f32 %v3244, %v3368
        %v3421 = vadd.f32 %v3245, %v3377
        %v3422 = vadd.f32 %v3246, %v3382
        %v3423 = vadd.f32 %v3247, %v3391
        %v3424 = vadd.f32 %v3248, %v3396
        %v3425 = vadd.f32 %v3249, %v3405
        %v3426 = vadd.f32 %v3250, %v3410
        %v3427 = vld [vmem:[#allocation2 + $0xbf] sm:$0xff]
        %v3428 = vld [vmem:[#allocation2 + $0xc7] sm:$0xff]
        %v3429 = vld [vmem:[#allocation2 + $0xcf] sm:$0xff]
        %v3430 = vld [vmem:[#allocation2 + $0xd7] sm:$0xff]
        %v3431 = vld [vmem:[#allocation2 + $0xdf] sm:$0xff]
        %v3432 = vld [vmem:[#allocation2 + $0xe7] sm:$0xff]
        %v3433 = vld [vmem:[#allocation2 + $0xef] sm:$0xff]
        %v3434 = vld [vmem:[#allocation2 + $0xf7] sm:$0xff]
        %v3435 = vld [vmem:[#allocation2 + $0xff] sm:$0xff]
        %v3436 = vld [vmem:[#allocation2 + $0x107] sm:$0xff]
        %v3437 = vld [vmem:[#allocation2 + $0x10f] sm:$0xff]
        %v3438 = vld [vmem:[#allocation2 + $0x117] sm:$0xff]
        %v3439 = vld [vmem:[#allocation2 + $0x11f] sm:$0xff]
        %v3440 = vld [vmem:[#allocation2 + $0x127] sm:$0xff]
        %v3441 = vld [vmem:[#allocation2 + $0x12f] sm:$0xff]
        %v3442 = vld [vmem:[%s1839] sm:$0xff]
        %v3443 = vld [vmem:[%s1839 + $0x8] sm:$0xff]
        %v3444 = vld [vmem:[%s1839 + $0x10] sm:$0xff]
        %v3445 = vld [vmem:[%s1839 + $0x18] sm:$0xff]
        %v3446 = vld [vmem:[%s1839 + $0x20] sm:$0xff]
        %v3447 = vld [vmem:[%s1839 + $0x28] sm:$0xff]
        %v3448 = vld [vmem:[%s1839 + $0x30] sm:$0xff]
        %v3449 = vld [vmem:[%s1839 + $0x38] sm:$0xff]
        %v3450 = vld [vmem:[%s1839 + $0x40] sm:$0xff]
        %v3451 = vld [vmem:[%s1839 + $0x48] sm:$0xff]
        %v3452 = vld [vmem:[%s1839 + $0x50] sm:$0xff]
        %v3453 = vld [vmem:[%s1839 + $0x58] sm:$0xff]
        %v3454 = vld [vmem:[%s1839 + $0x60] sm:$0xff]
        %v3455 = vld [vmem:[%s1839 + $0x68] sm:$0xff]
        %v3456 = vld [vmem:[%s1839 + $0x70] sm:$0xff]
        %v3457 = vld [vmem:[%s1839 + $0x78] sm:$0xff]
        %3458 = vmatprep.subr.mxu0 0.0
        %3459 = vmatpush1.msra.mxu0 %v3442
        %3460 = vmatprep.subr.mxu0 0.0
        %3461 = vmatpush1.msra.mxu0 %v3443
        %3462 = vmatprep.subr.mxu0 0.0
        %3463 = vmatpush1.msra.mxu0 %v3444
        %3464 = vmatprep.subr.mxu0 0.0
        %3465 = vmatpush1.msra.mxu0 %v3445
        %3466 = vmatprep.subr.mxu0 0.0
        %3467 = vmatpush1.msra.mxu0 %v3446
        %3468 = vmatprep.subr.mxu0 0.0
        %3469 = vmatpush1.msra.mxu0 %v3447
        %3470 = vmatprep.subr.mxu0 0.0
        %3471 = vmatpush1.msra.mxu0 %v3448
        %3472 = vmatprep.subr.mxu0 0.0
        %3473 = vmatpush1.msra.mxu0 %v3449
        %3474 = vmatprep.subr.mxu0 0.0
        %3475 = vmatpush1.msra.mxu0 %v3450
        %3476 = vmatprep.subr.mxu0 0.0
        %3477 = vmatpush1.msra.mxu0 %v3451
        %3478 = vmatprep.subr.mxu0 0.0
        %3479 = vmatpush1.msra.mxu0 %v3452
        %3480 = vmatprep.subr.mxu0 0.0
        %3481 = vmatpush1.msra.mxu0 %v3453
        %3482 = vmatprep.subr.mxu0 0.0
        %3483 = vmatpush1.msra.mxu0 %v3454
        %3484 = vmatprep.subr.mxu0 0.0
        %3485 = vmatpush1.msra.mxu0 %v3455
        %3486 = vmatprep.subr.mxu0 0.0
        %3487 = vmatpush1.msra.mxu0 %v3456
        %3488 = vmatprep.subr.mxu0 0.0
        %3489 = vmatpush1.msra.mxu0 %v3457
        %3490 = vmatprep.subr.mxu0 0.0
        %3491 = vmatpush1.msra.mxu0 0.0
        %3492 = vmatprep.subr.mxu0 0.0
        %3493 = vmatpush1.msra.mxu0 0.0
        %3494 = vmatprep.subr.mxu0 0.0
        %3495 = vmatpush1.msra.mxu0 0.0
        %3496 = vmatprep.subr.mxu0 0.0
        %3497 = vmatpush1.msra.mxu0 0.0
        %3498 = vmatprep.subr.mxu0 0.0
        %3499 = vmatpush1.msra.mxu0 0.0
        %3500 = vmatprep.subr.mxu0 0.0
        %3501 = vmatpush1.msra.mxu0 0.0
        %3502 = vmatprep.subr.mxu0 0.0
        %3503 = vmatpush1.msra.mxu0 0.0
        %3504 = vmatprep.subr.mxu0 0.0
        %3505 = vmatpush1.msra.mxu0 0.0
        %3506 = vmatprep.subr.mxu0 0.0
        %3507 = vmatpush1.msra.mxu0 0.0
        %3508 = vmatprep.subr.mxu0 0.0
        %3509 = vmatpush1.msra.mxu0 0.0
        %3510 = vmatprep.subr.mxu0 0.0
        %3511 = vmatpush1.msra.mxu0 0.0
        %3512 = vmatprep.subr.mxu0 0.0
        %3513 = vmatpush1.msra.mxu0 0.0
        %3514 = vmatprep.subr.mxu0 0.0
        %3515 = vmatpush1.msra.mxu0 0.0
        %3516 = vmatprep.subr.mxu0 0.0
        %3517 = vmatpush1.msra.mxu0 0.0
        %3518 = vmatprep.subr.mxu0 0.0
        %3519 = vmatpush1.msra.mxu0 0.0
        %3520 = vmatprep.subr.mxu0 0.0
        %3521 = vmatpush1.msra.mxu0 0.0
        %3522 = vmatprep.mubr.f32.mxu0 0.0
        %3523 = vmatmul.mubr.f32.gmra.mrb[0].mxu0 %v3427
        %v3524 = vpop.f32.mrb[0].mxu0
        %v3525 = vadd.f32 0.0, %v3524
        %v3526 = vpop.f32.mrb[0].mxu0
        %3527 = vmatprep.mubr.f32.mxu0 0.0
        %3528 = vmatmul.mubr.f32.gmra.mrb[0].mxu0 %v3428
        %v3529 = vpop.f32.mrb[0].mxu0
        %v3530 = vadd.f32 0.0, %v3529
        %v3531 = vpop.f32.mrb[0].mxu0
        %3532 = vmatprep.mubr.f32.mxu0 0.0
        %3533 = vmatmul.mubr.f32.gmra.mrb[0].mxu0 %v3429
        %v3534 = vpop.f32.mrb[0].mxu0
        %v3535 = vpop.f32.mrb[0].mxu0
        %3536 = vmatprep.mubr.f32.mxu0 0.0
        %3537 = vmatmul.mubr.f32.gmra.mrb[0].mxu0 %v3430
        %v3538 = vpop.f32.mrb[0].mxu0
        %v3539 = vadd.f32 0.0, %v3538
        %v3540 = vpop.f32.mrb[0].mxu0
        %3541 = vmatprep.mubr.f32.mxu0 0.0
        %3542 = vmatmul.mubr.f32.gmra.mrb[0].mxu0 %v3431
        %v3543 = vpop.f32.mrb[0].mxu0
        %v3544 = vadd.f32 0.0, %v3543
        %v3545 = vpop.f32.mrb[0].mxu0
        %3546 = vmatprep.mubr.f32.mxu0 0.0
        %3547 = vmatmul.mubr.f32.gmra.mrb[0].mxu0 %v3432
        %v3548 = vpop.f32.mrb[0].mxu0
        %v3549 = vpop.f32.mrb[0].mxu0
        %3550 = vmatprep.mubr.f32.mxu0 0.0
        %3551 = vmatmul.mubr.f32.gmra.mrb[0].mxu0 %v3433
        %v3552 = vpop.f32.mrb[0].mxu0
        %v3553 = vadd.f32 0.0, %v3552
        %v3554 = vpop.f32.mrb[0].mxu0
        %3555 = vmatprep.mubr.f32.mxu0 0.0
        %3556 = vmatmul.mubr.f32.gmra.mrb[0].mxu0 %v3434
        %v3557 = vpop.f32.mrb[0].mxu0
        %v3558 = vadd.f32 0.0, %v3557
        %v3559 = vpop.f32.mrb[0].mxu0
        %3560 = vmatprep.mubr.f32.mxu0 0.0
        %3561 = vmatmul.mubr.f32.gmra.mrb[0].mxu0 %v3435
        %v3562 = vpop.f32.mrb[0].mxu0
        %v3563 = vpop.f32.mrb[0].mxu0
        %3564 = vmatprep.mubr.f32.mxu0 0.0
        %3565 = vmatmul.mubr.f32.gmra.mrb[0].mxu0 %v3436
        %v3566 = vpop.f32.mrb[0].mxu0
        %v3567 = vadd.f32 0.0, %v3566
        %v3568 = vpop.f32.mrb[0].mxu0
        %3569 = vmatprep.mubr.f32.mxu0 0.0
        %3570 = vmatmul.mubr.f32.gmra.mrb[0].mxu0 %v3437
        %v3571 = vpop.f32.mrb[0].mxu0
        %v3572 = vadd.f32 0.0, %v3571
        %v3573 = vpop.f32.mrb[0].mxu0
        %3574 = vmatprep.mubr.f32.mxu0 0.0
        %3575 = vmatmul.mubr.f32.gmra.mrb[0].mxu0 %v3438
        %v3576 = vpop.f32.mrb[0].mxu0
        %v3577 = vpop.f32.mrb[0].mxu0
        %3578 = vmatprep.mubr.f32.mxu0 0.0
        %3579 = vmatmul.mubr.f32.gmra.mrb[0].mxu0 %v3439
        %v3580 = vpop.f32.mrb[0].mxu0
        %v3581 = vadd.f32 0.0, %v3580
        %v3582 = vpop.f32.mrb[0].mxu0
        %3583 = vmatprep.mubr.f32.mxu0 0.0
        %3584 = vmatmul.mubr.f32.gmra.mrb[0].mxu0 %v3440
        %v3585 = vpop.f32.mrb[0].mxu0
        %v3586 = vadd.f32 0.0, %v3585
        %v3587 = vpop.f32.mrb[0].mxu0
        %3588 = vmatprep.mubr.f32.mxu0 0.0
        %3589 = vmatmul.mubr.f32.gmra.mrb[0].mxu0 %v3441
        %v3590 = vpop.f32.mrb[0].mxu0
        %v3591 = vpop.f32.mrb[0].mxu0
        %3592 = vdwg.mxu0
        %v3593 = vadd.f32 %v3417, %v3525
        %v3594 = vadd.f32 %v3418, %v3530
        %v3595 = vadd.f32 %v3419, %v3539
        %v3596 = vadd.f32 %v3420, %v3544
        %v3597 = vadd.f32 %v3421, %v3553
        %v3598 = vadd.f32 %v3422, %v3558
        %v3599 = vadd.f32 %v3423, %v3567
        %v3600 = vadd.f32 %v3424, %v3572
        %v3601 = vadd.f32 %v3425, %v3581
        %v3602 = vadd.f32 %v3426, %v3586
        %v3603 = vld [vmem:[#allocation2 + $0xc0] sm:$0xff]
        %v3604 = vld [vmem:[#allocation2 + $0xc8] sm:$0xff]
        %v3605 = vld [vmem:[#allocation2 + $0xd0] sm:$0xff]
        %v3606 = vld [vmem:[#allocation2 + $0xd8] sm:$0xff]
        %v3607 = vld [vmem:[#allocation2 + $0xe0] sm:$0xff]
        %v3608 = vld [vmem:[#allocation2 + $0xe8] sm:$0xff]
        %v3609 = vld [vmem:[#allocation2 + $0xf0] sm:$0xff]
        %v3610 = vld [vmem:[#allocation2 + $0xf8] sm:$0xff]
        %v3611 = vld [vmem:[#allocation2 + $0x100] sm:$0xff]
        %v3612 = vld [vmem:[#allocation2 + $0x108] sm:$0xff]
        %v3613 = vld [vmem:[#allocation2 + $0x110] sm:$0xff]
        %v3614 = vld [vmem:[#allocation2 + $0x118] sm:$0xff]
        %v3615 = vld [vmem:[#allocation2 + $0x120] sm:$0xff]
        %v3616 = vld [vmem:[#allocation2 + $0x128] sm:$0xff]
        %v3617 = vld [vmem:[#allocation2 + $0x130] sm:$0xff]
        %v3618 = vld [vmem:[%s2016] sm:$0xff]
        %v3619 = vld [vmem:[%s2016 + $0x8] sm:$0xff]
        %v3620 = vld [vmem:[%s2016 + $0x10] sm:$0xff]
        %v3621 = vld [vmem:[%s2016 + $0x18] sm:$0xff]
        %v3622 = vld [vmem:[%s2016 + $0x20] sm:$0xff]
        %v3623 = vld [vmem:[%s2016 + $0x28] sm:$0xff]
        %v3624 = vld [vmem:[%s2016 + $0x30] sm:$0xff]
        %v3625 = vld [vmem:[%s2016 + $0x38] sm:$0xff]
        %v3626 = vld [vmem:[%s2016 + $0x40] sm:$0xff]
        %v3627 = vld [vmem:[%s2016 + $0x48] sm:$0xff]
        %v3628 = vld [vmem:[%s2016 + $0x50] sm:$0xff]
        %v3629 = vld [vmem:[%s2016 + $0x58] sm:$0xff]
        %v3630 = vld [vmem:[%s2016 + $0x60] sm:$0xff]
        %v3631 = vld [vmem:[%s2016 + $0x68] sm:$0xff]
        %v3632 = vld [vmem:[%s2016 + $0x70] sm:$0xff]
        %v3633 = vld [vmem:[%s2016 + $0x78] sm:$0xff]
        %3634 = vmatprep.subr.mxu0 0.0
        %3635 = vmatpush1.msra.mxu0 %v3618
        %3636 = vmatprep.subr.mxu0 0.0
        %3637 = vmatpush1.msra.mxu0 %v3619
        %3638 = vmatprep.subr.mxu0 0.0
        %3639 = vmatpush1.msra.mxu0 %v3620
        %3640 = vmatprep.subr.mxu0 0.0
        %3641 = vmatpush1.msra.mxu0 %v3621
        %3642 = vmatprep.subr.mxu0 0.0
        %3643 = vmatpush1.msra.mxu0 %v3622
        %3644 = vmatprep.subr.mxu0 0.0
        %3645 = vmatpush1.msra.mxu0 %v3623
        %3646 = vmatprep.subr.mxu0 0.0
        %3647 = vmatpush1.msra.mxu0 %v3624
        %3648 = vmatprep.subr.mxu0 0.0
        %3649 = vmatpush1.msra.mxu0 %v3625
        %3650 = vmatprep.subr.mxu0 0.0
        %3651 = vmatpush1.msra.mxu0 %v3626
        %3652 = vmatprep.subr.mxu0 0.0
        %3653 = vmatpush1.msra.mxu0 %v3627
        %3654 = vmatprep.subr.mxu0 0.0
        %3655 = vmatpush1.msra.mxu0 %v3628
        %3656 = vmatprep.subr.mxu0 0.0
        %3657 = vmatpush1.msra.mxu0 %v3629
        %3658 = vmatprep.subr.mxu0 0.0
        %3659 = vmatpush1.msra.mxu0 %v3630
        %3660 = vmatprep.subr.mxu0 0.0
        %3661 = vmatpush1.msra.mxu0 %v3631
        %3662 = vmatprep.subr.mxu0 0.0
        %3663 = vmatpush1.msra.mxu0 %v3632
        %3664 = vmatprep.subr.mxu0 0.0
        %3665 = vmatpush1.msra.mxu0 %v3633
        %3666 = vmatprep.subr.mxu0 0.0
        %3667 = vmatpush1.msra.mxu0 0.0
        %3668 = vmatprep.subr.mxu0 0.0
        %3669 = vmatpush1.msra.mxu0 0.0
        %3670 = vmatprep.subr.mxu0 0.0
        %3671 = vmatpush1.msra.mxu0 0.0
        %3672 = vmatprep.subr.mxu0 0.0
        %3673 = vmatpush1.msra.mxu0 0.0
        %3674 = vmatprep.subr.mxu0 0.0
        %3675 = vmatpush1.msra.mxu0 0.0
        %3676 = vmatprep.subr.mxu0 0.0
        %3677 = vmatpush1.msra.mxu0 0.0
        %3678 = vmatprep.subr.mxu0 0.0
        %3679 = vmatpush1.msra.mxu0 0.0
        %3680 = vmatprep.subr.mxu0 0.0
        %3681 = vmatpush1.msra.mxu0 0.0
        %3682 = vmatprep.subr.mxu0 0.0
        %3683 = vmatpush1.msra.mxu0 0.0
        %3684 = vmatprep.subr.mxu0 0.0
        %3685 = vmatpush1.msra.mxu0 0.0
        %3686 = vmatprep.subr.mxu0 0.0
        %3687 = vmatpush1.msra.mxu0 0.0
        %3688 = vmatprep.subr.mxu0 0.0
        %3689 = vmatpush1.msra.mxu0 0.0
        %3690 = vmatprep.subr.mxu0 0.0
        %3691 = vmatpush1.msra.mxu0 0.0
        %3692 = vmatprep.subr.mxu0 0.0
        %3693 = vmatpush1.msra.mxu0 0.0
        %3694 = vmatprep.subr.mxu0 0.0
        %3695 = vmatpush1.msra.mxu0 0.0
        %3696 = vmatprep.subr.mxu0 0.0
        %3697 = vmatpush1.msra.mxu0 0.0
        %3698 = vmatprep.mubr.f32.mxu0 0.0
        %3699 = vmatmul.mubr.f32.gmra.mrb[0].mxu0 %v3603
        %v3700 = vpop.f32.mrb[0].mxu0
        %v3701 = vadd.f32 0.0, %v3700
        %v3702 = vpop.f32.mrb[0].mxu0
        %3703 = vmatprep.mubr.f32.mxu0 0.0
        %3704 = vmatmul.mubr.f32.gmra.mrb[0].mxu0 %v3604
        %v3705 = vpop.f32.mrb[0].mxu0
        %v3706 = vadd.f32 0.0, %v3705
        %v3707 = vpop.f32.mrb[0].mxu0
        %3708 = vmatprep.mubr.f32.mxu0 0.0
        %3709 = vmatmul.mubr.f32.gmra.mrb[0].mxu0 %v3605
        %v3710 = vpop.f32.mrb[0].mxu0
        %v3711 = vpop.f32.mrb[0].mxu0
        %3712 = vmatprep.mubr.f32.mxu0 0.0
        %3713 = vmatmul.mubr.f32.gmra.mrb[0].mxu0 %v3606
        %v3714 = vpop.f32.mrb[0].mxu0
        %v3715 = vadd.f32 0.0, %v3714
        %v3716 = vpop.f32.mrb[0].mxu0
        %3717 = vmatprep.mubr.f32.mxu0 0.0
        %3718 = vmatmul.mubr.f32.gmra.mrb[0].mxu0 %v3607
        %v3719 = vpop.f32.mrb[0].mxu0
        %v3720 = vadd.f32 0.0, %v3719
        %v3721 = vpop.f32.mrb[0].mxu0
        %3722 = vmatprep.mubr.f32.mxu0 0.0
        %3723 = vmatmul.mubr.f32.gmra.mrb[0].mxu0 %v3608
        %v3724 = vpop.f32.mrb[0].mxu0
        %v3725 = vpop.f32.mrb[0].mxu0
        %3726 = vmatprep.mubr.f32.mxu0 0.0
        %3727 = vmatmul.mubr.f32.gmra.mrb[0].mxu0 %v3609
        %v3728 = vpop.f32.mrb[0].mxu0
        %v3729 = vadd.f32 0.0, %v3728
        %v3730 = vpop.f32.mrb[0].mxu0
        %3731 = vmatprep.mubr.f32.mxu0 0.0
        %3732 = vmatmul.mubr.f32.gmra.mrb[0].mxu0 %v3610
        %v3733 = vpop.f32.mrb[0].mxu0
        %v3734 = vadd.f32 0.0, %v3733
        %v3735 = vpop.f32.mrb[0].mxu0
        %3736 = vmatprep.mubr.f32.mxu0 0.0
        %3737 = vmatmul.mubr.f32.gmra.mrb[0].mxu0 %v3611
        %v3738 = vpop.f32.mrb[0].mxu0
        %v3739 = vpop.f32.mrb[0].mxu0
        %3740 = vmatprep.mubr.f32.mxu0 0.0
        %3741 = vmatmul.mubr.f32.gmra.mrb[0].mxu0 %v3612
        %v3742 = vpop.f32.mrb[0].mxu0
        %v3743 = vadd.f32 0.0, %v3742
        %v3744 = vpop.f32.mrb[0].mxu0
        %3745 = vmatprep.mubr.f32.mxu0 0.0
        %3746 = vmatmul.mubr.f32.gmra.mrb[0].mxu0 %v3613
        %v3747 = vpop.f32.mrb[0].mxu0
        %v3748 = vadd.f32 0.0, %v3747
        %v3749 = vpop.f32.mrb[0].mxu0
        %3750 = vmatprep.mubr.f32.mxu0 0.0
        %3751 = vmatmul.mubr.f32.gmra.mrb[0].mxu0 %v3614
        %v3752 = vpop.f32.mrb[0].mxu0
        %v3753 = vpop.f32.mrb[0].mxu0
        %3754 = vmatprep.mubr.f32.mxu0 0.0
        %3755 = vmatmul.mubr.f32.gmra.mrb[0].mxu0 %v3615
        %v3756 = vpop.f32.mrb[0].mxu0
        %v3757 = vadd.f32 0.0, %v3756
        %v3758 = vpop.f32.mrb[0].mxu0
        %3759 = vmatprep.mubr.f32.mxu0 0.0
        %3760 = vmatmul.mubr.f32.gmra.mrb[0].mxu0 %v3616
        %v3761 = vpop.f32.mrb[0].mxu0
        %v3762 = vadd.f32 0.0, %v3761
        %v3763 = vpop.f32.mrb[0].mxu0
        %3764 = vmatprep.mubr.f32.mxu0 0.0
        %3765 = vmatmul.mubr.f32.gmra.mrb[0].mxu0 %v3617
        %v3766 = vpop.f32.mrb[0].mxu0
        %v3767 = vpop.f32.mrb[0].mxu0
        %3768 = vdwg.mxu0
        %v3769 = vadd.f32 %v3593, %v3701
        %v3770 = vadd.f32 %v3594, %v3706
        %v3771 = vadd.f32 %v3595, %v3715
        %v3772 = vadd.f32 %v3596, %v3720
        %v3773 = vadd.f32 %v3597, %v3729
        %v3774 = vadd.f32 %v3598, %v3734
        %v3775 = vadd.f32 %v3599, %v3743
        %v3776 = vadd.f32 %v3600, %v3748
        %v3777 = vadd.f32 %v3601, %v3757
        %v3778 = vadd.f32 %v3602, %v3762
        %v3779 = vld [vmem:[#allocation2 + $0xc1] sm:$0xff]
        %v3780 = vld [vmem:[#allocation2 + $0xc9] sm:$0xff]
        %v3781 = vld [vmem:[#allocation2 + $0xd1] sm:$0xff]
        %v3782 = vld [vmem:[#allocation2 + $0xd9] sm:$0xff]
        %v3783 = vld [vmem:[#allocation2 + $0xe1] sm:$0xff]
        %v3784 = vld [vmem:[#allocation2 + $0xe9] sm:$0xff]
        %v3785 = vld [vmem:[#allocation2 + $0xf1] sm:$0xff]
        %v3786 = vld [vmem:[#allocation2 + $0xf9] sm:$0xff]
        %v3787 = vld [vmem:[#allocation2 + $0x101] sm:$0xff]
        %v3788 = vld [vmem:[#allocation2 + $0x109] sm:$0xff]
        %v3789 = vld [vmem:[#allocation2 + $0x111] sm:$0xff]
        %v3790 = vld [vmem:[#allocation2 + $0x119] sm:$0xff]
        %v3791 = vld [vmem:[#allocation2 + $0x121] sm:$0xff]
        %v3792 = vld [vmem:[#allocation2 + $0x129] sm:$0xff]
        %v3793 = vld [vmem:[#allocation2 + $0x131] sm:$0xff]
        %v3794 = vld [vmem:[%s2193] sm:$0xff]
        %v3795 = vld [vmem:[%s2193 + $0x8] sm:$0xff]
        %v3796 = vld [vmem:[%s2193 + $0x10] sm:$0xff]
        %v3797 = vld [vmem:[%s2193 + $0x18] sm:$0xff]
        %v3798 = vld [vmem:[%s2193 + $0x20] sm:$0xff]
        %v3799 = vld [vmem:[%s2193 + $0x28] sm:$0xff]
        %v3800 = vld [vmem:[%s2193 + $0x30] sm:$0xff]
        %v3801 = vld [vmem:[%s2193 + $0x38] sm:$0xff]
        %v3802 = vld [vmem:[%s2193 + $0x40] sm:$0xff]
        %v3803 = vld [vmem:[%s2193 + $0x48] sm:$0xff]
        %v3804 = vld [vmem:[%s2193 + $0x50] sm:$0xff]
        %v3805 = vld [vmem:[%s2193 + $0x58] sm:$0xff]
        %v3806 = vld [vmem:[%s2193 + $0x60] sm:$0xff]
        %v3807 = vld [vmem:[%s2193 + $0x68] sm:$0xff]
        %v3808 = vld [vmem:[%s2193 + $0x70] sm:$0xff]
        %v3809 = vld [vmem:[%s2193 + $0x78] sm:$0xff]
        %3810 = vmatprep.subr.mxu0 0.0
        %3811 = vmatpush1.msra.mxu0 %v3794
        %3812 = vmatprep.subr.mxu0 0.0
        %3813 = vmatpush1.msra.mxu0 %v3795
        %3814 = vmatprep.subr.mxu0 0.0
        %3815 = vmatpush1.msra.mxu0 %v3796
        %3816 = vmatprep.subr.mxu0 0.0
        %3817 = vmatpush1.msra.mxu0 %v3797
        %3818 = vmatprep.subr.mxu0 0.0
        %3819 = vmatpush1.msra.mxu0 %v3798
        %3820 = vmatprep.subr.mxu0 0.0
        %3821 = vmatpush1.msra.mxu0 %v3799
        %3822 = vmatprep.subr.mxu0 0.0
        %3823 = vmatpush1.msra.mxu0 %v3800
        %3824 = vmatprep.subr.mxu0 0.0
        %3825 = vmatpush1.msra.mxu0 %v3801
        %3826 = vmatprep.subr.mxu0 0.0
        %3827 = vmatpush1.msra.mxu0 %v3802
        %3828 = vmatprep.subr.mxu0 0.0
        %3829 = vmatpush1.msra.mxu0 %v3803
        %3830 = vmatprep.subr.mxu0 0.0
        %3831 = vmatpush1.msra.mxu0 %v3804
        %3832 = vmatprep.subr.mxu0 0.0
        %3833 = vmatpush1.msra.mxu0 %v3805
        %3834 = vmatprep.subr.mxu0 0.0
        %3835 = vmatpush1.msra.mxu0 %v3806
        %3836 = vmatprep.subr.mxu0 0.0
        %3837 = vmatpush1.msra.mxu0 %v3807
        %3838 = vmatprep.subr.mxu0 0.0
        %3839 = vmatpush1.msra.mxu0 %v3808
        %3840 = vmatprep.subr.mxu0 0.0
        %3841 = vmatpush1.msra.mxu0 %v3809
        %3842 = vmatprep.subr.mxu0 0.0
        %3843 = vmatpush1.msra.mxu0 0.0
        %3844 = vmatprep.subr.mxu0 0.0
        %3845 = vmatpush1.msra.mxu0 0.0
        %3846 = vmatprep.subr.mxu0 0.0
        %3847 = vmatpush1.msra.mxu0 0.0
        %3848 = vmatprep.subr.mxu0 0.0
        %3849 = vmatpush1.msra.mxu0 0.0
        %3850 = vmatprep.subr.mxu0 0.0
        %3851 = vmatpush1.msra.mxu0 0.0
        %3852 = vmatprep.subr.mxu0 0.0
        %3853 = vmatpush1.msra.mxu0 0.0
        %3854 = vmatprep.subr.mxu0 0.0
        %3855 = vmatpush1.msra.mxu0 0.0
        %3856 = vmatprep.subr.mxu0 0.0
        %3857 = vmatpush1.msra.mxu0 0.0
        %3858 = vmatprep.subr.mxu0 0.0
        %3859 = vmatpush1.msra.mxu0 0.0
        %3860 = vmatprep.subr.mxu0 0.0
        %3861 = vmatpush1.msra.mxu0 0.0
        %3862 = vmatprep.subr.mxu0 0.0
        %3863 = vmatpush1.msra.mxu0 0.0
        %3864 = vmatprep.subr.mxu0 0.0
        %3865 = vmatpush1.msra.mxu0 0.0
        %3866 = vmatprep.subr.mxu0 0.0
        %3867 = vmatpush1.msra.mxu0 0.0
        %3868 = vmatprep.subr.mxu0 0.0
        %3869 = vmatpush1.msra.mxu0 0.0
        %3870 = vmatprep.subr.mxu0 0.0
        %3871 = vmatpush1.msra.mxu0 0.0
        %3872 = vmatprep.subr.mxu0 0.0
        %3873 = vmatpush1.msra.mxu0 0.0
        %3874 = vmatprep.mubr.f32.mxu0 0.0
        %3875 = vmatmul.mubr.f32.gmra.mrb[0].mxu0 %v3779
        %v3876 = vpop.f32.mrb[0].mxu0
        %v3877 = vadd.f32 0.0, %v3876
        %v3878 = vpop.f32.mrb[0].mxu0
        %3879 = vmatprep.mubr.f32.mxu0 0.0
        %3880 = vmatmul.mubr.f32.gmra.mrb[0].mxu0 %v3780
        %v3881 = vpop.f32.mrb[0].mxu0
        %v3882 = vadd.f32 0.0, %v3881
        %v3883 = vpop.f32.mrb[0].mxu0
        %3884 = vmatprep.mubr.f32.mxu0 0.0
        %3885 = vmatmul.mubr.f32.gmra.mrb[0].mxu0 %v3781
        %v3886 = vpop.f32.mrb[0].mxu0
        %v3887 = vpop.f32.mrb[0].mxu0
        %3888 = vmatprep.mubr.f32.mxu0 0.0
        %3889 = vmatmul.mubr.f32.gmra.mrb[0].mxu0 %v3782
        %v3890 = vpop.f32.mrb[0].mxu0
        %v3891 = vadd.f32 0.0, %v3890
        %v3892 = vpop.f32.mrb[0].mxu0
        %3893 = vmatprep.mubr.f32.mxu0 0.0
        %3894 = vmatmul.mubr.f32.gmra.mrb[0].mxu0 %v3783
        %v3895 = vpop.f32.mrb[0].mxu0
        %v3896 = vadd.f32 0.0, %v3895
        %v3897 = vpop.f32.mrb[0].mxu0
        %3898 = vmatprep.mubr.f32.mxu0 0.0
        %3899 = vmatmul.mubr.f32.gmra.mrb[0].mxu0 %v3784
        %v3900 = vpop.f32.mrb[0].mxu0
        %v3901 = vpop.f32.mrb[0].mxu0
        %3902 = vmatprep.mubr.f32.mxu0 0.0
        %3903 = vmatmul.mubr.f32.gmra.mrb[0].mxu0 %v3785
        %v3904 = vpop.f32.mrb[0].mxu0
        %v3905 = vadd.f32 0.0, %v3904
        %v3906 = vpop.f32.mrb[0].mxu0
        %3907 = vmatprep.mubr.f32.mxu0 0.0
        %3908 = vmatmul.mubr.f32.gmra.mrb[0].mxu0 %v3786
        %v3909 = vpop.f32.mrb[0].mxu0
        %v3910 = vadd.f32 0.0, %v3909
        %v3911 = vpop.f32.mrb[0].mxu0
        %3912 = vmatprep.mubr.f32.mxu0 0.0
        %3913 = vmatmul.mubr.f32.gmra.mrb[0].mxu0 %v3787
        %v3914 = vpop.f32.mrb[0].mxu0
        %v3915 = vpop.f32.mrb[0].mxu0
        %3916 = vmatprep.mubr.f32.mxu0 0.0
        %3917 = vmatmul.mubr.f32.gmra.mrb[0].mxu0 %v3788
        %v3918 = vpop.f32.mrb[0].mxu0
        %v3919 = vadd.f32 0.0, %v3918
        %v3920 = vpop.f32.mrb[0].mxu0
        %3921 = vmatprep.mubr.f32.mxu0 0.0
        %3922 = vmatmul.mubr.f32.gmra.mrb[0].mxu0 %v3789
        %v3923 = vpop.f32.mrb[0].mxu0
        %v3924 = vadd.f32 0.0, %v3923
        %v3925 = vpop.f32.mrb[0].mxu0
        %3926 = vmatprep.mubr.f32.mxu0 0.0
        %3927 = vmatmul.mubr.f32.gmra.mrb[0].mxu0 %v3790
        %v3928 = vpop.f32.mrb[0].mxu0
        %v3929 = vpop.f32.mrb[0].mxu0
        %3930 = vmatprep.mubr.f32.mxu0 0.0
        %3931 = vmatmul.mubr.f32.gmra.mrb[0].mxu0 %v3791
        %v3932 = vpop.f32.mrb[0].mxu0
        %v3933 = vadd.f32 0.0, %v3932
        %v3934 = vpop.f32.mrb[0].mxu0
        %3935 = vmatprep.mubr.f32.mxu0 0.0
        %3936 = vmatmul.mubr.f32.gmra.mrb[0].mxu0 %v3792
        %v3937 = vpop.f32.mrb[0].mxu0
        %v3938 = vadd.f32 0.0, %v3937
        %v3939 = vpop.f32.mrb[0].mxu0
        %3940 = vmatprep.mubr.f32.mxu0 0.0
        %3941 = vmatmul.mubr.f32.gmra.mrb[0].mxu0 %v3793
        %v3942 = vpop.f32.mrb[0].mxu0
        %v3943 = vpop.f32.mrb[0].mxu0
        %3944 = vdwg.mxu0
        %v3945 = vadd.f32 %v3769, %v3877
        %v3946 = vadd.f32 %v3770, %v3882
        %v3947 = vadd.f32 %v3771, %v3891
        %v3948 = vadd.f32 %v3772, %v3896
        %v3949 = vadd.f32 %v3773, %v3905
        %v3950 = vadd.f32 %v3774, %v3910
        %v3951 = vadd.f32 %v3775, %v3919
        %v3952 = vadd.f32 %v3776, %v3924
        %v3953 = vadd.f32 %v3777, %v3933
        %v3954 = vadd.f32 %v3778, %v3938
        %v3955 = vadd.f32 %v3945, %v2359
        %v3956 = vadd.f32 %v3946, %v2359
        %v3957 = vmax.f32 %v3955, 0.0
        %v3958 = vmax.f32 %v3956, 0.0
        %3959 = vst [vmem:[#allocation3 + $0x90] sm:$0xff] %v3957
        %3960 = vst [vmem:[#allocation3 + $0x98] sm:$0xff] %v3958
        %v3961 = vadd.f32 %v3947, %v2359
        %v3962 = vadd.f32 %v3948, %v2359
        %v3963 = vmax.f32 %v3961, 0.0
        %v3964 = vmax.f32 %v3962, 0.0
        %3965 = vst [vmem:[#allocation3 + $0xa8] sm:$0xff] %v3963
        %3966 = vst [vmem:[#allocation3 + $0xb0] sm:$0xff] %v3964
        %v3967 = vadd.f32 %v3949, %v2359
        %v3968 = vadd.f32 %v3950, %v2359
        %v3969 = vmax.f32 %v3967, 0.0
        %v3970 = vmax.f32 %v3968, 0.0
        %3971 = vst [vmem:[#allocation3 + $0xc0] sm:$0xff] %v3969
        %3972 = vst [vmem:[#allocation3 + $0xc8] sm:$0xff] %v3970
        %v3973 = vadd.f32 %v3951, %v2359
        %v3974 = vadd.f32 %v3952, %v2359
        %v3975 = vmax.f32 %v3973, 0.0
        %v3976 = vmax.f32 %v3974, 0.0
        %3977 = vst [vmem:[#allocation3 + $0xd8] sm:$0xff] %v3975
        %3978 = vst [vmem:[#allocation3 + $0xe0] sm:$0xff] %v3976
        %v3979 = vadd.f32 %v3953, %v2359
        %v3980 = vadd.f32 %v3954, %v2359
        %v3981 = vmax.f32 %v3979, 0.0
        %v3982 = vmax.f32 %v3980, 0.0
        %3983 = vst [vmem:[#allocation3 + $0xf0] sm:$0xff] %v3981
        %3984 = vst [vmem:[#allocation3 + $0xf8] sm:$0xff] %v3982
        %p3985 = scmp.eq.s32.totalorder %s639, 0
        // Predicated region
        $region85: #{tpu_custom_call.1} parent=55 // pred_check
          %p3986 = pneg %p3985
        $region86: #{tpu_custom_call.1} parent=55 // pred_check_branch
          %3988 = sbr.rel (%p3986) target = $region88
        $region87: #{tpu_custom_call.1} parent=55 // pred_region
          %3989 = vst [vmem:[#allocation3 + $0x18] sm:$0xff] 0.0
          %3990 = vst [vmem:[#allocation3 + $0x20] sm:$0xff] 0.0
        $region88: #{tpu_custom_call.1} parent=55 // pred_fallthru
          _
        %p3991 = scmp.eq.s32.totalorder %s38, 1
        // Predicated region
        $region89: #{tpu_custom_call.1} parent=55 // pred_check
          %p3992 = pneg %p3991
        $region90: #{tpu_custom_call.1} parent=55 // pred_check_branch
          %3994 = sbr.rel (%p3992) target = $region92
        $region91: #{tpu_custom_call.1} parent=55 // pred_region
          %3995 = vst [vmem:[#allocation3 + $0xf0] sm:$0xff] 0.0
          %3996 = vst [vmem:[#allocation3 + $0xf8] sm:$0xff] 0.0
        $region92: #{tpu_custom_call.1} parent=55 // pred_fallthru
          _
        %v3997 = vld [vmem:[#allocation3 + $0x17] sm:$0xff]
        %v3998 = vld [vmem:[#allocation3 + $0x1f] sm:$0xff]
        %v3999 = vld [vmem:[#allocation3 + $0x27] sm:$0xff]
        %v4000 = vld [vmem:[#allocation3 + $0x2f] sm:$0xff]
        %v4001 = vld [vmem:[#allocation3 + $0x37] sm:$0xff]
        %v4002 = vld [vmem:[#allocation3 + $0x3f] sm:$0xff]
        %v4003 = vld [vmem:[#allocation3 + $0x47] sm:$0xff]
        %v4004 = vld [vmem:[#allocation3 + $0x4f] sm:$0xff]
        %v4005 = vld [vmem:[#allocation3 + $0x57] sm:$0xff]
        %v4006 = vld [vmem:[#allocation3 + $0x5f] sm:$0xff]
        %v4007 = vld [vmem:[#allocation3 + $0x67] sm:$0xff]
        %v4008 = vld [vmem:[#allocation3 + $0x6f] sm:$0xff]
        %v4009 = vld [vmem:[#allocation3 + $0x77] sm:$0xff]
        %v4010 = vld [vmem:[#allocation3 + $0x7f] sm:$0xff]
        %v4011 = vld [vmem:[#allocation3 + $0x87] sm:$0xff]
        %v4012 = vld [vmem:[#allocation15] sm:$0xff]
        %v4013 = vld [vmem:[#allocation15 + $0x8] sm:$0xff]
        %v4014 = vld [vmem:[#allocation15 + $0x10] sm:$0xff]
        %v4015 = vld [vmem:[#allocation15 + $0x18] sm:$0xff]
        %v4016 = vld [vmem:[#allocation15 + $0x20] sm:$0xff]
        %v4017 = vld [vmem:[#allocation15 + $0x28] sm:$0xff]
        %v4018 = vld [vmem:[#allocation15 + $0x30] sm:$0xff]
        %v4019 = vld [vmem:[#allocation15 + $0x38] sm:$0xff]
        %v4020 = vld [vmem:[#allocation15 + $0x40] sm:$0xff]
        %v4021 = vld [vmem:[#allocation15 + $0x48] sm:$0xff]
        %v4022 = vld [vmem:[#allocation15 + $0x50] sm:$0xff]
        %v4023 = vld [vmem:[#allocation15 + $0x58] sm:$0xff]
        %v4024 = vld [vmem:[#allocation15 + $0x60] sm:$0xff]
        %v4025 = vld [vmem:[#allocation15 + $0x68] sm:$0xff]
        %v4026 = vld [vmem:[#allocation15 + $0x70] sm:$0xff]
        %v4027 = vld [vmem:[#allocation15 + $0x78] sm:$0xff]
        %v4028 = vld [vmem:[#allocation3 + $0x18] sm:$0xff]
        %v4029 = vld [vmem:[#allocation3 + $0x20] sm:$0xff]
        %v4030 = vld [vmem:[#allocation3 + $0x28] sm:$0xff]
        %v4031 = vld [vmem:[#allocation3 + $0x30] sm:$0xff]
        %v4032 = vld [vmem:[#allocation3 + $0x38] sm:$0xff]
        %v4033 = vld [vmem:[#allocation3 + $0x40] sm:$0xff]
        %v4034 = vld [vmem:[#allocation3 + $0x48] sm:$0xff]
        %v4035 = vld [vmem:[#allocation3 + $0x50] sm:$0xff]
        %v4036 = vld [vmem:[#allocation3 + $0x58] sm:$0xff]
        %v4037 = vld [vmem:[#allocation3 + $0x60] sm:$0xff]
        %v4038 = vld [vmem:[#allocation3 + $0x68] sm:$0xff]
        %v4039 = vld [vmem:[#allocation3 + $0x70] sm:$0xff]
        %v4040 = vld [vmem:[#allocation3 + $0x78] sm:$0xff]
        %v4041 = vld [vmem:[#allocation3 + $0x80] sm:$0xff]
        %v4042 = vld [vmem:[#allocation3 + $0x88] sm:$0xff]
        %s4043 = scalar_lea.vmem [#allocation15], 128
        %v4044 = vld [vmem:[%s4043] sm:$0xff]
        %v4045 = vld [vmem:[%s4043 + $0x8] sm:$0xff]
        %v4046 = vld [vmem:[%s4043 + $0x10] sm:$0xff]
        %v4047 = vld [vmem:[%s4043 + $0x18] sm:$0xff]
        %v4048 = vld [vmem:[%s4043 + $0x20] sm:$0xff]
        %v4049 = vld [vmem:[%s4043 + $0x28] sm:$0xff]
        %v4050 = vld [vmem:[%s4043 + $0x30] sm:$0xff]
        %v4051 = vld [vmem:[%s4043 + $0x38] sm:$0xff]
        %v4052 = vld [vmem:[%s4043 + $0x40] sm:$0xff]
        %v4053 = vld [vmem:[%s4043 + $0x48] sm:$0xff]
        %v4054 = vld [vmem:[%s4043 + $0x50] sm:$0xff]
        %v4055 = vld [vmem:[%s4043 + $0x58] sm:$0xff]
        %v4056 = vld [vmem:[%s4043 + $0x60] sm:$0xff]
        %v4057 = vld [vmem:[%s4043 + $0x68] sm:$0xff]
        %v4058 = vld [vmem:[%s4043 + $0x70] sm:$0xff]
        %v4059 = vld [vmem:[%s4043 + $0x78] sm:$0xff]
        %4060 = vmatprep.subr.mxu0 0.0
        %4061 = vmatpush1.msra.mxu0 %v4044
        %4062 = vmatprep.subr.mxu0 0.0
        %4063 = vmatpush1.msra.mxu0 %v4045
        %4064 = vmatprep.subr.mxu0 0.0
        %4065 = vmatpush1.msra.mxu0 %v4046
        %4066 = vmatprep.subr.mxu0 0.0
        %4067 = vmatpush1.msra.mxu0 %v4047
        %4068 = vmatprep.subr.mxu0 0.0
        %4069 = vmatpush1.msra.mxu0 %v4048
        %4070 = vmatprep.subr.mxu0 0.0
        %4071 = vmatpush1.msra.mxu0 %v4049
        %4072 = vmatprep.subr.mxu0 0.0
        %4073 = vmatpush1.msra.mxu0 %v4050
        %4074 = vmatprep.subr.mxu0 0.0
        %4075 = vmatpush1.msra.mxu0 %v4051
        %4076 = vmatprep.subr.mxu0 0.0
        %4077 = vmatpush1.msra.mxu0 %v4052
        %4078 = vmatprep.subr.mxu0 0.0
        %4079 = vmatpush1.msra.mxu0 %v4053
        %4080 = vmatprep.subr.mxu0 0.0
        %4081 = vmatpush1.msra.mxu0 %v4054
        %4082 = vmatprep.subr.mxu0 0.0
        %4083 = vmatpush1.msra.mxu0 %v4055
        %4084 = vmatprep.subr.mxu0 0.0
        %4085 = vmatpush1.msra.mxu0 %v4056
        %4086 = vmatprep.subr.mxu0 0.0
        %4087 = vmatpush1.msra.mxu0 %v4057
        %4088 = vmatprep.subr.mxu0 0.0
        %4089 = vmatpush1.msra.mxu0 %v4058
        %4090 = vmatprep.subr.mxu0 0.0
        %4091 = vmatpush1.msra.mxu0 %v4059
        %4092 = vmatprep.subr.mxu0 0.0
        %4093 = vmatpush1.msra.mxu0 0.0
        %4094 = vmatprep.subr.mxu0 0.0
        %4095 = vmatpush1.msra.mxu0 0.0
        %4096 = vmatprep.subr.mxu0 0.0
        %4097 = vmatpush1.msra.mxu0 0.0
        %4098 = vmatprep.subr.mxu0 0.0
        %4099 = vmatpush1.msra.mxu0 0.0
        %4100 = vmatprep.subr.mxu0 0.0
        %4101 = vmatpush1.msra.mxu0 0.0
        %4102 = vmatprep.subr.mxu0 0.0
        %4103 = vmatpush1.msra.mxu0 0.0
        %4104 = vmatprep.subr.mxu0 0.0
        %4105 = vmatpush1.msra.mxu0 0.0
        %4106 = vmatprep.subr.mxu0 0.0
        %4107 = vmatpush1.msra.mxu0 0.0
        %4108 = vmatprep.subr.mxu0 0.0
        %4109 = vmatpush1.msra.mxu0 0.0
        %4110 = vmatprep.subr.mxu0 0.0
        %4111 = vmatpush1.msra.mxu0 0.0
        %4112 = vmatprep.subr.mxu0 0.0
        %4113 = vmatpush1.msra.mxu0 0.0
        %4114 = vmatprep.subr.mxu0 0.0
        %4115 = vmatpush1.msra.mxu0 0.0
        %4116 = vmatprep.subr.mxu0 0.0
        %4117 = vmatpush1.msra.mxu0 0.0
        %4118 = vmatprep.subr.mxu0 0.0
        %4119 = vmatpush1.msra.mxu0 0.0
        %4120 = vmatprep.subr.mxu0 0.0
        %4121 = vmatpush1.msra.mxu0 0.0
        %4122 = vmatprep.subr.mxu0 0.0
        %4123 = vmatpush1.msra.mxu0 0.0
        %4124 = vmatprep.mubr.f32.mxu0 0.0
        %4125 = vmatmul.mubr.f32.gmra.mrb[0].mxu0 %v4028
        %v4126 = vpop.f32.mrb[0].mxu0
        %v4127 = vadd.f32 0.0, %v4126
        %v4128 = vpop.f32.mrb[0].mxu0
        %4129 = vmatprep.mubr.f32.mxu0 0.0
        %4130 = vmatmul.mubr.f32.gmra.mrb[0].mxu0 %v4029
        %v4131 = vpop.f32.mrb[0].mxu0
        %v4132 = vadd.f32 0.0, %v4131
        %v4133 = vpop.f32.mrb[0].mxu0
        %4134 = vmatprep.mubr.f32.mxu0 0.0
        %4135 = vmatmul.mubr.f32.gmra.mrb[0].mxu0 %v4030
        %v4136 = vpop.f32.mrb[0].mxu0
        %v4137 = vpop.f32.mrb[0].mxu0
        %4138 = vmatprep.mubr.f32.mxu0 0.0
        %4139 = vmatmul.mubr.f32.gmra.mrb[0].mxu0 %v4031
        %v4140 = vpop.f32.mrb[0].mxu0
        %v4141 = vadd.f32 0.0, %v4140
        %v4142 = vpop.f32.mrb[0].mxu0
        %4143 = vmatprep.mubr.f32.mxu0 0.0
        %4144 = vmatmul.mubr.f32.gmra.mrb[0].mxu0 %v4032
        %v4145 = vpop.f32.mrb[0].mxu0
        %v4146 = vadd.f32 0.0, %v4145
        %v4147 = vpop.f32.mrb[0].mxu0
        %4148 = vmatprep.mubr.f32.mxu0 0.0
        %4149 = vmatmul.mubr.f32.gmra.mrb[0].mxu0 %v4033
        %v4150 = vpop.f32.mrb[0].mxu0
        %v4151 = vpop.f32.mrb[0].mxu0
        %4152 = vmatprep.mubr.f32.mxu0 0.0
        %4153 = vmatmul.mubr.f32.gmra.mrb[0].mxu0 %v4034
        %v4154 = vpop.f32.mrb[0].mxu0
        %v4155 = vadd.f32 0.0, %v4154
        %v4156 = vpop.f32.mrb[0].mxu0
        %4157 = vmatprep.mubr.f32.mxu0 0.0
        %4158 = vmatmul.mubr.f32.gmra.mrb[0].mxu0 %v4035
        %v4159 = vpop.f32.mrb[0].mxu0
        %v4160 = vadd.f32 0.0, %v4159
        %v4161 = vpop.f32.mrb[0].mxu0
        %4162 = vmatprep.mubr.f32.mxu0 0.0
        %4163 = vmatmul.mubr.f32.gmra.mrb[0].mxu0 %v4036
        %v4164 = vpop.f32.mrb[0].mxu0
        %v4165 = vpop.f32.mrb[0].mxu0
        %4166 = vmatprep.mubr.f32.mxu0 0.0
        %4167 = vmatmul.mubr.f32.gmra.mrb[0].mxu0 %v4037
        %v4168 = vpop.f32.mrb[0].mxu0
        %v4169 = vadd.f32 0.0, %v4168
        %v4170 = vpop.f32.mrb[0].mxu0
        %4171 = vmatprep.mubr.f32.mxu0 0.0
        %4172 = vmatmul.mubr.f32.gmra.mrb[0].mxu0 %v4038
        %v4173 = vpop.f32.mrb[0].mxu0
        %v4174 = vadd.f32 0.0, %v4173
        %v4175 = vpop.f32.mrb[0].mxu0
        %4176 = vmatprep.mubr.f32.mxu0 0.0
        %4177 = vmatmul.mubr.f32.gmra.mrb[0].mxu0 %v4039
        %v4178 = vpop.f32.mrb[0].mxu0
        %v4179 = vpop.f32.mrb[0].mxu0
        %4180 = vmatprep.mubr.f32.mxu0 0.0
        %4181 = vmatmul.mubr.f32.gmra.mrb[0].mxu0 %v4040
        %v4182 = vpop.f32.mrb[0].mxu0
        %v4183 = vadd.f32 0.0, %v4182
        %v4184 = vpop.f32.mrb[0].mxu0
        %4185 = vmatprep.mubr.f32.mxu0 0.0
        %4186 = vmatmul.mubr.f32.gmra.mrb[0].mxu0 %v4041
        %v4187 = vpop.f32.mrb[0].mxu0
        %v4188 = vadd.f32 0.0, %v4187
        %v4189 = vpop.f32.mrb[0].mxu0
        %4190 = vmatprep.mubr.f32.mxu0 0.0
        %4191 = vmatmul.mubr.f32.gmra.mrb[0].mxu0 %v4042
        %v4192 = vpop.f32.mrb[0].mxu0
        %v4193 = vpop.f32.mrb[0].mxu0
        %4194 = vdwg.mxu0
        %4195 = vmatprep.subr.mxu0 0.0
        %4196 = vmatpush1.msra.mxu0 %v4012
        %4197 = vmatprep.subr.mxu0 0.0
        %4198 = vmatpush1.msra.mxu0 %v4013
        %4199 = vmatprep.subr.mxu0 0.0
        %4200 = vmatpush1.msra.mxu0 %v4014
        %4201 = vmatprep.subr.mxu0 0.0
        %4202 = vmatpush1.msra.mxu0 %v4015
        %4203 = vmatprep.subr.mxu0 0.0
        %4204 = vmatpush1.msra.mxu0 %v4016
        %4205 = vmatprep.subr.mxu0 0.0
        %4206 = vmatpush1.msra.mxu0 %v4017
        %4207 = vmatprep.subr.mxu0 0.0
        %4208 = vmatpush1.msra.mxu0 %v4018
        %4209 = vmatprep.subr.mxu0 0.0
        %4210 = vmatpush1.msra.mxu0 %v4019
        %4211 = vmatprep.subr.mxu0 0.0
        %4212 = vmatpush1.msra.mxu0 %v4020
        %4213 = vmatprep.subr.mxu0 0.0
        %4214 = vmatpush1.msra.mxu0 %v4021
        %4215 = vmatprep.subr.mxu0 0.0
        %4216 = vmatpush1.msra.mxu0 %v4022
        %4217 = vmatprep.subr.mxu0 0.0
        %4218 = vmatpush1.msra.mxu0 %v4023
        %4219 = vmatprep.subr.mxu0 0.0
        %4220 = vmatpush1.msra.mxu0 %v4024
        %4221 = vmatprep.subr.mxu0 0.0
        %4222 = vmatpush1.msra.mxu0 %v4025
        %4223 = vmatprep.subr.mxu0 0.0
        %4224 = vmatpush1.msra.mxu0 %v4026
        %4225 = vmatprep.subr.mxu0 0.0
        %4226 = vmatpush1.msra.mxu0 %v4027
        %4227 = vmatprep.subr.mxu0 0.0
        %4228 = vmatpush1.msra.mxu0 0.0
        %4229 = vmatprep.subr.mxu0 0.0
        %4230 = vmatpush1.msra.mxu0 0.0
        %4231 = vmatprep.subr.mxu0 0.0
        %4232 = vmatpush1.msra.mxu0 0.0
        %4233 = vmatprep.subr.mxu0 0.0
        %4234 = vmatpush1.msra.mxu0 0.0
        %4235 = vmatprep.subr.mxu0 0.0
        %4236 = vmatpush1.msra.mxu0 0.0
        %4237 = vmatprep.subr.mxu0 0.0
        %4238 = vmatpush1.msra.mxu0 0.0
        %4239 = vmatprep.subr.mxu0 0.0
        %4240 = vmatpush1.msra.mxu0 0.0
        %4241 = vmatprep.subr.mxu0 0.0
        %4242 = vmatpush1.msra.mxu0 0.0
        %4243 = vmatprep.subr.mxu0 0.0
        %4244 = vmatpush1.msra.mxu0 0.0
        %4245 = vmatprep.subr.mxu0 0.0
        %4246 = vmatpush1.msra.mxu0 0.0
        %4247 = vmatprep.subr.mxu0 0.0
        %4248 = vmatpush1.msra.mxu0 0.0
        %4249 = vmatprep.subr.mxu0 0.0
        %4250 = vmatpush1.msra.mxu0 0.0
        %4251 = vmatprep.subr.mxu0 0.0
        %4252 = vmatpush1.msra.mxu0 0.0
        %4253 = vmatprep.subr.mxu0 0.0
        %4254 = vmatpush1.msra.mxu0 0.0
        %4255 = vmatprep.subr.mxu0 0.0
        %4256 = vmatpush1.msra.mxu0 0.0
        %4257 = vmatprep.subr.mxu0 0.0
        %4258 = vmatpush1.msra.mxu0 0.0
        %4259 = vmatprep.mubr.f32.mxu0 0.0
        %4260 = vmatmul.mubr.f32.gmra.mrb[0].mxu0 %v3997
        %v4261 = vpop.f32.mrb[0].mxu0
        %v4262 = vadd.f32 %v4127, %v4261
        %v4263 = vpop.f32.mrb[0].mxu0
        %4264 = vmatprep.mubr.f32.mxu0 0.0
        %4265 = vmatmul.mubr.f32.gmra.mrb[0].mxu0 %v3998
        %v4266 = vpop.f32.mrb[0].mxu0
        %v4267 = vadd.f32 %v4132, %v4266
        %v4268 = vpop.f32.mrb[0].mxu0
        %4269 = vmatprep.mubr.f32.mxu0 0.0
        %4270 = vmatmul.mubr.f32.gmra.mrb[0].mxu0 %v3999
        %v4271 = vpop.f32.mrb[0].mxu0
        %v4272 = vpop.f32.mrb[0].mxu0
        %4273 = vmatprep.mubr.f32.mxu0 0.0
        %4274 = vmatmul.mubr.f32.gmra.mrb[0].mxu0 %v4000
        %v4275 = vpop.f32.mrb[0].mxu0
        %v4276 = vadd.f32 %v4141, %v4275
        %v4277 = vpop.f32.mrb[0].mxu0
        %4278 = vmatprep.mubr.f32.mxu0 0.0
        %4279 = vmatmul.mubr.f32.gmra.mrb[0].mxu0 %v4001
        %v4280 = vpop.f32.mrb[0].mxu0
        %v4281 = vadd.f32 %v4146, %v4280
        %v4282 = vpop.f32.mrb[0].mxu0
        %4283 = vmatprep.mubr.f32.mxu0 0.0
        %4284 = vmatmul.mubr.f32.gmra.mrb[0].mxu0 %v4002
        %v4285 = vpop.f32.mrb[0].mxu0
        %v4286 = vpop.f32.mrb[0].mxu0
        %4287 = vmatprep.mubr.f32.mxu0 0.0
        %4288 = vmatmul.mubr.f32.gmra.mrb[0].mxu0 %v4003
        %v4289 = vpop.f32.mrb[0].mxu0
        %v4290 = vadd.f32 %v4155, %v4289
        %v4291 = vpop.f32.mrb[0].mxu0
        %4292 = vmatprep.mubr.f32.mxu0 0.0
        %4293 = vmatmul.mubr.f32.gmra.mrb[0].mxu0 %v4004
        %v4294 = vpop.f32.mrb[0].mxu0
        %v4295 = vadd.f32 %v4160, %v4294
        %v4296 = vpop.f32.mrb[0].mxu0
        %4297 = vmatprep.mubr.f32.mxu0 0.0
        %4298 = vmatmul.mubr.f32.gmra.mrb[0].mxu0 %v4005
        %v4299 = vpop.f32.mrb[0].mxu0
        %v4300 = vpop.f32.mrb[0].mxu0
        %4301 = vmatprep.mubr.f32.mxu0 0.0
        %4302 = vmatmul.mubr.f32.gmra.mrb[0].mxu0 %v4006
        %v4303 = vpop.f32.mrb[0].mxu0
        %v4304 = vadd.f32 %v4169, %v4303
        %v4305 = vpop.f32.mrb[0].mxu0
        %4306 = vmatprep.mubr.f32.mxu0 0.0
        %4307 = vmatmul.mubr.f32.gmra.mrb[0].mxu0 %v4007
        %v4308 = vpop.f32.mrb[0].mxu0
        %v4309 = vadd.f32 %v4174, %v4308
        %v4310 = vpop.f32.mrb[0].mxu0
        %4311 = vmatprep.mubr.f32.mxu0 0.0
        %4312 = vmatmul.mubr.f32.gmra.mrb[0].mxu0 %v4008
        %v4313 = vpop.f32.mrb[0].mxu0
        %v4314 = vpop.f32.mrb[0].mxu0
        %4315 = vmatprep.mubr.f32.mxu0 0.0
        %4316 = vmatmul.mubr.f32.gmra.mrb[0].mxu0 %v4009
        %v4317 = vpop.f32.mrb[0].mxu0
        %v4318 = vadd.f32 %v4183, %v4317
        %v4319 = vpop.f32.mrb[0].mxu0
        %4320 = vmatprep.mubr.f32.mxu0 0.0
        %4321 = vmatmul.mubr.f32.gmra.mrb[0].mxu0 %v4010
        %v4322 = vpop.f32.mrb[0].mxu0
        %v4323 = vadd.f32 %v4188, %v4322
        %v4324 = vpop.f32.mrb[0].mxu0
        %4325 = vmatprep.mubr.f32.mxu0 0.0
        %4326 = vmatmul.mubr.f32.gmra.mrb[0].mxu0 %v4011
        %v4327 = vpop.f32.mrb[0].mxu0
        %v4328 = vpop.f32.mrb[0].mxu0
        %4329 = vdwg.mxu0
        %v4330 = vld [vmem:[#allocation3 + $0x19] sm:$0xff]
        %v4331 = vld [vmem:[#allocation3 + $0x21] sm:$0xff]
        %v4332 = vld [vmem:[#allocation3 + $0x29] sm:$0xff]
        %v4333 = vld [vmem:[#allocation3 + $0x31] sm:$0xff]
        %v4334 = vld [vmem:[#allocation3 + $0x39] sm:$0xff]
        %v4335 = vld [vmem:[#allocation3 + $0x41] sm:$0xff]
        %v4336 = vld [vmem:[#allocation3 + $0x49] sm:$0xff]
        %v4337 = vld [vmem:[#allocation3 + $0x51] sm:$0xff]
        %v4338 = vld [vmem:[#allocation3 + $0x59] sm:$0xff]
        %v4339 = vld [vmem:[#allocation3 + $0x61] sm:$0xff]
        %v4340 = vld [vmem:[#allocation3 + $0x69] sm:$0xff]
        %v4341 = vld [vmem:[#allocation3 + $0x71] sm:$0xff]
        %v4342 = vld [vmem:[#allocation3 + $0x79] sm:$0xff]
        %v4343 = vld [vmem:[#allocation3 + $0x81] sm:$0xff]
        %v4344 = vld [vmem:[#allocation3 + $0x89] sm:$0xff]
        %s4345 = scalar_lea.vmem [#allocation15], 256
        %v4346 = vld [vmem:[%s4345] sm:$0xff]
        %v4347 = vld [vmem:[%s4345 + $0x8] sm:$0xff]
        %v4348 = vld [vmem:[%s4345 + $0x10] sm:$0xff]
        %v4349 = vld [vmem:[%s4345 + $0x18] sm:$0xff]
        %v4350 = vld [vmem:[%s4345 + $0x20] sm:$0xff]
        %v4351 = vld [vmem:[%s4345 + $0x28] sm:$0xff]
        %v4352 = vld [vmem:[%s4345 + $0x30] sm:$0xff]
        %v4353 = vld [vmem:[%s4345 + $0x38] sm:$0xff]
        %v4354 = vld [vmem:[%s4345 + $0x40] sm:$0xff]
        %v4355 = vld [vmem:[%s4345 + $0x48] sm:$0xff]
        %v4356 = vld [vmem:[%s4345 + $0x50] sm:$0xff]
        %v4357 = vld [vmem:[%s4345 + $0x58] sm:$0xff]
        %v4358 = vld [vmem:[%s4345 + $0x60] sm:$0xff]
        %v4359 = vld [vmem:[%s4345 + $0x68] sm:$0xff]
        %v4360 = vld [vmem:[%s4345 + $0x70] sm:$0xff]
        %v4361 = vld [vmem:[%s4345 + $0x78] sm:$0xff]
        %4362 = vmatprep.subr.mxu0 0.0
        %4363 = vmatpush1.msra.mxu0 %v4346
        %4364 = vmatprep.subr.mxu0 0.0
        %4365 = vmatpush1.msra.mxu0 %v4347
        %4366 = vmatprep.subr.mxu0 0.0
        %4367 = vmatpush1.msra.mxu0 %v4348
        %4368 = vmatprep.subr.mxu0 0.0
        %4369 = vmatpush1.msra.mxu0 %v4349
        %4370 = vmatprep.subr.mxu0 0.0
        %4371 = vmatpush1.msra.mxu0 %v4350
        %4372 = vmatprep.subr.mxu0 0.0
        %4373 = vmatpush1.msra.mxu0 %v4351
        %4374 = vmatprep.subr.mxu0 0.0
        %4375 = vmatpush1.msra.mxu0 %v4352
        %4376 = vmatprep.subr.mxu0 0.0
        %4377 = vmatpush1.msra.mxu0 %v4353
        %4378 = vmatprep.subr.mxu0 0.0
        %4379 = vmatpush1.msra.mxu0 %v4354
        %4380 = vmatprep.subr.mxu0 0.0
        %4381 = vmatpush1.msra.mxu0 %v4355
        %4382 = vmatprep.subr.mxu0 0.0
        %4383 = vmatpush1.msra.mxu0 %v4356
        %4384 = vmatprep.subr.mxu0 0.0
        %4385 = vmatpush1.msra.mxu0 %v4357
        %4386 = vmatprep.subr.mxu0 0.0
        %4387 = vmatpush1.msra.mxu0 %v4358
        %4388 = vmatprep.subr.mxu0 0.0
        %4389 = vmatpush1.msra.mxu0 %v4359
        %4390 = vmatprep.subr.mxu0 0.0
        %4391 = vmatpush1.msra.mxu0 %v4360
        %4392 = vmatprep.subr.mxu0 0.0
        %4393 = vmatpush1.msra.mxu0 %v4361
        %4394 = vmatprep.subr.mxu0 0.0
        %4395 = vmatpush1.msra.mxu0 0.0
        %4396 = vmatprep.subr.mxu0 0.0
        %4397 = vmatpush1.msra.mxu0 0.0
        %4398 = vmatprep.subr.mxu0 0.0
        %4399 = vmatpush1.msra.mxu0 0.0
        %4400 = vmatprep.subr.mxu0 0.0
        %4401 = vmatpush1.msra.mxu0 0.0
        %4402 = vmatprep.subr.mxu0 0.0
        %4403 = vmatpush1.msra.mxu0 0.0
        %4404 = vmatprep.subr.mxu0 0.0
        %4405 = vmatpush1.msra.mxu0 0.0
        %4406 = vmatprep.subr.mxu0 0.0
        %4407 = vmatpush1.msra.mxu0 0.0
        %4408 = vmatprep.subr.mxu0 0.0
        %4409 = vmatpush1.msra.mxu0 0.0
        %4410 = vmatprep.subr.mxu0 0.0
        %4411 = vmatpush1.msra.mxu0 0.0
        %4412 = vmatprep.subr.mxu0 0.0
        %4413 = vmatpush1.msra.mxu0 0.0
        %4414 = vmatprep.subr.mxu0 0.0
        %4415 = vmatpush1.msra.mxu0 0.0
        %4416 = vmatprep.subr.mxu0 0.0
        %4417 = vmatpush1.msra.mxu0 0.0
        %4418 = vmatprep.subr.mxu0 0.0
        %4419 = vmatpush1.msra.mxu0 0.0
        %4420 = vmatprep.subr.mxu0 0.0
        %4421 = vmatpush1.msra.mxu0 0.0
        %4422 = vmatprep.subr.mxu0 0.0
        %4423 = vmatpush1.msra.mxu0 0.0
        %4424 = vmatprep.subr.mxu0 0.0
        %4425 = vmatpush1.msra.mxu0 0.0
        %4426 = vmatprep.mubr.f32.mxu0 0.0
        %4427 = vmatmul.mubr.f32.gmra.mrb[0].mxu0 %v4330
        %v4428 = vpop.f32.mrb[0].mxu0
        %v4429 = vadd.f32 0.0, %v4428
        %v4430 = vpop.f32.mrb[0].mxu0
        %4431 = vmatprep.mubr.f32.mxu0 0.0
        %4432 = vmatmul.mubr.f32.gmra.mrb[0].mxu0 %v4331
        %v4433 = vpop.f32.mrb[0].mxu0
        %v4434 = vadd.f32 0.0, %v4433
        %v4435 = vpop.f32.mrb[0].mxu0
        %4436 = vmatprep.mubr.f32.mxu0 0.0
        %4437 = vmatmul.mubr.f32.gmra.mrb[0].mxu0 %v4332
        %v4438 = vpop.f32.mrb[0].mxu0
        %v4439 = vpop.f32.mrb[0].mxu0
        %4440 = vmatprep.mubr.f32.mxu0 0.0
        %4441 = vmatmul.mubr.f32.gmra.mrb[0].mxu0 %v4333
        %v4442 = vpop.f32.mrb[0].mxu0
        %v4443 = vadd.f32 0.0, %v4442
        %v4444 = vpop.f32.mrb[0].mxu0
        %4445 = vmatprep.mubr.f32.mxu0 0.0
        %4446 = vmatmul.mubr.f32.gmra.mrb[0].mxu0 %v4334
        %v4447 = vpop.f32.mrb[0].mxu0
        %v4448 = vadd.f32 0.0, %v4447
        %v4449 = vpop.f32.mrb[0].mxu0
        %4450 = vmatprep.mubr.f32.mxu0 0.0
        %4451 = vmatmul.mubr.f32.gmra.mrb[0].mxu0 %v4335
        %v4452 = vpop.f32.mrb[0].mxu0
        %v4453 = vpop.f32.mrb[0].mxu0
        %4454 = vmatprep.mubr.f32.mxu0 0.0
        %4455 = vmatmul.mubr.f32.gmra.mrb[0].mxu0 %v4336
        %v4456 = vpop.f32.mrb[0].mxu0
        %v4457 = vadd.f32 0.0, %v4456
        %v4458 = vpop.f32.mrb[0].mxu0
        %4459 = vmatprep.mubr.f32.mxu0 0.0
        %4460 = vmatmul.mubr.f32.gmra.mrb[0].mxu0 %v4337
        %v4461 = vpop.f32.mrb[0].mxu0
        %v4462 = vadd.f32 0.0, %v4461
        %v4463 = vpop.f32.mrb[0].mxu0
        %4464 = vmatprep.mubr.f32.mxu0 0.0
        %4465 = vmatmul.mubr.f32.gmra.mrb[0].mxu0 %v4338
        %v4466 = vpop.f32.mrb[0].mxu0
        %v4467 = vpop.f32.mrb[0].mxu0
        %4468 = vmatprep.mubr.f32.mxu0 0.0
        %4469 = vmatmul.mubr.f32.gmra.mrb[0].mxu0 %v4339
        %v4470 = vpop.f32.mrb[0].mxu0
        %v4471 = vadd.f32 0.0, %v4470
        %v4472 = vpop.f32.mrb[0].mxu0
        %4473 = vmatprep.mubr.f32.mxu0 0.0
        %4474 = vmatmul.mubr.f32.gmra.mrb[0].mxu0 %v4340
        %v4475 = vpop.f32.mrb[0].mxu0
        %v4476 = vadd.f32 0.0, %v4475
        %v4477 = vpop.f32.mrb[0].mxu0
        %4478 = vmatprep.mubr.f32.mxu0 0.0
        %4479 = vmatmul.mubr.f32.gmra.mrb[0].mxu0 %v4341
        %v4480 = vpop.f32.mrb[0].mxu0
        %v4481 = vpop.f32.mrb[0].mxu0
        %4482 = vmatprep.mubr.f32.mxu0 0.0
        %4483 = vmatmul.mubr.f32.gmra.mrb[0].mxu0 %v4342
        %v4484 = vpop.f32.mrb[0].mxu0
        %v4485 = vadd.f32 0.0, %v4484
        %v4486 = vpop.f32.mrb[0].mxu0
        %4487 = vmatprep.mubr.f32.mxu0 0.0
        %4488 = vmatmul.mubr.f32.gmra.mrb[0].mxu0 %v4343
        %v4489 = vpop.f32.mrb[0].mxu0
        %v4490 = vadd.f32 0.0, %v4489
        %v4491 = vpop.f32.mrb[0].mxu0
        %4492 = vmatprep.mubr.f32.mxu0 0.0
        %4493 = vmatmul.mubr.f32.gmra.mrb[0].mxu0 %v4344
        %v4494 = vpop.f32.mrb[0].mxu0
        %v4495 = vpop.f32.mrb[0].mxu0
        %4496 = vdwg.mxu0
        %v4497 = vadd.f32 %v4262, %v4429
        %v4498 = vadd.f32 %v4267, %v4434
        %v4499 = vadd.f32 %v4276, %v4443
        %v4500 = vadd.f32 %v4281, %v4448
        %v4501 = vadd.f32 %v4290, %v4457
        %v4502 = vadd.f32 %v4295, %v4462
        %v4503 = vadd.f32 %v4304, %v4471
        %v4504 = vadd.f32 %v4309, %v4476
        %v4505 = vadd.f32 %v4318, %v4485
        %v4506 = vadd.f32 %v4323, %v4490
        %v4507 = vld [vmem:[#allocation3 + $0x2f] sm:$0xff]
        %v4508 = vld [vmem:[#allocation3 + $0x37] sm:$0xff]
        %v4509 = vld [vmem:[#allocation3 + $0x3f] sm:$0xff]
        %v4510 = vld [vmem:[#allocation3 + $0x47] sm:$0xff]
        %v4511 = vld [vmem:[#allocation3 + $0x4f] sm:$0xff]
        %v4512 = vld [vmem:[#allocation3 + $0x57] sm:$0xff]
        %v4513 = vld [vmem:[#allocation3 + $0x5f] sm:$0xff]
        %v4514 = vld [vmem:[#allocation3 + $0x67] sm:$0xff]
        %v4515 = vld [vmem:[#allocation3 + $0x6f] sm:$0xff]
        %v4516 = vld [vmem:[#allocation3 + $0x77] sm:$0xff]
        %v4517 = vld [vmem:[#allocation3 + $0x7f] sm:$0xff]
        %v4518 = vld [vmem:[#allocation3 + $0x87] sm:$0xff]
        %v4519 = vld [vmem:[#allocation3 + $0x8f] sm:$0xff]
        %v4520 = vld [vmem:[#allocation3 + $0x97] sm:$0xff]
        %v4521 = vld [vmem:[#allocation3 + $0x9f] sm:$0xff]
        %s4522 = scalar_lea.vmem [#allocation15], 384
        %v4523 = vld [vmem:[%s4522] sm:$0xff]
        %v4524 = vld [vmem:[%s4522 + $0x8] sm:$0xff]
        %v4525 = vld [vmem:[%s4522 + $0x10] sm:$0xff]
        %v4526 = vld [vmem:[%s4522 + $0x18] sm:$0xff]
        %v4527 = vld [vmem:[%s4522 + $0x20] sm:$0xff]
        %v4528 = vld [vmem:[%s4522 + $0x28] sm:$0xff]
        %v4529 = vld [vmem:[%s4522 + $0x30] sm:$0xff]
        %v4530 = vld [vmem:[%s4522 + $0x38] sm:$0xff]
        %v4531 = vld [vmem:[%s4522 + $0x40] sm:$0xff]
        %v4532 = vld [vmem:[%s4522 + $0x48] sm:$0xff]
        %v4533 = vld [vmem:[%s4522 + $0x50] sm:$0xff]
        %v4534 = vld [vmem:[%s4522 + $0x58] sm:$0xff]
        %v4535 = vld [vmem:[%s4522 + $0x60] sm:$0xff]
        %v4536 = vld [vmem:[%s4522 + $0x68] sm:$0xff]
        %v4537 = vld [vmem:[%s4522 + $0x70] sm:$0xff]
        %v4538 = vld [vmem:[%s4522 + $0x78] sm:$0xff]
        %4539 = vmatprep.subr.mxu0 0.0
        %4540 = vmatpush1.msra.mxu0 %v4523
        %4541 = vmatprep.subr.mxu0 0.0
        %4542 = vmatpush1.msra.mxu0 %v4524
        %4543 = vmatprep.subr.mxu0 0.0
        %4544 = vmatpush1.msra.mxu0 %v4525
        %4545 = vmatprep.subr.mxu0 0.0
        %4546 = vmatpush1.msra.mxu0 %v4526
        %4547 = vmatprep.subr.mxu0 0.0
        %4548 = vmatpush1.msra.mxu0 %v4527
        %4549 = vmatprep.subr.mxu0 0.0
        %4550 = vmatpush1.msra.mxu0 %v4528
        %4551 = vmatprep.subr.mxu0 0.0
        %4552 = vmatpush1.msra.mxu0 %v4529
        %4553 = vmatprep.subr.mxu0 0.0
        %4554 = vmatpush1.msra.mxu0 %v4530
        %4555 = vmatprep.subr.mxu0 0.0
        %4556 = vmatpush1.msra.mxu0 %v4531
        %4557 = vmatprep.subr.mxu0 0.0
        %4558 = vmatpush1.msra.mxu0 %v4532
        %4559 = vmatprep.subr.mxu0 0.0
        %4560 = vmatpush1.msra.mxu0 %v4533
        %4561 = vmatprep.subr.mxu0 0.0
        %4562 = vmatpush1.msra.mxu0 %v4534
        %4563 = vmatprep.subr.mxu0 0.0
        %4564 = vmatpush1.msra.mxu0 %v4535
        %4565 = vmatprep.subr.mxu0 0.0
        %4566 = vmatpush1.msra.mxu0 %v4536
        %4567 = vmatprep.subr.mxu0 0.0
        %4568 = vmatpush1.msra.mxu0 %v4537
        %4569 = vmatprep.subr.mxu0 0.0
        %4570 = vmatpush1.msra.mxu0 %v4538
        %4571 = vmatprep.subr.mxu0 0.0
        %4572 = vmatpush1.msra.mxu0 0.0
        %4573 = vmatprep.subr.mxu0 0.0
        %4574 = vmatpush1.msra.mxu0 0.0
        %4575 = vmatprep.subr.mxu0 0.0
        %4576 = vmatpush1.msra.mxu0 0.0
        %4577 = vmatprep.subr.mxu0 0.0
        %4578 = vmatpush1.msra.mxu0 0.0
        %4579 = vmatprep.subr.mxu0 0.0
        %4580 = vmatpush1.msra.mxu0 0.0
        %4581 = vmatprep.subr.mxu0 0.0
        %4582 = vmatpush1.msra.mxu0 0.0
        %4583 = vmatprep.subr.mxu0 0.0
        %4584 = vmatpush1.msra.mxu0 0.0
        %4585 = vmatprep.subr.mxu0 0.0
        %4586 = vmatpush1.msra.mxu0 0.0
        %4587 = vmatprep.subr.mxu0 0.0
        %4588 = vmatpush1.msra.mxu0 0.0
        %4589 = vmatprep.subr.mxu0 0.0
        %4590 = vmatpush1.msra.mxu0 0.0
        %4591 = vmatprep.subr.mxu0 0.0
        %4592 = vmatpush1.msra.mxu0 0.0
        %4593 = vmatprep.subr.mxu0 0.0
        %4594 = vmatpush1.msra.mxu0 0.0
        %4595 = vmatprep.subr.mxu0 0.0
        %4596 = vmatpush1.msra.mxu0 0.0
        %4597 = vmatprep.subr.mxu0 0.0
        %4598 = vmatpush1.msra.mxu0 0.0
        %4599 = vmatprep.subr.mxu0 0.0
        %4600 = vmatpush1.msra.mxu0 0.0
        %4601 = vmatprep.subr.mxu0 0.0
        %4602 = vmatpush1.msra.mxu0 0.0
        %4603 = vmatprep.mubr.f32.mxu0 0.0
        %4604 = vmatmul.mubr.f32.gmra.mrb[0].mxu0 %v4507
        %v4605 = vpop.f32.mrb[0].mxu0
        %v4606 = vadd.f32 0.0, %v4605
        %v4607 = vpop.f32.mrb[0].mxu0
        %4608 = vmatprep.mubr.f32.mxu0 0.0
        %4609 = vmatmul.mubr.f32.gmra.mrb[0].mxu0 %v4508
        %v4610 = vpop.f32.mrb[0].mxu0
        %v4611 = vadd.f32 0.0, %v4610
        %v4612 = vpop.f32.mrb[0].mxu0
        %4613 = vmatprep.mubr.f32.mxu0 0.0
        %4614 = vmatmul.mubr.f32.gmra.mrb[0].mxu0 %v4509
        %v4615 = vpop.f32.mrb[0].mxu0
        %v4616 = vpop.f32.mrb[0].mxu0
        %4617 = vmatprep.mubr.f32.mxu0 0.0
        %4618 = vmatmul.mubr.f32.gmra.mrb[0].mxu0 %v4510
        %v4619 = vpop.f32.mrb[0].mxu0
        %v4620 = vadd.f32 0.0, %v4619
        %v4621 = vpop.f32.mrb[0].mxu0
        %4622 = vmatprep.mubr.f32.mxu0 0.0
        %4623 = vmatmul.mubr.f32.gmra.mrb[0].mxu0 %v4511
        %v4624 = vpop.f32.mrb[0].mxu0
        %v4625 = vadd.f32 0.0, %v4624
        %v4626 = vpop.f32.mrb[0].mxu0
        %4627 = vmatprep.mubr.f32.mxu0 0.0
        %4628 = vmatmul.mubr.f32.gmra.mrb[0].mxu0 %v4512
        %v4629 = vpop.f32.mrb[0].mxu0
        %v4630 = vpop.f32.mrb[0].mxu0
        %4631 = vmatprep.mubr.f32.mxu0 0.0
        %4632 = vmatmul.mubr.f32.gmra.mrb[0].mxu0 %v4513
        %v4633 = vpop.f32.mrb[0].mxu0
        %v4634 = vadd.f32 0.0, %v4633
        %v4635 = vpop.f32.mrb[0].mxu0
        %4636 = vmatprep.mubr.f32.mxu0 0.0
        %4637 = vmatmul.mubr.f32.gmra.mrb[0].mxu0 %v4514
        %v4638 = vpop.f32.mrb[0].mxu0
        %v4639 = vadd.f32 0.0, %v4638
        %v4640 = vpop.f32.mrb[0].mxu0
        %4641 = vmatprep.mubr.f32.mxu0 0.0
        %4642 = vmatmul.mubr.f32.gmra.mrb[0].mxu0 %v4515
        %v4643 = vpop.f32.mrb[0].mxu0
        %v4644 = vpop.f32.mrb[0].mxu0
        %4645 = vmatprep.mubr.f32.mxu0 0.0
        %4646 = vmatmul.mubr.f32.gmra.mrb[0].mxu0 %v4516
        %v4647 = vpop.f32.mrb[0].mxu0
        %v4648 = vadd.f32 0.0, %v4647
        %v4649 = vpop.f32.mrb[0].mxu0
        %4650 = vmatprep.mubr.f32.mxu0 0.0
        %4651 = vmatmul.mubr.f32.gmra.mrb[0].mxu0 %v4517
        %v4652 = vpop.f32.mrb[0].mxu0
        %v4653 = vadd.f32 0.0, %v4652
        %v4654 = vpop.f32.mrb[0].mxu0
        %4655 = vmatprep.mubr.f32.mxu0 0.0
        %4656 = vmatmul.mubr.f32.gmra.mrb[0].mxu0 %v4518
        %v4657 = vpop.f32.mrb[0].mxu0
        %v4658 = vpop.f32.mrb[0].mxu0
        %4659 = vmatprep.mubr.f32.mxu0 0.0
        %4660 = vmatmul.mubr.f32.gmra.mrb[0].mxu0 %v4519
        %v4661 = vpop.f32.mrb[0].mxu0
        %v4662 = vadd.f32 0.0, %v4661
        %v4663 = vpop.f32.mrb[0].mxu0
        %4664 = vmatprep.mubr.f32.mxu0 0.0
        %4665 = vmatmul.mubr.f32.gmra.mrb[0].mxu0 %v4520
        %v4666 = vpop.f32.mrb[0].mxu0
        %v4667 = vadd.f32 0.0, %v4666
        %v4668 = vpop.f32.mrb[0].mxu0
        %4669 = vmatprep.mubr.f32.mxu0 0.0
        %4670 = vmatmul.mubr.f32.gmra.mrb[0].mxu0 %v4521
        %v4671 = vpop.f32.mrb[0].mxu0
        %v4672 = vpop.f32.mrb[0].mxu0
        %4673 = vdwg.mxu0
        %v4674 = vadd.f32 %v4497, %v4606
        %v4675 = vadd.f32 %v4498, %v4611
        %v4676 = vadd.f32 %v4499, %v4620
        %v4677 = vadd.f32 %v4500, %v4625
        %v4678 = vadd.f32 %v4501, %v4634
        %v4679 = vadd.f32 %v4502, %v4639
        %v4680 = vadd.f32 %v4503, %v4648
        %v4681 = vadd.f32 %v4504, %v4653
        %v4682 = vadd.f32 %v4505, %v4662
        %v4683 = vadd.f32 %v4506, %v4667
        %v4684 = vld [vmem:[#allocation3 + $0x30] sm:$0xff]
        %v4685 = vld [vmem:[#allocation3 + $0x38] sm:$0xff]
        %v4686 = vld [vmem:[#allocation3 + $0x40] sm:$0xff]
        %v4687 = vld [vmem:[#allocation3 + $0x48] sm:$0xff]
        %v4688 = vld [vmem:[#allocation3 + $0x50] sm:$0xff]
        %v4689 = vld [vmem:[#allocation3 + $0x58] sm:$0xff]
        %v4690 = vld [vmem:[#allocation3 + $0x60] sm:$0xff]
        %v4691 = vld [vmem:[#allocation3 + $0x68] sm:$0xff]
        %v4692 = vld [vmem:[#allocation3 + $0x70] sm:$0xff]
        %v4693 = vld [vmem:[#allocation3 + $0x78] sm:$0xff]
        %v4694 = vld [vmem:[#allocation3 + $0x80] sm:$0xff]
        %v4695 = vld [vmem:[#allocation3 + $0x88] sm:$0xff]
        %v4696 = vld [vmem:[#allocation3 + $0x90] sm:$0xff]
        %v4697 = vld [vmem:[#allocation3 + $0x98] sm:$0xff]
        %v4698 = vld [vmem:[#allocation3 + $0xa0] sm:$0xff]
        %s4699 = scalar_lea.vmem [#allocation15], 512
        %v4700 = vld [vmem:[%s4699] sm:$0xff]
        %v4701 = vld [vmem:[%s4699 + $0x8] sm:$0xff]
        %v4702 = vld [vmem:[%s4699 + $0x10] sm:$0xff]
        %v4703 = vld [vmem:[%s4699 + $0x18] sm:$0xff]
        %v4704 = vld [vmem:[%s4699 + $0x20] sm:$0xff]
        %v4705 = vld [vmem:[%s4699 + $0x28] sm:$0xff]
        %v4706 = vld [vmem:[%s4699 + $0x30] sm:$0xff]
        %v4707 = vld [vmem:[%s4699 + $0x38] sm:$0xff]
        %v4708 = vld [vmem:[%s4699 + $0x40] sm:$0xff]
        %v4709 = vld [vmem:[%s4699 + $0x48] sm:$0xff]
        %v4710 = vld [vmem:[%s4699 + $0x50] sm:$0xff]
        %v4711 = vld [vmem:[%s4699 + $0x58] sm:$0xff]
        %v4712 = vld [vmem:[%s4699 + $0x60] sm:$0xff]
        %v4713 = vld [vmem:[%s4699 + $0x68] sm:$0xff]
        %v4714 = vld [vmem:[%s4699 + $0x70] sm:$0xff]
        %v4715 = vld [vmem:[%s4699 + $0x78] sm:$0xff]
        %4716 = vmatprep.subr.mxu0 0.0
        %4717 = vmatpush1.msra.mxu0 %v4700
        %4718 = vmatprep.subr.mxu0 0.0
        %4719 = vmatpush1.msra.mxu0 %v4701
        %4720 = vmatprep.subr.mxu0 0.0
        %4721 = vmatpush1.msra.mxu0 %v4702
        %4722 = vmatprep.subr.mxu0 0.0
        %4723 = vmatpush1.msra.mxu0 %v4703
        %4724 = vmatprep.subr.mxu0 0.0
        %4725 = vmatpush1.msra.mxu0 %v4704
        %4726 = vmatprep.subr.mxu0 0.0
        %4727 = vmatpush1.msra.mxu0 %v4705
        %4728 = vmatprep.subr.mxu0 0.0
        %4729 = vmatpush1.msra.mxu0 %v4706
        %4730 = vmatprep.subr.mxu0 0.0
        %4731 = vmatpush1.msra.mxu0 %v4707
        %4732 = vmatprep.subr.mxu0 0.0
        %4733 = vmatpush1.msra.mxu0 %v4708
        %4734 = vmatprep.subr.mxu0 0.0
        %4735 = vmatpush1.msra.mxu0 %v4709
        %4736 = vmatprep.subr.mxu0 0.0
        %4737 = vmatpush1.msra.mxu0 %v4710
        %4738 = vmatprep.subr.mxu0 0.0
        %4739 = vmatpush1.msra.mxu0 %v4711
        %4740 = vmatprep.subr.mxu0 0.0
        %4741 = vmatpush1.msra.mxu0 %v4712
        %4742 = vmatprep.subr.mxu0 0.0
        %4743 = vmatpush1.msra.mxu0 %v4713
        %4744 = vmatprep.subr.mxu0 0.0
        %4745 = vmatpush1.msra.mxu0 %v4714
        %4746 = vmatprep.subr.mxu0 0.0
        %4747 = vmatpush1.msra.mxu0 %v4715
        %4748 = vmatprep.subr.mxu0 0.0
        %4749 = vmatpush1.msra.mxu0 0.0
        %4750 = vmatprep.subr.mxu0 0.0
        %4751 = vmatpush1.msra.mxu0 0.0
        %4752 = vmatprep.subr.mxu0 0.0
        %4753 = vmatpush1.msra.mxu0 0.0
        %4754 = vmatprep.subr.mxu0 0.0
        %4755 = vmatpush1.msra.mxu0 0.0
        %4756 = vmatprep.subr.mxu0 0.0
        %4757 = vmatpush1.msra.mxu0 0.0
        %4758 = vmatprep.subr.mxu0 0.0
        %4759 = vmatpush1.msra.mxu0 0.0
        %4760 = vmatprep.subr.mxu0 0.0
        %4761 = vmatpush1.msra.mxu0 0.0
        %4762 = vmatprep.subr.mxu0 0.0
        %4763 = vmatpush1.msra.mxu0 0.0
        %4764 = vmatprep.subr.mxu0 0.0
        %4765 = vmatpush1.msra.mxu0 0.0
        %4766 = vmatprep.subr.mxu0 0.0
        %4767 = vmatpush1.msra.mxu0 0.0
        %4768 = vmatprep.subr.mxu0 0.0
        %4769 = vmatpush1.msra.mxu0 0.0
        %4770 = vmatprep.subr.mxu0 0.0
        %4771 = vmatpush1.msra.mxu0 0.0
        %4772 = vmatprep.subr.mxu0 0.0
        %4773 = vmatpush1.msra.mxu0 0.0
        %4774 = vmatprep.subr.mxu0 0.0
        %4775 = vmatpush1.msra.mxu0 0.0
        %4776 = vmatprep.subr.mxu0 0.0
        %4777 = vmatpush1.msra.mxu0 0.0
        %4778 = vmatprep.subr.mxu0 0.0
        %4779 = vmatpush1.msra.mxu0 0.0
        %4780 = vmatprep.mubr.f32.mxu0 0.0
        %4781 = vmatmul.mubr.f32.gmra.mrb[0].mxu0 %v4684
        %v4782 = vpop.f32.mrb[0].mxu0
        %v4783 = vadd.f32 0.0, %v4782
        %v4784 = vpop.f32.mrb[0].mxu0
        %4785 = vmatprep.mubr.f32.mxu0 0.0
        %4786 = vmatmul.mubr.f32.gmra.mrb[0].mxu0 %v4685
        %v4787 = vpop.f32.mrb[0].mxu0
        %v4788 = vadd.f32 0.0, %v4787
        %v4789 = vpop.f32.mrb[0].mxu0
        %4790 = vmatprep.mubr.f32.mxu0 0.0
        %4791 = vmatmul.mubr.f32.gmra.mrb[0].mxu0 %v4686
        %v4792 = vpop.f32.mrb[0].mxu0
        %v4793 = vpop.f32.mrb[0].mxu0
        %4794 = vmatprep.mubr.f32.mxu0 0.0
        %4795 = vmatmul.mubr.f32.gmra.mrb[0].mxu0 %v4687
        %v4796 = vpop.f32.mrb[0].mxu0
        %v4797 = vadd.f32 0.0, %v4796
        %v4798 = vpop.f32.mrb[0].mxu0
        %4799 = vmatprep.mubr.f32.mxu0 0.0
        %4800 = vmatmul.mubr.f32.gmra.mrb[0].mxu0 %v4688
        %v4801 = vpop.f32.mrb[0].mxu0
        %v4802 = vadd.f32 0.0, %v4801
        %v4803 = vpop.f32.mrb[0].mxu0
        %4804 = vmatprep.mubr.f32.mxu0 0.0
        %4805 = vmatmul.mubr.f32.gmra.mrb[0].mxu0 %v4689
        %v4806 = vpop.f32.mrb[0].mxu0
        %v4807 = vpop.f32.mrb[0].mxu0
        %4808 = vmatprep.mubr.f32.mxu0 0.0
        %4809 = vmatmul.mubr.f32.gmra.mrb[0].mxu0 %v4690
        %v4810 = vpop.f32.mrb[0].mxu0
        %v4811 = vadd.f32 0.0, %v4810
        %v4812 = vpop.f32.mrb[0].mxu0
        %4813 = vmatprep.mubr.f32.mxu0 0.0
        %4814 = vmatmul.mubr.f32.gmra.mrb[0].mxu0 %v4691
        %v4815 = vpop.f32.mrb[0].mxu0
        %v4816 = vadd.f32 0.0, %v4815
        %v4817 = vpop.f32.mrb[0].mxu0
        %4818 = vmatprep.mubr.f32.mxu0 0.0
        %4819 = vmatmul.mubr.f32.gmra.mrb[0].mxu0 %v4692
        %v4820 = vpop.f32.mrb[0].mxu0
        %v4821 = vpop.f32.mrb[0].mxu0
        %4822 = vmatprep.mubr.f32.mxu0 0.0
        %4823 = vmatmul.mubr.f32.gmra.mrb[0].mxu0 %v4693
        %v4824 = vpop.f32.mrb[0].mxu0
        %v4825 = vadd.f32 0.0, %v4824
        %v4826 = vpop.f32.mrb[0].mxu0
        %4827 = vmatprep.mubr.f32.mxu0 0.0
        %4828 = vmatmul.mubr.f32.gmra.mrb[0].mxu0 %v4694
        %v4829 = vpop.f32.mrb[0].mxu0
        %v4830 = vadd.f32 0.0, %v4829
        %v4831 = vpop.f32.mrb[0].mxu0
        %4832 = vmatprep.mubr.f32.mxu0 0.0
        %4833 = vmatmul.mubr.f32.gmra.mrb[0].mxu0 %v4695
        %v4834 = vpop.f32.mrb[0].mxu0
        %v4835 = vpop.f32.mrb[0].mxu0
        %4836 = vmatprep.mubr.f32.mxu0 0.0
        %4837 = vmatmul.mubr.f32.gmra.mrb[0].mxu0 %v4696
        %v4838 = vpop.f32.mrb[0].mxu0
        %v4839 = vadd.f32 0.0, %v4838
        %v4840 = vpop.f32.mrb[0].mxu0
        %4841 = vmatprep.mubr.f32.mxu0 0.0
        %4842 = vmatmul.mubr.f32.gmra.mrb[0].mxu0 %v4697
        %v4843 = vpop.f32.mrb[0].mxu0
        %v4844 = vadd.f32 0.0, %v4843
        %v4845 = vpop.f32.mrb[0].mxu0
        %4846 = vmatprep.mubr.f32.mxu0 0.0
        %4847 = vmatmul.mubr.f32.gmra.mrb[0].mxu0 %v4698
        %v4848 = vpop.f32.mrb[0].mxu0
        %v4849 = vpop.f32.mrb[0].mxu0
        %4850 = vdwg.mxu0
        %v4851 = vadd.f32 %v4674, %v4783
        %v4852 = vadd.f32 %v4675, %v4788
        %v4853 = vadd.f32 %v4676, %v4797
        %v4854 = vadd.f32 %v4677, %v4802
        %v4855 = vadd.f32 %v4678, %v4811
        %v4856 = vadd.f32 %v4679, %v4816
        %v4857 = vadd.f32 %v4680, %v4825
        %v4858 = vadd.f32 %v4681, %v4830
        %v4859 = vadd.f32 %v4682, %v4839
        %v4860 = vadd.f32 %v4683, %v4844
        %v4861 = vld [vmem:[#allocation3 + $0x31] sm:$0xff]
        %v4862 = vld [vmem:[#allocation3 + $0x39] sm:$0xff]
        %v4863 = vld [vmem:[#allocation3 + $0x41] sm:$0xff]
        %v4864 = vld [vmem:[#allocation3 + $0x49] sm:$0xff]
        %v4865 = vld [vmem:[#allocation3 + $0x51] sm:$0xff]
        %v4866 = vld [vmem:[#allocation3 + $0x59] sm:$0xff]
        %v4867 = vld [vmem:[#allocation3 + $0x61] sm:$0xff]
        %v4868 = vld [vmem:[#allocation3 + $0x69] sm:$0xff]
        %v4869 = vld [vmem:[#allocation3 + $0x71] sm:$0xff]
        %v4870 = vld [vmem:[#allocation3 + $0x79] sm:$0xff]
        %v4871 = vld [vmem:[#allocation3 + $0x81] sm:$0xff]
        %v4872 = vld [vmem:[#allocation3 + $0x89] sm:$0xff]
        %v4873 = vld [vmem:[#allocation3 + $0x91] sm:$0xff]
        %v4874 = vld [vmem:[#allocation3 + $0x99] sm:$0xff]
        %v4875 = vld [vmem:[#allocation3 + $0xa1] sm:$0xff]
        %s4876 = scalar_lea.vmem [#allocation15], 640
        %v4877 = vld [vmem:[%s4876] sm:$0xff]
        %v4878 = vld [vmem:[%s4876 + $0x8] sm:$0xff]
        %v4879 = vld [vmem:[%s4876 + $0x10] sm:$0xff]
        %v4880 = vld [vmem:[%s4876 + $0x18] sm:$0xff]
        %v4881 = vld [vmem:[%s4876 + $0x20] sm:$0xff]
        %v4882 = vld [vmem:[%s4876 + $0x28] sm:$0xff]
        %v4883 = vld [vmem:[%s4876 + $0x30] sm:$0xff]
        %v4884 = vld [vmem:[%s4876 + $0x38] sm:$0xff]
        %v4885 = vld [vmem:[%s4876 + $0x40] sm:$0xff]
        %v4886 = vld [vmem:[%s4876 + $0x48] sm:$0xff]
        %v4887 = vld [vmem:[%s4876 + $0x50] sm:$0xff]
        %v4888 = vld [vmem:[%s4876 + $0x58] sm:$0xff]
        %v4889 = vld [vmem:[%s4876 + $0x60] sm:$0xff]
        %v4890 = vld [vmem:[%s4876 + $0x68] sm:$0xff]
        %v4891 = vld [vmem:[%s4876 + $0x70] sm:$0xff]
        %v4892 = vld [vmem:[%s4876 + $0x78] sm:$0xff]
        %4893 = vmatprep.subr.mxu0 0.0
        %4894 = vmatpush1.msra.mxu0 %v4877
        %4895 = vmatprep.subr.mxu0 0.0
        %4896 = vmatpush1.msra.mxu0 %v4878
        %4897 = vmatprep.subr.mxu0 0.0
        %4898 = vmatpush1.msra.mxu0 %v4879
        %4899 = vmatprep.subr.mxu0 0.0
        %4900 = vmatpush1.msra.mxu0 %v4880
        %4901 = vmatprep.subr.mxu0 0.0
        %4902 = vmatpush1.msra.mxu0 %v4881
        %4903 = vmatprep.subr.mxu0 0.0
        %4904 = vmatpush1.msra.mxu0 %v4882
        %4905 = vmatprep.subr.mxu0 0.0
        %4906 = vmatpush1.msra.mxu0 %v4883
        %4907 = vmatprep.subr.mxu0 0.0
        %4908 = vmatpush1.msra.mxu0 %v4884
        %4909 = vmatprep.subr.mxu0 0.0
        %4910 = vmatpush1.msra.mxu0 %v4885
        %4911 = vmatprep.subr.mxu0 0.0
        %4912 = vmatpush1.msra.mxu0 %v4886
        %4913 = vmatprep.subr.mxu0 0.0
        %4914 = vmatpush1.msra.mxu0 %v4887
        %4915 = vmatprep.subr.mxu0 0.0
        %4916 = vmatpush1.msra.mxu0 %v4888
        %4917 = vmatprep.subr.mxu0 0.0
        %4918 = vmatpush1.msra.mxu0 %v4889
        %4919 = vmatprep.subr.mxu0 0.0
        %4920 = vmatpush1.msra.mxu0 %v4890
        %4921 = vmatprep.subr.mxu0 0.0
        %4922 = vmatpush1.msra.mxu0 %v4891
        %4923 = vmatprep.subr.mxu0 0.0
        %4924 = vmatpush1.msra.mxu0 %v4892
        %4925 = vmatprep.subr.mxu0 0.0
        %4926 = vmatpush1.msra.mxu0 0.0
        %4927 = vmatprep.subr.mxu0 0.0
        %4928 = vmatpush1.msra.mxu0 0.0
        %4929 = vmatprep.subr.mxu0 0.0
        %4930 = vmatpush1.msra.mxu0 0.0
        %4931 = vmatprep.subr.mxu0 0.0
        %4932 = vmatpush1.msra.mxu0 0.0
        %4933 = vmatprep.subr.mxu0 0.0
        %4934 = vmatpush1.msra.mxu0 0.0
        %4935 = vmatprep.subr.mxu0 0.0
        %4936 = vmatpush1.msra.mxu0 0.0
        %4937 = vmatprep.subr.mxu0 0.0
        %4938 = vmatpush1.msra.mxu0 0.0
        %4939 = vmatprep.subr.mxu0 0.0
        %4940 = vmatpush1.msra.mxu0 0.0
        %4941 = vmatprep.subr.mxu0 0.0
        %4942 = vmatpush1.msra.mxu0 0.0
        %4943 = vmatprep.subr.mxu0 0.0
        %4944 = vmatpush1.msra.mxu0 0.0
        %4945 = vmatprep.subr.mxu0 0.0
        %4946 = vmatpush1.msra.mxu0 0.0
        %4947 = vmatprep.subr.mxu0 0.0
        %4948 = vmatpush1.msra.mxu0 0.0
        %4949 = vmatprep.subr.mxu0 0.0
        %4950 = vmatpush1.msra.mxu0 0.0
        %4951 = vmatprep.subr.mxu0 0.0
        %4952 = vmatpush1.msra.mxu0 0.0
        %4953 = vmatprep.subr.mxu0 0.0
        %4954 = vmatpush1.msra.mxu0 0.0
        %4955 = vmatprep.subr.mxu0 0.0
        %4956 = vmatpush1.msra.mxu0 0.0
        %4957 = vmatprep.mubr.f32.mxu0 0.0
        %4958 = vmatmul.mubr.f32.gmra.mrb[0].mxu0 %v4861
        %v4959 = vpop.f32.mrb[0].mxu0
        %v4960 = vadd.f32 0.0, %v4959
        %v4961 = vpop.f32.mrb[0].mxu0
        %4962 = vmatprep.mubr.f32.mxu0 0.0
        %4963 = vmatmul.mubr.f32.gmra.mrb[0].mxu0 %v4862
        %v4964 = vpop.f32.mrb[0].mxu0
        %v4965 = vadd.f32 0.0, %v4964
        %v4966 = vpop.f32.mrb[0].mxu0
        %4967 = vmatprep.mubr.f32.mxu0 0.0
        %4968 = vmatmul.mubr.f32.gmra.mrb[0].mxu0 %v4863
        %v4969 = vpop.f32.mrb[0].mxu0
        %v4970 = vpop.f32.mrb[0].mxu0
        %4971 = vmatprep.mubr.f32.mxu0 0.0
        %4972 = vmatmul.mubr.f32.gmra.mrb[0].mxu0 %v4864
        %v4973 = vpop.f32.mrb[0].mxu0
        %v4974 = vadd.f32 0.0, %v4973
        %v4975 = vpop.f32.mrb[0].mxu0
        %4976 = vmatprep.mubr.f32.mxu0 0.0
        %4977 = vmatmul.mubr.f32.gmra.mrb[0].mxu0 %v4865
        %v4978 = vpop.f32.mrb[0].mxu0
        %v4979 = vadd.f32 0.0, %v4978
        %v4980 = vpop.f32.mrb[0].mxu0
        %4981 = vmatprep.mubr.f32.mxu0 0.0
        %4982 = vmatmul.mubr.f32.gmra.mrb[0].mxu0 %v4866
        %v4983 = vpop.f32.mrb[0].mxu0
        %v4984 = vpop.f32.mrb[0].mxu0
        %4985 = vmatprep.mubr.f32.mxu0 0.0
        %4986 = vmatmul.mubr.f32.gmra.mrb[0].mxu0 %v4867
        %v4987 = vpop.f32.mrb[0].mxu0
        %v4988 = vadd.f32 0.0, %v4987
        %v4989 = vpop.f32.mrb[0].mxu0
        %4990 = vmatprep.mubr.f32.mxu0 0.0
        %4991 = vmatmul.mubr.f32.gmra.mrb[0].mxu0 %v4868
        %v4992 = vpop.f32.mrb[0].mxu0
        %v4993 = vadd.f32 0.0, %v4992
        %v4994 = vpop.f32.mrb[0].mxu0
        %4995 = vmatprep.mubr.f32.mxu0 0.0
        %4996 = vmatmul.mubr.f32.gmra.mrb[0].mxu0 %v4869
        %v4997 = vpop.f32.mrb[0].mxu0
        %v4998 = vpop.f32.mrb[0].mxu0
        %4999 = vmatprep.mubr.f32.mxu0 0.0
        %5000 = vmatmul.mubr.f32.gmra.mrb[0].mxu0 %v4870
        %v5001 = vpop.f32.mrb[0].mxu0
        %v5002 = vadd.f32 0.0, %v5001
        %v5003 = vpop.f32.mrb[0].mxu0
        %5004 = vmatprep.mubr.f32.mxu0 0.0
        %5005 = vmatmul.mubr.f32.gmra.mrb[0].mxu0 %v4871
        %v5006 = vpop.f32.mrb[0].mxu0
        %v5007 = vadd.f32 0.0, %v5006
        %v5008 = vpop.f32.mrb[0].mxu0
        %5009 = vmatprep.mubr.f32.mxu0 0.0
        %5010 = vmatmul.mubr.f32.gmra.mrb[0].mxu0 %v4872
        %v5011 = vpop.f32.mrb[0].mxu0
        %v5012 = vpop.f32.mrb[0].mxu0
        %5013 = vmatprep.mubr.f32.mxu0 0.0
        %5014 = vmatmul.mubr.f32.gmra.mrb[0].mxu0 %v4873
        %v5015 = vpop.f32.mrb[0].mxu0
        %v5016 = vadd.f32 0.0, %v5015
        %v5017 = vpop.f32.mrb[0].mxu0
        %5018 = vmatprep.mubr.f32.mxu0 0.0
        %5019 = vmatmul.mubr.f32.gmra.mrb[0].mxu0 %v4874
        %v5020 = vpop.f32.mrb[0].mxu0
        %v5021 = vadd.f32 0.0, %v5020
        %v5022 = vpop.f32.mrb[0].mxu0
        %5023 = vmatprep.mubr.f32.mxu0 0.0
        %5024 = vmatmul.mubr.f32.gmra.mrb[0].mxu0 %v4875
        %v5025 = vpop.f32.mrb[0].mxu0
        %v5026 = vpop.f32.mrb[0].mxu0
        %5027 = vdwg.mxu0
        %v5028 = vadd.f32 %v4851, %v4960
        %v5029 = vadd.f32 %v4852, %v4965
        %v5030 = vadd.f32 %v4853, %v4974
        %v5031 = vadd.f32 %v4854, %v4979
        %v5032 = vadd.f32 %v4855, %v4988
        %v5033 = vadd.f32 %v4856, %v4993
        %v5034 = vadd.f32 %v4857, %v5002
        %v5035 = vadd.f32 %v4858, %v5007
        %v5036 = vadd.f32 %v4859, %v5016
        %v5037 = vadd.f32 %v4860, %v5021
        %v5038 = vld [vmem:[#allocation3 + $0x47] sm:$0xff]
        %v5039 = vld [vmem:[#allocation3 + $0x4f] sm:$0xff]
        %v5040 = vld [vmem:[#allocation3 + $0x57] sm:$0xff]
        %v5041 = vld [vmem:[#allocation3 + $0x5f] sm:$0xff]
        %v5042 = vld [vmem:[#allocation3 + $0x67] sm:$0xff]
        %v5043 = vld [vmem:[#allocation3 + $0x6f] sm:$0xff]
        %v5044 = vld [vmem:[#allocation3 + $0x77] sm:$0xff]
        %v5045 = vld [vmem:[#allocation3 + $0x7f] sm:$0xff]
        %v5046 = vld [vmem:[#allocation3 + $0x87] sm:$0xff]
        %v5047 = vld [vmem:[#allocation3 + $0x8f] sm:$0xff]
        %v5048 = vld [vmem:[#allocation3 + $0x97] sm:$0xff]
        %v5049 = vld [vmem:[#allocation3 + $0x9f] sm:$0xff]
        %v5050 = vld [vmem:[#allocation3 + $0xa7] sm:$0xff]
        %v5051 = vld [vmem:[#allocation3 + $0xaf] sm:$0xff]
        %v5052 = vld [vmem:[#allocation3 + $0xb7] sm:$0xff]
        %s5053 = scalar_lea.vmem [#allocation15], 768
        %v5054 = vld [vmem:[%s5053] sm:$0xff]
        %v5055 = vld [vmem:[%s5053 + $0x8] sm:$0xff]
        %v5056 = vld [vmem:[%s5053 + $0x10] sm:$0xff]
        %v5057 = vld [vmem:[%s5053 + $0x18] sm:$0xff]
        %v5058 = vld [vmem:[%s5053 + $0x20] sm:$0xff]
        %v5059 = vld [vmem:[%s5053 + $0x28] sm:$0xff]
        %v5060 = vld [vmem:[%s5053 + $0x30] sm:$0xff]
        %v5061 = vld [vmem:[%s5053 + $0x38] sm:$0xff]
        %v5062 = vld [vmem:[%s5053 + $0x40] sm:$0xff]
        %v5063 = vld [vmem:[%s5053 + $0x48] sm:$0xff]
        %v5064 = vld [vmem:[%s5053 + $0x50] sm:$0xff]
        %v5065 = vld [vmem:[%s5053 + $0x58] sm:$0xff]
        %v5066 = vld [vmem:[%s5053 + $0x60] sm:$0xff]
        %v5067 = vld [vmem:[%s5053 + $0x68] sm:$0xff]
        %v5068 = vld [vmem:[%s5053 + $0x70] sm:$0xff]
        %v5069 = vld [vmem:[%s5053 + $0x78] sm:$0xff]
        %5070 = vmatprep.subr.mxu0 0.0
        %5071 = vmatpush1.msra.mxu0 %v5054
        %5072 = vmatprep.subr.mxu0 0.0
        %5073 = vmatpush1.msra.mxu0 %v5055
        %5074 = vmatprep.subr.mxu0 0.0
        %5075 = vmatpush1.msra.mxu0 %v5056
        %5076 = vmatprep.subr.mxu0 0.0
        %5077 = vmatpush1.msra.mxu0 %v5057
        %5078 = vmatprep.subr.mxu0 0.0
        %5079 = vmatpush1.msra.mxu0 %v5058
        %5080 = vmatprep.subr.mxu0 0.0
        %5081 = vmatpush1.msra.mxu0 %v5059
        %5082 = vmatprep.subr.mxu0 0.0
        %5083 = vmatpush1.msra.mxu0 %v5060
        %5084 = vmatprep.subr.mxu0 0.0
        %5085 = vmatpush1.msra.mxu0 %v5061
        %5086 = vmatprep.subr.mxu0 0.0
        %5087 = vmatpush1.msra.mxu0 %v5062
        %5088 = vmatprep.subr.mxu0 0.0
        %5089 = vmatpush1.msra.mxu0 %v5063
        %5090 = vmatprep.subr.mxu0 0.0
        %5091 = vmatpush1.msra.mxu0 %v5064
        %5092 = vmatprep.subr.mxu0 0.0
        %5093 = vmatpush1.msra.mxu0 %v5065
        %5094 = vmatprep.subr.mxu0 0.0
        %5095 = vmatpush1.msra.mxu0 %v5066
        %5096 = vmatprep.subr.mxu0 0.0
        %5097 = vmatpush1.msra.mxu0 %v5067
        %5098 = vmatprep.subr.mxu0 0.0
        %5099 = vmatpush1.msra.mxu0 %v5068
        %5100 = vmatprep.subr.mxu0 0.0
        %5101 = vmatpush1.msra.mxu0 %v5069
        %5102 = vmatprep.subr.mxu0 0.0
        %5103 = vmatpush1.msra.mxu0 0.0
        %5104 = vmatprep.subr.mxu0 0.0
        %5105 = vmatpush1.msra.mxu0 0.0
        %5106 = vmatprep.subr.mxu0 0.0
        %5107 = vmatpush1.msra.mxu0 0.0
        %5108 = vmatprep.subr.mxu0 0.0
        %5109 = vmatpush1.msra.mxu0 0.0
        %5110 = vmatprep.subr.mxu0 0.0
        %5111 = vmatpush1.msra.mxu0 0.0
        %5112 = vmatprep.subr.mxu0 0.0
        %5113 = vmatpush1.msra.mxu0 0.0
        %5114 = vmatprep.subr.mxu0 0.0
        %5115 = vmatpush1.msra.mxu0 0.0
        %5116 = vmatprep.subr.mxu0 0.0
        %5117 = vmatpush1.msra.mxu0 0.0
        %5118 = vmatprep.subr.mxu0 0.0
        %5119 = vmatpush1.msra.mxu0 0.0
        %5120 = vmatprep.subr.mxu0 0.0
        %5121 = vmatpush1.msra.mxu0 0.0
        %5122 = vmatprep.subr.mxu0 0.0
        %5123 = vmatpush1.msra.mxu0 0.0
        %5124 = vmatprep.subr.mxu0 0.0
        %5125 = vmatpush1.msra.mxu0 0.0
        %5126 = vmatprep.subr.mxu0 0.0
        %5127 = vmatpush1.msra.mxu0 0.0
        %5128 = vmatprep.subr.mxu0 0.0
        %5129 = vmatpush1.msra.mxu0 0.0
        %5130 = vmatprep.subr.mxu0 0.0
        %5131 = vmatpush1.msra.mxu0 0.0
        %5132 = vmatprep.subr.mxu0 0.0
        %5133 = vmatpush1.msra.mxu0 0.0
        %5134 = vmatprep.mubr.f32.mxu0 0.0
        %5135 = vmatmul.mubr.f32.gmra.mrb[0].mxu0 %v5038
        %v5136 = vpop.f32.mrb[0].mxu0
        %v5137 = vadd.f32 0.0, %v5136
        %v5138 = vpop.f32.mrb[0].mxu0
        %5139 = vmatprep.mubr.f32.mxu0 0.0
        %5140 = vmatmul.mubr.f32.gmra.mrb[0].mxu0 %v5039
        %v5141 = vpop.f32.mrb[0].mxu0
        %v5142 = vadd.f32 0.0, %v5141
        %v5143 = vpop.f32.mrb[0].mxu0
        %5144 = vmatprep.mubr.f32.mxu0 0.0
        %5145 = vmatmul.mubr.f32.gmra.mrb[0].mxu0 %v5040
        %v5146 = vpop.f32.mrb[0].mxu0
        %v5147 = vpop.f32.mrb[0].mxu0
        %5148 = vmatprep.mubr.f32.mxu0 0.0
        %5149 = vmatmul.mubr.f32.gmra.mrb[0].mxu0 %v5041
        %v5150 = vpop.f32.mrb[0].mxu0
        %v5151 = vadd.f32 0.0, %v5150
        %v5152 = vpop.f32.mrb[0].mxu0
        %5153 = vmatprep.mubr.f32.mxu0 0.0
        %5154 = vmatmul.mubr.f32.gmra.mrb[0].mxu0 %v5042
        %v5155 = vpop.f32.mrb[0].mxu0
        %v5156 = vadd.f32 0.0, %v5155
        %v5157 = vpop.f32.mrb[0].mxu0
        %5158 = vmatprep.mubr.f32.mxu0 0.0
        %5159 = vmatmul.mubr.f32.gmra.mrb[0].mxu0 %v5043
        %v5160 = vpop.f32.mrb[0].mxu0
        %v5161 = vpop.f32.mrb[0].mxu0
        %5162 = vmatprep.mubr.f32.mxu0 0.0
        %5163 = vmatmul.mubr.f32.gmra.mrb[0].mxu0 %v5044
        %v5164 = vpop.f32.mrb[0].mxu0
        %v5165 = vadd.f32 0.0, %v5164
        %v5166 = vpop.f32.mrb[0].mxu0
        %5167 = vmatprep.mubr.f32.mxu0 0.0
        %5168 = vmatmul.mubr.f32.gmra.mrb[0].mxu0 %v5045
        %v5169 = vpop.f32.mrb[0].mxu0
        %v5170 = vadd.f32 0.0, %v5169
        %v5171 = vpop.f32.mrb[0].mxu0
        %5172 = vmatprep.mubr.f32.mxu0 0.0
        %5173 = vmatmul.mubr.f32.gmra.mrb[0].mxu0 %v5046
        %v5174 = vpop.f32.mrb[0].mxu0
        %v5175 = vpop.f32.mrb[0].mxu0
        %5176 = vmatprep.mubr.f32.mxu0 0.0
        %5177 = vmatmul.mubr.f32.gmra.mrb[0].mxu0 %v5047
        %v5178 = vpop.f32.mrb[0].mxu0
        %v5179 = vadd.f32 0.0, %v5178
        %v5180 = vpop.f32.mrb[0].mxu0
        %5181 = vmatprep.mubr.f32.mxu0 0.0
        %5182 = vmatmul.mubr.f32.gmra.mrb[0].mxu0 %v5048
        %v5183 = vpop.f32.mrb[0].mxu0
        %v5184 = vadd.f32 0.0, %v5183
        %v5185 = vpop.f32.mrb[0].mxu0
        %5186 = vmatprep.mubr.f32.mxu0 0.0
        %5187 = vmatmul.mubr.f32.gmra.mrb[0].mxu0 %v5049
        %v5188 = vpop.f32.mrb[0].mxu0
        %v5189 = vpop.f32.mrb[0].mxu0
        %5190 = vmatprep.mubr.f32.mxu0 0.0
        %5191 = vmatmul.mubr.f32.gmra.mrb[0].mxu0 %v5050
        %v5192 = vpop.f32.mrb[0].mxu0
        %v5193 = vadd.f32 0.0, %v5192
        %v5194 = vpop.f32.mrb[0].mxu0
        %5195 = vmatprep.mubr.f32.mxu0 0.0
        %5196 = vmatmul.mubr.f32.gmra.mrb[0].mxu0 %v5051
        %v5197 = vpop.f32.mrb[0].mxu0
        %v5198 = vadd.f32 0.0, %v5197
        %v5199 = vpop.f32.mrb[0].mxu0
        %5200 = vmatprep.mubr.f32.mxu0 0.0
        %5201 = vmatmul.mubr.f32.gmra.mrb[0].mxu0 %v5052
        %v5202 = vpop.f32.mrb[0].mxu0
        %v5203 = vpop.f32.mrb[0].mxu0
        %5204 = vdwg.mxu0
        %v5205 = vadd.f32 %v5028, %v5137
        %v5206 = vadd.f32 %v5029, %v5142
        %v5207 = vadd.f32 %v5030, %v5151
        %v5208 = vadd.f32 %v5031, %v5156
        %v5209 = vadd.f32 %v5032, %v5165
        %v5210 = vadd.f32 %v5033, %v5170
        %v5211 = vadd.f32 %v5034, %v5179
        %v5212 = vadd.f32 %v5035, %v5184
        %v5213 = vadd.f32 %v5036, %v5193
        %v5214 = vadd.f32 %v5037, %v5198
        %v5215 = vld [vmem:[#allocation3 + $0x48] sm:$0xff]
        %v5216 = vld [vmem:[#allocation3 + $0x50] sm:$0xff]
        %v5217 = vld [vmem:[#allocation3 + $0x58] sm:$0xff]
        %v5218 = vld [vmem:[#allocation3 + $0x60] sm:$0xff]
        %v5219 = vld [vmem:[#allocation3 + $0x68] sm:$0xff]
        %v5220 = vld [vmem:[#allocation3 + $0x70] sm:$0xff]
        %v5221 = vld [vmem:[#allocation3 + $0x78] sm:$0xff]
        %v5222 = vld [vmem:[#allocation3 + $0x80] sm:$0xff]
        %v5223 = vld [vmem:[#allocation3 + $0x88] sm:$0xff]
        %v5224 = vld [vmem:[#allocation3 + $0x90] sm:$0xff]
        %v5225 = vld [vmem:[#allocation3 + $0x98] sm:$0xff]
        %v5226 = vld [vmem:[#allocation3 + $0xa0] sm:$0xff]
        %v5227 = vld [vmem:[#allocation3 + $0xa8] sm:$0xff]
        %v5228 = vld [vmem:[#allocation3 + $0xb0] sm:$0xff]
        %v5229 = vld [vmem:[#allocation3 + $0xb8] sm:$0xff]
        %s5230 = scalar_lea.vmem [#allocation15], 896
        %v5231 = vld [vmem:[%s5230] sm:$0xff]
        %v5232 = vld [vmem:[%s5230 + $0x8] sm:$0xff]
        %v5233 = vld [vmem:[%s5230 + $0x10] sm:$0xff]
        %v5234 = vld [vmem:[%s5230 + $0x18] sm:$0xff]
        %v5235 = vld [vmem:[%s5230 + $0x20] sm:$0xff]
        %v5236 = vld [vmem:[%s5230 + $0x28] sm:$0xff]
        %v5237 = vld [vmem:[%s5230 + $0x30] sm:$0xff]
        %v5238 = vld [vmem:[%s5230 + $0x38] sm:$0xff]
        %v5239 = vld [vmem:[%s5230 + $0x40] sm:$0xff]
        %v5240 = vld [vmem:[%s5230 + $0x48] sm:$0xff]
        %v5241 = vld [vmem:[%s5230 + $0x50] sm:$0xff]
        %v5242 = vld [vmem:[%s5230 + $0x58] sm:$0xff]
        %v5243 = vld [vmem:[%s5230 + $0x60] sm:$0xff]
        %v5244 = vld [vmem:[%s5230 + $0x68] sm:$0xff]
        %v5245 = vld [vmem:[%s5230 + $0x70] sm:$0xff]
        %v5246 = vld [vmem:[%s5230 + $0x78] sm:$0xff]
        %5247 = vmatprep.subr.mxu0 0.0
        %5248 = vmatpush1.msra.mxu0 %v5231
        %5249 = vmatprep.subr.mxu0 0.0
        %5250 = vmatpush1.msra.mxu0 %v5232
        %5251 = vmatprep.subr.mxu0 0.0
        %5252 = vmatpush1.msra.mxu0 %v5233
        %5253 = vmatprep.subr.mxu0 0.0
        %5254 = vmatpush1.msra.mxu0 %v5234
        %5255 = vmatprep.subr.mxu0 0.0
        %5256 = vmatpush1.msra.mxu0 %v5235
        %5257 = vmatprep.subr.mxu0 0.0
        %5258 = vmatpush1.msra.mxu0 %v5236
        %5259 = vmatprep.subr.mxu0 0.0
        %5260 = vmatpush1.msra.mxu0 %v5237
        %5261 = vmatprep.subr.mxu0 0.0
        %5262 = vmatpush1.msra.mxu0 %v5238
        %5263 = vmatprep.subr.mxu0 0.0
        %5264 = vmatpush1.msra.mxu0 %v5239
        %5265 = vmatprep.subr.mxu0 0.0
        %5266 = vmatpush1.msra.mxu0 %v5240
        %5267 = vmatprep.subr.mxu0 0.0
        %5268 = vmatpush1.msra.mxu0 %v5241
        %5269 = vmatprep.subr.mxu0 0.0
        %5270 = vmatpush1.msra.mxu0 %v5242
        %5271 = vmatprep.subr.mxu0 0.0
        %5272 = vmatpush1.msra.mxu0 %v5243
        %5273 = vmatprep.subr.mxu0 0.0
        %5274 = vmatpush1.msra.mxu0 %v5244
        %5275 = vmatprep.subr.mxu0 0.0
        %5276 = vmatpush1.msra.mxu0 %v5245
        %5277 = vmatprep.subr.mxu0 0.0
        %5278 = vmatpush1.msra.mxu0 %v5246
        %5279 = vmatprep.subr.mxu0 0.0
        %5280 = vmatpush1.msra.mxu0 0.0
        %5281 = vmatprep.subr.mxu0 0.0
        %5282 = vmatpush1.msra.mxu0 0.0
        %5283 = vmatprep.subr.mxu0 0.0
        %5284 = vmatpush1.msra.mxu0 0.0
        %5285 = vmatprep.subr.mxu0 0.0
        %5286 = vmatpush1.msra.mxu0 0.0
        %5287 = vmatprep.subr.mxu0 0.0
        %5288 = vmatpush1.msra.mxu0 0.0
        %5289 = vmatprep.subr.mxu0 0.0
        %5290 = vmatpush1.msra.mxu0 0.0
        %5291 = vmatprep.subr.mxu0 0.0
        %5292 = vmatpush1.msra.mxu0 0.0
        %5293 = vmatprep.subr.mxu0 0.0
        %5294 = vmatpush1.msra.mxu0 0.0
        %5295 = vmatprep.subr.mxu0 0.0
        %5296 = vmatpush1.msra.mxu0 0.0
        %5297 = vmatprep.subr.mxu0 0.0
        %5298 = vmatpush1.msra.mxu0 0.0
        %5299 = vmatprep.subr.mxu0 0.0
        %5300 = vmatpush1.msra.mxu0 0.0
        %5301 = vmatprep.subr.mxu0 0.0
        %5302 = vmatpush1.msra.mxu0 0.0
        %5303 = vmatprep.subr.mxu0 0.0
        %5304 = vmatpush1.msra.mxu0 0.0
        %5305 = vmatprep.subr.mxu0 0.0
        %5306 = vmatpush1.msra.mxu0 0.0
        %5307 = vmatprep.subr.mxu0 0.0
        %5308 = vmatpush1.msra.mxu0 0.0
        %5309 = vmatprep.subr.mxu0 0.0
        %5310 = vmatpush1.msra.mxu0 0.0
        %5311 = vmatprep.mubr.f32.mxu0 0.0
        %5312 = vmatmul.mubr.f32.gmra.mrb[0].mxu0 %v5215
        %v5313 = vpop.f32.mrb[0].mxu0
        %v5314 = vadd.f32 0.0, %v5313
        %v5315 = vpop.f32.mrb[0].mxu0
        %5316 = vmatprep.mubr.f32.mxu0 0.0
        %5317 = vmatmul.mubr.f32.gmra.mrb[0].mxu0 %v5216
        %v5318 = vpop.f32.mrb[0].mxu0
        %v5319 = vadd.f32 0.0, %v5318
        %v5320 = vpop.f32.mrb[0].mxu0
        %5321 = vmatprep.mubr.f32.mxu0 0.0
        %5322 = vmatmul.mubr.f32.gmra.mrb[0].mxu0 %v5217
        %v5323 = vpop.f32.mrb[0].mxu0
        %v5324 = vpop.f32.mrb[0].mxu0
        %5325 = vmatprep.mubr.f32.mxu0 0.0
        %5326 = vmatmul.mubr.f32.gmra.mrb[0].mxu0 %v5218
        %v5327 = vpop.f32.mrb[0].mxu0
        %v5328 = vadd.f32 0.0, %v5327
        %v5329 = vpop.f32.mrb[0].mxu0
        %5330 = vmatprep.mubr.f32.mxu0 0.0
        %5331 = vmatmul.mubr.f32.gmra.mrb[0].mxu0 %v5219
        %v5332 = vpop.f32.mrb[0].mxu0
        %v5333 = vadd.f32 0.0, %v5332
        %v5334 = vpop.f32.mrb[0].mxu0
        %5335 = vmatprep.mubr.f32.mxu0 0.0
        %5336 = vmatmul.mubr.f32.gmra.mrb[0].mxu0 %v5220
        %v5337 = vpop.f32.mrb[0].mxu0
        %v5338 = vpop.f32.mrb[0].mxu0
        %5339 = vmatprep.mubr.f32.mxu0 0.0
        %5340 = vmatmul.mubr.f32.gmra.mrb[0].mxu0 %v5221
        %v5341 = vpop.f32.mrb[0].mxu0
        %v5342 = vadd.f32 0.0, %v5341
        %v5343 = vpop.f32.mrb[0].mxu0
        %5344 = vmatprep.mubr.f32.mxu0 0.0
        %5345 = vmatmul.mubr.f32.gmra.mrb[0].mxu0 %v5222
        %v5346 = vpop.f32.mrb[0].mxu0
        %v5347 = vadd.f32 0.0, %v5346
        %v5348 = vpop.f32.mrb[0].mxu0
        %5349 = vmatprep.mubr.f32.mxu0 0.0
        %5350 = vmatmul.mubr.f32.gmra.mrb[0].mxu0 %v5223
        %v5351 = vpop.f32.mrb[0].mxu0
        %v5352 = vpop.f32.mrb[0].mxu0
        %5353 = vmatprep.mubr.f32.mxu0 0.0
        %5354 = vmatmul.mubr.f32.gmra.mrb[0].mxu0 %v5224
        %v5355 = vpop.f32.mrb[0].mxu0
        %v5356 = vadd.f32 0.0, %v5355
        %v5357 = vpop.f32.mrb[0].mxu0
        %5358 = vmatprep.mubr.f32.mxu0 0.0
        %5359 = vmatmul.mubr.f32.gmra.mrb[0].mxu0 %v5225
        %v5360 = vpop.f32.mrb[0].mxu0
        %v5361 = vadd.f32 0.0, %v5360
        %v5362 = vpop.f32.mrb[0].mxu0
        %5363 = vmatprep.mubr.f32.mxu0 0.0
        %5364 = vmatmul.mubr.f32.gmra.mrb[0].mxu0 %v5226
        %v5365 = vpop.f32.mrb[0].mxu0
        %v5366 = vpop.f32.mrb[0].mxu0
        %5367 = vmatprep.mubr.f32.mxu0 0.0
        %5368 = vmatmul.mubr.f32.gmra.mrb[0].mxu0 %v5227
        %v5369 = vpop.f32.mrb[0].mxu0
        %v5370 = vadd.f32 0.0, %v5369
        %v5371 = vpop.f32.mrb[0].mxu0
        %5372 = vmatprep.mubr.f32.mxu0 0.0
        %5373 = vmatmul.mubr.f32.gmra.mrb[0].mxu0 %v5228
        %v5374 = vpop.f32.mrb[0].mxu0
        %v5375 = vadd.f32 0.0, %v5374
        %v5376 = vpop.f32.mrb[0].mxu0
        %5377 = vmatprep.mubr.f32.mxu0 0.0
        %5378 = vmatmul.mubr.f32.gmra.mrb[0].mxu0 %v5229
        %v5379 = vpop.f32.mrb[0].mxu0
        %v5380 = vpop.f32.mrb[0].mxu0
        %5381 = vdwg.mxu0
        %v5382 = vadd.f32 %v5205, %v5314
        %v5383 = vadd.f32 %v5206, %v5319
        %v5384 = vadd.f32 %v5207, %v5328
        %v5385 = vadd.f32 %v5208, %v5333
        %v5386 = vadd.f32 %v5209, %v5342
        %v5387 = vadd.f32 %v5210, %v5347
        %v5388 = vadd.f32 %v5211, %v5356
        %v5389 = vadd.f32 %v5212, %v5361
        %v5390 = vadd.f32 %v5213, %v5370
        %v5391 = vadd.f32 %v5214, %v5375
        %v5392 = vld [vmem:[#allocation3 + $0x49] sm:$0xff]
        %v5393 = vld [vmem:[#allocation3 + $0x51] sm:$0xff]
        %v5394 = vld [vmem:[#allocation3 + $0x59] sm:$0xff]
        %v5395 = vld [vmem:[#allocation3 + $0x61] sm:$0xff]
        %v5396 = vld [vmem:[#allocation3 + $0x69] sm:$0xff]
        %v5397 = vld [vmem:[#allocation3 + $0x71] sm:$0xff]
        %v5398 = vld [vmem:[#allocation3 + $0x79] sm:$0xff]
        %v5399 = vld [vmem:[#allocation3 + $0x81] sm:$0xff]
        %v5400 = vld [vmem:[#allocation3 + $0x89] sm:$0xff]
        %v5401 = vld [vmem:[#allocation3 + $0x91] sm:$0xff]
        %v5402 = vld [vmem:[#allocation3 + $0x99] sm:$0xff]
        %v5403 = vld [vmem:[#allocation3 + $0xa1] sm:$0xff]
        %v5404 = vld [vmem:[#allocation3 + $0xa9] sm:$0xff]
        %v5405 = vld [vmem:[#allocation3 + $0xb1] sm:$0xff]
        %v5406 = vld [vmem:[#allocation3 + $0xb9] sm:$0xff]
        %s5407 = scalar_lea.vmem [#allocation15], 1024
        %v5408 = vld [vmem:[%s5407] sm:$0xff]
        %v5409 = vld [vmem:[%s5407 + $0x8] sm:$0xff]
        %v5410 = vld [vmem:[%s5407 + $0x10] sm:$0xff]
        %v5411 = vld [vmem:[%s5407 + $0x18] sm:$0xff]
        %v5412 = vld [vmem:[%s5407 + $0x20] sm:$0xff]
        %v5413 = vld [vmem:[%s5407 + $0x28] sm:$0xff]
        %v5414 = vld [vmem:[%s5407 + $0x30] sm:$0xff]
        %v5415 = vld [vmem:[%s5407 + $0x38] sm:$0xff]
        %v5416 = vld [vmem:[%s5407 + $0x40] sm:$0xff]
        %v5417 = vld [vmem:[%s5407 + $0x48] sm:$0xff]
        %v5418 = vld [vmem:[%s5407 + $0x50] sm:$0xff]
        %v5419 = vld [vmem:[%s5407 + $0x58] sm:$0xff]
        %v5420 = vld [vmem:[%s5407 + $0x60] sm:$0xff]
        %v5421 = vld [vmem:[%s5407 + $0x68] sm:$0xff]
        %v5422 = vld [vmem:[%s5407 + $0x70] sm:$0xff]
        %v5423 = vld [vmem:[%s5407 + $0x78] sm:$0xff]
        %5424 = vmatprep.subr.mxu0 0.0
        %5425 = vmatpush1.msra.mxu0 %v5408
        %5426 = vmatprep.subr.mxu0 0.0
        %5427 = vmatpush1.msra.mxu0 %v5409
        %5428 = vmatprep.subr.mxu0 0.0
        %5429 = vmatpush1.msra.mxu0 %v5410
        %5430 = vmatprep.subr.mxu0 0.0
        %5431 = vmatpush1.msra.mxu0 %v5411
        %5432 = vmatprep.subr.mxu0 0.0
        %5433 = vmatpush1.msra.mxu0 %v5412
        %5434 = vmatprep.subr.mxu0 0.0
        %5435 = vmatpush1.msra.mxu0 %v5413
        %5436 = vmatprep.subr.mxu0 0.0
        %5437 = vmatpush1.msra.mxu0 %v5414
        %5438 = vmatprep.subr.mxu0 0.0
        %5439 = vmatpush1.msra.mxu0 %v5415
        %5440 = vmatprep.subr.mxu0 0.0
        %5441 = vmatpush1.msra.mxu0 %v5416
        %5442 = vmatprep.subr.mxu0 0.0
        %5443 = vmatpush1.msra.mxu0 %v5417
        %5444 = vmatprep.subr.mxu0 0.0
        %5445 = vmatpush1.msra.mxu0 %v5418
        %5446 = vmatprep.subr.mxu0 0.0
        %5447 = vmatpush1.msra.mxu0 %v5419
        %5448 = vmatprep.subr.mxu0 0.0
        %5449 = vmatpush1.msra.mxu0 %v5420
        %5450 = vmatprep.subr.mxu0 0.0
        %5451 = vmatpush1.msra.mxu0 %v5421
        %5452 = vmatprep.subr.mxu0 0.0
        %5453 = vmatpush1.msra.mxu0 %v5422
        %5454 = vmatprep.subr.mxu0 0.0
        %5455 = vmatpush1.msra.mxu0 %v5423
        %5456 = vmatprep.subr.mxu0 0.0
        %5457 = vmatpush1.msra.mxu0 0.0
        %5458 = vmatprep.subr.mxu0 0.0
        %5459 = vmatpush1.msra.mxu0 0.0
        %5460 = vmatprep.subr.mxu0 0.0
        %5461 = vmatpush1.msra.mxu0 0.0
        %5462 = vmatprep.subr.mxu0 0.0
        %5463 = vmatpush1.msra.mxu0 0.0
        %5464 = vmatprep.subr.mxu0 0.0
        %5465 = vmatpush1.msra.mxu0 0.0
        %5466 = vmatprep.subr.mxu0 0.0
        %5467 = vmatpush1.msra.mxu0 0.0
        %5468 = vmatprep.subr.mxu0 0.0
        %5469 = vmatpush1.msra.mxu0 0.0
        %5470 = vmatprep.subr.mxu0 0.0
        %5471 = vmatpush1.msra.mxu0 0.0
        %5472 = vmatprep.subr.mxu0 0.0
        %5473 = vmatpush1.msra.mxu0 0.0
        %5474 = vmatprep.subr.mxu0 0.0
        %5475 = vmatpush1.msra.mxu0 0.0
        %5476 = vmatprep.subr.mxu0 0.0
        %5477 = vmatpush1.msra.mxu0 0.0
        %5478 = vmatprep.subr.mxu0 0.0
        %5479 = vmatpush1.msra.mxu0 0.0
        %5480 = vmatprep.subr.mxu0 0.0
        %5481 = vmatpush1.msra.mxu0 0.0
        %5482 = vmatprep.subr.mxu0 0.0
        %5483 = vmatpush1.msra.mxu0 0.0
        %5484 = vmatprep.subr.mxu0 0.0
        %5485 = vmatpush1.msra.mxu0 0.0
        %5486 = vmatprep.subr.mxu0 0.0
        %5487 = vmatpush1.msra.mxu0 0.0
        %5488 = vmatprep.mubr.f32.mxu0 0.0
        %5489 = vmatmul.mubr.f32.gmra.mrb[0].mxu0 %v5392
        %v5490 = vpop.f32.mrb[0].mxu0
        %v5491 = vadd.f32 0.0, %v5490
        %v5492 = vpop.f32.mrb[0].mxu0
        %5493 = vmatprep.mubr.f32.mxu0 0.0
        %5494 = vmatmul.mubr.f32.gmra.mrb[0].mxu0 %v5393
        %v5495 = vpop.f32.mrb[0].mxu0
        %v5496 = vadd.f32 0.0, %v5495
        %v5497 = vpop.f32.mrb[0].mxu0
        %5498 = vmatprep.mubr.f32.mxu0 0.0
        %5499 = vmatmul.mubr.f32.gmra.mrb[0].mxu0 %v5394
        %v5500 = vpop.f32.mrb[0].mxu0
        %v5501 = vpop.f32.mrb[0].mxu0
        %5502 = vmatprep.mubr.f32.mxu0 0.0
        %5503 = vmatmul.mubr.f32.gmra.mrb[0].mxu0 %v5395
        %v5504 = vpop.f32.mrb[0].mxu0
        %v5505 = vadd.f32 0.0, %v5504
        %v5506 = vpop.f32.mrb[0].mxu0
        %5507 = vmatprep.mubr.f32.mxu0 0.0
        %5508 = vmatmul.mubr.f32.gmra.mrb[0].mxu0 %v5396
        %v5509 = vpop.f32.mrb[0].mxu0
        %v5510 = vadd.f32 0.0, %v5509
        %v5511 = vpop.f32.mrb[0].mxu0
        %5512 = vmatprep.mubr.f32.mxu0 0.0
        %5513 = vmatmul.mubr.f32.gmra.mrb[0].mxu0 %v5397
        %v5514 = vpop.f32.mrb[0].mxu0
        %v5515 = vpop.f32.mrb[0].mxu0
        %5516 = vmatprep.mubr.f32.mxu0 0.0
        %5517 = vmatmul.mubr.f32.gmra.mrb[0].mxu0 %v5398
        %v5518 = vpop.f32.mrb[0].mxu0
        %v5519 = vadd.f32 0.0, %v5518
        %v5520 = vpop.f32.mrb[0].mxu0
        %5521 = vmatprep.mubr.f32.mxu0 0.0
        %5522 = vmatmul.mubr.f32.gmra.mrb[0].mxu0 %v5399
        %v5523 = vpop.f32.mrb[0].mxu0
        %v5524 = vadd.f32 0.0, %v5523
        %v5525 = vpop.f32.mrb[0].mxu0
        %5526 = vmatprep.mubr.f32.mxu0 0.0
        %5527 = vmatmul.mubr.f32.gmra.mrb[0].mxu0 %v5400
        %v5528 = vpop.f32.mrb[0].mxu0
        %v5529 = vpop.f32.mrb[0].mxu0
        %5530 = vmatprep.mubr.f32.mxu0 0.0
        %5531 = vmatmul.mubr.f32.gmra.mrb[0].mxu0 %v5401
        %v5532 = vpop.f32.mrb[0].mxu0
        %v5533 = vadd.f32 0.0, %v5532
        %v5534 = vpop.f32.mrb[0].mxu0
        %5535 = vmatprep.mubr.f32.mxu0 0.0
        %5536 = vmatmul.mubr.f32.gmra.mrb[0].mxu0 %v5402
        %v5537 = vpop.f32.mrb[0].mxu0
        %v5538 = vadd.f32 0.0, %v5537
        %v5539 = vpop.f32.mrb[0].mxu0
        %5540 = vmatprep.mubr.f32.mxu0 0.0
        %5541 = vmatmul.mubr.f32.gmra.mrb[0].mxu0 %v5403
        %v5542 = vpop.f32.mrb[0].mxu0
        %v5543 = vpop.f32.mrb[0].mxu0
        %5544 = vmatprep.mubr.f32.mxu0 0.0
        %5545 = vmatmul.mubr.f32.gmra.mrb[0].mxu0 %v5404
        %v5546 = vpop.f32.mrb[0].mxu0
        %v5547 = vadd.f32 0.0, %v5546
        %v5548 = vpop.f32.mrb[0].mxu0
        %5549 = vmatprep.mubr.f32.mxu0 0.0
        %5550 = vmatmul.mubr.f32.gmra.mrb[0].mxu0 %v5405
        %v5551 = vpop.f32.mrb[0].mxu0
        %v5552 = vadd.f32 0.0, %v5551
        %v5553 = vpop.f32.mrb[0].mxu0
        %5554 = vmatprep.mubr.f32.mxu0 0.0
        %5555 = vmatmul.mubr.f32.gmra.mrb[0].mxu0 %v5406
        %v5556 = vpop.f32.mrb[0].mxu0
        %v5557 = vpop.f32.mrb[0].mxu0
        %5558 = vdwg.mxu0
        %v5559 = vadd.f32 %v5382, %v5491
        %v5560 = vadd.f32 %v5383, %v5496
        %v5561 = vadd.f32 %v5384, %v5505
        %v5562 = vadd.f32 %v5385, %v5510
        %v5563 = vadd.f32 %v5386, %v5519
        %v5564 = vadd.f32 %v5387, %v5524
        %v5565 = vadd.f32 %v5388, %v5533
        %v5566 = vadd.f32 %v5389, %v5538
        %v5567 = vadd.f32 %v5390, %v5547
        %v5568 = vadd.f32 %v5391, %v5552
        %v5570 = vlaneseq
        %v5571 = vshrl.u32 %v5570, 7
        %v5572 = vsub.s32 0, %v5571
        %v5573 = vrot.slane %v782, %v5572
        %v5575 = vadd.f32 %v5559, %v5573
        %v5576 = vadd.f32 %v5560, %v5573
        %v5577 = vld [vmem:[%s521] sm:$0xff]
        %v5578 = vld [vmem:[%s521 + $0x8] sm:$0xff]
        %v5579 = vadd.f32 %v5575, %v5577
        %v5580 = vadd.f32 %v5576, %v5578
        %5581 = vst [vmem:[%s619] sm:$0xff] %v5579
        %5582 = vst [vmem:[%s619 + $0x8] sm:$0xff] %v5580
        %v5583 = vadd.f32 %v5561, %v5573
        %v5584 = vadd.f32 %v5562, %v5573
        %v5585 = vld [vmem:[%s680] sm:$0xff]
        %v5586 = vld [vmem:[%s680 + $0x8] sm:$0xff]
        %v5587 = vadd.f32 %v5583, %v5585
        %v5588 = vadd.f32 %v5584, %v5586
        %s5589 = scalar_lea.vmem %s619, 16 [#allocation16]
        %5590 = vst [vmem:[%s5589] sm:$0xff] %v5587
        %5591 = vst [vmem:[%s5589 + $0x8] sm:$0xff] %v5588
        %v5592 = vadd.f32 %v5563, %v5573
        %v5593 = vadd.f32 %v5564, %v5573
        %v5594 = vld [vmem:[%s687] sm:$0xff]
        %v5595 = vld [vmem:[%s687 + $0x8] sm:$0xff]
        %v5596 = vadd.f32 %v5592, %v5594
        %v5597 = vadd.f32 %v5593, %v5595
        %s5598 = scalar_lea.vmem %s619, 32 [#allocation16]
        %5599 = vst [vmem:[%s5598] sm:$0xff] %v5596
        %5600 = vst [vmem:[%s5598 + $0x8] sm:$0xff] %v5597
        %v5601 = vadd.f32 %v5565, %v5573
        %v5602 = vadd.f32 %v5566, %v5573
        %v5603 = vld [vmem:[%s694] sm:$0xff]
        %v5604 = vld [vmem:[%s694 + $0x8] sm:$0xff]
        %v5605 = vadd.f32 %v5601, %v5603
        %v5606 = vadd.f32 %v5602, %v5604
        %s5607 = scalar_lea.vmem %s619, 48 [#allocation16]
        %5608 = vst [vmem:[%s5607] sm:$0xff] %v5605
        %5609 = vst [vmem:[%s5607 + $0x8] sm:$0xff] %v5606
        %v5610 = vadd.f32 %v5567, %v5573
        %v5611 = vadd.f32 %v5568, %v5573
        %v5612 = vld [vmem:[%s701] sm:$0xff]
        %v5613 = vld [vmem:[%s701 + $0x8] sm:$0xff]
        %v5614 = vadd.f32 %v5610, %v5612
        %v5615 = vadd.f32 %v5611, %v5613
        %s5616 = scalar_lea.vmem %s619, 64 [#allocation16]
        %5617 = vst [vmem:[%s5616] sm:$0xff] %v5614
        %5618 = vst [vmem:[%s5616 + $0x8] sm:$0xff] %v5615
        %v5619 = vld [vmem:[#allocation3 + $0x8f] sm:$0xff]
        %v5620 = vld [vmem:[#allocation3 + $0x97] sm:$0xff]
        %v5621 = vld [vmem:[#allocation3 + $0x9f] sm:$0xff]
        %v5622 = vld [vmem:[#allocation3 + $0xa7] sm:$0xff]
        %v5623 = vld [vmem:[#allocation3 + $0xaf] sm:$0xff]
        %v5624 = vld [vmem:[#allocation3 + $0xb7] sm:$0xff]
        %v5625 = vld [vmem:[#allocation3 + $0xbf] sm:$0xff]
        %v5626 = vld [vmem:[#allocation3 + $0xc7] sm:$0xff]
        %v5627 = vld [vmem:[#allocation3 + $0xcf] sm:$0xff]
        %v5628 = vld [vmem:[#allocation15] sm:$0xff]
        %v5629 = vld [vmem:[#allocation15 + $0x8] sm:$0xff]
        %v5630 = vld [vmem:[#allocation15 + $0x10] sm:$0xff]
        %v5631 = vld [vmem:[#allocation15 + $0x18] sm:$0xff]
        %v5632 = vld [vmem:[#allocation15 + $0x20] sm:$0xff]
        %v5633 = vld [vmem:[#allocation15 + $0x28] sm:$0xff]
        %v5634 = vld [vmem:[#allocation15 + $0x30] sm:$0xff]
        %v5635 = vld [vmem:[#allocation15 + $0x38] sm:$0xff]
        %v5636 = vld [vmem:[#allocation15 + $0x40] sm:$0xff]
        %v5637 = vld [vmem:[#allocation15 + $0x48] sm:$0xff]
        %v5638 = vld [vmem:[#allocation15 + $0x50] sm:$0xff]
        %v5639 = vld [vmem:[#allocation15 + $0x58] sm:$0xff]
        %v5640 = vld [vmem:[#allocation15 + $0x60] sm:$0xff]
        %v5641 = vld [vmem:[#allocation15 + $0x68] sm:$0xff]
        %v5642 = vld [vmem:[#allocation15 + $0x70] sm:$0xff]
        %v5643 = vld [vmem:[#allocation15 + $0x78] sm:$0xff]
        %v5644 = vld [vmem:[#allocation3 + $0x90] sm:$0xff]
        %v5645 = vld [vmem:[#allocation3 + $0x98] sm:$0xff]
        %v5646 = vld [vmem:[#allocation3 + $0xa0] sm:$0xff]
        %v5647 = vld [vmem:[#allocation3 + $0xa8] sm:$0xff]
        %v5648 = vld [vmem:[#allocation3 + $0xb0] sm:$0xff]
        %v5649 = vld [vmem:[#allocation3 + $0xb8] sm:$0xff]
        %v5650 = vld [vmem:[#allocation3 + $0xc0] sm:$0xff]
        %v5651 = vld [vmem:[#allocation3 + $0xc8] sm:$0xff]
        %v5652 = vld [vmem:[#allocation3 + $0xd0] sm:$0xff]
        %v5653 = vld [vmem:[%s4043] sm:$0xff]
        %v5654 = vld [vmem:[%s4043 + $0x8] sm:$0xff]
        %v5655 = vld [vmem:[%s4043 + $0x10] sm:$0xff]
        %v5656 = vld [vmem:[%s4043 + $0x18] sm:$0xff]
        %v5657 = vld [vmem:[%s4043 + $0x20] sm:$0xff]
        %v5658 = vld [vmem:[%s4043 + $0x28] sm:$0xff]
        %v5659 = vld [vmem:[%s4043 + $0x30] sm:$0xff]
        %v5660 = vld [vmem:[%s4043 + $0x38] sm:$0xff]
        %v5661 = vld [vmem:[%s4043 + $0x40] sm:$0xff]
        %v5662 = vld [vmem:[%s4043 + $0x48] sm:$0xff]
        %v5663 = vld [vmem:[%s4043 + $0x50] sm:$0xff]
        %v5664 = vld [vmem:[%s4043 + $0x58] sm:$0xff]
        %v5665 = vld [vmem:[%s4043 + $0x60] sm:$0xff]
        %v5666 = vld [vmem:[%s4043 + $0x68] sm:$0xff]
        %v5667 = vld [vmem:[%s4043 + $0x70] sm:$0xff]
        %v5668 = vld [vmem:[%s4043 + $0x78] sm:$0xff]
        %5669 = vmatprep.subr.mxu0 0.0
        %5670 = vmatpush1.msra.mxu0 %v5653
        %5671 = vmatprep.subr.mxu0 0.0
        %5672 = vmatpush1.msra.mxu0 %v5654
        %5673 = vmatprep.subr.mxu0 0.0
        %5674 = vmatpush1.msra.mxu0 %v5655
        %5675 = vmatprep.subr.mxu0 0.0
        %5676 = vmatpush1.msra.mxu0 %v5656
        %5677 = vmatprep.subr.mxu0 0.0
        %5678 = vmatpush1.msra.mxu0 %v5657
        %5679 = vmatprep.subr.mxu0 0.0
        %5680 = vmatpush1.msra.mxu0 %v5658
        %5681 = vmatprep.subr.mxu0 0.0
        %5682 = vmatpush1.msra.mxu0 %v5659
        %5683 = vmatprep.subr.mxu0 0.0
        %5684 = vmatpush1.msra.mxu0 %v5660
        %5685 = vmatprep.subr.mxu0 0.0
        %5686 = vmatpush1.msra.mxu0 %v5661
        %5687 = vmatprep.subr.mxu0 0.0
        %5688 = vmatpush1.msra.mxu0 %v5662
        %5689 = vmatprep.subr.mxu0 0.0
        %5690 = vmatpush1.msra.mxu0 %v5663
        %5691 = vmatprep.subr.mxu0 0.0
        %5692 = vmatpush1.msra.mxu0 %v5664
        %5693 = vmatprep.subr.mxu0 0.0
        %5694 = vmatpush1.msra.mxu0 %v5665
        %5695 = vmatprep.subr.mxu0 0.0
        %5696 = vmatpush1.msra.mxu0 %v5666
        %5697 = vmatprep.subr.mxu0 0.0
        %5698 = vmatpush1.msra.mxu0 %v5667
        %5699 = vmatprep.subr.mxu0 0.0
        %5700 = vmatpush1.msra.mxu0 %v5668
        %5701 = vmatprep.subr.mxu0 0.0
        %5702 = vmatpush1.msra.mxu0 0.0
        %5703 = vmatprep.subr.mxu0 0.0
        %5704 = vmatpush1.msra.mxu0 0.0
        %5705 = vmatprep.subr.mxu0 0.0
        %5706 = vmatpush1.msra.mxu0 0.0
        %5707 = vmatprep.subr.mxu0 0.0
        %5708 = vmatpush1.msra.mxu0 0.0
        %5709 = vmatprep.subr.mxu0 0.0
        %5710 = vmatpush1.msra.mxu0 0.0
        %5711 = vmatprep.subr.mxu0 0.0
        %5712 = vmatpush1.msra.mxu0 0.0
        %5713 = vmatprep.subr.mxu0 0.0
        %5714 = vmatpush1.msra.mxu0 0.0
        %5715 = vmatprep.subr.mxu0 0.0
        %5716 = vmatpush1.msra.mxu0 0.0
        %5717 = vmatprep.subr.mxu0 0.0
        %5718 = vmatpush1.msra.mxu0 0.0
        %5719 = vmatprep.subr.mxu0 0.0
        %5720 = vmatpush1.msra.mxu0 0.0
        %5721 = vmatprep.subr.mxu0 0.0
        %5722 = vmatpush1.msra.mxu0 0.0
        %5723 = vmatprep.subr.mxu0 0.0
        %5724 = vmatpush1.msra.mxu0 0.0
        %5725 = vmatprep.subr.mxu0 0.0
        %5726 = vmatpush1.msra.mxu0 0.0
        %5727 = vmatprep.subr.mxu0 0.0
        %5728 = vmatpush1.msra.mxu0 0.0
        %5729 = vmatprep.subr.mxu0 0.0
        %5730 = vmatpush1.msra.mxu0 0.0
        %5731 = vmatprep.subr.mxu0 0.0
        %5732 = vmatpush1.msra.mxu0 0.0
        %5733 = vmatprep.mubr.f32.mxu0 0.0
        %5734 = vmatmul.mubr.f32.gmra.mrb[0].mxu0 %v5644
        %v5735 = vpop.f32.mrb[0].mxu0
        %v5736 = vadd.f32 0.0, %v5735
        %v5737 = vpop.f32.mrb[0].mxu0
        %5738 = vmatprep.mubr.f32.mxu0 0.0
        %5739 = vmatmul.mubr.f32.gmra.mrb[0].mxu0 %v5645
        %v5740 = vpop.f32.mrb[0].mxu0
        %v5741 = vadd.f32 0.0, %v5740
        %v5742 = vpop.f32.mrb[0].mxu0
        %5743 = vmatprep.mubr.f32.mxu0 0.0
        %5744 = vmatmul.mubr.f32.gmra.mrb[0].mxu0 %v5646
        %v5745 = vpop.f32.mrb[0].mxu0
        %v5746 = vpop.f32.mrb[0].mxu0
        %5747 = vmatprep.mubr.f32.mxu0 0.0
        %5748 = vmatmul.mubr.f32.gmra.mrb[0].mxu0 %v5647
        %v5749 = vpop.f32.mrb[0].mxu0
        %v5750 = vadd.f32 0.0, %v5749
        %v5751 = vpop.f32.mrb[0].mxu0
        %5752 = vmatprep.mubr.f32.mxu0 0.0
        %5753 = vmatmul.mubr.f32.gmra.mrb[0].mxu0 %v5648
        %v5754 = vpop.f32.mrb[0].mxu0
        %v5755 = vadd.f32 0.0, %v5754
        %v5756 = vpop.f32.mrb[0].mxu0
        %5757 = vmatprep.mubr.f32.mxu0 0.0
        %5758 = vmatmul.mubr.f32.gmra.mrb[0].mxu0 %v5649
        %v5759 = vpop.f32.mrb[0].mxu0
        %v5760 = vpop.f32.mrb[0].mxu0
        %5761 = vmatprep.mubr.f32.mxu0 0.0
        %5762 = vmatmul.mubr.f32.gmra.mrb[0].mxu0 %v5650
        %v5763 = vpop.f32.mrb[0].mxu0
        %v5764 = vadd.f32 0.0, %v5763
        %v5765 = vpop.f32.mrb[0].mxu0
        %5766 = vmatprep.mubr.f32.mxu0 0.0
        %5767 = vmatmul.mubr.f32.gmra.mrb[0].mxu0 %v5651
        %v5768 = vpop.f32.mrb[0].mxu0
        %v5769 = vadd.f32 0.0, %v5768
        %v5770 = vpop.f32.mrb[0].mxu0
        %5771 = vmatprep.mubr.f32.mxu0 0.0
        %5772 = vmatmul.mubr.f32.gmra.mrb[0].mxu0 %v5652
        %v5773 = vpop.f32.mrb[0].mxu0
        %v5774 = vpop.f32.mrb[0].mxu0
        %5775 = vdwg.mxu0
        %5776 = vmatprep.subr.mxu0 0.0
        %5777 = vmatpush1.msra.mxu0 %v5628
        %5778 = vmatprep.subr.mxu0 0.0
        %5779 = vmatpush1.msra.mxu0 %v5629
        %5780 = vmatprep.subr.mxu0 0.0
        %5781 = vmatpush1.msra.mxu0 %v5630
        %5782 = vmatprep.subr.mxu0 0.0
        %5783 = vmatpush1.msra.mxu0 %v5631
        %5784 = vmatprep.subr.mxu0 0.0
        %5785 = vmatpush1.msra.mxu0 %v5632
        %5786 = vmatprep.subr.mxu0 0.0
        %5787 = vmatpush1.msra.mxu0 %v5633
        %5788 = vmatprep.subr.mxu0 0.0
        %5789 = vmatpush1.msra.mxu0 %v5634
        %5790 = vmatprep.subr.mxu0 0.0
        %5791 = vmatpush1.msra.mxu0 %v5635
        %5792 = vmatprep.subr.mxu0 0.0
        %5793 = vmatpush1.msra.mxu0 %v5636
        %5794 = vmatprep.subr.mxu0 0.0
        %5795 = vmatpush1.msra.mxu0 %v5637
        %5796 = vmatprep.subr.mxu0 0.0
        %5797 = vmatpush1.msra.mxu0 %v5638
        %5798 = vmatprep.subr.mxu0 0.0
        %5799 = vmatpush1.msra.mxu0 %v5639
        %5800 = vmatprep.subr.mxu0 0.0
        %5801 = vmatpush1.msra.mxu0 %v5640
        %5802 = vmatprep.subr.mxu0 0.0
        %5803 = vmatpush1.msra.mxu0 %v5641
        %5804 = vmatprep.subr.mxu0 0.0
        %5805 = vmatpush1.msra.mxu0 %v5642
        %5806 = vmatprep.subr.mxu0 0.0
        %5807 = vmatpush1.msra.mxu0 %v5643
        %5808 = vmatprep.subr.mxu0 0.0
        %5809 = vmatpush1.msra.mxu0 0.0
        %5810 = vmatprep.subr.mxu0 0.0
        %5811 = vmatpush1.msra.mxu0 0.0
        %5812 = vmatprep.subr.mxu0 0.0
        %5813 = vmatpush1.msra.mxu0 0.0
        %5814 = vmatprep.subr.mxu0 0.0
        %5815 = vmatpush1.msra.mxu0 0.0
        %5816 = vmatprep.subr.mxu0 0.0
        %5817 = vmatpush1.msra.mxu0 0.0
        %5818 = vmatprep.subr.mxu0 0.0
        %5819 = vmatpush1.msra.mxu0 0.0
        %5820 = vmatprep.subr.mxu0 0.0
        %5821 = vmatpush1.msra.mxu0 0.0
        %5822 = vmatprep.subr.mxu0 0.0
        %5823 = vmatpush1.msra.mxu0 0.0
        %5824 = vmatprep.subr.mxu0 0.0
        %5825 = vmatpush1.msra.mxu0 0.0
        %5826 = vmatprep.subr.mxu0 0.0
        %5827 = vmatpush1.msra.mxu0 0.0
        %5828 = vmatprep.subr.mxu0 0.0
        %5829 = vmatpush1.msra.mxu0 0.0
        %5830 = vmatprep.subr.mxu0 0.0
        %5831 = vmatpush1.msra.mxu0 0.0
        %5832 = vmatprep.subr.mxu0 0.0
        %5833 = vmatpush1.msra.mxu0 0.0
        %5834 = vmatprep.subr.mxu0 0.0
        %5835 = vmatpush1.msra.mxu0 0.0
        %5836 = vmatprep.subr.mxu0 0.0
        %5837 = vmatpush1.msra.mxu0 0.0
        %5838 = vmatprep.subr.mxu0 0.0
        %5839 = vmatpush1.msra.mxu0 0.0
        %5840 = vmatprep.mubr.f32.mxu0 0.0
        %5841 = vmatmul.mubr.f32.gmra.mrb[0].mxu0 %v5619
        %v5842 = vpop.f32.mrb[0].mxu0
        %v5843 = vadd.f32 %v5736, %v5842
        %v5844 = vpop.f32.mrb[0].mxu0
        %5845 = vmatprep.mubr.f32.mxu0 0.0
        %5846 = vmatmul.mubr.f32.gmra.mrb[0].mxu0 %v5620
        %v5847 = vpop.f32.mrb[0].mxu0
        %v5848 = vadd.f32 %v5741, %v5847
        %v5849 = vpop.f32.mrb[0].mxu0
        %5850 = vmatprep.mubr.f32.mxu0 0.0
        %5851 = vmatmul.mubr.f32.gmra.mrb[0].mxu0 %v5621
        %v5852 = vpop.f32.mrb[0].mxu0
        %v5853 = vpop.f32.mrb[0].mxu0
        %5854 = vmatprep.mubr.f32.mxu0 0.0
        %5855 = vmatmul.mubr.f32.gmra.mrb[0].mxu0 %v5622
        %v5856 = vpop.f32.mrb[0].mxu0
        %v5857 = vadd.f32 %v5750, %v5856
        %v5858 = vpop.f32.mrb[0].mxu0
        %5859 = vmatprep.mubr.f32.mxu0 0.0
        %5860 = vmatmul.mubr.f32.gmra.mrb[0].mxu0 %v5623
        %v5861 = vpop.f32.mrb[0].mxu0
        %v5862 = vadd.f32 %v5755, %v5861
        %v5863 = vpop.f32.mrb[0].mxu0
        %5864 = vmatprep.mubr.f32.mxu0 0.0
        %5865 = vmatmul.mubr.f32.gmra.mrb[0].mxu0 %v5624
        %v5866 = vpop.f32.mrb[0].mxu0
        %v5867 = vpop.f32.mrb[0].mxu0
        %5868 = vmatprep.mubr.f32.mxu0 0.0
        %5869 = vmatmul.mubr.f32.gmra.mrb[0].mxu0 %v5625
        %v5870 = vpop.f32.mrb[0].mxu0
        %v5871 = vadd.f32 %v5764, %v5870
        %v5872 = vpop.f32.mrb[0].mxu0
        %5873 = vmatprep.mubr.f32.mxu0 0.0
        %5874 = vmatmul.mubr.f32.gmra.mrb[0].mxu0 %v5626
        %v5875 = vpop.f32.mrb[0].mxu0
        %v5876 = vadd.f32 %v5769, %v5875
        %v5877 = vpop.f32.mrb[0].mxu0
        %5878 = vmatprep.mubr.f32.mxu0 0.0
        %5879 = vmatmul.mubr.f32.gmra.mrb[0].mxu0 %v5627
        %v5880 = vpop.f32.mrb[0].mxu0
        %v5881 = vpop.f32.mrb[0].mxu0
        %5882 = vdwg.mxu0
        %v5883 = vld [vmem:[#allocation3 + $0x91] sm:$0xff]
        %v5884 = vld [vmem:[#allocation3 + $0x99] sm:$0xff]
        %v5885 = vld [vmem:[#allocation3 + $0xa1] sm:$0xff]
        %v5886 = vld [vmem:[#allocation3 + $0xa9] sm:$0xff]
        %v5887 = vld [vmem:[#allocation3 + $0xb1] sm:$0xff]
        %v5888 = vld [vmem:[#allocation3 + $0xb9] sm:$0xff]
        %v5889 = vld [vmem:[#allocation3 + $0xc1] sm:$0xff]
        %v5890 = vld [vmem:[#allocation3 + $0xc9] sm:$0xff]
        %v5891 = vld [vmem:[#allocation3 + $0xd1] sm:$0xff]
        %v5892 = vld [vmem:[%s4345] sm:$0xff]
        %v5893 = vld [vmem:[%s4345 + $0x8] sm:$0xff]
        %v5894 = vld [vmem:[%s4345 + $0x10] sm:$0xff]
        %v5895 = vld [vmem:[%s4345 + $0x18] sm:$0xff]
        %v5896 = vld [vmem:[%s4345 + $0x20] sm:$0xff]
        %v5897 = vld [vmem:[%s4345 + $0x28] sm:$0xff]
        %v5898 = vld [vmem:[%s4345 + $0x30] sm:$0xff]
        %v5899 = vld [vmem:[%s4345 + $0x38] sm:$0xff]
        %v5900 = vld [vmem:[%s4345 + $0x40] sm:$0xff]
        %v5901 = vld [vmem:[%s4345 + $0x48] sm:$0xff]
        %v5902 = vld [vmem:[%s4345 + $0x50] sm:$0xff]
        %v5903 = vld [vmem:[%s4345 + $0x58] sm:$0xff]
        %v5904 = vld [vmem:[%s4345 + $0x60] sm:$0xff]
        %v5905 = vld [vmem:[%s4345 + $0x68] sm:$0xff]
        %v5906 = vld [vmem:[%s4345 + $0x70] sm:$0xff]
        %v5907 = vld [vmem:[%s4345 + $0x78] sm:$0xff]
        %5908 = vmatprep.subr.mxu0 0.0
        %5909 = vmatpush1.msra.mxu0 %v5892
        %5910 = vmatprep.subr.mxu0 0.0
        %5911 = vmatpush1.msra.mxu0 %v5893
        %5912 = vmatprep.subr.mxu0 0.0
        %5913 = vmatpush1.msra.mxu0 %v5894
        %5914 = vmatprep.subr.mxu0 0.0
        %5915 = vmatpush1.msra.mxu0 %v5895
        %5916 = vmatprep.subr.mxu0 0.0
        %5917 = vmatpush1.msra.mxu0 %v5896
        %5918 = vmatprep.subr.mxu0 0.0
        %5919 = vmatpush1.msra.mxu0 %v5897
        %5920 = vmatprep.subr.mxu0 0.0
        %5921 = vmatpush1.msra.mxu0 %v5898
        %5922 = vmatprep.subr.mxu0 0.0
        %5923 = vmatpush1.msra.mxu0 %v5899
        %5924 = vmatprep.subr.mxu0 0.0
        %5925 = vmatpush1.msra.mxu0 %v5900
        %5926 = vmatprep.subr.mxu0 0.0
        %5927 = vmatpush1.msra.mxu0 %v5901
        %5928 = vmatprep.subr.mxu0 0.0
        %5929 = vmatpush1.msra.mxu0 %v5902
        %5930 = vmatprep.subr.mxu0 0.0
        %5931 = vmatpush1.msra.mxu0 %v5903
        %5932 = vmatprep.subr.mxu0 0.0
        %5933 = vmatpush1.msra.mxu0 %v5904
        %5934 = vmatprep.subr.mxu0 0.0
        %5935 = vmatpush1.msra.mxu0 %v5905
        %5936 = vmatprep.subr.mxu0 0.0
        %5937 = vmatpush1.msra.mxu0 %v5906
        %5938 = vmatprep.subr.mxu0 0.0
        %5939 = vmatpush1.msra.mxu0 %v5907
        %5940 = vmatprep.subr.mxu0 0.0
        %5941 = vmatpush1.msra.mxu0 0.0
        %5942 = vmatprep.subr.mxu0 0.0
        %5943 = vmatpush1.msra.mxu0 0.0
        %5944 = vmatprep.subr.mxu0 0.0
        %5945 = vmatpush1.msra.mxu0 0.0
        %5946 = vmatprep.subr.mxu0 0.0
        %5947 = vmatpush1.msra.mxu0 0.0
        %5948 = vmatprep.subr.mxu0 0.0
        %5949 = vmatpush1.msra.mxu0 0.0
        %5950 = vmatprep.subr.mxu0 0.0
        %5951 = vmatpush1.msra.mxu0 0.0
        %5952 = vmatprep.subr.mxu0 0.0
        %5953 = vmatpush1.msra.mxu0 0.0
        %5954 = vmatprep.subr.mxu0 0.0
        %5955 = vmatpush1.msra.mxu0 0.0
        %5956 = vmatprep.subr.mxu0 0.0
        %5957 = vmatpush1.msra.mxu0 0.0
        %5958 = vmatprep.subr.mxu0 0.0
        %5959 = vmatpush1.msra.mxu0 0.0
        %5960 = vmatprep.subr.mxu0 0.0
        %5961 = vmatpush1.msra.mxu0 0.0
        %5962 = vmatprep.subr.mxu0 0.0
        %5963 = vmatpush1.msra.mxu0 0.0
        %5964 = vmatprep.subr.mxu0 0.0
        %5965 = vmatpush1.msra.mxu0 0.0
        %5966 = vmatprep.subr.mxu0 0.0
        %5967 = vmatpush1.msra.mxu0 0.0
        %5968 = vmatprep.subr.mxu0 0.0
        %5969 = vmatpush1.msra.mxu0 0.0
        %5970 = vmatprep.subr.mxu0 0.0
        %5971 = vmatpush1.msra.mxu0 0.0
        %5972 = vmatprep.mubr.f32.mxu0 0.0
        %5973 = vmatmul.mubr.f32.gmra.mrb[0].mxu0 %v5883
        %v5974 = vpop.f32.mrb[0].mxu0
        %v5975 = vadd.f32 0.0, %v5974
        %v5976 = vpop.f32.mrb[0].mxu0
        %5977 = vmatprep.mubr.f32.mxu0 0.0
        %5978 = vmatmul.mubr.f32.gmra.mrb[0].mxu0 %v5884
        %v5979 = vpop.f32.mrb[0].mxu0
        %v5980 = vadd.f32 0.0, %v5979
        %v5981 = vpop.f32.mrb[0].mxu0
        %5982 = vmatprep.mubr.f32.mxu0 0.0
        %5983 = vmatmul.mubr.f32.gmra.mrb[0].mxu0 %v5885
        %v5984 = vpop.f32.mrb[0].mxu0
        %v5985 = vpop.f32.mrb[0].mxu0
        %5986 = vmatprep.mubr.f32.mxu0 0.0
        %5987 = vmatmul.mubr.f32.gmra.mrb[0].mxu0 %v5886
        %v5988 = vpop.f32.mrb[0].mxu0
        %v5989 = vadd.f32 0.0, %v5988
        %v5990 = vpop.f32.mrb[0].mxu0
        %5991 = vmatprep.mubr.f32.mxu0 0.0
        %5992 = vmatmul.mubr.f32.gmra.mrb[0].mxu0 %v5887
        %v5993 = vpop.f32.mrb[0].mxu0
        %v5994 = vadd.f32 0.0, %v5993
        %v5995 = vpop.f32.mrb[0].mxu0
        %5996 = vmatprep.mubr.f32.mxu0 0.0
        %5997 = vmatmul.mubr.f32.gmra.mrb[0].mxu0 %v5888
        %v5998 = vpop.f32.mrb[0].mxu0
        %v5999 = vpop.f32.mrb[0].mxu0
        %6000 = vmatprep.mubr.f32.mxu0 0.0
        %6001 = vmatmul.mubr.f32.gmra.mrb[0].mxu0 %v5889
        %v6002 = vpop.f32.mrb[0].mxu0
        %v6003 = vadd.f32 0.0, %v6002
        %v6004 = vpop.f32.mrb[0].mxu0
        %6005 = vmatprep.mubr.f32.mxu0 0.0
        %6006 = vmatmul.mubr.f32.gmra.mrb[0].mxu0 %v5890
        %v6007 = vpop.f32.mrb[0].mxu0
        %v6008 = vadd.f32 0.0, %v6007
        %v6009 = vpop.f32.mrb[0].mxu0
        %6010 = vmatprep.mubr.f32.mxu0 0.0
        %6011 = vmatmul.mubr.f32.gmra.mrb[0].mxu0 %v5891
        %v6012 = vpop.f32.mrb[0].mxu0
        %v6013 = vpop.f32.mrb[0].mxu0
        %6014 = vdwg.mxu0
        %v6015 = vadd.f32 %v5843, %v5975
        %v6016 = vadd.f32 %v5848, %v5980
        %v6017 = vadd.f32 %v5857, %v5989
        %v6018 = vadd.f32 %v5862, %v5994
        %v6019 = vadd.f32 %v5871, %v6003
        %v6020 = vadd.f32 %v5876, %v6008
        %v6021 = vld [vmem:[#allocation3 + $0xa7] sm:$0xff]
        %v6022 = vld [vmem:[#allocation3 + $0xaf] sm:$0xff]
        %v6023 = vld [vmem:[#allocation3 + $0xb7] sm:$0xff]
        %v6024 = vld [vmem:[#allocation3 + $0xbf] sm:$0xff]
        %v6025 = vld [vmem:[#allocation3 + $0xc7] sm:$0xff]
        %v6026 = vld [vmem:[#allocation3 + $0xcf] sm:$0xff]
        %v6027 = vld [vmem:[#allocation3 + $0xd7] sm:$0xff]
        %v6028 = vld [vmem:[#allocation3 + $0xdf] sm:$0xff]
        %v6029 = vld [vmem:[#allocation3 + $0xe7] sm:$0xff]
        %v6030 = vld [vmem:[%s4522] sm:$0xff]
        %v6031 = vld [vmem:[%s4522 + $0x8] sm:$0xff]
        %v6032 = vld [vmem:[%s4522 + $0x10] sm:$0xff]
        %v6033 = vld [vmem:[%s4522 + $0x18] sm:$0xff]
        %v6034 = vld [vmem:[%s4522 + $0x20] sm:$0xff]
        %v6035 = vld [vmem:[%s4522 + $0x28] sm:$0xff]
        %v6036 = vld [vmem:[%s4522 + $0x30] sm:$0xff]
        %v6037 = vld [vmem:[%s4522 + $0x38] sm:$0xff]
        %v6038 = vld [vmem:[%s4522 + $0x40] sm:$0xff]
        %v6039 = vld [vmem:[%s4522 + $0x48] sm:$0xff]
        %v6040 = vld [vmem:[%s4522 + $0x50] sm:$0xff]
        %v6041 = vld [vmem:[%s4522 + $0x58] sm:$0xff]
        %v6042 = vld [vmem:[%s4522 + $0x60] sm:$0xff]
        %v6043 = vld [vmem:[%s4522 + $0x68] sm:$0xff]
        %v6044 = vld [vmem:[%s4522 + $0x70] sm:$0xff]
        %v6045 = vld [vmem:[%s4522 + $0x78] sm:$0xff]
        %6046 = vmatprep.subr.mxu0 0.0
        %6047 = vmatpush1.msra.mxu0 %v6030
        %6048 = vmatprep.subr.mxu0 0.0
        %6049 = vmatpush1.msra.mxu0 %v6031
        %6050 = vmatprep.subr.mxu0 0.0
        %6051 = vmatpush1.msra.mxu0 %v6032
        %6052 = vmatprep.subr.mxu0 0.0
        %6053 = vmatpush1.msra.mxu0 %v6033
        %6054 = vmatprep.subr.mxu0 0.0
        %6055 = vmatpush1.msra.mxu0 %v6034
        %6056 = vmatprep.subr.mxu0 0.0
        %6057 = vmatpush1.msra.mxu0 %v6035
        %6058 = vmatprep.subr.mxu0 0.0
        %6059 = vmatpush1.msra.mxu0 %v6036
        %6060 = vmatprep.subr.mxu0 0.0
        %6061 = vmatpush1.msra.mxu0 %v6037
        %6062 = vmatprep.subr.mxu0 0.0
        %6063 = vmatpush1.msra.mxu0 %v6038
        %6064 = vmatprep.subr.mxu0 0.0
        %6065 = vmatpush1.msra.mxu0 %v6039
        %6066 = vmatprep.subr.mxu0 0.0
        %6067 = vmatpush1.msra.mxu0 %v6040
        %6068 = vmatprep.subr.mxu0 0.0
        %6069 = vmatpush1.msra.mxu0 %v6041
        %6070 = vmatprep.subr.mxu0 0.0
        %6071 = vmatpush1.msra.mxu0 %v6042
        %6072 = vmatprep.subr.mxu0 0.0
        %6073 = vmatpush1.msra.mxu0 %v6043
        %6074 = vmatprep.subr.mxu0 0.0
        %6075 = vmatpush1.msra.mxu0 %v6044
        %6076 = vmatprep.subr.mxu0 0.0
        %6077 = vmatpush1.msra.mxu0 %v6045
        %6078 = vmatprep.subr.mxu0 0.0
        %6079 = vmatpush1.msra.mxu0 0.0
        %6080 = vmatprep.subr.mxu0 0.0
        %6081 = vmatpush1.msra.mxu0 0.0
        %6082 = vmatprep.subr.mxu0 0.0
        %6083 = vmatpush1.msra.mxu0 0.0
        %6084 = vmatprep.subr.mxu0 0.0
        %6085 = vmatpush1.msra.mxu0 0.0
        %6086 = vmatprep.subr.mxu0 0.0
        %6087 = vmatpush1.msra.mxu0 0.0
        %6088 = vmatprep.subr.mxu0 0.0
        %6089 = vmatpush1.msra.mxu0 0.0
        %6090 = vmatprep.subr.mxu0 0.0
        %6091 = vmatpush1.msra.mxu0 0.0
        %6092 = vmatprep.subr.mxu0 0.0
        %6093 = vmatpush1.msra.mxu0 0.0
        %6094 = vmatprep.subr.mxu0 0.0
        %6095 = vmatpush1.msra.mxu0 0.0
        %6096 = vmatprep.subr.mxu0 0.0
        %6097 = vmatpush1.msra.mxu0 0.0
        %6098 = vmatprep.subr.mxu0 0.0
        %6099 = vmatpush1.msra.mxu0 0.0
        %6100 = vmatprep.subr.mxu0 0.0
        %6101 = vmatpush1.msra.mxu0 0.0
        %6102 = vmatprep.subr.mxu0 0.0
        %6103 = vmatpush1.msra.mxu0 0.0
        %6104 = vmatprep.subr.mxu0 0.0
        %6105 = vmatpush1.msra.mxu0 0.0
        %6106 = vmatprep.subr.mxu0 0.0
        %6107 = vmatpush1.msra.mxu0 0.0
        %6108 = vmatprep.subr.mxu0 0.0
        %6109 = vmatpush1.msra.mxu0 0.0
        %6110 = vmatprep.mubr.f32.mxu0 0.0
        %6111 = vmatmul.mubr.f32.gmra.mrb[0].mxu0 %v6021
        %v6112 = vpop.f32.mrb[0].mxu0
        %v6113 = vadd.f32 0.0, %v6112
        %v6114 = vpop.f32.mrb[0].mxu0
        %6115 = vmatprep.mubr.f32.mxu0 0.0
        %6116 = vmatmul.mubr.f32.gmra.mrb[0].mxu0 %v6022
        %v6117 = vpop.f32.mrb[0].mxu0
        %v6118 = vadd.f32 0.0, %v6117
        %v6119 = vpop.f32.mrb[0].mxu0
        %6120 = vmatprep.mubr.f32.mxu0 0.0
        %6121 = vmatmul.mubr.f32.gmra.mrb[0].mxu0 %v6023
        %v6122 = vpop.f32.mrb[0].mxu0
        %v6123 = vpop.f32.mrb[0].mxu0
        %6124 = vmatprep.mubr.f32.mxu0 0.0
        %6125 = vmatmul.mubr.f32.gmra.mrb[0].mxu0 %v6024
        %v6126 = vpop.f32.mrb[0].mxu0
        %v6127 = vadd.f32 0.0, %v6126
        %v6128 = vpop.f32.mrb[0].mxu0
        %6129 = vmatprep.mubr.f32.mxu0 0.0
        %6130 = vmatmul.mubr.f32.gmra.mrb[0].mxu0 %v6025
        %v6131 = vpop.f32.mrb[0].mxu0
        %v6132 = vadd.f32 0.0, %v6131
        %v6133 = vpop.f32.mrb[0].mxu0
        %6134 = vmatprep.mubr.f32.mxu0 0.0
        %6135 = vmatmul.mubr.f32.gmra.mrb[0].mxu0 %v6026
        %v6136 = vpop.f32.mrb[0].mxu0
        %v6137 = vpop.f32.mrb[0].mxu0
        %6138 = vmatprep.mubr.f32.mxu0 0.0
        %6139 = vmatmul.mubr.f32.gmra.mrb[0].mxu0 %v6027
        %v6140 = vpop.f32.mrb[0].mxu0
        %v6141 = vadd.f32 0.0, %v6140
        %v6142 = vpop.f32.mrb[0].mxu0
        %6143 = vmatprep.mubr.f32.mxu0 0.0
        %6144 = vmatmul.mubr.f32.gmra.mrb[0].mxu0 %v6028
        %v6145 = vpop.f32.mrb[0].mxu0
        %v6146 = vadd.f32 0.0, %v6145
        %v6147 = vpop.f32.mrb[0].mxu0
        %6148 = vmatprep.mubr.f32.mxu0 0.0
        %6149 = vmatmul.mubr.f32.gmra.mrb[0].mxu0 %v6029
        %v6150 = vpop.f32.mrb[0].mxu0
        %v6151 = vpop.f32.mrb[0].mxu0
        %6152 = vdwg.mxu0
        %v6153 = vadd.f32 %v6015, %v6113
        %v6154 = vadd.f32 %v6016, %v6118
        %v6155 = vadd.f32 %v6017, %v6127
        %v6156 = vadd.f32 %v6018, %v6132
        %v6157 = vadd.f32 %v6019, %v6141
        %v6158 = vadd.f32 %v6020, %v6146
        %v6159 = vld [vmem:[#allocation3 + $0xa8] sm:$0xff]
        %v6160 = vld [vmem:[#allocation3 + $0xb0] sm:$0xff]
        %v6161 = vld [vmem:[#allocation3 + $0xb8] sm:$0xff]
        %v6162 = vld [vmem:[#allocation3 + $0xc0] sm:$0xff]
        %v6163 = vld [vmem:[#allocation3 + $0xc8] sm:$0xff]
        %v6164 = vld [vmem:[#allocation3 + $0xd0] sm:$0xff]
        %v6165 = vld [vmem:[#allocation3 + $0xd8] sm:$0xff]
        %v6166 = vld [vmem:[#allocation3 + $0xe0] sm:$0xff]
        %v6167 = vld [vmem:[#allocation3 + $0xe8] sm:$0xff]
        %v6168 = vld [vmem:[%s4699] sm:$0xff]
        %v6169 = vld [vmem:[%s4699 + $0x8] sm:$0xff]
        %v6170 = vld [vmem:[%s4699 + $0x10] sm:$0xff]
        %v6171 = vld [vmem:[%s4699 + $0x18] sm:$0xff]
        %v6172 = vld [vmem:[%s4699 + $0x20] sm:$0xff]
        %v6173 = vld [vmem:[%s4699 + $0x28] sm:$0xff]
        %v6174 = vld [vmem:[%s4699 + $0x30] sm:$0xff]
        %v6175 = vld [vmem:[%s4699 + $0x38] sm:$0xff]
        %v6176 = vld [vmem:[%s4699 + $0x40] sm:$0xff]
        %v6177 = vld [vmem:[%s4699 + $0x48] sm:$0xff]
        %v6178 = vld [vmem:[%s4699 + $0x50] sm:$0xff]
        %v6179 = vld [vmem:[%s4699 + $0x58] sm:$0xff]
        %v6180 = vld [vmem:[%s4699 + $0x60] sm:$0xff]
        %v6181 = vld [vmem:[%s4699 + $0x68] sm:$0xff]
        %v6182 = vld [vmem:[%s4699 + $0x70] sm:$0xff]
        %v6183 = vld [vmem:[%s4699 + $0x78] sm:$0xff]
        %6184 = vmatprep.subr.mxu0 0.0
        %6185 = vmatpush1.msra.mxu0 %v6168
        %6186 = vmatprep.subr.mxu0 0.0
        %6187 = vmatpush1.msra.mxu0 %v6169
        %6188 = vmatprep.subr.mxu0 0.0
        %6189 = vmatpush1.msra.mxu0 %v6170
        %6190 = vmatprep.subr.mxu0 0.0
        %6191 = vmatpush1.msra.mxu0 %v6171
        %6192 = vmatprep.subr.mxu0 0.0
        %6193 = vmatpush1.msra.mxu0 %v6172
        %6194 = vmatprep.subr.mxu0 0.0
        %6195 = vmatpush1.msra.mxu0 %v6173
        %6196 = vmatprep.subr.mxu0 0.0
        %6197 = vmatpush1.msra.mxu0 %v6174
        %6198 = vmatprep.subr.mxu0 0.0
        %6199 = vmatpush1.msra.mxu0 %v6175
        %6200 = vmatprep.subr.mxu0 0.0
        %6201 = vmatpush1.msra.mxu0 %v6176
        %6202 = vmatprep.subr.mxu0 0.0
        %6203 = vmatpush1.msra.mxu0 %v6177
        %6204 = vmatprep.subr.mxu0 0.0
        %6205 = vmatpush1.msra.mxu0 %v6178
        %6206 = vmatprep.subr.mxu0 0.0
        %6207 = vmatpush1.msra.mxu0 %v6179
        %6208 = vmatprep.subr.mxu0 0.0
        %6209 = vmatpush1.msra.mxu0 %v6180
        %6210 = vmatprep.subr.mxu0 0.0
        %6211 = vmatpush1.msra.mxu0 %v6181
        %6212 = vmatprep.subr.mxu0 0.0
        %6213 = vmatpush1.msra.mxu0 %v6182
        %6214 = vmatprep.subr.mxu0 0.0
        %6215 = vmatpush1.msra.mxu0 %v6183
        %6216 = vmatprep.subr.mxu0 0.0
        %6217 = vmatpush1.msra.mxu0 0.0
        %6218 = vmatprep.subr.mxu0 0.0
        %6219 = vmatpush1.msra.mxu0 0.0
        %6220 = vmatprep.subr.mxu0 0.0
        %6221 = vmatpush1.msra.mxu0 0.0
        %6222 = vmatprep.subr.mxu0 0.0
        %6223 = vmatpush1.msra.mxu0 0.0
        %6224 = vmatprep.subr.mxu0 0.0
        %6225 = vmatpush1.msra.mxu0 0.0
        %6226 = vmatprep.subr.mxu0 0.0
        %6227 = vmatpush1.msra.mxu0 0.0
        %6228 = vmatprep.subr.mxu0 0.0
        %6229 = vmatpush1.msra.mxu0 0.0
        %6230 = vmatprep.subr.mxu0 0.0
        %6231 = vmatpush1.msra.mxu0 0.0
        %6232 = vmatprep.subr.mxu0 0.0
        %6233 = vmatpush1.msra.mxu0 0.0
        %6234 = vmatprep.subr.mxu0 0.0
        %6235 = vmatpush1.msra.mxu0 0.0
        %6236 = vmatprep.subr.mxu0 0.0
        %6237 = vmatpush1.msra.mxu0 0.0
        %6238 = vmatprep.subr.mxu0 0.0
        %6239 = vmatpush1.msra.mxu0 0.0
        %6240 = vmatprep.subr.mxu0 0.0
        %6241 = vmatpush1.msra.mxu0 0.0
        %6242 = vmatprep.subr.mxu0 0.0
        %6243 = vmatpush1.msra.mxu0 0.0
        %6244 = vmatprep.subr.mxu0 0.0
        %6245 = vmatpush1.msra.mxu0 0.0
        %6246 = vmatprep.subr.mxu0 0.0
        %6247 = vmatpush1.msra.mxu0 0.0
        %6248 = vmatprep.mubr.f32.mxu0 0.0
        %6249 = vmatmul.mubr.f32.gmra.mrb[0].mxu0 %v6159
        %v6250 = vpop.f32.mrb[0].mxu0
        %v6251 = vadd.f32 0.0, %v6250
        %v6252 = vpop.f32.mrb[0].mxu0
        %6253 = vmatprep.mubr.f32.mxu0 0.0
        %6254 = vmatmul.mubr.f32.gmra.mrb[0].mxu0 %v6160
        %v6255 = vpop.f32.mrb[0].mxu0
        %v6256 = vadd.f32 0.0, %v6255
        %v6257 = vpop.f32.mrb[0].mxu0
        %6258 = vmatprep.mubr.f32.mxu0 0.0
        %6259 = vmatmul.mubr.f32.gmra.mrb[0].mxu0 %v6161
        %v6260 = vpop.f32.mrb[0].mxu0
        %v6261 = vpop.f32.mrb[0].mxu0
        %6262 = vmatprep.mubr.f32.mxu0 0.0
        %6263 = vmatmul.mubr.f32.gmra.mrb[0].mxu0 %v6162
        %v6264 = vpop.f32.mrb[0].mxu0
        %v6265 = vadd.f32 0.0, %v6264
        %v6266 = vpop.f32.mrb[0].mxu0
        %6267 = vmatprep.mubr.f32.mxu0 0.0
        %6268 = vmatmul.mubr.f32.gmra.mrb[0].mxu0 %v6163
        %v6269 = vpop.f32.mrb[0].mxu0
        %v6270 = vadd.f32 0.0, %v6269
        %v6271 = vpop.f32.mrb[0].mxu0
        %6272 = vmatprep.mubr.f32.mxu0 0.0
        %6273 = vmatmul.mubr.f32.gmra.mrb[0].mxu0 %v6164
        %v6274 = vpop.f32.mrb[0].mxu0
        %v6275 = vpop.f32.mrb[0].mxu0
        %6276 = vmatprep.mubr.f32.mxu0 0.0
        %6277 = vmatmul.mubr.f32.gmra.mrb[0].mxu0 %v6165
        %v6278 = vpop.f32.mrb[0].mxu0
        %v6279 = vadd.f32 0.0, %v6278
        %v6280 = vpop.f32.mrb[0].mxu0
        %6281 = vmatprep.mubr.f32.mxu0 0.0
        %6282 = vmatmul.mubr.f32.gmra.mrb[0].mxu0 %v6166
        %v6283 = vpop.f32.mrb[0].mxu0
        %v6284 = vadd.f32 0.0, %v6283
        %v6285 = vpop.f32.mrb[0].mxu0
        %6286 = vmatprep.mubr.f32.mxu0 0.0
        %6287 = vmatmul.mubr.f32.gmra.mrb[0].mxu0 %v6167
        %v6288 = vpop.f32.mrb[0].mxu0
        %v6289 = vpop.f32.mrb[0].mxu0
        %6290 = vdwg.mxu0
        %v6291 = vadd.f32 %v6153, %v6251
        %v6292 = vadd.f32 %v6154, %v6256
        %v6293 = vadd.f32 %v6155, %v6265
        %v6294 = vadd.f32 %v6156, %v6270
        %v6295 = vadd.f32 %v6157, %v6279
        %v6296 = vadd.f32 %v6158, %v6284
        %v6297 = vld [vmem:[#allocation3 + $0xa9] sm:$0xff]
        %v6298 = vld [vmem:[#allocation3 + $0xb1] sm:$0xff]
        %v6299 = vld [vmem:[#allocation3 + $0xb9] sm:$0xff]
        %v6300 = vld [vmem:[#allocation3 + $0xc1] sm:$0xff]
        %v6301 = vld [vmem:[#allocation3 + $0xc9] sm:$0xff]
        %v6302 = vld [vmem:[#allocation3 + $0xd1] sm:$0xff]
        %v6303 = vld [vmem:[#allocation3 + $0xd9] sm:$0xff]
        %v6304 = vld [vmem:[#allocation3 + $0xe1] sm:$0xff]
        %v6305 = vld [vmem:[#allocation3 + $0xe9] sm:$0xff]
        %v6306 = vld [vmem:[%s4876] sm:$0xff]
        %v6307 = vld [vmem:[%s4876 + $0x8] sm:$0xff]
        %v6308 = vld [vmem:[%s4876 + $0x10] sm:$0xff]
        %v6309 = vld [vmem:[%s4876 + $0x18] sm:$0xff]
        %v6310 = vld [vmem:[%s4876 + $0x20] sm:$0xff]
        %v6311 = vld [vmem:[%s4876 + $0x28] sm:$0xff]
        %v6312 = vld [vmem:[%s4876 + $0x30] sm:$0xff]
        %v6313 = vld [vmem:[%s4876 + $0x38] sm:$0xff]
        %v6314 = vld [vmem:[%s4876 + $0x40] sm:$0xff]
        %v6315 = vld [vmem:[%s4876 + $0x48] sm:$0xff]
        %v6316 = vld [vmem:[%s4876 + $0x50] sm:$0xff]
        %v6317 = vld [vmem:[%s4876 + $0x58] sm:$0xff]
        %v6318 = vld [vmem:[%s4876 + $0x60] sm:$0xff]
        %v6319 = vld [vmem:[%s4876 + $0x68] sm:$0xff]
        %v6320 = vld [vmem:[%s4876 + $0x70] sm:$0xff]
        %v6321 = vld [vmem:[%s4876 + $0x78] sm:$0xff]
        %6322 = vmatprep.subr.mxu0 0.0
        %6323 = vmatpush1.msra.mxu0 %v6306
        %6324 = vmatprep.subr.mxu0 0.0
        %6325 = vmatpush1.msra.mxu0 %v6307
        %6326 = vmatprep.subr.mxu0 0.0
        %6327 = vmatpush1.msra.mxu0 %v6308
        %6328 = vmatprep.subr.mxu0 0.0
        %6329 = vmatpush1.msra.mxu0 %v6309
        %6330 = vmatprep.subr.mxu0 0.0
        %6331 = vmatpush1.msra.mxu0 %v6310
        %6332 = vmatprep.subr.mxu0 0.0
        %6333 = vmatpush1.msra.mxu0 %v6311
        %6334 = vmatprep.subr.mxu0 0.0
        %6335 = vmatpush1.msra.mxu0 %v6312
        %6336 = vmatprep.subr.mxu0 0.0
        %6337 = vmatpush1.msra.mxu0 %v6313
        %6338 = vmatprep.subr.mxu0 0.0
        %6339 = vmatpush1.msra.mxu0 %v6314
        %6340 = vmatprep.subr.mxu0 0.0
        %6341 = vmatpush1.msra.mxu0 %v6315
        %6342 = vmatprep.subr.mxu0 0.0
        %6343 = vmatpush1.msra.mxu0 %v6316
        %6344 = vmatprep.subr.mxu0 0.0
        %6345 = vmatpush1.msra.mxu0 %v6317
        %6346 = vmatprep.subr.mxu0 0.0
        %6347 = vmatpush1.msra.mxu0 %v6318
        %6348 = vmatprep.subr.mxu0 0.0
        %6349 = vmatpush1.msra.mxu0 %v6319
        %6350 = vmatprep.subr.mxu0 0.0
        %6351 = vmatpush1.msra.mxu0 %v6320
        %6352 = vmatprep.subr.mxu0 0.0
        %6353 = vmatpush1.msra.mxu0 %v6321
        %6354 = vmatprep.subr.mxu0 0.0
        %6355 = vmatpush1.msra.mxu0 0.0
        %6356 = vmatprep.subr.mxu0 0.0
        %6357 = vmatpush1.msra.mxu0 0.0
        %6358 = vmatprep.subr.mxu0 0.0
        %6359 = vmatpush1.msra.mxu0 0.0
        %6360 = vmatprep.subr.mxu0 0.0
        %6361 = vmatpush1.msra.mxu0 0.0
        %6362 = vmatprep.subr.mxu0 0.0
        %6363 = vmatpush1.msra.mxu0 0.0
        %6364 = vmatprep.subr.mxu0 0.0
        %6365 = vmatpush1.msra.mxu0 0.0
        %6366 = vmatprep.subr.mxu0 0.0
        %6367 = vmatpush1.msra.mxu0 0.0
        %6368 = vmatprep.subr.mxu0 0.0
        %6369 = vmatpush1.msra.mxu0 0.0
        %6370 = vmatprep.subr.mxu0 0.0
        %6371 = vmatpush1.msra.mxu0 0.0
        %6372 = vmatprep.subr.mxu0 0.0
        %6373 = vmatpush1.msra.mxu0 0.0
        %6374 = vmatprep.subr.mxu0 0.0
        %6375 = vmatpush1.msra.mxu0 0.0
        %6376 = vmatprep.subr.mxu0 0.0
        %6377 = vmatpush1.msra.mxu0 0.0
        %6378 = vmatprep.subr.mxu0 0.0
        %6379 = vmatpush1.msra.mxu0 0.0
        %6380 = vmatprep.subr.mxu0 0.0
        %6381 = vmatpush1.msra.mxu0 0.0
        %6382 = vmatprep.subr.mxu0 0.0
        %6383 = vmatpush1.msra.mxu0 0.0
        %6384 = vmatprep.subr.mxu0 0.0
        %6385 = vmatpush1.msra.mxu0 0.0
        %6386 = vmatprep.mubr.f32.mxu0 0.0
        %6387 = vmatmul.mubr.f32.gmra.mrb[0].mxu0 %v6297
        %v6388 = vpop.f32.mrb[0].mxu0
        %v6389 = vadd.f32 0.0, %v6388
        %v6390 = vpop.f32.mrb[0].mxu0
        %6391 = vmatprep.mubr.f32.mxu0 0.0
        %6392 = vmatmul.mubr.f32.gmra.mrb[0].mxu0 %v6298
        %v6393 = vpop.f32.mrb[0].mxu0
        %v6394 = vadd.f32 0.0, %v6393
        %v6395 = vpop.f32.mrb[0].mxu0
        %6396 = vmatprep.mubr.f32.mxu0 0.0
        %6397 = vmatmul.mubr.f32.gmra.mrb[0].mxu0 %v6299
        %v6398 = vpop.f32.mrb[0].mxu0
        %v6399 = vpop.f32.mrb[0].mxu0
        %6400 = vmatprep.mubr.f32.mxu0 0.0
        %6401 = vmatmul.mubr.f32.gmra.mrb[0].mxu0 %v6300
        %v6402 = vpop.f32.mrb[0].mxu0
        %v6403 = vadd.f32 0.0, %v6402
        %v6404 = vpop.f32.mrb[0].mxu0
        %6405 = vmatprep.mubr.f32.mxu0 0.0
        %6406 = vmatmul.mubr.f32.gmra.mrb[0].mxu0 %v6301
        %v6407 = vpop.f32.mrb[0].mxu0
        %v6408 = vadd.f32 0.0, %v6407
        %v6409 = vpop.f32.mrb[0].mxu0
        %6410 = vmatprep.mubr.f32.mxu0 0.0
        %6411 = vmatmul.mubr.f32.gmra.mrb[0].mxu0 %v6302
        %v6412 = vpop.f32.mrb[0].mxu0
        %v6413 = vpop.f32.mrb[0].mxu0
        %6414 = vmatprep.mubr.f32.mxu0 0.0
        %6415 = vmatmul.mubr.f32.gmra.mrb[0].mxu0 %v6303
        %v6416 = vpop.f32.mrb[0].mxu0
        %v6417 = vadd.f32 0.0, %v6416
        %v6418 = vpop.f32.mrb[0].mxu0
        %6419 = vmatprep.mubr.f32.mxu0 0.0
        %6420 = vmatmul.mubr.f32.gmra.mrb[0].mxu0 %v6304
        %v6421 = vpop.f32.mrb[0].mxu0
        %v6422 = vadd.f32 0.0, %v6421
        %v6423 = vpop.f32.mrb[0].mxu0
        %6424 = vmatprep.mubr.f32.mxu0 0.0
        %6425 = vmatmul.mubr.f32.gmra.mrb[0].mxu0 %v6305
        %v6426 = vpop.f32.mrb[0].mxu0
        %v6427 = vpop.f32.mrb[0].mxu0
        %6428 = vdwg.mxu0
        %v6429 = vadd.f32 %v6291, %v6389
        %v6430 = vadd.f32 %v6292, %v6394
        %v6431 = vadd.f32 %v6293, %v6403
        %v6432 = vadd.f32 %v6294, %v6408
        %v6433 = vadd.f32 %v6295, %v6417
        %v6434 = vadd.f32 %v6296, %v6422
        %v6435 = vld [vmem:[#allocation3 + $0xbf] sm:$0xff]
        %v6436 = vld [vmem:[#allocation3 + $0xc7] sm:$0xff]
        %v6437 = vld [vmem:[#allocation3 + $0xcf] sm:$0xff]
        %v6438 = vld [vmem:[#allocation3 + $0xd7] sm:$0xff]
        %v6439 = vld [vmem:[#allocation3 + $0xdf] sm:$0xff]
        %v6440 = vld [vmem:[#allocation3 + $0xe7] sm:$0xff]
        %v6441 = vld [vmem:[#allocation3 + $0xef] sm:$0xff]
        %v6442 = vld [vmem:[#allocation3 + $0xf7] sm:$0xff]
        %v6443 = vld [vmem:[#allocation3 + $0xff] sm:$0xff]
        %v6444 = vld [vmem:[%s5053] sm:$0xff]
        %v6445 = vld [vmem:[%s5053 + $0x8] sm:$0xff]
        %v6446 = vld [vmem:[%s5053 + $0x10] sm:$0xff]
        %v6447 = vld [vmem:[%s5053 + $0x18] sm:$0xff]
        %v6448 = vld [vmem:[%s5053 + $0x20] sm:$0xff]
        %v6449 = vld [vmem:[%s5053 + $0x28] sm:$0xff]
        %v6450 = vld [vmem:[%s5053 + $0x30] sm:$0xff]
        %v6451 = vld [vmem:[%s5053 + $0x38] sm:$0xff]
        %v6452 = vld [vmem:[%s5053 + $0x40] sm:$0xff]
        %v6453 = vld [vmem:[%s5053 + $0x48] sm:$0xff]
        %v6454 = vld [vmem:[%s5053 + $0x50] sm:$0xff]
        %v6455 = vld [vmem:[%s5053 + $0x58] sm:$0xff]
        %v6456 = vld [vmem:[%s5053 + $0x60] sm:$0xff]
        %v6457 = vld [vmem:[%s5053 + $0x68] sm:$0xff]
        %v6458 = vld [vmem:[%s5053 + $0x70] sm:$0xff]
        %v6459 = vld [vmem:[%s5053 + $0x78] sm:$0xff]
        %6460 = vmatprep.subr.mxu0 0.0
        %6461 = vmatpush1.msra.mxu0 %v6444
        %6462 = vmatprep.subr.mxu0 0.0
        %6463 = vmatpush1.msra.mxu0 %v6445
        %6464 = vmatprep.subr.mxu0 0.0
        %6465 = vmatpush1.msra.mxu0 %v6446
        %6466 = vmatprep.subr.mxu0 0.0
        %6467 = vmatpush1.msra.mxu0 %v6447
        %6468 = vmatprep.subr.mxu0 0.0
        %6469 = vmatpush1.msra.mxu0 %v6448
        %6470 = vmatprep.subr.mxu0 0.0
        %6471 = vmatpush1.msra.mxu0 %v6449
        %6472 = vmatprep.subr.mxu0 0.0
        %6473 = vmatpush1.msra.mxu0 %v6450
        %6474 = vmatprep.subr.mxu0 0.0
        %6475 = vmatpush1.msra.mxu0 %v6451
        %6476 = vmatprep.subr.mxu0 0.0
        %6477 = vmatpush1.msra.mxu0 %v6452
        %6478 = vmatprep.subr.mxu0 0.0
        %6479 = vmatpush1.msra.mxu0 %v6453
        %6480 = vmatprep.subr.mxu0 0.0
        %6481 = vmatpush1.msra.mxu0 %v6454
        %6482 = vmatprep.subr.mxu0 0.0
        %6483 = vmatpush1.msra.mxu0 %v6455
        %6484 = vmatprep.subr.mxu0 0.0
        %6485 = vmatpush1.msra.mxu0 %v6456
        %6486 = vmatprep.subr.mxu0 0.0
        %6487 = vmatpush1.msra.mxu0 %v6457
        %6488 = vmatprep.subr.mxu0 0.0
        %6489 = vmatpush1.msra.mxu0 %v6458
        %6490 = vmatprep.subr.mxu0 0.0
        %6491 = vmatpush1.msra.mxu0 %v6459
        %6492 = vmatprep.subr.mxu0 0.0
        %6493 = vmatpush1.msra.mxu0 0.0
        %6494 = vmatprep.subr.mxu0 0.0
        %6495 = vmatpush1.msra.mxu0 0.0
        %6496 = vmatprep.subr.mxu0 0.0
        %6497 = vmatpush1.msra.mxu0 0.0
        %6498 = vmatprep.subr.mxu0 0.0
        %6499 = vmatpush1.msra.mxu0 0.0
        %6500 = vmatprep.subr.mxu0 0.0
        %6501 = vmatpush1.msra.mxu0 0.0
        %6502 = vmatprep.subr.mxu0 0.0
        %6503 = vmatpush1.msra.mxu0 0.0
        %6504 = vmatprep.subr.mxu0 0.0
        %6505 = vmatpush1.msra.mxu0 0.0
        %6506 = vmatprep.subr.mxu0 0.0
        %6507 = vmatpush1.msra.mxu0 0.0
        %6508 = vmatprep.subr.mxu0 0.0
        %6509 = vmatpush1.msra.mxu0 0.0
        %6510 = vmatprep.subr.mxu0 0.0
        %6511 = vmatpush1.msra.mxu0 0.0
        %6512 = vmatprep.subr.mxu0 0.0
        %6513 = vmatpush1.msra.mxu0 0.0
        %6514 = vmatprep.subr.mxu0 0.0
        %6515 = vmatpush1.msra.mxu0 0.0
        %6516 = vmatprep.subr.mxu0 0.0
        %6517 = vmatpush1.msra.mxu0 0.0
        %6518 = vmatprep.subr.mxu0 0.0
        %6519 = vmatpush1.msra.mxu0 0.0
        %6520 = vmatprep.subr.mxu0 0.0
        %6521 = vmatpush1.msra.mxu0 0.0
        %6522 = vmatprep.subr.mxu0 0.0
        %6523 = vmatpush1.msra.mxu0 0.0
        %6524 = vmatprep.mubr.f32.mxu0 0.0
        %6525 = vmatmul.mubr.f32.gmra.mrb[0].mxu0 %v6435
        %v6526 = vpop.f32.mrb[0].mxu0
        %v6527 = vadd.f32 0.0, %v6526
        %v6528 = vpop.f32.mrb[0].mxu0
        %6529 = vmatprep.mubr.f32.mxu0 0.0
        %6530 = vmatmul.mubr.f32.gmra.mrb[0].mxu0 %v6436
        %v6531 = vpop.f32.mrb[0].mxu0
        %v6532 = vadd.f32 0.0, %v6531
        %v6533 = vpop.f32.mrb[0].mxu0
        %6534 = vmatprep.mubr.f32.mxu0 0.0
        %6535 = vmatmul.mubr.f32.gmra.mrb[0].mxu0 %v6437
        %v6536 = vpop.f32.mrb[0].mxu0
        %v6537 = vpop.f32.mrb[0].mxu0
        %6538 = vmatprep.mubr.f32.mxu0 0.0
        %6539 = vmatmul.mubr.f32.gmra.mrb[0].mxu0 %v6438
        %v6540 = vpop.f32.mrb[0].mxu0
        %v6541 = vadd.f32 0.0, %v6540
        %v6542 = vpop.f32.mrb[0].mxu0
        %6543 = vmatprep.mubr.f32.mxu0 0.0
        %6544 = vmatmul.mubr.f32.gmra.mrb[0].mxu0 %v6439
        %v6545 = vpop.f32.mrb[0].mxu0
        %v6546 = vadd.f32 0.0, %v6545
        %v6547 = vpop.f32.mrb[0].mxu0
        %6548 = vmatprep.mubr.f32.mxu0 0.0
        %6549 = vmatmul.mubr.f32.gmra.mrb[0].mxu0 %v6440
        %v6550 = vpop.f32.mrb[0].mxu0
        %v6551 = vpop.f32.mrb[0].mxu0
        %6552 = vmatprep.mubr.f32.mxu0 0.0
        %6553 = vmatmul.mubr.f32.gmra.mrb[0].mxu0 %v6441
        %v6554 = vpop.f32.mrb[0].mxu0
        %v6555 = vadd.f32 0.0, %v6554
        %v6556 = vpop.f32.mrb[0].mxu0
        %6557 = vmatprep.mubr.f32.mxu0 0.0
        %6558 = vmatmul.mubr.f32.gmra.mrb[0].mxu0 %v6442
        %v6559 = vpop.f32.mrb[0].mxu0
        %v6560 = vadd.f32 0.0, %v6559
        %v6561 = vpop.f32.mrb[0].mxu0
        %6562 = vmatprep.mubr.f32.mxu0 0.0
        %6563 = vmatmul.mubr.f32.gmra.mrb[0].mxu0 %v6443
        %v6564 = vpop.f32.mrb[0].mxu0
        %v6565 = vpop.f32.mrb[0].mxu0
        %6566 = vdwg.mxu0
        %v6567 = vadd.f32 %v6429, %v6527
        %v6568 = vadd.f32 %v6430, %v6532
        %v6569 = vadd.f32 %v6431, %v6541
        %v6570 = vadd.f32 %v6432, %v6546
        %v6571 = vadd.f32 %v6433, %v6555
        %v6572 = vadd.f32 %v6434, %v6560
        %v6573 = vld [vmem:[#allocation3 + $0xc0] sm:$0xff]
        %v6574 = vld [vmem:[#allocation3 + $0xc8] sm:$0xff]
        %v6575 = vld [vmem:[#allocation3 + $0xd0] sm:$0xff]
        %v6576 = vld [vmem:[#allocation3 + $0xd8] sm:$0xff]
        %v6577 = vld [vmem:[#allocation3 + $0xe0] sm:$0xff]
        %v6578 = vld [vmem:[#allocation3 + $0xe8] sm:$0xff]
        %v6579 = vld [vmem:[#allocation3 + $0xf0] sm:$0xff]
        %v6580 = vld [vmem:[#allocation3 + $0xf8] sm:$0xff]
        %v6581 = vld [vmem:[#allocation3 + $0x100] sm:$0xff]
        %v6582 = vld [vmem:[%s5230] sm:$0xff]
        %v6583 = vld [vmem:[%s5230 + $0x8] sm:$0xff]
        %v6584 = vld [vmem:[%s5230 + $0x10] sm:$0xff]
        %v6585 = vld [vmem:[%s5230 + $0x18] sm:$0xff]
        %v6586 = vld [vmem:[%s5230 + $0x20] sm:$0xff]
        %v6587 = vld [vmem:[%s5230 + $0x28] sm:$0xff]
        %v6588 = vld [vmem:[%s5230 + $0x30] sm:$0xff]
        %v6589 = vld [vmem:[%s5230 + $0x38] sm:$0xff]
        %v6590 = vld [vmem:[%s5230 + $0x40] sm:$0xff]
        %v6591 = vld [vmem:[%s5230 + $0x48] sm:$0xff]
        %v6592 = vld [vmem:[%s5230 + $0x50] sm:$0xff]
        %v6593 = vld [vmem:[%s5230 + $0x58] sm:$0xff]
        %v6594 = vld [vmem:[%s5230 + $0x60] sm:$0xff]
        %v6595 = vld [vmem:[%s5230 + $0x68] sm:$0xff]
        %v6596 = vld [vmem:[%s5230 + $0x70] sm:$0xff]
        %v6597 = vld [vmem:[%s5230 + $0x78] sm:$0xff]
        %6598 = vmatprep.subr.mxu0 0.0
        %6599 = vmatpush1.msra.mxu0 %v6582
        %6600 = vmatprep.subr.mxu0 0.0
        %6601 = vmatpush1.msra.mxu0 %v6583
        %6602 = vmatprep.subr.mxu0 0.0
        %6603 = vmatpush1.msra.mxu0 %v6584
        %6604 = vmatprep.subr.mxu0 0.0
        %6605 = vmatpush1.msra.mxu0 %v6585
        %6606 = vmatprep.subr.mxu0 0.0
        %6607 = vmatpush1.msra.mxu0 %v6586
        %6608 = vmatprep.subr.mxu0 0.0
        %6609 = vmatpush1.msra.mxu0 %v6587
        %6610 = vmatprep.subr.mxu0 0.0
        %6611 = vmatpush1.msra.mxu0 %v6588
        %6612 = vmatprep.subr.mxu0 0.0
        %6613 = vmatpush1.msra.mxu0 %v6589
        %6614 = vmatprep.subr.mxu0 0.0
        %6615 = vmatpush1.msra.mxu0 %v6590
        %6616 = vmatprep.subr.mxu0 0.0
        %6617 = vmatpush1.msra.mxu0 %v6591
        %6618 = vmatprep.subr.mxu0 0.0
        %6619 = vmatpush1.msra.mxu0 %v6592
        %6620 = vmatprep.subr.mxu0 0.0
        %6621 = vmatpush1.msra.mxu0 %v6593
        %6622 = vmatprep.subr.mxu0 0.0
        %6623 = vmatpush1.msra.mxu0 %v6594
        %6624 = vmatprep.subr.mxu0 0.0
        %6625 = vmatpush1.msra.mxu0 %v6595
        %6626 = vmatprep.subr.mxu0 0.0
        %6627 = vmatpush1.msra.mxu0 %v6596
        %6628 = vmatprep.subr.mxu0 0.0
        %6629 = vmatpush1.msra.mxu0 %v6597
        %6630 = vmatprep.subr.mxu0 0.0
        %6631 = vmatpush1.msra.mxu0 0.0
        %6632 = vmatprep.subr.mxu0 0.0
        %6633 = vmatpush1.msra.mxu0 0.0
        %6634 = vmatprep.subr.mxu0 0.0
        %6635 = vmatpush1.msra.mxu0 0.0
        %6636 = vmatprep.subr.mxu0 0.0
        %6637 = vmatpush1.msra.mxu0 0.0
        %6638 = vmatprep.subr.mxu0 0.0
        %6639 = vmatpush1.msra.mxu0 0.0
        %6640 = vmatprep.subr.mxu0 0.0
        %6641 = vmatpush1.msra.mxu0 0.0
        %6642 = vmatprep.subr.mxu0 0.0
        %6643 = vmatpush1.msra.mxu0 0.0
        %6644 = vmatprep.subr.mxu0 0.0
        %6645 = vmatpush1.msra.mxu0 0.0
        %6646 = vmatprep.subr.mxu0 0.0
        %6647 = vmatpush1.msra.mxu0 0.0
        %6648 = vmatprep.subr.mxu0 0.0
        %6649 = vmatpush1.msra.mxu0 0.0
        %6650 = vmatprep.subr.mxu0 0.0
        %6651 = vmatpush1.msra.mxu0 0.0
        %6652 = vmatprep.subr.mxu0 0.0
        %6653 = vmatpush1.msra.mxu0 0.0
        %6654 = vmatprep.subr.mxu0 0.0
        %6655 = vmatpush1.msra.mxu0 0.0
        %6656 = vmatprep.subr.mxu0 0.0
        %6657 = vmatpush1.msra.mxu0 0.0
        %6658 = vmatprep.subr.mxu0 0.0
        %6659 = vmatpush1.msra.mxu0 0.0
        %6660 = vmatprep.subr.mxu0 0.0
        %6661 = vmatpush1.msra.mxu0 0.0
        %6662 = vmatprep.mubr.f32.mxu0 0.0
        %6663 = vmatmul.mubr.f32.gmra.mrb[0].mxu0 %v6573
        %v6664 = vpop.f32.mrb[0].mxu0
        %v6665 = vadd.f32 0.0, %v6664
        %v6666 = vpop.f32.mrb[0].mxu0
        %6667 = vmatprep.mubr.f32.mxu0 0.0
        %6668 = vmatmul.mubr.f32.gmra.mrb[0].mxu0 %v6574
        %v6669 = vpop.f32.mrb[0].mxu0
        %v6670 = vadd.f32 0.0, %v6669
        %v6671 = vpop.f32.mrb[0].mxu0
        %6672 = vmatprep.mubr.f32.mxu0 0.0
        %6673 = vmatmul.mubr.f32.gmra.mrb[0].mxu0 %v6575
        %v6674 = vpop.f32.mrb[0].mxu0
        %v6675 = vpop.f32.mrb[0].mxu0
        %6676 = vmatprep.mubr.f32.mxu0 0.0
        %6677 = vmatmul.mubr.f32.gmra.mrb[0].mxu0 %v6576
        %v6678 = vpop.f32.mrb[0].mxu0
        %v6679 = vadd.f32 0.0, %v6678
        %v6680 = vpop.f32.mrb[0].mxu0
        %6681 = vmatprep.mubr.f32.mxu0 0.0
        %6682 = vmatmul.mubr.f32.gmra.mrb[0].mxu0 %v6577
        %v6683 = vpop.f32.mrb[0].mxu0
        %v6684 = vadd.f32 0.0, %v6683
        %v6685 = vpop.f32.mrb[0].mxu0
        %6686 = vmatprep.mubr.f32.mxu0 0.0
        %6687 = vmatmul.mubr.f32.gmra.mrb[0].mxu0 %v6578
        %v6688 = vpop.f32.mrb[0].mxu0
        %v6689 = vpop.f32.mrb[0].mxu0
        %6690 = vmatprep.mubr.f32.mxu0 0.0
        %6691 = vmatmul.mubr.f32.gmra.mrb[0].mxu0 %v6579
        %v6692 = vpop.f32.mrb[0].mxu0
        %v6693 = vadd.f32 0.0, %v6692
        %v6694 = vpop.f32.mrb[0].mxu0
        %6695 = vmatprep.mubr.f32.mxu0 0.0
        %6696 = vmatmul.mubr.f32.gmra.mrb[0].mxu0 %v6580
        %v6697 = vpop.f32.mrb[0].mxu0
        %v6698 = vadd.f32 0.0, %v6697
        %v6699 = vpop.f32.mrb[0].mxu0
        %6700 = vmatprep.mubr.f32.mxu0 0.0
        %6701 = vmatmul.mubr.f32.gmra.mrb[0].mxu0 %v6581
        %v6702 = vpop.f32.mrb[0].mxu0
        %v6703 = vpop.f32.mrb[0].mxu0
        %6704 = vdwg.mxu0
        %v6705 = vadd.f32 %v6567, %v6665
        %v6706 = vadd.f32 %v6568, %v6670
        %v6707 = vadd.f32 %v6569, %v6679
        %v6708 = vadd.f32 %v6570, %v6684
        %v6709 = vadd.f32 %v6571, %v6693
        %v6710 = vadd.f32 %v6572, %v6698
        %v6711 = vld [vmem:[#allocation3 + $0xc1] sm:$0xff]
        %v6712 = vld [vmem:[#allocation3 + $0xc9] sm:$0xff]
        %v6713 = vld [vmem:[#allocation3 + $0xd1] sm:$0xff]
        %v6714 = vld [vmem:[#allocation3 + $0xd9] sm:$0xff]
        %v6715 = vld [vmem:[#allocation3 + $0xe1] sm:$0xff]
        %v6716 = vld [vmem:[#allocation3 + $0xe9] sm:$0xff]
        %v6717 = vld [vmem:[#allocation3 + $0xf1] sm:$0xff]
        %v6718 = vld [vmem:[#allocation3 + $0xf9] sm:$0xff]
        %v6719 = vld [vmem:[#allocation3 + $0x101] sm:$0xff]
        %v6720 = vld [vmem:[%s5407] sm:$0xff]
        %v6721 = vld [vmem:[%s5407 + $0x8] sm:$0xff]
        %v6722 = vld [vmem:[%s5407 + $0x10] sm:$0xff]
        %v6723 = vld [vmem:[%s5407 + $0x18] sm:$0xff]
        %v6724 = vld [vmem:[%s5407 + $0x20] sm:$0xff]
        %v6725 = vld [vmem:[%s5407 + $0x28] sm:$0xff]
        %v6726 = vld [vmem:[%s5407 + $0x30] sm:$0xff]
        %v6727 = vld [vmem:[%s5407 + $0x38] sm:$0xff]
        %v6728 = vld [vmem:[%s5407 + $0x40] sm:$0xff]
        %v6729 = vld [vmem:[%s5407 + $0x48] sm:$0xff]
        %v6730 = vld [vmem:[%s5407 + $0x50] sm:$0xff]
        %v6731 = vld [vmem:[%s5407 + $0x58] sm:$0xff]
        %v6732 = vld [vmem:[%s5407 + $0x60] sm:$0xff]
        %v6733 = vld [vmem:[%s5407 + $0x68] sm:$0xff]
        %v6734 = vld [vmem:[%s5407 + $0x70] sm:$0xff]
        %v6735 = vld [vmem:[%s5407 + $0x78] sm:$0xff]
        %6736 = vmatprep.subr.mxu0 0.0
        %6737 = vmatpush1.msra.mxu0 %v6720
        %6738 = vmatprep.subr.mxu0 0.0
        %6739 = vmatpush1.msra.mxu0 %v6721
        %6740 = vmatprep.subr.mxu0 0.0
        %6741 = vmatpush1.msra.mxu0 %v6722
        %6742 = vmatprep.subr.mxu0 0.0
        %6743 = vmatpush1.msra.mxu0 %v6723
        %6744 = vmatprep.subr.mxu0 0.0
        %6745 = vmatpush1.msra.mxu0 %v6724
        %6746 = vmatprep.subr.mxu0 0.0
        %6747 = vmatpush1.msra.mxu0 %v6725
        %6748 = vmatprep.subr.mxu0 0.0
        %6749 = vmatpush1.msra.mxu0 %v6726
        %6750 = vmatprep.subr.mxu0 0.0
        %6751 = vmatpush1.msra.mxu0 %v6727
        %6752 = vmatprep.subr.mxu0 0.0
        %6753 = vmatpush1.msra.mxu0 %v6728
        %6754 = vmatprep.subr.mxu0 0.0
        %6755 = vmatpush1.msra.mxu0 %v6729
        %6756 = vmatprep.subr.mxu0 0.0
        %6757 = vmatpush1.msra.mxu0 %v6730
        %6758 = vmatprep.subr.mxu0 0.0
        %6759 = vmatpush1.msra.mxu0 %v6731
        %6760 = vmatprep.subr.mxu0 0.0
        %6761 = vmatpush1.msra.mxu0 %v6732
        %6762 = vmatprep.subr.mxu0 0.0
        %6763 = vmatpush1.msra.mxu0 %v6733
        %6764 = vmatprep.subr.mxu0 0.0
        %6765 = vmatpush1.msra.mxu0 %v6734
        %6766 = vmatprep.subr.mxu0 0.0
        %6767 = vmatpush1.msra.mxu0 %v6735
        %6768 = vmatprep.subr.mxu0 0.0
        %6769 = vmatpush1.msra.mxu0 0.0
        %6770 = vmatprep.subr.mxu0 0.0
        %6771 = vmatpush1.msra.mxu0 0.0
        %6772 = vmatprep.subr.mxu0 0.0
        %6773 = vmatpush1.msra.mxu0 0.0
        %6774 = vmatprep.subr.mxu0 0.0
        %6775 = vmatpush1.msra.mxu0 0.0
        %6776 = vmatprep.subr.mxu0 0.0
        %6777 = vmatpush1.msra.mxu0 0.0
        %6778 = vmatprep.subr.mxu0 0.0
        %6779 = vmatpush1.msra.mxu0 0.0
        %6780 = vmatprep.subr.mxu0 0.0
        %6781 = vmatpush1.msra.mxu0 0.0
        %6782 = vmatprep.subr.mxu0 0.0
        %6783 = vmatpush1.msra.mxu0 0.0
        %6784 = vmatprep.subr.mxu0 0.0
        %6785 = vmatpush1.msra.mxu0 0.0
        %6786 = vmatprep.subr.mxu0 0.0
        %6787 = vmatpush1.msra.mxu0 0.0
        %6788 = vmatprep.subr.mxu0 0.0
        %6789 = vmatpush1.msra.mxu0 0.0
        %6790 = vmatprep.subr.mxu0 0.0
        %6791 = vmatpush1.msra.mxu0 0.0
        %6792 = vmatprep.subr.mxu0 0.0
        %6793 = vmatpush1.msra.mxu0 0.0
        %6794 = vmatprep.subr.mxu0 0.0
        %6795 = vmatpush1.msra.mxu0 0.0
        %6796 = vmatprep.subr.mxu0 0.0
        %6797 = vmatpush1.msra.mxu0 0.0
        %6798 = vmatprep.subr.mxu0 0.0
        %6799 = vmatpush1.msra.mxu0 0.0
        %6800 = vmatprep.mubr.f32.mxu0 0.0
        %6801 = vmatmul.mubr.f32.gmra.mrb[0].mxu0 %v6711
        %v6802 = vpop.f32.mrb[0].mxu0
        %v6803 = vadd.f32 0.0, %v6802
        %v6804 = vpop.f32.mrb[0].mxu0
        %6805 = vmatprep.mubr.f32.mxu0 0.0
        %6806 = vmatmul.mubr.f32.gmra.mrb[0].mxu0 %v6712
        %v6807 = vpop.f32.mrb[0].mxu0
        %v6808 = vadd.f32 0.0, %v6807
        %v6809 = vpop.f32.mrb[0].mxu0
        %6810 = vmatprep.mubr.f32.mxu0 0.0
        %6811 = vmatmul.mubr.f32.gmra.mrb[0].mxu0 %v6713
        %v6812 = vpop.f32.mrb[0].mxu0
        %v6813 = vpop.f32.mrb[0].mxu0
        %6814 = vmatprep.mubr.f32.mxu0 0.0
        %6815 = vmatmul.mubr.f32.gmra.mrb[0].mxu0 %v6714
        %v6816 = vpop.f32.mrb[0].mxu0
        %v6817 = vadd.f32 0.0, %v6816
        %v6818 = vpop.f32.mrb[0].mxu0
        %6819 = vmatprep.mubr.f32.mxu0 0.0
        %6820 = vmatmul.mubr.f32.gmra.mrb[0].mxu0 %v6715
        %v6821 = vpop.f32.mrb[0].mxu0
        %v6822 = vadd.f32 0.0, %v6821
        %v6823 = vpop.f32.mrb[0].mxu0
        %6824 = vmatprep.mubr.f32.mxu0 0.0
        %6825 = vmatmul.mubr.f32.gmra.mrb[0].mxu0 %v6716
        %v6826 = vpop.f32.mrb[0].mxu0
        %v6827 = vpop.f32.mrb[0].mxu0
        %6828 = vmatprep.mubr.f32.mxu0 0.0
        %6829 = vmatmul.mubr.f32.gmra.mrb[0].mxu0 %v6717
        %v6830 = vpop.f32.mrb[0].mxu0
        %v6831 = vadd.f32 0.0, %v6830
        %v6832 = vpop.f32.mrb[0].mxu0
        %6833 = vmatprep.mubr.f32.mxu0 0.0
        %6834 = vmatmul.mubr.f32.gmra.mrb[0].mxu0 %v6718
        %v6835 = vpop.f32.mrb[0].mxu0
        %v6836 = vadd.f32 0.0, %v6835
        %v6837 = vpop.f32.mrb[0].mxu0
        %6838 = vmatprep.mubr.f32.mxu0 0.0
        %6839 = vmatmul.mubr.f32.gmra.mrb[0].mxu0 %v6719
        %v6840 = vpop.f32.mrb[0].mxu0
        %v6841 = vpop.f32.mrb[0].mxu0
        %6842 = vdwg.mxu0
        %v6843 = vadd.f32 %v6705, %v6803
        %v6844 = vadd.f32 %v6706, %v6808
        %v6845 = vadd.f32 %v6707, %v6817
        %v6846 = vadd.f32 %v6708, %v6822
        %v6847 = vadd.f32 %v6709, %v6831
        %v6848 = vadd.f32 %v6710, %v6836
        %v6849 = vadd.f32 %v6843, %v5573
        %v6850 = vadd.f32 %v6844, %v5573
        %v6851 = vld [vmem:[%s708] sm:$0xff]
        %v6852 = vld [vmem:[%s708 + $0x8] sm:$0xff]
        %v6853 = vadd.f32 %v6849, %v6851
        %v6854 = vadd.f32 %v6850, %v6852
        %s6855 = scalar_lea.vmem %s619, 80 [#allocation16]
        %6856 = vst [vmem:[%s6855] sm:$0xff] %v6853
        %6857 = vst [vmem:[%s6855 + $0x8] sm:$0xff] %v6854
        %v6858 = vadd.f32 %v6845, %v5573
        %v6859 = vadd.f32 %v6846, %v5573
        %v6860 = vld [vmem:[%s715] sm:$0xff]
        %v6861 = vld [vmem:[%s715 + $0x8] sm:$0xff]
        %v6862 = vadd.f32 %v6858, %v6860
        %v6863 = vadd.f32 %v6859, %v6861
        %s6864 = scalar_lea.vmem %s619, 96 [#allocation16]
        %6865 = vst [vmem:[%s6864] sm:$0xff] %v6862
        %6866 = vst [vmem:[%s6864 + $0x8] sm:$0xff] %v6863
        %v6867 = vadd.f32 %v6847, %v5573
        %v6868 = vadd.f32 %v6848, %v5573
        %v6869 = vld [vmem:[%s722] sm:$0xff]
        %v6870 = vld [vmem:[%s722 + $0x8] sm:$0xff]
        %v6871 = vadd.f32 %v6867, %v6869
        %v6872 = vadd.f32 %v6868, %v6870
        %s6873 = scalar_lea.vmem %s619, 112 [#allocation16]
        %6874 = vst [vmem:[%s6873] sm:$0xff] %v6871
        %6875 = vst [vmem:[%s6873 + $0x8] sm:$0xff] %v6872
        %s6876 = sand.u32 %s313, 1
        %s6877 = scalar_lea.sflag [#allocation6], %s6876
        %s6878 = sand.u32 %s313, 1
        %s6879 = smul.addr %s6878, 128
        %s6880 = scalar_lea.vmem [#allocation16], %s6879
        // Predicated region
        $region93: #{tpu_custom_call.1} parent=55 // pred_check
          %p6881 = pneg %p323
        $region94: #{tpu_custom_call.1} parent=55 // pred_check_branch
          %6883 = sbr.rel (%p6881) target = $region96
        $region95: #{tpu_custom_call.1} parent=55 // pred_region
          %s6884 = smul.u32 8, %s38
          %s6886 = ssub.s32 2048, 2048
          %6887 = vsyncadd %s6877, %s6886
          %s6888 = smul.addr %s6884, 2
          %s6889 = smul.addr %s37, 32
          %s6890 = sadd.s32 %s6888, %s6889
          %s6891 = smul.addr %s6890, 128
          %s6892 = scalar_lea.hbm %s9, %s6891
          %s6893 = sshll.u32 %s6880, 4
          %s6894 = int_to_ptr.vmem [resolvable:$true] %s6893
          %6899 = dma.vmem_to_hbm [thread:$0]  %s6894, 2048, %s6892, %s6877, 128, 128, 8
        $region96: #{tpu_custom_call.1} parent=55 // pred_fallthru
          _
      $region56: #{tpu_custom_call.1} parent=5 // pred_fallthru
        _
      %p6900 = scmp.le.s32.totalorder 2, %s28
      // Predicated region
      $region97: #{tpu_custom_call.1} parent=5 // pred_check
        %p6901 = pneg %p6900
      $region98: #{tpu_custom_call.1} parent=5 // pred_check_branch
        %6903 = sbr.rel (%p6901) target = $region100
      $region99: #{tpu_custom_call.1} parent=5 // pred_region
        %s6904 = ssub.s32 %s28, 2
        // Predicated region
        $region101: #{tpu_custom_call.1} parent=99 // pred_check
          %p6905 = pneg %p329
        $region102: #{tpu_custom_call.1} parent=99 // pred_check_branch
          %6907 = sbr.rel (%p6905) target = $region104
        $region103: #{tpu_custom_call.1} parent=99 // pred_region
          %s6908 = sand.u32 %s314, 1
          %s6909 = scalar_lea.sflag [#allocation6], %s6908
          %s6910 = sand.u32 %s314, 1
          %s6911 = smul.addr %s6910, 128
          %s6912 = scalar_lea.vmem [#allocation16], %s6911
          %6913 = dma.done %s6909, 2048
        $region104: #{tpu_custom_call.1} parent=99 // pred_fallthru
          _
      $region100: #{tpu_custom_call.1} parent=5 // pred_fallthru
        _
    $region6: #{tpu_custom_call.1} parent=1 // loop_footer
      %s32 = sadd.s32 1, %s28
    $region7: #{tpu_custom_call.1} parent=1 // loop_footer_branch
      %27 = sbr.rel target = $region3
    $region8: #{tpu_custom_call.1} parent=1 // loop_exit
      _
    %6914 = vsyncpa [#allocation5], 1
    %s6915 = scalar_lea.sflag [#allocation5], 1
    %6916 = vsyncpa %s6915, 1
    %6917 = vsyncpa [#allocation8], 1
    %s6918 = scalar_lea.sflag [#allocation8], 1
    %6919 = vsyncpa %s6918, 1
    %6920 = vsyncpa [#allocation11], 1
    %s6921 = scalar_lea.sflag [#allocation11], 1
    %6922 = vsyncpa %s6921, 1
    %6923 = vsyncpa [#allocation14], 1
    %6924 = vsyncpa [#allocation6], 1
    %s6925 = scalar_lea.sflag [#allocation6], 1
    %6926 = vsyncpa %s6925, 1

</llo_original>
